<compile_context>
chip_gen: v7x
topology: tpu7x:2x2x1
jax: 0.10.0
libtpu: 0.0.40
codegen_flags: <defaults>
</compile_context>

<pallas_src>
import functools

import jax
import jax.numpy as jnp
from jax import lax
from jax.experimental import pallas as pl
from jax.experimental.pallas import tpu as pltpu


# ----------------------------------------------------------------------------
# Model dimensions (small synthetic ViT-style encoder)
# ----------------------------------------------------------------------------
PATCH = 4
HIDDEN = 32
HEADS = 4
HEAD_DIM = HIDDEN // HEADS
MLP_DIM = 64
FEAT_DIM = 32
LN_EPS = 1e-5

_F32 = jnp.float32
_BF16 = jnp.bfloat16


# ----------------------------------------------------------------------------
# In-kernel helpers (f32 math on VPU/EUP/XLU)
# ----------------------------------------------------------------------------
def _layernorm(x, g, b, eps):
    mu = jnp.mean(x, axis=-1, keepdims=True)
    xc = x - mu
    var = jnp.mean(xc * xc, axis=-1, keepdims=True)
    return xc * lax.rsqrt(var + eps) * g + b


def _quick_gelu(x):
    # CLIP's QuickGELU: x * sigmoid(1.702 * x)
    return x * jax.nn.sigmoid(1.702 * x)


# ----------------------------------------------------------------------------
# Single fused Pallas kernel: whole image-encoder forward for one batch tile
# ----------------------------------------------------------------------------
def _fused_encoder_kernel(
    patches_ref, pos_ref,
    w_patch_ref, b_patch_ref,
    ln1_g_ref, ln1_b_ref,
    w_qkv_ref, b_qkv_ref,
    w_o_ref, b_o_ref,
    ln2_g_ref, ln2_b_ref,
    w_fc1_ref, b_fc1_ref,
    w_fc2_ref, b_fc2_ref,
    lnf_g_ref, lnf_b_ref,
    w_proj_ref, b_proj_ref,
    feat_ref,
    attn_ref,                       # VMEM scratch (bt*S, hidden) f32
    *, bt, S, heads, head_dim, hidden, eps):
    f32 = jnp.float32
    bf16 = jnp.bfloat16
    R = bt * S

    # --- Patch embedding + positional embedding (broadcast add) -------------
    x = jnp.dot(patches_ref[...], w_patch_ref[...],
                preferred_element_type=f32) + b_patch_ref[...]      # (R, hidden) f32
    pos = pos_ref[...].astype(f32)                                   # (S, hidden)
    x = (x.reshape(bt, S, hidden) + pos[None]).reshape(R, hidden)

    # --- Transformer block (pre-LN) ------------------------------------------
    h = _layernorm(x, ln1_g_ref[...], ln1_b_ref[...], eps)
    qkv = jnp.dot(h.astype(bf16), w_qkv_ref[...],
                  preferred_element_type=f32) + b_qkv_ref[...]       # (R, 3*hidden)

    # Multi-head attention: one batched einsum pair per head (batched over the
    # whole batch tile), head outputs written straight into VMEM scratch.
    # Attention scale is folded into w_qkv/b_qkv Q columns at init.
    for hh in range(heads):
        c0 = hh * head_dim
        q = qkv[:, c0:c0 + head_dim].astype(bf16).reshape(bt, S, head_dim)
        k = qkv[:, hidden + c0:hidden + c0 + head_dim].astype(bf16).reshape(bt, S, head_dim)
        v = qkv[:, 2 * hidden + c0:2 * hidden + c0 + head_dim].astype(bf16).reshape(bt, S, head_dim)
        s = jnp.einsum('bqd,bkd->bqk', q, k,
                       preferred_element_type=f32)                   # (bt, S, S)
        m = jnp.max(s, axis=-1, keepdims=True)
        p = jnp.exp(s - m)
        p = p / jnp.sum(p, axis=-1, keepdims=True)                   # exact divide
        o = jnp.einsum('bqk,bkd->bqd', p.astype(bf16), v,
                       preferred_element_type=f32)                   # (bt, S, d)
        attn_ref[:, c0:c0 + head_dim] = o.reshape(R, head_dim)

    attn = jnp.dot(attn_ref[...].astype(bf16), w_o_ref[...],
                   preferred_element_type=f32) + b_o_ref[...]
    x = x + attn

    h = _layernorm(x, ln2_g_ref[...], ln2_b_ref[...], eps)
    h = jnp.dot(h.astype(bf16), w_fc1_ref[...],
                preferred_element_type=f32) + b_fc1_ref[...]
    h = _quick_gelu(h)
    h = jnp.dot(h.astype(bf16), w_fc2_ref[...],
                preferred_element_type=f32) + b_fc2_ref[...]
    x = x + h

    # --- Final LN, mean-pool over tokens, projection to features -------------
    # TODO(synk): real CLIP uses a class token + ln_pre/ln_post and takes the
    # CLS embedding; here we mean-pool patch tokens (same output shape).
    x = _layernorm(x, lnf_g_ref[...], lnf_b_ref[...], eps)
    pooled = jnp.mean(x.reshape(bt, S, hidden), axis=1)              # (bt, hidden)
    feat = jnp.dot(pooled.astype(bf16), w_proj_ref[...],
                   preferred_element_type=f32) + b_proj_ref[...]
    feat_ref[...] = feat.astype(feat_ref.dtype)


# ----------------------------------------------------------------------------
# Parameters: MXU-facing weights stored bf16 once; biases/LN params f32, (1,N)
# ----------------------------------------------------------------------------
def init_params(key, in_ch, num_patches):
    patch_dim = in_ch * PATCH * PATCH
    keys = jax.random.split(key, 8)
    std = 0.02
    scale = 1.0 / (HEAD_DIM ** 0.5)

    w_qkv = std * jax.random.normal(keys[2], (HIDDEN, 3 * HIDDEN), _F32)
    b_qkv = jnp.zeros((1, 3 * HIDDEN), _F32)
    # Fold the attention scale into the Q projection (kernel has no `* scale`).
    w_qkv = w_qkv.at[:, :HIDDEN].multiply(scale)
    b_qkv = b_qkv.at[:, :HIDDEN].multiply(scale)

    return {
        "w_patch": (std * jax.random.normal(keys[0], (patch_dim, HIDDEN), _F32)).astype(_BF16),
        "b_patch": jnp.zeros((1, HIDDEN), _F32),
        "pos_emb": std * jax.random.normal(keys[1], (num_patches, HIDDEN), _F32),
        "ln1_g": jnp.ones((1, HIDDEN), _F32),
        "ln1_b": jnp.zeros((1, HIDDEN), _F32),
        "w_qkv": w_qkv.astype(_BF16),
        "b_qkv": b_qkv,
        "w_o": (std * jax.random.normal(keys[3], (HIDDEN, HIDDEN), _F32)).astype(_BF16),
        "b_o": jnp.zeros((1, HIDDEN), _F32),
        "ln2_g": jnp.ones((1, HIDDEN), _F32),
        "ln2_b": jnp.zeros((1, HIDDEN), _F32),
        "w_fc1": (std * jax.random.normal(keys[4], (HIDDEN, MLP_DIM), _F32)).astype(_BF16),
        "b_fc1": jnp.zeros((1, MLP_DIM), _F32),
        "w_fc2": (std * jax.random.normal(keys[5], (MLP_DIM, HIDDEN), _F32)).astype(_BF16),
        "b_fc2": jnp.zeros((1, HIDDEN), _F32),
        "lnf_g": jnp.ones((1, HIDDEN), _F32),
        "lnf_b": jnp.zeros((1, HIDDEN), _F32),
        "w_proj": (std * jax.random.normal(keys[6], (HIDDEN, FEAT_DIM), _F32)).astype(_BF16),
        "b_proj": jnp.zeros((1, FEAT_DIM), _F32),
    }


_PARAM_ORDER = (
    "pos_emb", "w_patch", "b_patch", "ln1_g", "ln1_b", "w_qkv", "b_qkv",
    "w_o", "b_o", "ln2_g", "ln2_b", "w_fc1", "b_fc1", "w_fc2", "b_fc2",
    "lnf_g", "lnf_b", "w_proj", "b_proj",
)


# ----------------------------------------------------------------------------
# ModelWrapper.forward equivalent: features = image_encoder(images)
# ----------------------------------------------------------------------------
def model_wrapper_forward(params, images, *, batch_tile=8):
    B, C, H, W = images.shape          # NCHW (PyTorch layout)
    P = PATCH
    nh, nw = H // P, W // P
    S = nh * nw
    patch_dim = C * P * P

    # Batch tile: B_TILE images (= B_TILE*S token rows) per grid step.
    bt = batch_tile if (B % batch_tile == 0) else B
    grid = (B // bt,)

    # Glue: unfold NCHW into (B*S, C*P*P) patch rows (pure layout, no compute);
    # cast the streamed input to bf16 once to halve its HBM/DMA bytes.
    patches = images.reshape(B, C, nh, P, nw, P)
    patches = patches.transpose(0, 2, 4, 1, 3, 5).reshape(B * S, patch_dim)
    patches = patches.astype(_BF16)

    kernel = functools.partial(
        _fused_encoder_kernel, bt=bt, S=S, heads=HEADS, head_dim=HEAD_DIM,
        hidden=HIDDEN, eps=LN_EPS)

    weights = tuple(params[name] for name in _PARAM_ORDER)

    # Streamed input: one (bt*S, patch_dim) row tile per grid step.
    patch_spec = pl.BlockSpec((bt * S, patch_dim), lambda i: (i, 0))
    # Weights/biases: full-array blocks with constant index_maps -> fetched
    # once, resident in VMEM across all grid steps (no per-step re-DMA).
    weight_specs = [pl.BlockSpec(w.shape, lambda i: (0, 0)) for w in weights]

    return pl.pallas_call(
        kernel,
        out_shape=jax.ShapeDtypeStruct((B, FEAT_DIM), images.dtype),
        grid=grid,
        in_specs=[patch_spec] + weight_specs,
        out_specs=pl.BlockSpec((bt, FEAT_DIM), lambda i: (i, 0)),
        scratch_shapes=[pltpu.VMEM((bt * S, HIDDEN), jnp.float32)],
        compiler_params=pltpu.CompilerParams(
            dimension_semantics=("parallel",)),   # v7x: both TCs split batch
    )(patches, *weights)


if __name__ == "__main__":
    key = jax.random.PRNGKey(0)
    k_img, k_par = jax.random.split(key)

    # Small deterministic example: 16 RGB 16x16 images -> 2 grid steps of
    # 8 images (128 token rows) each.
    B, C, H, W = 16, 3, 16, 16
    images = jax.random.normal(k_img, (B, C, H, W), jnp.float32)

    num_patches = (H // PATCH) * (W // PATCH)
    params = init_params(k_par, C, num_patches)

    fwd = jax.jit(model_wrapper_forward)
    features = fwd(params, images)
    jax.block_until_ready(features)

    assert features.shape == (B, FEAT_DIM)
    assert bool(jnp.all(jnp.isfinite(features)))
    print("KERNEL_OK")
</pallas_src>

<mosaic_0001>
module attributes {stable_mosaic.version = 11 : i64} {
  func.func @_fused_encoder_kernel(%arg0: i32, %arg1: memref<128x48xbf16, #tpu.memory_space<vmem>>, %arg2: memref<16x32xf32, #tpu.memory_space<vmem>>, %arg3: memref<48x32xbf16, #tpu.memory_space<vmem>>, %arg4: memref<1x32xf32, #tpu.memory_space<vmem>>, %arg5: memref<1x32xf32, #tpu.memory_space<vmem>>, %arg6: memref<1x32xf32, #tpu.memory_space<vmem>>, %arg7: memref<32x96xbf16, #tpu.memory_space<vmem>>, %arg8: memref<1x96xf32, #tpu.memory_space<vmem>>, %arg9: memref<32x32xbf16, #tpu.memory_space<vmem>>, %arg10: memref<1x32xf32, #tpu.memory_space<vmem>>, %arg11: memref<1x32xf32, #tpu.memory_space<vmem>>, %arg12: memref<1x32xf32, #tpu.memory_space<vmem>>, %arg13: memref<32x64xbf16, #tpu.memory_space<vmem>>, %arg14: memref<1x64xf32, #tpu.memory_space<vmem>>, %arg15: memref<64x32xbf16, #tpu.memory_space<vmem>>, %arg16: memref<1x32xf32, #tpu.memory_space<vmem>>, %arg17: memref<1x32xf32, #tpu.memory_space<vmem>>, %arg18: memref<1x32xf32, #tpu.memory_space<vmem>>, %arg19: memref<32x32xbf16, #tpu.memory_space<vmem>>, %arg20: memref<1x32xf32, #tpu.memory_space<vmem>>, %arg21: memref<8x32xf32, #tpu.memory_space<vmem>>, %arg22: memref<128x32xf32, #tpu.memory_space<vmem>>) attributes {dimension_semantics = [#tpu.dimension_semantics<parallel>], iteration_bounds = array<i64: 2>, scalar_prefetch = 0 : i64, scratch_operands = 1 : i64, tpu.core_type = #tpu.core_type<tc>, window_params = [{transform_indices = @transform_0, window_bounds = array<i64: 128, 48>}, {pipeline_mode = #tpu.pipeline_mode<synchronous>, transform_indices = @transform_1, window_bounds = array<i64: 16, 32>}, {pipeline_mode = #tpu.pipeline_mode<synchronous>, transform_indices = @transform_2, window_bounds = array<i64: 48, 32>}, {pipeline_mode = #tpu.pipeline_mode<synchronous>, transform_indices = @transform_3, window_bounds = array<i64: 1, 32>}, {pipeline_mode = #tpu.pipeline_mode<synchronous>, transform_indices = @transform_4, window_bounds = array<i64: 1, 32>}, {pipeline_mode = #tpu.pipeline_mode<synchronous>, transform_indices = @transform_5, window_bounds = array<i64: 1, 32>}, {pipeline_mode = #tpu.pipeline_mode<synchronous>, transform_indices = @transform_6, window_bounds = array<i64: 32, 96>}, {pipeline_mode = #tpu.pipeline_mode<synchronous>, transform_indices = @transform_7, window_bounds = array<i64: 1, 96>}, {pipeline_mode = #tpu.pipeline_mode<synchronous>, transform_indices = @transform_8, window_bounds = array<i64: 32, 32>}, {pipeline_mode = #tpu.pipeline_mode<synchronous>, transform_indices = @transform_9, window_bounds = array<i64: 1, 32>}, {pipeline_mode = #tpu.pipeline_mode<synchronous>, transform_indices = @transform_10, window_bounds = array<i64: 1, 32>}, {pipeline_mode = #tpu.pipeline_mode<synchronous>, transform_indices = @transform_11, window_bounds = array<i64: 1, 32>}, {pipeline_mode = #tpu.pipeline_mode<synchronous>, transform_indices = @transform_12, window_bounds = array<i64: 32, 64>}, {pipeline_mode = #tpu.pipeline_mode<synchronous>, transform_indices = @transform_13, window_bounds = array<i64: 1, 64>}, {pipeline_mode = #tpu.pipeline_mode<synchronous>, transform_indices = @transform_14, window_bounds = array<i64: 64, 32>}, {pipeline_mode = #tpu.pipeline_mode<synchronous>, transform_indices = @transform_15, window_bounds = array<i64: 1, 32>}, {pipeline_mode = #tpu.pipeline_mode<synchronous>, transform_indices = @transform_16, window_bounds = array<i64: 1, 32>}, {pipeline_mode = #tpu.pipeline_mode<synchronous>, transform_indices = @transform_17, window_bounds = array<i64: 1, 32>}, {pipeline_mode = #tpu.pipeline_mode<synchronous>, transform_indices = @transform_18, window_bounds = array<i64: 32, 32>}, {pipeline_mode = #tpu.pipeline_mode<synchronous>, transform_indices = @transform_19, window_bounds = array<i64: 1, 32>}, {transform_indices = @transform_20, window_bounds = array<i64: 8, 32>}]} {
    %c0 = arith.constant 0 : index
    %c0_0 = arith.constant 0 : index
    %0 = vector.load %arg1[%c0, %c0_0] : memref<128x48xbf16, #tpu.memory_space<vmem>>, vector<128x48xbf16>
    %c0_1 = arith.constant 0 : index
    %c0_2 = arith.constant 0 : index
    %1 = vector.load %arg3[%c0_1, %c0_2] : memref<48x32xbf16, #tpu.memory_space<vmem>>, vector<48x32xbf16>
    %cst = arith.constant dense<0.000000e+00> : vector<128x32xf32>
    %2 = tpu.matmul %0, %1, %cst {dimension_numbers = #tpu.dot_dimension_numbers<[1], [0], [0], [1], [0, 0, 1, 1], [], []>} : vector<128x48xbf16>, vector<48x32xbf16>, vector<128x32xf32> -> vector<128x32xf32>
    %c0_3 = arith.constant 0 : index
    %c0_4 = arith.constant 0 : index
    %3 = vector.load %arg4[%c0_3, %c0_4] : memref<1x32xf32, #tpu.memory_space<vmem>>, vector<1x32xf32>
    %4 = vector.broadcast %3 : vector<1x32xf32> to vector<128x32xf32>
    %5 = arith.addf %2, %4 : vector<128x32xf32>
    %c0_5 = arith.constant 0 : index
    %c0_6 = arith.constant 0 : index
    %6 = vector.load %arg2[%c0_5, %c0_6] : memref<16x32xf32, #tpu.memory_space<vmem>>, vector<16x32xf32>
    %7 = vector.shape_cast %5 : vector<128x32xf32> to vector<8x16x32xf32>
    %8 = vector.shape_cast %6 : vector<16x32xf32> to vector<1x16x32xf32>
    %9 = vector.broadcast %8 : vector<1x16x32xf32> to vector<8x16x32xf32>
    %10 = arith.addf %7, %9 : vector<8x16x32xf32>
    %11 = vector.shape_cast %10 : vector<8x16x32xf32> to vector<128x32xf32>
    %c0_7 = arith.constant 0 : index
    %c0_8 = arith.constant 0 : index
    %12 = vector.load %arg5[%c0_7, %c0_8] : memref<1x32xf32, #tpu.memory_space<vmem>>, vector<1x32xf32>
    %c0_9 = arith.constant 0 : index
    %c0_10 = arith.constant 0 : index
    %13 = vector.load %arg6[%c0_9, %c0_10] : memref<1x32xf32, #tpu.memory_space<vmem>>, vector<1x32xf32>
    %cst_11 = arith.constant dense<0.000000e+00> : vector<128xf32>
    %14 = vector.multi_reduction <add>, %11, %cst_11 [1] : vector<128x32xf32> to vector<128xf32>
    %15 = vector.shape_cast %14 : vector<128xf32> to vector<128x1xf32>
    %cst_12 = arith.constant 3.200000e+01 : f32
    %16 = vector.broadcast %cst_12 : f32 to vector<128x1xf32>
    %17 = arith.divf %15, %16 : vector<128x1xf32>
    %18 = vector.broadcast %17 : vector<128x1xf32> to vector<128x32xf32>
    %19 = arith.subf %11, %18 : vector<128x32xf32>
    %20 = arith.mulf %19, %19 : vector<128x32xf32>
    %cst_13 = arith.constant dense<0.000000e+00> : vector<128xf32>
    %21 = vector.multi_reduction <add>, %20, %cst_13 [1] : vector<128x32xf32> to vector<128xf32>
    %22 = vector.shape_cast %21 : vector<128xf32> to vector<128x1xf32>
    %cst_14 = arith.constant 3.200000e+01 : f32
    %23 = vector.broadcast %cst_14 : f32 to vector<128x1xf32>
    %24 = arith.divf %22, %23 : vector<128x1xf32>
    %cst_15 = arith.constant 9.99999974E-6 : f32
    %25 = vector.broadcast %cst_15 : f32 to vector<128x1xf32>
    %26 = arith.addf %24, %25 : vector<128x1xf32>
    %27 = math.rsqrt %26 : vector<128x1xf32>
    %28 = vector.broadcast %27 : vector<128x1xf32> to vector<128x32xf32>
    %29 = arith.mulf %19, %28 : vector<128x32xf32>
    %30 = vector.broadcast %12 : vector<1x32xf32> to vector<128x32xf32>
    %31 = arith.mulf %29, %30 : vector<128x32xf32>
    %32 = vector.broadcast %13 : vector<1x32xf32> to vector<128x32xf32>
    %33 = arith.addf %31, %32 : vector<128x32xf32>
    %34 = arith.truncf %33 : vector<128x32xf32> to vector<128x32xbf16>
    %c0_16 = arith.constant 0 : index
    %c0_17 = arith.constant 0 : index
    %35 = vector.load %arg7[%c0_16, %c0_17] : memref<32x96xbf16, #tpu.memory_space<vmem>>, vector<32x96xbf16>
    %cst_18 = arith.constant dense<0.000000e+00> : vector<128x96xf32>
    %36 = tpu.matmul %34, %35, %cst_18 {dimension_numbers = #tpu.dot_dimension_numbers<[1], [0], [0], [1], [0, 0, 1, 1], [], []>} : vector<128x32xbf16>, vector<32x96xbf16>, vector<128x96xf32> -> vector<128x96xf32>
    %c0_19 = arith.constant 0 : index
    %c0_20 = arith.constant 0 : index
    %37 = vector.load %arg8[%c0_19, %c0_20] : memref<1x96xf32, #tpu.memory_space<vmem>>, vector<1x96xf32>
    %38 = vector.broadcast %37 : vector<1x96xf32> to vector<128x96xf32>
    %39 = arith.addf %36, %38 : vector<128x96xf32>
    %40 = vector.extract_strided_slice %39 {offsets = [0, 0], sizes = [128, 8], strides = [1, 1]} : vector<128x96xf32> to vector<128x8xf32>
    %41 = arith.truncf %40 : vector<128x8xf32> to vector<128x8xbf16>
    %42 = vector.shape_cast %41 : vector<128x8xbf16> to vector<8x16x8xbf16>
    %43 = vector.extract_strided_slice %39 {offsets = [0, 32], sizes = [128, 8], strides = [1, 1]} : vector<128x96xf32> to vector<128x8xf32>
    %44 = arith.truncf %43 : vector<128x8xf32> to vector<128x8xbf16>
    %45 = vector.shape_cast %44 : vector<128x8xbf16> to vector<8x16x8xbf16>
    %46 = vector.extract_strided_slice %39 {offsets = [0, 64], sizes = [128, 8], strides = [1, 1]} : vector<128x96xf32> to vector<128x8xf32>
    %47 = arith.truncf %46 : vector<128x8xf32> to vector<128x8xbf16>
    %48 = vector.shape_cast %47 : vector<128x8xbf16> to vector<8x16x8xbf16>
    "tpu.trace_start"() <{level = 10 : i32, message = "bqd,bkd->bqk"}> : () -> ()
    %cst_21 = arith.constant dense<0.000000e+00> : vector<8x16x16xf32>
    %49 = tpu.matmul %42, %45, %cst_21 {dimension_numbers = #tpu.dot_dimension_numbers<[2], [2], [1], [1], [0, 0, 0, 1, 1, 1], [0], [0]>} : vector<8x16x8xbf16>, vector<8x16x8xbf16>, vector<8x16x16xf32> -> vector<8x16x16xf32>
    "tpu.trace_stop"() : () -> ()
    %cst_22 = arith.constant dense<0xFF800000> : vector<8x16xf32>
    %50 = vector.multi_reduction <maximumf>, %49, %cst_22 [2] : vector<8x16x16xf32> to vector<8x16xf32>
    %51 = vector.shape_cast %50 : vector<8x16xf32> to vector<8x16x1xf32>
    %52 = vector.broadcast %51 : vector<8x16x1xf32> to vector<8x16x16xf32>
    %53 = arith.subf %49, %52 : vector<8x16x16xf32>
    %54 = math.exp %53 : vector<8x16x16xf32>
    %cst_23 = arith.constant dense<0.000000e+00> : vector<8x16xf32>
    %55 = vector.multi_reduction <add>, %54, %cst_23 [2] : vector<8x16x16xf32> to vector<8x16xf32>
    %56 = vector.shape_cast %55 : vector<8x16xf32> to vector<8x16x1xf32>
    %57 = vector.broadcast %56 : vector<8x16x1xf32> to vector<8x16x16xf32>
    %58 = arith.divf %54, %57 : vector<8x16x16xf32>
    %59 = arith.truncf %58 : vector<8x16x16xf32> to vector<8x16x16xbf16>
    "tpu.trace_start"() <{level = 10 : i32, message = "bqk,bkd->bqd"}> : () -> ()
    %cst_24 = arith.constant dense<0.000000e+00> : vector<8x16x8xf32>
    %60 = tpu.matmul %59, %48, %cst_24 {dimension_numbers = #tpu.dot_dimension_numbers<[2], [1], [1], [2], [0, 0, 0, 1, 1, 2], [0], [0]>} : vector<8x16x16xbf16>, vector<8x16x8xbf16>, vector<8x16x8xf32> -> vector<8x16x8xf32>
    "tpu.trace_stop"() : () -> ()
    %61 = vector.shape_cast %60 : vector<8x16x8xf32> to vector<128x8xf32>
    %c0_25 = arith.constant 0 : index
    %c0_26 = arith.constant 0 : index
    %62 = vector.load %arg22[%c0_25, %c0_26] : memref<128x32xf32, #tpu.memory_space<vmem>>, vector<128x8xf32>
    tpu.vector_store %arg22[%c0_25, %c0_26], %61 {strides = array<i32>} : memref<128x32xf32, #tpu.memory_space<vmem>>, vector<128x8xf32>,
    %63 = vector.extract_strided_slice %39 {offsets = [0, 8], sizes = [128, 8], strides = [1, 1]} : vector<128x96xf32> to vector<128x8xf32>
    %64 = arith.truncf %63 : vector<128x8xf32> to vector<128x8xbf16>
    %65 = vector.shape_cast %64 : vector<128x8xbf16> to vector<8x16x8xbf16>
    %66 = vector.extract_strided_slice %39 {offsets = [0, 40], sizes = [128, 8], strides = [1, 1]} : vector<128x96xf32> to vector<128x8xf32>
    %67 = arith.truncf %66 : vector<128x8xf32> to vector<128x8xbf16>
    %68 = vector.shape_cast %67 : vector<128x8xbf16> to vector<8x16x8xbf16>
    %69 = vector.extract_strided_slice %39 {offsets = [0, 72], sizes = [128, 8], strides = [1, 1]} : vector<128x96xf32> to vector<128x8xf32>
    %70 = arith.truncf %69 : vector<128x8xf32> to vector<128x8xbf16>
    %71 = vector.shape_cast %70 : vector<128x8xbf16> to vector<8x16x8xbf16>
    "tpu.trace_start"() <{level = 10 : i32, message = "bqd,bkd->bqk"}> : () -> ()
    %cst_27 = arith.constant dense<0.000000e+00> : vector<8x16x16xf32>
    %72 = tpu.matmul %65, %68, %cst_27 {dimension_numbers = #tpu.dot_dimension_numbers<[2], [2], [1], [1], [0, 0, 0, 1, 1, 1], [0], [0]>} : vector<8x16x8xbf16>, vector<8x16x8xbf16>, vector<8x16x16xf32> -> vector<8x16x16xf32>
    "tpu.trace_stop"() : () -> ()
    %cst_28 = arith.constant dense<0xFF800000> : vector<8x16xf32>
    %73 = vector.multi_reduction <maximumf>, %72, %cst_28 [2] : vector<8x16x16xf32> to vector<8x16xf32>
    %74 = vector.shape_cast %73 : vector<8x16xf32> to vector<8x16x1xf32>
    %75 = vector.broadcast %74 : vector<8x16x1xf32> to vector<8x16x16xf32>
    %76 = arith.subf %72, %75 : vector<8x16x16xf32>
    %77 = math.exp %76 : vector<8x16x16xf32>
    %cst_29 = arith.constant dense<0.000000e+00> : vector<8x16xf32>
    %78 = vector.multi_reduction <add>, %77, %cst_29 [2] : vector<8x16x16xf32> to vector<8x16xf32>
    %79 = vector.shape_cast %78 : vector<8x16xf32> to vector<8x16x1xf32>
    %80 = vector.broadcast %79 : vector<8x16x1xf32> to vector<8x16x16xf32>
    %81 = arith.divf %77, %80 : vector<8x16x16xf32>
    %82 = arith.truncf %81 : vector<8x16x16xf32> to vector<8x16x16xbf16>
    "tpu.trace_start"() <{level = 10 : i32, message = "bqk,bkd->bqd"}> : () -> ()
    %cst_30 = arith.constant dense<0.000000e+00> : vector<8x16x8xf32>
    %83 = tpu.matmul %82, %71, %cst_30 {dimension_numbers = #tpu.dot_dimension_numbers<[2], [1], [1], [2], [0, 0, 0, 1, 1, 2], [0], [0]>} : vector<8x16x16xbf16>, vector<8x16x8xbf16>, vector<8x16x8xf32> -> vector<8x16x8xf32>
    "tpu.trace_stop"() : () -> ()
    %84 = vector.shape_cast %83 : vector<8x16x8xf32> to vector<128x8xf32>
    %c0_31 = arith.constant 0 : index
    %c8 = arith.constant 8 : index
    %85 = vector.load %arg22[%c0_31, %c8] : memref<128x32xf32, #tpu.memory_space<vmem>>, vector<128x8xf32>
    tpu.vector_store %arg22[%c0_31, %c8], %84 {strides = array<i32>} : memref<128x32xf32, #tpu.memory_space<vmem>>, vector<128x8xf32>,
    %86 = vector.extract_strided_slice %39 {offsets = [0, 16], sizes = [128, 8], strides = [1, 1]} : vector<128x96xf32> to vector<128x8xf32>
    %87 = arith.truncf %86 : vector<128x8xf32> to vector<128x8xbf16>
    %88 = vector.shape_cast %87 : vector<128x8xbf16> to vector<8x16x8xbf16>
    %89 = vector.extract_strided_slice %39 {offsets = [0, 48], sizes = [128, 8], strides = [1, 1]} : vector<128x96xf32> to vector<128x8xf32>
    %90 = arith.truncf %89 : vector<128x8xf32> to vector<128x8xbf16>
    %91 = vector.shape_cast %90 : vector<128x8xbf16> to vector<8x16x8xbf16>
    %92 = vector.extract_strided_slice %39 {offsets = [0, 80], sizes = [128, 8], strides = [1, 1]} : vector<128x96xf32> to vector<128x8xf32>
    %93 = arith.truncf %92 : vector<128x8xf32> to vector<128x8xbf16>
    %94 = vector.shape_cast %93 : vector<128x8xbf16> to vector<8x16x8xbf16>
    "tpu.trace_start"() <{level = 10 : i32, message = "bqd,bkd->bqk"}> : () -> ()
    %cst_32 = arith.constant dense<0.000000e+00> : vector<8x16x16xf32>
    %95 = tpu.matmul %88, %91, %cst_32 {dimension_numbers = #tpu.dot_dimension_numbers<[2], [2], [1], [1], [0, 0, 0, 1, 1, 1], [0], [0]>} : vector<8x16x8xbf16>, vector<8x16x8xbf16>, vector<8x16x16xf32> -> vector<8x16x16xf32>
    "tpu.trace_stop"() : () -> ()
    %cst_33 = arith.constant dense<0xFF800000> : vector<8x16xf32>
    %96 = vector.multi_reduction <maximumf>, %95, %cst_33 [2] : vector<8x16x16xf32> to vector<8x16xf32>
    %97 = vector.shape_cast %96 : vector<8x16xf32> to vector<8x16x1xf32>
    %98 = vector.broadcast %97 : vector<8x16x1xf32> to vector<8x16x16xf32>
    %99 = arith.subf %95, %98 : vector<8x16x16xf32>
    %100 = math.exp %99 : vector<8x16x16xf32>
    %cst_34 = arith.constant dense<0.000000e+00> : vector<8x16xf32>
    %101 = vector.multi_reduction <add>, %100, %cst_34 [2] : vector<8x16x16xf32> to vector<8x16xf32>
    %102 = vector.shape_cast %101 : vector<8x16xf32> to vector<8x16x1xf32>
    %103 = vector.broadcast %102 : vector<8x16x1xf32> to vector<8x16x16xf32>
    %104 = arith.divf %100, %103 : vector<8x16x16xf32>
    %105 = arith.truncf %104 : vector<8x16x16xf32> to vector<8x16x16xbf16>
    "tpu.trace_start"() <{level = 10 : i32, message = "bqk,bkd->bqd"}> : () -> ()
    %cst_35 = arith.constant dense<0.000000e+00> : vector<8x16x8xf32>
    %106 = tpu.matmul %105, %94, %cst_35 {dimension_numbers = #tpu.dot_dimension_numbers<[2], [1], [1], [2], [0, 0, 0, 1, 1, 2], [0], [0]>} : vector<8x16x16xbf16>, vector<8x16x8xbf16>, vector<8x16x8xf32> -> vector<8x16x8xf32>
    "tpu.trace_stop"() : () -> ()
    %107 = vector.shape_cast %106 : vector<8x16x8xf32> to vector<128x8xf32>
    %c0_36 = arith.constant 0 : index
    %c16 = arith.constant 16 : index
    %108 = vector.load %arg22[%c0_36, %c16] : memref<128x32xf32, #tpu.memory_space<vmem>>, vector<128x8xf32>
    tpu.vector_store %arg22[%c0_36, %c16], %107 {strides = array<i32>} : memref<128x32xf32, #tpu.memory_space<vmem>>, vector<128x8xf32>,
    %109 = vector.extract_strided_slice %39 {offsets = [0, 24], sizes = [128, 8], strides = [1, 1]} : vector<128x96xf32> to vector<128x8xf32>
    %110 = arith.truncf %109 : vector<128x8xf32> to vector<128x8xbf16>
    %111 = vector.shape_cast %110 : vector<128x8xbf16> to vector<8x16x8xbf16>
    %112 = vector.extract_strided_slice %39 {offsets = [0, 56], sizes = [128, 8], strides = [1, 1]} : vector<128x96xf32> to vector<128x8xf32>
    %113 = arith.truncf %112 : vector<128x8xf32> to vector<128x8xbf16>
    %114 = vector.shape_cast %113 : vector<128x8xbf16> to vector<8x16x8xbf16>
    %115 = vector.extract_strided_slice %39 {offsets = [0, 88], sizes = [128, 8], strides = [1, 1]} : vector<128x96xf32> to vector<128x8xf32>
    %116 = arith.truncf %115 : vector<128x8xf32> to vector<128x8xbf16>
    %117 = vector.shape_cast %116 : vector<128x8xbf16> to vector<8x16x8xbf16>
    "tpu.trace_start"() <{level = 10 : i32, message = "bqd,bkd->bqk"}> : () -> ()
    %cst_37 = arith.constant dense<0.000000e+00> : vector<8x16x16xf32>
    %118 = tpu.matmul %111, %114, %cst_37 {dimension_numbers = #tpu.dot_dimension_numbers<[2], [2], [1], [1], [0, 0, 0, 1, 1, 1], [0], [0]>} : vector<8x16x8xbf16>, vector<8x16x8xbf16>, vector<8x16x16xf32> -> vector<8x16x16xf32>
    "tpu.trace_stop"() : () -> ()
    %cst_38 = arith.constant dense<0xFF800000> : vector<8x16xf32>
    %119 = vector.multi_reduction <maximumf>, %118, %cst_38 [2] : vector<8x16x16xf32> to vector<8x16xf32>
    %120 = vector.shape_cast %119 : vector<8x16xf32> to vector<8x16x1xf32>
    %121 = vector.broadcast %120 : vector<8x16x1xf32> to vector<8x16x16xf32>
    %122 = arith.subf %118, %121 : vector<8x16x16xf32>
    %123 = math.exp %122 : vector<8x16x16xf32>
    %cst_39 = arith.constant dense<0.000000e+00> : vector<8x16xf32>
    %124 = vector.multi_reduction <add>, %123, %cst_39 [2] : vector<8x16x16xf32> to vector<8x16xf32>
    %125 = vector.shape_cast %124 : vector<8x16xf32> to vector<8x16x1xf32>
    %126 = vector.broadcast %125 : vector<8x16x1xf32> to vector<8x16x16xf32>
    %127 = arith.divf %123, %126 : vector<8x16x16xf32>
    %128 = arith.truncf %127 : vector<8x16x16xf32> to vector<8x16x16xbf16>
    "tpu.trace_start"() <{level = 10 : i32, message = "bqk,bkd->bqd"}> : () -> ()
    %cst_40 = arith.constant dense<0.000000e+00> : vector<8x16x8xf32>
    %129 = tpu.matmul %128, %117, %cst_40 {dimension_numbers = #tpu.dot_dimension_numbers<[2], [1], [1], [2], [0, 0, 0, 1, 1, 2], [0], [0]>} : vector<8x16x16xbf16>, vector<8x16x8xbf16>, vector<8x16x8xf32> -> vector<8x16x8xf32>
    "tpu.trace_stop"() : () -> ()
    %130 = vector.shape_cast %129 : vector<8x16x8xf32> to vector<128x8xf32>
    %c0_41 = arith.constant 0 : index
    %c24 = arith.constant 24 : index
    %131 = vector.load %arg22[%c0_41, %c24] : memref<128x32xf32, #tpu.memory_space<vmem>>, vector<128x8xf32>
    tpu.vector_store %arg22[%c0_41, %c24], %130 {strides = array<i32>} : memref<128x32xf32, #tpu.memory_space<vmem>>, vector<128x8xf32>,
    %c0_42 = arith.constant 0 : index
    %c0_43 = arith.constant 0 : index
    %132 = vector.load %arg22[%c0_42, %c0_43] : memref<128x32xf32, #tpu.memory_space<vmem>>, vector<128x32xf32>
    %133 = arith.truncf %132 : vector<128x32xf32> to vector<128x32xbf16>
    %c0_44 = arith.constant 0 : index
    %c0_45 = arith.constant 0 : index
    %134 = vector.load %arg9[%c0_44, %c0_45] : memref<32x32xbf16, #tpu.memory_space<vmem>>, vector<32x32xbf16>
    %cst_46 = arith.constant dense<0.000000e+00> : vector<128x32xf32>
    %135 = tpu.matmul %133, %134, %cst_46 {dimension_numbers = #tpu.dot_dimension_numbers<[1], [0], [0], [1], [0, 0, 1, 1], [], []>} : vector<128x32xbf16>, vector<32x32xbf16>, vector<128x32xf32> -> vector<128x32xf32>
    %c0_47 = arith.constant 0 : index
    %c0_48 = arith.constant 0 : index
    %136 = vector.load %arg10[%c0_47, %c0_48] : memref<1x32xf32, #tpu.memory_space<vmem>>, vector<1x32xf32>
    %137 = vector.broadcast %136 : vector<1x32xf32> to vector<128x32xf32>
    %138 = arith.addf %135, %137 : vector<128x32xf32>
    %139 = arith.addf %11, %138 : vector<128x32xf32>
    %c0_49 = arith.constant 0 : index
    %c0_50 = arith.constant 0 : index
    %140 = vector.load %arg11[%c0_49, %c0_50] : memref<1x32xf32, #tpu.memory_space<vmem>>, vector<1x32xf32>
    %c0_51 = arith.constant 0 : index
    %c0_52 = arith.constant 0 : index
    %141 = vector.load %arg12[%c0_51, %c0_52] : memref<1x32xf32, #tpu.memory_space<vmem>>, vector<1x32xf32>
    %cst_53 = arith.constant dense<0.000000e+00> : vector<128xf32>
    %142 = vector.multi_reduction <add>, %139, %cst_53 [1] : vector<128x32xf32> to vector<128xf32>
    %143 = vector.shape_cast %142 : vector<128xf32> to vector<128x1xf32>
    %cst_54 = arith.constant 3.200000e+01 : f32
    %144 = vector.broadcast %cst_54 : f32 to vector<128x1xf32>
    %145 = arith.divf %143, %144 : vector<128x1xf32>
    %146 = vector.broadcast %145 : vector<128x1xf32> to vector<128x32xf32>
    %147 = arith.subf %139, %146 : vector<128x32xf32>
    %148 = arith.mulf %147, %147 : vector<128x32xf32>
    %cst_55 = arith.constant dense<0.000000e+00> : vector<128xf32>
    %149 = vector.multi_reduction <add>, %148, %cst_55 [1] : vector<128x32xf32> to vector<128xf32>
    %150 = vector.shape_cast %149 : vector<128xf32> to vector<128x1xf32>
    %cst_56 = arith.constant 3.200000e+01 : f32
    %151 = vector.broadcast %cst_56 : f32 to vector<128x1xf32>
    %152 = arith.divf %150, %151 : vector<128x1xf32>
    %cst_57 = arith.constant 9.99999974E-6 : f32
    %153 = vector.broadcast %cst_57 : f32 to vector<128x1xf32>
    %154 = arith.addf %152, %153 : vector<128x1xf32>
    %155 = math.rsqrt %154 : vector<128x1xf32>
    %156 = vector.broadcast %155 : vector<128x1xf32> to vector<128x32xf32>
    %157 = arith.mulf %147, %156 : vector<128x32xf32>
    %158 = vector.broadcast %140 : vector<1x32xf32> to vector<128x32xf32>
    %159 = arith.mulf %157, %158 : vector<128x32xf32>
    %160 = vector.broadcast %141 : vector<1x32xf32> to vector<128x32xf32>
    %161 = arith.addf %159, %160 : vector<128x32xf32>
    %162 = arith.truncf %161 : vector<128x32xf32> to vector<128x32xbf16>
    %c0_58 = arith.constant 0 : index
    %c0_59 = arith.constant 0 : index
    %163 = vector.load %arg13[%c0_58, %c0_59] : memref<32x64xbf16, #tpu.memory_space<vmem>>, vector<32x64xbf16>
    %cst_60 = arith.constant dense<0.000000e+00> : vector<128x64xf32>
    %164 = tpu.matmul %162, %163, %cst_60 {dimension_numbers = #tpu.dot_dimension_numbers<[1], [0], [0], [1], [0, 0, 1, 1], [], []>} : vector<128x32xbf16>, vector<32x64xbf16>, vector<128x64xf32> -> vector<128x64xf32>
    %c0_61 = arith.constant 0 : index
    %c0_62 = arith.constant 0 : index
    %165 = vector.load %arg14[%c0_61, %c0_62] : memref<1x64xf32, #tpu.memory_space<vmem>>, vector<1x64xf32>
    %166 = vector.broadcast %165 : vector<1x64xf32> to vector<128x64xf32>
    %167 = arith.addf %164, %166 : vector<128x64xf32>
    %cst_63 = arith.constant 1.702000e+00 : f32
    %168 = vector.broadcast %cst_63 : f32 to vector<128x64xf32>
    %169 = arith.mulf %168, %167 : vector<128x64xf32>
    %170 = arith.negf %169 : vector<128x64xf32>
    %171 = math.exp %170 : vector<128x64xf32>
    %cst_64 = arith.constant 1.000000e+00 : f32
    %172 = vector.broadcast %cst_64 : f32 to vector<128x64xf32>
    %173 = arith.addf %172, %171 : vector<128x64xf32>
    %174 = arith.divf %172, %173 : vector<128x64xf32>
    %175 = arith.mulf %167, %174 : vector<128x64xf32>
    %176 = arith.truncf %175 : vector<128x64xf32> to vector<128x64xbf16>
    %c0_65 = arith.constant 0 : index
    %c0_66 = arith.constant 0 : index
    %177 = vector.load %arg15[%c0_65, %c0_66] : memref<64x32xbf16, #tpu.memory_space<vmem>>, vector<64x32xbf16>
    %cst_67 = arith.constant dense<0.000000e+00> : vector<128x32xf32>
    %178 = tpu.matmul %176, %177, %cst_67 {dimension_numbers = #tpu.dot_dimension_numbers<[1], [0], [0], [1], [0, 0, 1, 1], [], []>} : vector<128x64xbf16>, vector<64x32xbf16>, vector<128x32xf32> -> vector<128x32xf32>
    %c0_68 = arith.constant 0 : index
    %c0_69 = arith.constant 0 : index
    %179 = vector.load %arg16[%c0_68, %c0_69] : memref<1x32xf32, #tpu.memory_space<vmem>>, vector<1x32xf32>
    %180 = vector.broadcast %179 : vector<1x32xf32> to vector<128x32xf32>
    %181 = arith.addf %178, %180 : vector<128x32xf32>
    %182 = arith.addf %139, %181 : vector<128x32xf32>
    %c0_70 = arith.constant 0 : index
    %c0_71 = arith.constant 0 : index
    %183 = vector.load %arg17[%c0_70, %c0_71] : memref<1x32xf32, #tpu.memory_space<vmem>>, vector<1x32xf32>
    %c0_72 = arith.constant 0 : index
    %c0_73 = arith.constant 0 : index
    %184 = vector.load %arg18[%c0_72, %c0_73] : memref<1x32xf32, #tpu.memory_space<vmem>>, vector<1x32xf32>
    %cst_74 = arith.constant dense<0.000000e+00> : vector<128xf32>
    %185 = vector.multi_reduction <add>, %182, %cst_74 [1] : vector<128x32xf32> to vector<128xf32>
    %186 = vector.shape_cast %185 : vector<128xf32> to vector<128x1xf32>
    %cst_75 = arith.constant 3.200000e+01 : f32
    %187 = vector.broadcast %cst_75 : f32 to vector<128x1xf32>
    %188 = arith.divf %186, %187 : vector<128x1xf32>
    %189 = vector.broadcast %188 : vector<128x1xf32> to vector<128x32xf32>
    %190 = arith.subf %182, %189 : vector<128x32xf32>
    %191 = arith.mulf %190, %190 : vector<128x32xf32>
    %cst_76 = arith.constant dense<0.000000e+00> : vector<128xf32>
    %192 = vector.multi_reduction <add>, %191, %cst_76 [1] : vector<128x32xf32> to vector<128xf32>
    %193 = vector.shape_cast %192 : vector<128xf32> to vector<128x1xf32>
    %cst_77 = arith.constant 3.200000e+01 : f32
    %194 = vector.broadcast %cst_77 : f32 to vector<128x1xf32>
    %195 = arith.divf %193, %194 : vector<128x1xf32>
    %cst_78 = arith.constant 9.99999974E-6 : f32
    %196 = vector.broadcast %cst_78 : f32 to vector<128x1xf32>
    %197 = arith.addf %195, %196 : vector<128x1xf32>
    %198 = math.rsqrt %197 : vector<128x1xf32>
    %199 = vector.broadcast %198 : vector<128x1xf32> to vector<128x32xf32>
    %200 = arith.mulf %190, %199 : vector<128x32xf32>
    %201 = vector.broadcast %183 : vector<1x32xf32> to vector<128x32xf32>
    %202 = arith.mulf %200, %201 : vector<128x32xf32>
    %203 = vector.broadcast %184 : vector<1x32xf32> to vector<128x32xf32>
    %204 = arith.addf %202, %203 : vector<128x32xf32>
    %205 = vector.shape_cast %204 : vector<128x32xf32> to vector<8x16x32xf32>
    %cst_79 = arith.constant dense<0.000000e+00> : vector<8x32xf32>
    %206 = vector.multi_reduction <add>, %205, %cst_79 [1] : vector<8x16x32xf32> to vector<8x32xf32>
    %cst_80 = arith.constant 1.600000e+01 : f32
    %207 = vector.broadcast %cst_80 : f32 to vector<8x32xf32>
    %208 = arith.divf %206, %207 : vector<8x32xf32>
    %209 = arith.truncf %208 : vector<8x32xf32> to vector<8x32xbf16>
    %c0_81 = arith.constant 0 : index
    %c0_82 = arith.constant 0 : index
    %210 = vector.load %arg19[%c0_81, %c0_82] : memref<32x32xbf16, #tpu.memory_space<vmem>>, vector<32x32xbf16>
    %cst_83 = arith.constant dense<0.000000e+00> : vector<8x32xf32>
    %211 = tpu.matmul %209, %210, %cst_83 {dimension_numbers = #tpu.dot_dimension_numbers<[1], [0], [0], [1], [0, 0, 1, 1], [], []>} : vector<8x32xbf16>, vector<32x32xbf16>, vector<8x32xf32> -> vector<8x32xf32>
    %c0_84 = arith.constant 0 : index
    %c0_85 = arith.constant 0 : index
    %212 = vector.load %arg20[%c0_84, %c0_85] : memref<1x32xf32, #tpu.memory_space<vmem>>, vector<1x32xf32>
    %213 = vector.broadcast %212 : vector<1x32xf32> to vector<8x32xf32>
    %214 = arith.addf %211, %213 : vector<8x32xf32>
    %c0_86 = arith.constant 0 : index
    %c0_87 = arith.constant 0 : index
    %215 = vector.load %arg21[%c0_86, %c0_87] : memref<8x32xf32, #tpu.memory_space<vmem>>, vector<8x32xf32>
    tpu.vector_store %arg21[%c0_86, %c0_87], %214 {strides = array<i32>} : memref<8x32xf32, #tpu.memory_space<vmem>>, vector<8x32xf32>,
    return
  }
  func.func @transform_0(%arg0: i32) -> (i32, i32) {
    %c0_i32 = arith.constant 0 : i32
    %c0_i32_0 = arith.constant 0 : i32
    return %arg0, %c0_i32 : i32, i32
  }
  func.func @transform_1(%arg0: i32) -> (i32, i32) {
    %c0_i32 = arith.constant 0 : i32
    %c0_i32_0 = arith.constant 0 : i32
    %c0_i32_1 = arith.constant 0 : i32
    return %c0_i32, %c0_i32_0 : i32, i32
  }
  func.func @transform_2(%arg0: i32) -> (i32, i32) {
    %c0_i32 = arith.constant 0 : i32
    %c0_i32_0 = arith.constant 0 : i32
    %c0_i32_1 = arith.constant 0 : i32
    return %c0_i32, %c0_i32_0 : i32, i32
  }
  func.func @transform_3(%arg0: i32) -> (i32, i32) {
    %c0_i32 = arith.constant 0 : i32
    %c0_i32_0 = arith.constant 0 : i32
    %c0_i32_1 = arith.constant 0 : i32
    return %c0_i32, %c0_i32_0 : i32, i32
  }
  func.func @transform_4(%arg0: i32) -> (i32, i32) {
    %c0_i32 = arith.constant 0 : i32
    %c0_i32_0 = arith.constant 0 : i32
    %c0_i32_1 = arith.constant 0 : i32
    return %c0_i32, %c0_i32_0 : i32, i32
  }
  func.func @transform_5(%arg0: i32) -> (i32, i32) {
    %c0_i32 = arith.constant 0 : i32
    %c0_i32_0 = arith.constant 0 : i32
    %c0_i32_1 = arith.constant 0 : i32
    return %c0_i32, %c0_i32_0 : i32, i32
  }
  func.func @transform_6(%arg0: i32) -> (i32, i32) {
    %c0_i32 = arith.constant 0 : i32
    %c0_i32_0 = arith.constant 0 : i32
    %c0_i32_1 = arith.constant 0 : i32
    return %c0_i32, %c0_i32_0 : i32, i32
  }
  func.func @transform_7(%arg0: i32) -> (i32, i32) {
    %c0_i32 = arith.constant 0 : i32
    %c0_i32_0 = arith.constant 0 : i32
    %c0_i32_1 = arith.constant 0 : i32
    return %c0_i32, %c0_i32_0 : i32, i32
  }
  func.func @transform_8(%arg0: i32) -> (i32, i32) {
    %c0_i32 = arith.constant 0 : i32
    %c0_i32_0 = arith.constant 0 : i32
    %c0_i32_1 = arith.constant 0 : i32
    return %c0_i32, %c0_i32_0 : i32, i32
  }
  func.func @transform_9(%arg0: i32) -> (i32, i32) {
    %c0_i32 = arith.constant 0 : i32
    %c0_i32_0 = arith.constant 0 : i32
    %c0_i32_1 = arith.constant 0 : i32
    return %c0_i32, %c0_i32_0 : i32, i32
  }
  func.func @transform_10(%arg0: i32) -> (i32, i32) {
    %c0_i32 = arith.constant 0 : i32
    %c0_i32_0 = arith.constant 0 : i32
    %c0_i32_1 = arith.constant 0 : i32
    return %c0_i32, %c0_i32_0 : i32, i32
  }
  func.func @transform_11(%arg0: i32) -> (i32, i32) {
    %c0_i32 = arith.constant 0 : i32
    %c0_i32_0 = arith.constant 0 : i32
    %c0_i32_1 = arith.constant 0 : i32
    return %c0_i32, %c0_i32_0 : i32, i32
  }
  func.func @transform_12(%arg0: i32) -> (i32, i32) {
    %c0_i32 = arith.constant 0 : i32
    %c0_i32_0 = arith.constant 0 : i32
    %c0_i32_1 = arith.constant 0 : i32
    return %c0_i32, %c0_i32_0 : i32, i32
  }
  func.func @transform_13(%arg0: i32) -> (i32, i32) {
    %c0_i32 = arith.constant 0 : i32
    %c0_i32_0 = arith.constant 0 : i32
    %c0_i32_1 = arith.constant 0 : i32
    return %c0_i32, %c0_i32_0 : i32, i32
  }
  func.func @transform_14(%arg0: i32) -> (i32, i32) {
    %c0_i32 = arith.constant 0 : i32
    %c0_i32_0 = arith.constant 0 : i32
    %c0_i32_1 = arith.constant 0 : i32
    return %c0_i32, %c0_i32_0 : i32, i32
  }
  func.func @transform_15(%arg0: i32) -> (i32, i32) {
    %c0_i32 = arith.constant 0 : i32
    %c0_i32_0 = arith.constant 0 : i32
    %c0_i32_1 = arith.constant 0 : i32
    return %c0_i32, %c0_i32_0 : i32, i32
  }
  func.func @transform_16(%arg0: i32) -> (i32, i32) {
    %c0_i32 = arith.constant 0 : i32
    %c0_i32_0 = arith.constant 0 : i32
    %c0_i32_1 = arith.constant 0 : i32
    return %c0_i32, %c0_i32_0 : i32, i32
  }
  func.func @transform_17(%arg0: i32) -> (i32, i32) {
    %c0_i32 = arith.constant 0 : i32
    %c0_i32_0 = arith.constant 0 : i32
    %c0_i32_1 = arith.constant 0 : i32
    return %c0_i32, %c0_i32_0 : i32, i32
  }
  func.func @transform_18(%arg0: i32) -> (i32, i32) {
    %c0_i32 = arith.constant 0 : i32
    %c0_i32_0 = arith.constant 0 : i32
    %c0_i32_1 = arith.constant 0 : i32
    return %c0_i32, %c0_i32_0 : i32, i32
  }
  func.func @transform_19(%arg0: i32) -> (i32, i32) {
    %c0_i32 = arith.constant 0 : i32
    %c0_i32_0 = arith.constant 0 : i32
    %c0_i32_1 = arith.constant 0 : i32
    return %c0_i32, %c0_i32_0 : i32, i32
  }
  func.func @transform_20(%arg0: i32) -> (i32, i32) {
    %c0_i32 = arith.constant 0 : i32
    %c0_i32_0 = arith.constant 0 : i32
    return %arg0, %c0_i32 : i32, i32
  }
}

</mosaic_0001>

<llo_original>
// kernel: model_wrapper_forward.1
$region0: #{model_wrapper_forward.1}
  #allocation0 [shape = 'u32[]', space=smem, size = 0x4, offset = 0x4, fixed_abs, tag = 'smem constant byte address 0x4 - core index']
  #allocation1 [shape = 'u32[144,128]{1,0:T(1,128)}', space=vmem, size = 0x12000, scoped, tag = 'internal scratch']
  #allocation2 [shape = 'f32[128,32]{1,0:T(8,128)}', space=vmem, size = 0x10000, scoped, tag = 'scratch operand']
  %s0 = inlined_call_operand.vmem [shape: bf16[256,48], index: 0, kind: input, shape index: {}]
  %s1 = inlined_call_operand.vmem [shape: f32[16,32], index: 1, kind: input, shape index: {}]
  %s2 = inlined_call_operand.vmem [shape: bf16[48,32], index: 2, kind: input, shape index: {}]
  %s3 = inlined_call_operand.vmem [shape: f32[1,32], index: 3, kind: input, shape index: {}]
  %s4 = inlined_call_operand.vmem [shape: f32[1,32], index: 4, kind: input, shape index: {}]
  %s5 = inlined_call_operand.vmem [shape: f32[1,32], index: 5, kind: input, shape index: {}]
  %s6 = inlined_call_operand.vmem [shape: bf16[32,96], index: 6, kind: input, shape index: {}]
  %s7 = inlined_call_operand.vmem [shape: f32[1,96], index: 7, kind: input, shape index: {}]
  %s8 = inlined_call_operand.vmem [shape: bf16[32,32], index: 8, kind: input, shape index: {}]
  %s9 = inlined_call_operand.vmem [shape: f32[1,32], index: 9, kind: input, shape index: {}]
  %s10 = inlined_call_operand.vmem [shape: f32[1,32], index: 10, kind: input, shape index: {}]
  %s11 = inlined_call_operand.vmem [shape: f32[1,32], index: 11, kind: input, shape index: {}]
  %s12 = inlined_call_operand.vmem [shape: bf16[32,64], index: 12, kind: input, shape index: {}]
  %s13 = inlined_call_operand.vmem [shape: f32[1,64], index: 13, kind: input, shape index: {}]
  %s14 = inlined_call_operand.vmem [shape: bf16[64,32], index: 14, kind: input, shape index: {}]
  %s15 = inlined_call_operand.vmem [shape: f32[1,32], index: 15, kind: input, shape index: {}]
  %s16 = inlined_call_operand.vmem [shape: f32[1,32], index: 16, kind: input, shape index: {}]
  %s17 = inlined_call_operand.vmem [shape: f32[1,32], index: 17, kind: input, shape index: {}]
  %s18 = inlined_call_operand.vmem [shape: bf16[32,32], index: 18, kind: input, shape index: {}]
  %s19 = inlined_call_operand.vmem [shape: f32[1,32], index: 19, kind: input, shape index: {}]
  %s20 = inlined_call_operand.hbm [shape: f32[16,32], index: 20, kind: output, shape index: {}]
  %s21 = sld [smem:[#allocation0]]
  $region113: #{model_wrapper_forward.1} parent=0
    _
  %s23 = ssub.s32 1, %s21
  %s24 = scalar_select 0, %s23, %s21
  $region1: #{model_wrapper_forward.1} parent=0
    #allocation3 [shape = 'u8[8192]{0}', space=vmem, size = 0x2000, scoped, tag = 'output window, operand 0']
    #allocation4 [shape = 's32[2]{0}', space=sflag, size = 0x8, scoped, tag = 'scoped memory for model_wrapper_forward.1']
    %25 = vsyncpa [#allocation4], 0
    %s26 = scalar_lea.sflag [#allocation4], 1
    %27 = vsyncpa %s26, 0
    loop: start=0, step=1, limit=4
    $region2: #{model_wrapper_forward.1} parent=1 // loop_pre_header
      _
    $region3: #{model_wrapper_forward.1} parent=1 // loop_header
      %s29 = sphi 0, %s33
      %p30 = scmp.ge.s32.totalorder %s29, 4
      %s39 = sphi 0, %s41
      %s42 = sphi 0, %s39
      %s43 = sphi 0, %s42
      %s59 = sphi 0, %s43
      %s63 = sphi 0, %s63
      %s65 = sphi 0, %s63
      %s66 = sphi 0, %s65
      %s80 = sphi 0, %s66
      %s84 = sphi 0, %s84
      %s86 = sphi 0, %s84
      %s87 = sphi 0, %s86
      %s101 = sphi 0, %s87
      %s105 = sphi 0, %s105
      %s107 = sphi 0, %s105
      %s108 = sphi 0, %s107
      %s122 = sphi 0, %s108
      %s126 = sphi 0, %s126
      %s128 = sphi 0, %s126
      %s129 = sphi 0, %s128
      %s143 = sphi 0, %s129
      %s147 = sphi 0, %s147
      %s149 = sphi 0, %s147
      %s150 = sphi 0, %s149
      %s164 = sphi 0, %s150
      %s168 = sphi 0, %s168
      %s170 = sphi 0, %s168
      %s171 = sphi 0, %s170
      %s185 = sphi 0, %s171
      %s189 = sphi 0, %s189
      %s191 = sphi 0, %s189
      %s192 = sphi 0, %s191
      %s206 = sphi 0, %s192
      %s210 = sphi 0, %s210
      %s212 = sphi 0, %s210
      %s213 = sphi 0, %s212
      %s227 = sphi 0, %s213
      %s231 = sphi 0, %s231
      %s233 = sphi 0, %s231
      %s234 = sphi 0, %s233
      %s248 = sphi 0, %s234
      %s252 = sphi 0, %s252
      %s254 = sphi 0, %s252
      %s255 = sphi 0, %s254
      %s269 = sphi 0, %s255
      %s273 = sphi 0, %s273
      %s275 = sphi 0, %s273
      %s276 = sphi 0, %s275
      %s290 = sphi 0, %s276
      %s294 = sphi 0, %s294
      %s296 = sphi 0, %s294
      %s297 = sphi 0, %s296
      %s311 = sphi 0, %s297
      %s315 = sphi 0, %s315
      %s317 = sphi 0, %s315
      %s318 = sphi 0, %s317
      %s332 = sphi 0, %s318
      %s336 = sphi 0, %s336
      %s338 = sphi 0, %s336
      %s339 = sphi 0, %s338
      %s353 = sphi 0, %s339
      %s357 = sphi 0, %s357
      %s359 = sphi 0, %s357
      %s360 = sphi 0, %s359
      %s374 = sphi 0, %s360
      %s378 = sphi 0, %s378
      %s380 = sphi 0, %s378
      %s381 = sphi 0, %s380
      %s395 = sphi 0, %s381
      %s399 = sphi 0, %s399
      %s401 = sphi 0, %s399
      %s402 = sphi 0, %s401
      %s416 = sphi 0, %s402
      %s420 = sphi 0, %s420
      %s422 = sphi 0, %s420
      %s423 = sphi 0, %s422
      %s437 = sphi 0, %s423
      %s441 = sphi 0, %s441
      %s443 = sphi 0, %s441
      %s444 = sphi 0, %s443
      %s458 = sphi 0, %s444
      %s464 = sphi 0, %s466
      %s467 = sphi 0, %s464
      %s468 = sphi 0, %s467
      %s484 = sphi 0, %s468
    $region4: #{model_wrapper_forward.1} parent=1 // loop_header_branch
      %32 = sbr.rel (%p30) target = $region8
    $region5: #{model_wrapper_forward.1} parent=1 // loop_body
      %s34 = ssub.s32 %s29, 1
      %s35 = ssub.s32 %s29, 2
      %s36 = sadd.s32 %s29, 1
      %s37 = ssub.s32 %s29, %s36
      %p38 = scmp.eq.s32.totalorder %s37, 0
      %s40 = sadd.s32 %s39, 1
      %s41 = scalar_select %p38, %s39, %s40
      %p44 = pneg %p38
      %p45 = scmp.eq.s32.totalorder %s29, 1
      %p46 = por %p44, %p45
      %p47 = scmp.ne.s32.totalorder %s39, %s42
      %p48 = scmp.eq.s32.totalorder %s29, 0
      %p49 = por %p47, %p48
      %p50 = scmp.ne.s32.totalorder %s39, %s42
      %p51 = scmp.eq.s32.totalorder %s34, 1
      %p52 = por %p50, %p51
      %p53 = scmp.ne.s32.totalorder %s42, %s43
      %p54 = scmp.eq.s32.totalorder %s34, 0
      %p55 = por %p53, %p54
      %p56 = scmp.ne.s32.totalorder %s42, %s43
      %p57 = scmp.eq.s32.totalorder %s35, 1
      %p58 = por %p56, %p57
      %p60 = scmp.ne.s32.totalorder %s43, %s59
      %p61 = scmp.eq.s32.totalorder %s35, 0
      %p62 = por %p60, %p61
      %s64 = sadd.s32 %s63, 1
      %p67 = scmp.eq.s32.totalorder %s29, 1
      %p68 = scmp.ne.s32.totalorder %s63, %s65
      %p69 = scmp.eq.s32.totalorder %s29, 0
      %p70 = por %p68, %p69
      %p71 = scmp.ne.s32.totalorder %s63, %s65
      %p72 = scmp.eq.s32.totalorder %s34, 1
      %p73 = por %p71, %p72
      %p74 = scmp.ne.s32.totalorder %s65, %s66
      %p75 = scmp.eq.s32.totalorder %s34, 0
      %p76 = por %p74, %p75
      %p77 = scmp.ne.s32.totalorder %s65, %s66
      %p78 = scmp.eq.s32.totalorder %s35, 1
      %p79 = por %p77, %p78
      %p81 = scmp.ne.s32.totalorder %s66, %s80
      %p82 = scmp.eq.s32.totalorder %s35, 0
      %p83 = por %p81, %p82
      %s85 = sadd.s32 %s84, 1
      %p88 = scmp.eq.s32.totalorder %s29, 1
      %p89 = scmp.ne.s32.totalorder %s84, %s86
      %p90 = scmp.eq.s32.totalorder %s29, 0
      %p91 = por %p89, %p90
      %p92 = scmp.ne.s32.totalorder %s84, %s86
      %p93 = scmp.eq.s32.totalorder %s34, 1
      %p94 = por %p92, %p93
      %p95 = scmp.ne.s32.totalorder %s86, %s87
      %p96 = scmp.eq.s32.totalorder %s34, 0
      %p97 = por %p95, %p96
      %p98 = scmp.ne.s32.totalorder %s86, %s87
      %p99 = scmp.eq.s32.totalorder %s35, 1
      %p100 = por %p98, %p99
      %p102 = scmp.ne.s32.totalorder %s87, %s101
      %p103 = scmp.eq.s32.totalorder %s35, 0
      %p104 = por %p102, %p103
      %s106 = sadd.s32 %s105, 1
      %p109 = scmp.eq.s32.totalorder %s29, 1
      %p110 = scmp.ne.s32.totalorder %s105, %s107
      %p111 = scmp.eq.s32.totalorder %s29, 0
      %p112 = por %p110, %p111
      %p113 = scmp.ne.s32.totalorder %s105, %s107
      %p114 = scmp.eq.s32.totalorder %s34, 1
      %p115 = por %p113, %p114
      %p116 = scmp.ne.s32.totalorder %s107, %s108
      %p117 = scmp.eq.s32.totalorder %s34, 0
      %p118 = por %p116, %p117
      %p119 = scmp.ne.s32.totalorder %s107, %s108
      %p120 = scmp.eq.s32.totalorder %s35, 1
      %p121 = por %p119, %p120
      %p123 = scmp.ne.s32.totalorder %s108, %s122
      %p124 = scmp.eq.s32.totalorder %s35, 0
      %p125 = por %p123, %p124
      %s127 = sadd.s32 %s126, 1
      %p130 = scmp.eq.s32.totalorder %s29, 1
      %p131 = scmp.ne.s32.totalorder %s126, %s128
      %p132 = scmp.eq.s32.totalorder %s29, 0
      %p133 = por %p131, %p132
      %p134 = scmp.ne.s32.totalorder %s126, %s128
      %p135 = scmp.eq.s32.totalorder %s34, 1
      %p136 = por %p134, %p135
      %p137 = scmp.ne.s32.totalorder %s128, %s129
      %p138 = scmp.eq.s32.totalorder %s34, 0
      %p139 = por %p137, %p138
      %p140 = scmp.ne.s32.totalorder %s128, %s129
      %p141 = scmp.eq.s32.totalorder %s35, 1
      %p142 = por %p140, %p141
      %p144 = scmp.ne.s32.totalorder %s129, %s143
      %p145 = scmp.eq.s32.totalorder %s35, 0
      %p146 = por %p144, %p145
      %s148 = sadd.s32 %s147, 1
      %p151 = scmp.eq.s32.totalorder %s29, 1
      %p152 = scmp.ne.s32.totalorder %s147, %s149
      %p153 = scmp.eq.s32.totalorder %s29, 0
      %p154 = por %p152, %p153
      %p155 = scmp.ne.s32.totalorder %s147, %s149
      %p156 = scmp.eq.s32.totalorder %s34, 1
      %p157 = por %p155, %p156
      %p158 = scmp.ne.s32.totalorder %s149, %s150
      %p159 = scmp.eq.s32.totalorder %s34, 0
      %p160 = por %p158, %p159
      %p161 = scmp.ne.s32.totalorder %s149, %s150
      %p162 = scmp.eq.s32.totalorder %s35, 1
      %p163 = por %p161, %p162
      %p165 = scmp.ne.s32.totalorder %s150, %s164
      %p166 = scmp.eq.s32.totalorder %s35, 0
      %p167 = por %p165, %p166
      %s169 = sadd.s32 %s168, 1
      %p172 = scmp.eq.s32.totalorder %s29, 1
      %p173 = scmp.ne.s32.totalorder %s168, %s170
      %p174 = scmp.eq.s32.totalorder %s29, 0
      %p175 = por %p173, %p174
      %p176 = scmp.ne.s32.totalorder %s168, %s170
      %p177 = scmp.eq.s32.totalorder %s34, 1
      %p178 = por %p176, %p177
      %p179 = scmp.ne.s32.totalorder %s170, %s171
      %p180 = scmp.eq.s32.totalorder %s34, 0
      %p181 = por %p179, %p180
      %p182 = scmp.ne.s32.totalorder %s170, %s171
      %p183 = scmp.eq.s32.totalorder %s35, 1
      %p184 = por %p182, %p183
      %p186 = scmp.ne.s32.totalorder %s171, %s185
      %p187 = scmp.eq.s32.totalorder %s35, 0
      %p188 = por %p186, %p187
      %s190 = sadd.s32 %s189, 1
      %p193 = scmp.eq.s32.totalorder %s29, 1
      %p194 = scmp.ne.s32.totalorder %s189, %s191
      %p195 = scmp.eq.s32.totalorder %s29, 0
      %p196 = por %p194, %p195
      %p197 = scmp.ne.s32.totalorder %s189, %s191
      %p198 = scmp.eq.s32.totalorder %s34, 1
      %p199 = por %p197, %p198
      %p200 = scmp.ne.s32.totalorder %s191, %s192
      %p201 = scmp.eq.s32.totalorder %s34, 0
      %p202 = por %p200, %p201
      %p203 = scmp.ne.s32.totalorder %s191, %s192
      %p204 = scmp.eq.s32.totalorder %s35, 1
      %p205 = por %p203, %p204
      %p207 = scmp.ne.s32.totalorder %s192, %s206
      %p208 = scmp.eq.s32.totalorder %s35, 0
      %p209 = por %p207, %p208
      %s211 = sadd.s32 %s210, 1
      %p214 = scmp.eq.s32.totalorder %s29, 1
      %p215 = scmp.ne.s32.totalorder %s210, %s212
      %p216 = scmp.eq.s32.totalorder %s29, 0
      %p217 = por %p215, %p216
      %p218 = scmp.ne.s32.totalorder %s210, %s212
      %p219 = scmp.eq.s32.totalorder %s34, 1
      %p220 = por %p218, %p219
      %p221 = scmp.ne.s32.totalorder %s212, %s213
      %p222 = scmp.eq.s32.totalorder %s34, 0
      %p223 = por %p221, %p222
      %p224 = scmp.ne.s32.totalorder %s212, %s213
      %p225 = scmp.eq.s32.totalorder %s35, 1
      %p226 = por %p224, %p225
      %p228 = scmp.ne.s32.totalorder %s213, %s227
      %p229 = scmp.eq.s32.totalorder %s35, 0
      %p230 = por %p228, %p229
      %s232 = sadd.s32 %s231, 1
      %p235 = scmp.eq.s32.totalorder %s29, 1
      %p236 = scmp.ne.s32.totalorder %s231, %s233
      %p237 = scmp.eq.s32.totalorder %s29, 0
      %p238 = por %p236, %p237
      %p239 = scmp.ne.s32.totalorder %s231, %s233
      %p240 = scmp.eq.s32.totalorder %s34, 1
      %p241 = por %p239, %p240
      %p242 = scmp.ne.s32.totalorder %s233, %s234
      %p243 = scmp.eq.s32.totalorder %s34, 0
      %p244 = por %p242, %p243
      %p245 = scmp.ne.s32.totalorder %s233, %s234
      %p246 = scmp.eq.s32.totalorder %s35, 1
      %p247 = por %p245, %p246
      %p249 = scmp.ne.s32.totalorder %s234, %s248
      %p250 = scmp.eq.s32.totalorder %s35, 0
      %p251 = por %p249, %p250
      %s253 = sadd.s32 %s252, 1
      %p256 = scmp.eq.s32.totalorder %s29, 1
      %p257 = scmp.ne.s32.totalorder %s252, %s254
      %p258 = scmp.eq.s32.totalorder %s29, 0
      %p259 = por %p257, %p258
      %p260 = scmp.ne.s32.totalorder %s252, %s254
      %p261 = scmp.eq.s32.totalorder %s34, 1
      %p262 = por %p260, %p261
      %p263 = scmp.ne.s32.totalorder %s254, %s255
      %p264 = scmp.eq.s32.totalorder %s34, 0
      %p265 = por %p263, %p264
      %p266 = scmp.ne.s32.totalorder %s254, %s255
      %p267 = scmp.eq.s32.totalorder %s35, 1
      %p268 = por %p266, %p267
      %p270 = scmp.ne.s32.totalorder %s255, %s269
      %p271 = scmp.eq.s32.totalorder %s35, 0
      %p272 = por %p270, %p271
      %s274 = sadd.s32 %s273, 1
      %p277 = scmp.eq.s32.totalorder %s29, 1
      %p278 = scmp.ne.s32.totalorder %s273, %s275
      %p279 = scmp.eq.s32.totalorder %s29, 0
      %p280 = por %p278, %p279
      %p281 = scmp.ne.s32.totalorder %s273, %s275
      %p282 = scmp.eq.s32.totalorder %s34, 1
      %p283 = por %p281, %p282
      %p284 = scmp.ne.s32.totalorder %s275, %s276
      %p285 = scmp.eq.s32.totalorder %s34, 0
      %p286 = por %p284, %p285
      %p287 = scmp.ne.s32.totalorder %s275, %s276
      %p288 = scmp.eq.s32.totalorder %s35, 1
      %p289 = por %p287, %p288
      %p291 = scmp.ne.s32.totalorder %s276, %s290
      %p292 = scmp.eq.s32.totalorder %s35, 0
      %p293 = por %p291, %p292
      %s295 = sadd.s32 %s294, 1
      %p298 = scmp.eq.s32.totalorder %s29, 1
      %p299 = scmp.ne.s32.totalorder %s294, %s296
      %p300 = scmp.eq.s32.totalorder %s29, 0
      %p301 = por %p299, %p300
      %p302 = scmp.ne.s32.totalorder %s294, %s296
      %p303 = scmp.eq.s32.totalorder %s34, 1
      %p304 = por %p302, %p303
      %p305 = scmp.ne.s32.totalorder %s296, %s297
      %p306 = scmp.eq.s32.totalorder %s34, 0
      %p307 = por %p305, %p306
      %p308 = scmp.ne.s32.totalorder %s296, %s297
      %p309 = scmp.eq.s32.totalorder %s35, 1
      %p310 = por %p308, %p309
      %p312 = scmp.ne.s32.totalorder %s297, %s311
      %p313 = scmp.eq.s32.totalorder %s35, 0
      %p314 = por %p312, %p313
      %s316 = sadd.s32 %s315, 1
      %p319 = scmp.eq.s32.totalorder %s29, 1
      %p320 = scmp.ne.s32.totalorder %s315, %s317
      %p321 = scmp.eq.s32.totalorder %s29, 0
      %p322 = por %p320, %p321
      %p323 = scmp.ne.s32.totalorder %s315, %s317
      %p324 = scmp.eq.s32.totalorder %s34, 1
      %p325 = por %p323, %p324
      %p326 = scmp.ne.s32.totalorder %s317, %s318
      %p327 = scmp.eq.s32.totalorder %s34, 0
      %p328 = por %p326, %p327
      %p329 = scmp.ne.s32.totalorder %s317, %s318
      %p330 = scmp.eq.s32.totalorder %s35, 1
      %p331 = por %p329, %p330
      %p333 = scmp.ne.s32.totalorder %s318, %s332
      %p334 = scmp.eq.s32.totalorder %s35, 0
      %p335 = por %p333, %p334
      %s337 = sadd.s32 %s336, 1
      %p340 = scmp.eq.s32.totalorder %s29, 1
      %p341 = scmp.ne.s32.totalorder %s336, %s338
      %p342 = scmp.eq.s32.totalorder %s29, 0
      %p343 = por %p341, %p342
      %p344 = scmp.ne.s32.totalorder %s336, %s338
      %p345 = scmp.eq.s32.totalorder %s34, 1
      %p346 = por %p344, %p345
      %p347 = scmp.ne.s32.totalorder %s338, %s339
      %p348 = scmp.eq.s32.totalorder %s34, 0
      %p349 = por %p347, %p348
      %p350 = scmp.ne.s32.totalorder %s338, %s339
      %p351 = scmp.eq.s32.totalorder %s35, 1
      %p352 = por %p350, %p351
      %p354 = scmp.ne.s32.totalorder %s339, %s353
      %p355 = scmp.eq.s32.totalorder %s35, 0
      %p356 = por %p354, %p355
      %s358 = sadd.s32 %s357, 1
      %p361 = scmp.eq.s32.totalorder %s29, 1
      %p362 = scmp.ne.s32.totalorder %s357, %s359
      %p363 = scmp.eq.s32.totalorder %s29, 0
      %p364 = por %p362, %p363
      %p365 = scmp.ne.s32.totalorder %s357, %s359
      %p366 = scmp.eq.s32.totalorder %s34, 1
      %p367 = por %p365, %p366
      %p368 = scmp.ne.s32.totalorder %s359, %s360
      %p369 = scmp.eq.s32.totalorder %s34, 0
      %p370 = por %p368, %p369
      %p371 = scmp.ne.s32.totalorder %s359, %s360
      %p372 = scmp.eq.s32.totalorder %s35, 1
      %p373 = por %p371, %p372
      %p375 = scmp.ne.s32.totalorder %s360, %s374
      %p376 = scmp.eq.s32.totalorder %s35, 0
      %p377 = por %p375, %p376
      %s379 = sadd.s32 %s378, 1
      %p382 = scmp.eq.s32.totalorder %s29, 1
      %p383 = scmp.ne.s32.totalorder %s378, %s380
      %p384 = scmp.eq.s32.totalorder %s29, 0
      %p385 = por %p383, %p384
      %p386 = scmp.ne.s32.totalorder %s378, %s380
      %p387 = scmp.eq.s32.totalorder %s34, 1
      %p388 = por %p386, %p387
      %p389 = scmp.ne.s32.totalorder %s380, %s381
      %p390 = scmp.eq.s32.totalorder %s34, 0
      %p391 = por %p389, %p390
      %p392 = scmp.ne.s32.totalorder %s380, %s381
      %p393 = scmp.eq.s32.totalorder %s35, 1
      %p394 = por %p392, %p393
      %p396 = scmp.ne.s32.totalorder %s381, %s395
      %p397 = scmp.eq.s32.totalorder %s35, 0
      %p398 = por %p396, %p397
      %s400 = sadd.s32 %s399, 1
      %p403 = scmp.eq.s32.totalorder %s29, 1
      %p404 = scmp.ne.s32.totalorder %s399, %s401
      %p405 = scmp.eq.s32.totalorder %s29, 0
      %p406 = por %p404, %p405
      %p407 = scmp.ne.s32.totalorder %s399, %s401
      %p408 = scmp.eq.s32.totalorder %s34, 1
      %p409 = por %p407, %p408
      %p410 = scmp.ne.s32.totalorder %s401, %s402
      %p411 = scmp.eq.s32.totalorder %s34, 0
      %p412 = por %p410, %p411
      %p413 = scmp.ne.s32.totalorder %s401, %s402
      %p414 = scmp.eq.s32.totalorder %s35, 1
      %p415 = por %p413, %p414
      %p417 = scmp.ne.s32.totalorder %s402, %s416
      %p418 = scmp.eq.s32.totalorder %s35, 0
      %p419 = por %p417, %p418
      %s421 = sadd.s32 %s420, 1
      %p424 = scmp.eq.s32.totalorder %s29, 1
      %p425 = scmp.ne.s32.totalorder %s420, %s422
      %p426 = scmp.eq.s32.totalorder %s29, 0
      %p427 = por %p425, %p426
      %p428 = scmp.ne.s32.totalorder %s420, %s422
      %p429 = scmp.eq.s32.totalorder %s34, 1
      %p430 = por %p428, %p429
      %p431 = scmp.ne.s32.totalorder %s422, %s423
      %p432 = scmp.eq.s32.totalorder %s34, 0
      %p433 = por %p431, %p432
      %p434 = scmp.ne.s32.totalorder %s422, %s423
      %p435 = scmp.eq.s32.totalorder %s35, 1
      %p436 = por %p434, %p435
      %p438 = scmp.ne.s32.totalorder %s423, %s437
      %p439 = scmp.eq.s32.totalorder %s35, 0
      %p440 = por %p438, %p439
      %s442 = sadd.s32 %s441, 1
      %p445 = scmp.eq.s32.totalorder %s29, 1
      %p446 = scmp.ne.s32.totalorder %s441, %s443
      %p447 = scmp.eq.s32.totalorder %s29, 0
      %p448 = por %p446, %p447
      %p449 = scmp.ne.s32.totalorder %s441, %s443
      %p450 = scmp.eq.s32.totalorder %s34, 1
      %p451 = por %p449, %p450
      %p452 = scmp.ne.s32.totalorder %s443, %s444
      %p453 = scmp.eq.s32.totalorder %s34, 0
      %p454 = por %p452, %p453
      %p455 = scmp.ne.s32.totalorder %s443, %s444
      %p456 = scmp.eq.s32.totalorder %s35, 1
      %p457 = por %p455, %p456
      %p459 = scmp.ne.s32.totalorder %s444, %s458
      %p460 = scmp.eq.s32.totalorder %s35, 0
      %p461 = por %p459, %p460
      %s462 = ssub.s32 %s29, %s36
      %p463 = scmp.eq.s32.totalorder %s462, 0
      %s465 = sadd.s32 %s464, 1
      %s466 = scalar_select %p463, %s464, %s465
      %p469 = pneg %p463
      %p470 = scmp.eq.s32.totalorder %s29, 1
      %p471 = por %p469, %p470
      %p472 = scmp.ne.s32.totalorder %s464, %s467
      %p473 = scmp.eq.s32.totalorder %s29, 0
      %p474 = por %p472, %p473
      %p475 = scmp.ne.s32.totalorder %s464, %s467
      %p476 = scmp.eq.s32.totalorder %s34, 1
      %p477 = por %p475, %p476
      %p478 = scmp.ne.s32.totalorder %s467, %s468
      %p479 = scmp.eq.s32.totalorder %s34, 0
      %p480 = por %p478, %p479
      %p481 = scmp.ne.s32.totalorder %s467, %s468
      %p482 = scmp.eq.s32.totalorder %s35, 1
      %p483 = por %p481, %p482
      %p485 = scmp.ne.s32.totalorder %s468, %s484
      %p486 = scmp.eq.s32.totalorder %s35, 0
      %p487 = por %p485, %p486
      %p488 = scmp.le.s32.totalorder 1, %s29
      %p489 = scmp.lt.s32.totalorder %s29, 3
      %p490 = pnand %p488, %p489
      %p491 = pneg %p490
      // Predicated region
      $region9: #{model_wrapper_forward.1} parent=5 // pred_check
        _
      $region10: #{model_wrapper_forward.1} parent=5 // pred_check_branch
        %493 = sbr.rel (%p490) target = $region12
      $region11: #{model_wrapper_forward.1} parent=5 // pred_region
        %s494 = ssub.s32 %s29, 1
        // Predicated region
        $region13: #{model_wrapper_forward.1} parent=11 // pred_check
          %p495 = pneg %p76
        $region14: #{model_wrapper_forward.1} parent=11 // pred_check_branch
          %497 = sbr.rel (%p495) target = $region16
        $region15: #{model_wrapper_forward.1} parent=11 // pred_region
          _
        $region16: #{model_wrapper_forward.1} parent=11 // pred_fallthru
          _
        // Predicated region
        $region17: #{model_wrapper_forward.1} parent=11 // pred_check
          %p498 = pneg %p97
        $region18: #{model_wrapper_forward.1} parent=11 // pred_check_branch
          %500 = sbr.rel (%p498) target = $region20
        $region19: #{model_wrapper_forward.1} parent=11 // pred_region
          _
        $region20: #{model_wrapper_forward.1} parent=11 // pred_fallthru
          _
        // Predicated region
        $region21: #{model_wrapper_forward.1} parent=11 // pred_check
          %p501 = pneg %p118
        $region22: #{model_wrapper_forward.1} parent=11 // pred_check_branch
          %503 = sbr.rel (%p501) target = $region24
        $region23: #{model_wrapper_forward.1} parent=11 // pred_region
          _
        $region24: #{model_wrapper_forward.1} parent=11 // pred_fallthru
          _
        // Predicated region
        $region25: #{model_wrapper_forward.1} parent=11 // pred_check
          %p504 = pneg %p139
        $region26: #{model_wrapper_forward.1} parent=11 // pred_check_branch
          %506 = sbr.rel (%p504) target = $region28
        $region27: #{model_wrapper_forward.1} parent=11 // pred_region
          _
        $region28: #{model_wrapper_forward.1} parent=11 // pred_fallthru
          _
        // Predicated region
        $region29: #{model_wrapper_forward.1} parent=11 // pred_check
          %p507 = pneg %p160
        $region30: #{model_wrapper_forward.1} parent=11 // pred_check_branch
          %509 = sbr.rel (%p507) target = $region32
        $region31: #{model_wrapper_forward.1} parent=11 // pred_region
          _
        $region32: #{model_wrapper_forward.1} parent=11 // pred_fallthru
          _
        // Predicated region
        $region33: #{model_wrapper_forward.1} parent=11 // pred_check
          %p510 = pneg %p181
        $region34: #{model_wrapper_forward.1} parent=11 // pred_check_branch
          %512 = sbr.rel (%p510) target = $region36
        $region35: #{model_wrapper_forward.1} parent=11 // pred_region
          _
        $region36: #{model_wrapper_forward.1} parent=11 // pred_fallthru
          _
        // Predicated region
        $region37: #{model_wrapper_forward.1} parent=11 // pred_check
          %p513 = pneg %p202
        $region38: #{model_wrapper_forward.1} parent=11 // pred_check_branch
          %515 = sbr.rel (%p513) target = $region40
        $region39: #{model_wrapper_forward.1} parent=11 // pred_region
          _
        $region40: #{model_wrapper_forward.1} parent=11 // pred_fallthru
          _
        // Predicated region
        $region41: #{model_wrapper_forward.1} parent=11 // pred_check
          %p516 = pneg %p223
        $region42: #{model_wrapper_forward.1} parent=11 // pred_check_branch
          %518 = sbr.rel (%p516) target = $region44
        $region43: #{model_wrapper_forward.1} parent=11 // pred_region
          _
        $region44: #{model_wrapper_forward.1} parent=11 // pred_fallthru
          _
        // Predicated region
        $region45: #{model_wrapper_forward.1} parent=11 // pred_check
          %p519 = pneg %p244
        $region46: #{model_wrapper_forward.1} parent=11 // pred_check_branch
          %521 = sbr.rel (%p519) target = $region48
        $region47: #{model_wrapper_forward.1} parent=11 // pred_region
          _
        $region48: #{model_wrapper_forward.1} parent=11 // pred_fallthru
          _
        // Predicated region
        $region49: #{model_wrapper_forward.1} parent=11 // pred_check
          %p522 = pneg %p265
        $region50: #{model_wrapper_forward.1} parent=11 // pred_check_branch
          %524 = sbr.rel (%p522) target = $region52
        $region51: #{model_wrapper_forward.1} parent=11 // pred_region
          _
        $region52: #{model_wrapper_forward.1} parent=11 // pred_fallthru
          _
        // Predicated region
        $region53: #{model_wrapper_forward.1} parent=11 // pred_check
          %p525 = pneg %p286
        $region54: #{model_wrapper_forward.1} parent=11 // pred_check_branch
          %527 = sbr.rel (%p525) target = $region56
        $region55: #{model_wrapper_forward.1} parent=11 // pred_region
          _
        $region56: #{model_wrapper_forward.1} parent=11 // pred_fallthru
          _
        // Predicated region
        $region57: #{model_wrapper_forward.1} parent=11 // pred_check
          %p528 = pneg %p307
        $region58: #{model_wrapper_forward.1} parent=11 // pred_check_branch
          %530 = sbr.rel (%p528) target = $region60
        $region59: #{model_wrapper_forward.1} parent=11 // pred_region
          _
        $region60: #{model_wrapper_forward.1} parent=11 // pred_fallthru
          _
        // Predicated region
        $region61: #{model_wrapper_forward.1} parent=11 // pred_check
          %p531 = pneg %p328
        $region62: #{model_wrapper_forward.1} parent=11 // pred_check_branch
          %533 = sbr.rel (%p531) target = $region64
        $region63: #{model_wrapper_forward.1} parent=11 // pred_region
          _
        $region64: #{model_wrapper_forward.1} parent=11 // pred_fallthru
          _
        // Predicated region
        $region65: #{model_wrapper_forward.1} parent=11 // pred_check
          %p534 = pneg %p349
        $region66: #{model_wrapper_forward.1} parent=11 // pred_check_branch
          %536 = sbr.rel (%p534) target = $region68
        $region67: #{model_wrapper_forward.1} parent=11 // pred_region
          _
        $region68: #{model_wrapper_forward.1} parent=11 // pred_fallthru
          _
        // Predicated region
        $region69: #{model_wrapper_forward.1} parent=11 // pred_check
          %p537 = pneg %p370
        $region70: #{model_wrapper_forward.1} parent=11 // pred_check_branch
          %539 = sbr.rel (%p537) target = $region72
        $region71: #{model_wrapper_forward.1} parent=11 // pred_region
          _
        $region72: #{model_wrapper_forward.1} parent=11 // pred_fallthru
          _
        // Predicated region
        $region73: #{model_wrapper_forward.1} parent=11 // pred_check
          %p540 = pneg %p391
        $region74: #{model_wrapper_forward.1} parent=11 // pred_check_branch
          %542 = sbr.rel (%p540) target = $region76
        $region75: #{model_wrapper_forward.1} parent=11 // pred_region
          _
        $region76: #{model_wrapper_forward.1} parent=11 // pred_fallthru
          _
        // Predicated region
        $region77: #{model_wrapper_forward.1} parent=11 // pred_check
          %p543 = pneg %p412
        $region78: #{model_wrapper_forward.1} parent=11 // pred_check_branch
          %545 = sbr.rel (%p543) target = $region80
        $region79: #{model_wrapper_forward.1} parent=11 // pred_region
          _
        $region80: #{model_wrapper_forward.1} parent=11 // pred_fallthru
          _
        // Predicated region
        $region81: #{model_wrapper_forward.1} parent=11 // pred_check
          %p546 = pneg %p433
        $region82: #{model_wrapper_forward.1} parent=11 // pred_check_branch
          %548 = sbr.rel (%p546) target = $region84
        $region83: #{model_wrapper_forward.1} parent=11 // pred_region
          _
        $region84: #{model_wrapper_forward.1} parent=11 // pred_fallthru
          _
        // Predicated region
        $region85: #{model_wrapper_forward.1} parent=11 // pred_check
          %p549 = pneg %p454
        $region86: #{model_wrapper_forward.1} parent=11 // pred_check_branch
          %551 = sbr.rel (%p549) target = $region88
        $region87: #{model_wrapper_forward.1} parent=11 // pred_region
          _
        $region88: #{model_wrapper_forward.1} parent=11 // pred_fallthru
          _
      $region12: #{model_wrapper_forward.1} parent=5 // pred_fallthru
        _
      %p552 = scmp.lt.s32.totalorder %s29, 2
      // Predicated region
      $region89: #{model_wrapper_forward.1} parent=5 // pred_check
        %p553 = pneg %p552
      $region90: #{model_wrapper_forward.1} parent=5 // pred_check_branch
        %555 = sbr.rel (%p553) target = $region92
      $region91: #{model_wrapper_forward.1} parent=5 // pred_region
        // Predicated region
        $region93: #{model_wrapper_forward.1} parent=91 // pred_check
          %p556 = pneg %p49
        $region94: #{model_wrapper_forward.1} parent=91 // pred_check_branch
          %558 = sbr.rel (%p556) target = $region96
        $region95: #{model_wrapper_forward.1} parent=91 // pred_region
          %s559 = smul.u32 16, %s29
          %p560 = scmp.lt.s32.totalorder %s559, 31
          %s561 = scalar_select %p560, %s559, 31
          %s562 = smul.addr %s561, 4
          %s563 = scalar_lea.vmem %s0, %s562
          %s564 = smul.u32 16, %s29
        $region96: #{model_wrapper_forward.1} parent=91 // pred_fallthru
          _
      $region92: #{model_wrapper_forward.1} parent=5 // pred_fallthru
        _
      %p565 = scmp.le.s32.totalorder 1, %s29
      %p566 = scmp.lt.s32.totalorder %s29, 3
      %p567 = pnand %p565, %p566
      %p568 = pneg %p567
      // Predicated region
      $region97: #{model_wrapper_forward.1} parent=5 // pred_check
        _
      $region98: #{model_wrapper_forward.1} parent=5 // pred_check_branch
        %570 = sbr.rel (%p567) target = $region100
      $region99: #{model_wrapper_forward.1} parent=5 // pred_region
        %s571 = ssub.s32 %s29, 1
        %s572 = smul.u32 16, %s34
        %p573 = scmp.lt.s32.totalorder %s572, 31
        %s574 = scalar_select %p573, %s572, 31
        %s575 = smul.addr %s574, 4
        %s576 = scalar_lea.vmem %s0, %s575
        %p577 = pneg %p55
        %p578 = pneg %p52
        %p579 = pneg %p76
        %p580 = pneg %p73
        %p581 = pneg %p97
        %p582 = pneg %p94
        %p583 = pneg %p118
        %p584 = pneg %p115
        %p585 = pneg %p139
        %p586 = pneg %p136
        %p587 = pneg %p160
        %p588 = pneg %p157
        %p589 = pneg %p181
        %p590 = pneg %p178
        %p591 = pneg %p202
        %p592 = pneg %p199
        %p593 = pneg %p223
        %p594 = pneg %p220
        %p595 = pneg %p244
        %p596 = pneg %p241
        %p597 = pneg %p265
        %p598 = pneg %p262
        %p599 = pneg %p286
        %p600 = pneg %p283
        %p601 = pneg %p307
        %p602 = pneg %p304
        %p603 = pneg %p328
        %p604 = pneg %p325
        %p605 = pneg %p349
        %p606 = pneg %p346
        %p607 = pneg %p370
        %p608 = pneg %p367
        %p609 = pneg %p391
        %p610 = pneg %p388
        %p611 = pneg %p412
        %p612 = pneg %p409
        %p613 = pneg %p433
        %p614 = pneg %p430
        %p615 = pneg %p454
        %p616 = pneg %p451
        %p617 = pneg %p480
        %p618 = pneg %p477
        %s619 = sand.u32 %s467, 1
        %s620 = scalar_lea.sflag [#allocation4], %s619
        %s621 = sand.u32 %s467, 1
        %s622 = smul.addr %s621, 8
        %s623 = scalar_lea.vmem [#allocation3], %s622
        %s624 = smul.u32 16, %s34
        %p625 = scmp.lt.s32.totalorder %s624, 31
        %s626 = scalar_select %p625, %s624, 31
        %s627 = smul.addr %s626, 4
        %s628 = scalar_lea.vmem %s0, %s627
        %s629 = smul.u32 16, %s34
        %v631 = vld [vmem:[%s628] sm:$0xf]
        %v632 = vld [vmem:[%s628 + $0x4] sm:$0xf]
        %v633 = vld [vmem:[%s628 + $0x8] sm:$0xf]
        %v634 = vld [vmem:[%s628 + $0xc] sm:$0xf]
        %v635 = vld [vmem:[%s628 + $0x10] sm:$0xf]
        %v636 = vld [vmem:[%s628 + $0x14] sm:$0xf]
        %v637 = vld [vmem:[%s628 + $0x18] sm:$0xf]
        %v638 = vld [vmem:[%s628 + $0x1c] sm:$0xf]
        %v639 = vld [vmem:[%s628 + $0x20] sm:$0xf]
        %v640 = vld [vmem:[%s628 + $0x24] sm:$0xf]
        %v641 = vld [vmem:[%s628 + $0x28] sm:$0xf]
        %v642 = vld [vmem:[%s628 + $0x2c] sm:$0xf]
        %v643 = vld [vmem:[%s628 + $0x30] sm:$0xf]
        %v644 = vld [vmem:[%s628 + $0x34] sm:$0xf]
        %v645 = vld [vmem:[%s628 + $0x38] sm:$0xf]
        %v646 = vld [vmem:[%s628 + $0x3c] sm:$0xf]
        %v647 = vld [vmem:[%s2] sm:$0xf]
        %v648 = vld [vmem:[%s2 + $0x4] sm:$0xf]
        %v649 = vld [vmem:[%s2 + $0x8] sm:$0xf]
        %v650 = vld [vmem:[%s2 + $0xc] sm:$0xf]
        %v651 = vld [vmem:[%s2 + $0x10] sm:$0xf]
        %v652 = vld [vmem:[%s2 + $0x14] sm:$0xf]
        %v653 = vld [vmem:[%s3] sm:$0x1]
        %v655 = vlaneseq
        %v656 = vshrl.u32 %v655, 7
        %v657 = vsub.s32 0, %v656
        %v658 = vrot.slane %v653, %v657
        %v676 = vunpack.c.l.b16 %v631
        %v677 = vunpack.c.l.b16 %v632
        %v678 = vunpack.c.l.b16 %v633
        %v679 = vunpack.c.l.b16 %v634
        %v680 = vunpack.c.l.b16 %v635
        %v681 = vunpack.c.l.b16 %v636
        %v682 = vunpack.c.l.b16 %v637
        %v683 = vunpack.c.l.b16 %v638
        %v684 = vunpack.c.l.b16 %v639
        %v685 = vunpack.c.l.b16 %v640
        %v686 = vunpack.c.l.b16 %v641
        %v687 = vunpack.c.l.b16 %v642
        %v688 = vunpack.c.l.b16 %v643
        %v689 = vunpack.c.l.b16 %v644
        %v690 = vunpack.c.l.b16 %v645
        %v691 = vunpack.c.l.b16 %v646
        %v692 = vpack.c.b16 %v677, %v676
        %v693 = vpack.c.b16 %v679, %v678
        %v694 = vpack.c.b16 %v681, %v680
        %v695 = vpack.c.b16 %v683, %v682
        %v696 = vpack.c.b16 %v685, %v684
        %v697 = vpack.c.b16 %v687, %v686
        %v698 = vpack.c.b16 %v689, %v688
        %v699 = vpack.c.b16 %v691, %v690
        %v706 = vunpack.c.l.b16 %v647
        %v707 = vunpack.c.l.b16 %v648
        %v708 = vunpack.c.l.b16 %v649
        %v709 = vunpack.c.l.b16 %v650
        %v710 = vunpack.c.l.b16 %v651
        %v711 = vunpack.c.l.b16 %v652
        %v712 = vpack.c.b16 %v707, %v706
        %v713 = vpack.c.b16 %v709, %v708
        %v714 = vpack.c.b16 %v711, %v710
        %vm718 = vcmask 392192
        %v720 = vsel %vm718, %v692, 0
        %v723 = vsel %vm718, %v693, 0
        %v726 = vsel %vm718, %v694, 0
        %v729 = vsel %vm718, %v695, 0
        %v732 = vsel %vm718, %v696, 0
        %v735 = vsel %vm718, %v697, 0
        %v738 = vsel %vm718, %v698, 0
        %v741 = vsel %vm718, %v699, 0
        %743 = vmatprep.subr.bf16.mxu0 0
        %744 = vmatpush1.bf16.msra.mxu0 %v712
        %745 = vmatprep.subr.bf16.mxu0 0
        %746 = vmatpush1.bf16.msra.mxu0 %v713
        %747 = vmatprep.subr.bf16.mxu0 0
        %748 = vmatpush1.bf16.msra.mxu0 %v714
        %749 = vmatprep.subr.bf16.mxu0 0
        %750 = vmatpush1.bf16.msra.mxu0 0
        %751 = vmatprep.subr.bf16.mxu0 0
        %752 = vmatpush1.bf16.msra.mxu0 0
        %753 = vmatprep.subr.bf16.mxu0 0
        %754 = vmatpush1.bf16.msra.mxu0 0
        %755 = vmatprep.subr.bf16.mxu0 0
        %756 = vmatpush1.bf16.msra.mxu0 0
        %757 = vmatprep.subr.bf16.mxu0 0
        %758 = vmatpush1.bf16.msra.mxu0 0
        %759 = vmatprep.subr.bf16.mxu0 0
        %760 = vmatpush1.bf16.msra.mxu0 0
        %761 = vmatprep.subr.bf16.mxu0 0
        %762 = vmatpush1.bf16.msra.mxu0 0
        %763 = vmatprep.subr.bf16.mxu0 0
        %764 = vmatpush1.bf16.msra.mxu0 0
        %765 = vmatprep.subr.bf16.mxu0 0
        %766 = vmatpush1.bf16.msra.mxu0 0
        %767 = vmatprep.subr.bf16.mxu0 0
        %768 = vmatpush1.bf16.msra.mxu0 0
        %769 = vmatprep.subr.bf16.mxu0 0
        %770 = vmatpush1.bf16.msra.mxu0 0
        %771 = vmatprep.subr.bf16.mxu0 0
        %772 = vmatpush1.bf16.msra.mxu0 0
        %773 = vmatprep.subr.bf16.mxu0 0
        %774 = vmatpush1.bf16.msra.mxu0 0
        %775 = vmatprep.mubr.bf16.mxu0 0
        %776 = vmatmul.mubr.bf16.gmra.mrb[0].mxu0 %v720
        %v777 = vpop.f32.mrb[0].mxu0
        %v778 = vadd.f32 %v658, %v777
        %v779 = vpop.f32.mrb[0].mxu0
        %v780 = vpop.f32.mrb[0].mxu0
        %v781 = vadd.f32 %v658, %v780
        %v782 = vpop.f32.mrb[0].mxu0
        %783 = vmatprep.mubr.bf16.mxu0 0
        %784 = vmatmul.mubr.bf16.gmra.mrb[0].mxu0 %v723
        %v785 = vpop.f32.mrb[0].mxu0
        %v786 = vadd.f32 %v658, %v785
        %v787 = vpop.f32.mrb[0].mxu0
        %v788 = vpop.f32.mrb[0].mxu0
        %v789 = vadd.f32 %v658, %v788
        %v790 = vpop.f32.mrb[0].mxu0
        %791 = vmatprep.mubr.bf16.mxu0 0
        %792 = vmatmul.mubr.bf16.gmra.mrb[0].mxu0 %v726
        %v793 = vpop.f32.mrb[0].mxu0
        %v794 = vadd.f32 %v658, %v793
        %v795 = vpop.f32.mrb[0].mxu0
        %v796 = vpop.f32.mrb[0].mxu0
        %v797 = vadd.f32 %v658, %v796
        %v798 = vpop.f32.mrb[0].mxu0
        %799 = vmatprep.mubr.bf16.mxu0 0
        %800 = vmatmul.mubr.bf16.gmra.mrb[0].mxu0 %v729
        %v801 = vpop.f32.mrb[0].mxu0
        %v802 = vadd.f32 %v658, %v801
        %v803 = vpop.f32.mrb[0].mxu0
        %v804 = vpop.f32.mrb[0].mxu0
        %v805 = vadd.f32 %v658, %v804
        %v806 = vpop.f32.mrb[0].mxu0
        %807 = vmatprep.mubr.bf16.mxu0 0
        %808 = vmatmul.mubr.bf16.gmra.mrb[0].mxu0 %v732
        %v809 = vpop.f32.mrb[0].mxu0
        %v810 = vadd.f32 %v658, %v809
        %v811 = vpop.f32.mrb[0].mxu0
        %v812 = vpop.f32.mrb[0].mxu0
        %v813 = vadd.f32 %v658, %v812
        %v814 = vpop.f32.mrb[0].mxu0
        %815 = vmatprep.mubr.bf16.mxu0 0
        %816 = vmatmul.mubr.bf16.gmra.mrb[0].mxu0 %v735
        %v817 = vpop.f32.mrb[0].mxu0
        %v818 = vadd.f32 %v658, %v817
        %v819 = vpop.f32.mrb[0].mxu0
        %v820 = vpop.f32.mrb[0].mxu0
        %v821 = vadd.f32 %v658, %v820
        %v822 = vpop.f32.mrb[0].mxu0
        %823 = vmatprep.mubr.bf16.mxu0 0
        %824 = vmatmul.mubr.bf16.gmra.mrb[0].mxu0 %v738
        %v825 = vpop.f32.mrb[0].mxu0
        %v826 = vadd.f32 %v658, %v825
        %v827 = vpop.f32.mrb[0].mxu0
        %v828 = vpop.f32.mrb[0].mxu0
        %v829 = vadd.f32 %v658, %v828
        %v830 = vpop.f32.mrb[0].mxu0
        %831 = vmatprep.mubr.bf16.mxu0 0
        %832 = vmatmul.mubr.bf16.gmra.mrb[0].mxu0 %v741
        %v833 = vpop.f32.mrb[0].mxu0
        %v834 = vadd.f32 %v658, %v833
        %v835 = vpop.f32.mrb[0].mxu0
        %v836 = vpop.f32.mrb[0].mxu0
        %v837 = vadd.f32 %v658, %v836
        %v838 = vpop.f32.mrb[0].mxu0
        %839 = vdwg.mxu0
        %v840 = vld [vmem:[%s1] sm:$0xff]
        %v841 = vld [vmem:[%s1 + $0x8] sm:$0xff]
        %v842 = vadd.f32 %v778, %v840
        %v843 = vadd.f32 %v781, %v841
        %v844 = vadd.f32 %v786, %v840
        %v845 = vadd.f32 %v789, %v841
        %v846 = vadd.f32 %v794, %v840
        %v847 = vadd.f32 %v797, %v841
        %v848 = vadd.f32 %v802, %v840
        %v849 = vadd.f32 %v805, %v841
        %v850 = vadd.f32 %v810, %v840
        %v851 = vadd.f32 %v813, %v841
        %v852 = vadd.f32 %v818, %v840
        %v853 = vadd.f32 %v821, %v841
        %v854 = vadd.f32 %v826, %v840
        %v855 = vadd.f32 %v829, %v841
        %v856 = vadd.f32 %v834, %v840
        %v857 = vadd.f32 %v837, %v841
        %v858 = vld [vmem:[%s4] sm:$0x1]
        %v859 = vld [vmem:[%s5] sm:$0x1]
        %vm860 = vcmask 261120
        %v861 = vsel %vm860, %v842, 0.0
        %862 = vadd.xlane.f32.xlu0 %v861
        %v863 = vpop.xlane.xlu0 %862
        %v864 = vsel %vm860, %v843, 0.0
        %865 = vadd.xlane.f32.xlu0 %v864
        %v866 = vpop.xlane.xlu0 %865
        %v867 = vsel %vm860, %v844, 0.0
        %868 = vadd.xlane.f32.xlu0 %v867
        %v869 = vpop.xlane.xlu0 %868
        %v870 = vsel %vm860, %v845, 0.0
        %871 = vadd.xlane.f32.xlu0 %v870
        %v872 = vpop.xlane.xlu0 %871
        %v873 = vsel %vm860, %v846, 0.0
        %874 = vadd.xlane.f32.xlu0 %v873
        %v875 = vpop.xlane.xlu0 %874
        %v876 = vsel %vm860, %v847, 0.0
        %877 = vadd.xlane.f32.xlu0 %v876
        %v878 = vpop.xlane.xlu0 %877
        %v879 = vsel %vm860, %v848, 0.0
        %880 = vadd.xlane.f32.xlu0 %v879
        %v881 = vpop.xlane.xlu0 %880
        %v882 = vsel %vm860, %v849, 0.0
        %883 = vadd.xlane.f32.xlu0 %v882
        %v884 = vpop.xlane.xlu0 %883
        %v885 = vsel %vm860, %v850, 0.0
        %886 = vadd.xlane.f32.xlu0 %v885
        %v887 = vpop.xlane.xlu0 %886
        %v888 = vsel %vm860, %v851, 0.0
        %889 = vadd.xlane.f32.xlu0 %v888
        %v890 = vpop.xlane.xlu0 %889
        %v891 = vsel %vm860, %v852, 0.0
        %892 = vadd.xlane.f32.xlu0 %v891
        %v893 = vpop.xlane.xlu0 %892
        %v894 = vsel %vm860, %v853, 0.0
        %895 = vadd.xlane.f32.xlu0 %v894
        %v896 = vpop.xlane.xlu0 %895
        %v897 = vsel %vm860, %v854, 0.0
        %898 = vadd.xlane.f32.xlu0 %v897
        %v899 = vpop.xlane.xlu0 %898
        %v900 = vsel %vm860, %v855, 0.0
        %901 = vadd.xlane.f32.xlu0 %v900
        %v902 = vpop.xlane.xlu0 %901
        %v903 = vsel %vm860, %v856, 0.0
        %904 = vadd.xlane.f32.xlu0 %v903
        %v905 = vpop.xlane.xlu0 %904
        %v906 = vsel %vm860, %v857, 0.0
        %907 = vadd.xlane.f32.xlu0 %v906
        %v908 = vpop.xlane.xlu0 %907
        %v909 = vrcp.pop 32.0
        %v910 = vmul.f32 %v863, %v909
        %v911 = vmul.f32 %v866, %v909
        %v912 = vmul.f32 %v869, %v909
        %v913 = vmul.f32 %v872, %v909
        %v914 = vmul.f32 %v875, %v909
        %v915 = vmul.f32 %v878, %v909
        %v916 = vmul.f32 %v881, %v909
        %v917 = vmul.f32 %v884, %v909
        %v918 = vmul.f32 %v887, %v909
        %v919 = vmul.f32 %v890, %v909
        %v920 = vmul.f32 %v893, %v909
        %v921 = vmul.f32 %v896, %v909
        %v922 = vmul.f32 %v899, %v909
        %v923 = vmul.f32 %v902, %v909
        %v924 = vmul.f32 %v905, %v909
        %v925 = vmul.f32 %v908, %v909
        %v926 = vsub.f32 %v842, %v910
        %v927 = vsub.f32 %v843, %v911
        %v928 = vsub.f32 %v844, %v912
        %v929 = vsub.f32 %v845, %v913
        %v930 = vsub.f32 %v846, %v914
        %v931 = vsub.f32 %v847, %v915
        %v932 = vsub.f32 %v848, %v916
        %v933 = vsub.f32 %v849, %v917
        %v934 = vsub.f32 %v850, %v918
        %v935 = vsub.f32 %v851, %v919
        %v936 = vsub.f32 %v852, %v920
        %v937 = vsub.f32 %v853, %v921
        %v938 = vsub.f32 %v854, %v922
        %v939 = vsub.f32 %v855, %v923
        %v940 = vsub.f32 %v856, %v924
        %v941 = vsub.f32 %v857, %v925
        %v942 = vmul.f32 %v926, %v926
        %v943 = vmul.f32 %v927, %v927
        %v944 = vmul.f32 %v928, %v928
        %v945 = vmul.f32 %v929, %v929
        %v946 = vmul.f32 %v930, %v930
        %v947 = vmul.f32 %v931, %v931
        %v948 = vmul.f32 %v932, %v932
        %v949 = vmul.f32 %v933, %v933
        %v950 = vmul.f32 %v934, %v934
        %v951 = vmul.f32 %v935, %v935
        %v952 = vmul.f32 %v936, %v936
        %v953 = vmul.f32 %v937, %v937
        %v954 = vmul.f32 %v938, %v938
        %v955 = vmul.f32 %v939, %v939
        %v956 = vmul.f32 %v940, %v940
        %v957 = vmul.f32 %v941, %v941
        %v958 = vsel %vm860, %v942, 0.0
        %959 = vadd.xlane.f32.xlu0 %v958
        %v960 = vpop.xlane.xlu0 %959
        %v961 = vsel %vm860, %v943, 0.0
        %962 = vadd.xlane.f32.xlu0 %v961
        %v963 = vpop.xlane.xlu0 %962
        %v964 = vsel %vm860, %v944, 0.0
        %965 = vadd.xlane.f32.xlu0 %v964
        %v966 = vpop.xlane.xlu0 %965
        %v967 = vsel %vm860, %v945, 0.0
        %968 = vadd.xlane.f32.xlu0 %v967
        %v969 = vpop.xlane.xlu0 %968
        %v970 = vsel %vm860, %v946, 0.0
        %971 = vadd.xlane.f32.xlu0 %v970
        %v972 = vpop.xlane.xlu0 %971
        %v973 = vsel %vm860, %v947, 0.0
        %974 = vadd.xlane.f32.xlu0 %v973
        %v975 = vpop.xlane.xlu0 %974
        %v976 = vsel %vm860, %v948, 0.0
        %977 = vadd.xlane.f32.xlu0 %v976
        %v978 = vpop.xlane.xlu0 %977
        %v979 = vsel %vm860, %v949, 0.0
        %980 = vadd.xlane.f32.xlu0 %v979
        %v981 = vpop.xlane.xlu0 %980
        %v982 = vsel %vm860, %v950, 0.0
        %983 = vadd.xlane.f32.xlu0 %v982
        %v984 = vpop.xlane.xlu0 %983
        %v985 = vsel %vm860, %v951, 0.0
        %986 = vadd.xlane.f32.xlu0 %v985
        %v987 = vpop.xlane.xlu0 %986
        %v988 = vsel %vm860, %v952, 0.0
        %989 = vadd.xlane.f32.xlu0 %v988
        %v990 = vpop.xlane.xlu0 %989
        %v991 = vsel %vm860, %v953, 0.0
        %992 = vadd.xlane.f32.xlu0 %v991
        %v993 = vpop.xlane.xlu0 %992
        %v994 = vsel %vm860, %v954, 0.0
        %995 = vadd.xlane.f32.xlu0 %v994
        %v996 = vpop.xlane.xlu0 %995
        %v997 = vsel %vm860, %v955, 0.0
        %998 = vadd.xlane.f32.xlu0 %v997
        %v999 = vpop.xlane.xlu0 %998
        %v1000 = vsel %vm860, %v956, 0.0
        %1001 = vadd.xlane.f32.xlu0 %v1000
        %v1002 = vpop.xlane.xlu0 %1001
        %v1003 = vsel %vm860, %v957, 0.0
        %1004 = vadd.xlane.f32.xlu0 %v1003
        %v1005 = vpop.xlane.xlu0 %1004
        %v1006 = vmul.f32 %v960, %v909
        %v1007 = vmul.f32 %v963, %v909
        %v1008 = vmul.f32 %v966, %v909
        %v1009 = vmul.f32 %v969, %v909
        %v1010 = vmul.f32 %v972, %v909
        %v1011 = vmul.f32 %v975, %v909
        %v1012 = vmul.f32 %v978, %v909
        %v1013 = vmul.f32 %v981, %v909
        %v1014 = vmul.f32 %v984, %v909
        %v1015 = vmul.f32 %v987, %v909
        %v1016 = vmul.f32 %v990, %v909
        %v1017 = vmul.f32 %v993, %v909
        %v1018 = vmul.f32 %v996, %v909
        %v1019 = vmul.f32 %v999, %v909
        %v1020 = vmul.f32 %v1002, %v909
        %v1021 = vmul.f32 %v1005, %v909
        %v1022 = vadd.f32 %v1006, 1e-05
        %v1023 = vadd.f32 %v1007, 1e-05
        %v1024 = vadd.f32 %v1008, 1e-05
        %v1025 = vadd.f32 %v1009, 1e-05
        %v1026 = vadd.f32 %v1010, 1e-05
        %v1027 = vadd.f32 %v1011, 1e-05
        %v1028 = vadd.f32 %v1012, 1e-05
        %v1029 = vadd.f32 %v1013, 1e-05
        %v1030 = vadd.f32 %v1014, 1e-05
        %v1031 = vadd.f32 %v1015, 1e-05
        %v1032 = vadd.f32 %v1016, 1e-05
        %v1033 = vadd.f32 %v1017, 1e-05
        %v1034 = vadd.f32 %v1018, 1e-05
        %v1035 = vadd.f32 %v1019, 1e-05
        %v1036 = vadd.f32 %v1020, 1e-05
        %v1037 = vadd.f32 %v1021, 1e-05
        %v1038 = vrsqrt.pop %v1022
        %v1039 = vrsqrt.pop %v1023
        %v1040 = vrsqrt.pop %v1024
        %v1041 = vrsqrt.pop %v1025
        %v1042 = vrsqrt.pop %v1026
        %v1043 = vrsqrt.pop %v1027
        %v1044 = vrsqrt.pop %v1028
        %v1045 = vrsqrt.pop %v1029
        %v1046 = vrsqrt.pop %v1030
        %v1047 = vrsqrt.pop %v1031
        %v1048 = vrsqrt.pop %v1032
        %v1049 = vrsqrt.pop %v1033
        %v1050 = vrsqrt.pop %v1034
        %v1051 = vrsqrt.pop %v1035
        %v1052 = vrsqrt.pop %v1036
        %v1053 = vrsqrt.pop %v1037
        %v1054 = vmul.f32 %v926, %v1038
        %v1055 = vmul.f32 %v927, %v1039
        %v1056 = vmul.f32 %v928, %v1040
        %v1057 = vmul.f32 %v929, %v1041
        %v1058 = vmul.f32 %v930, %v1042
        %v1059 = vmul.f32 %v931, %v1043
        %v1060 = vmul.f32 %v932, %v1044
        %v1061 = vmul.f32 %v933, %v1045
        %v1062 = vmul.f32 %v934, %v1046
        %v1063 = vmul.f32 %v935, %v1047
        %v1064 = vmul.f32 %v936, %v1048
        %v1065 = vmul.f32 %v937, %v1049
        %v1066 = vmul.f32 %v938, %v1050
        %v1067 = vmul.f32 %v939, %v1051
        %v1068 = vmul.f32 %v940, %v1052
        %v1069 = vmul.f32 %v941, %v1053
        %v1071 = vlaneseq
        %v1072 = vshrl.u32 %v1071, 7
        %v1073 = vsub.s32 0, %v1072
        %v1074 = vrot.slane %v858, %v1073
        %v1076 = vmul.f32 %v1054, %v1074
        %v1077 = vmul.f32 %v1055, %v1074
        %v1078 = vmul.f32 %v1056, %v1074
        %v1079 = vmul.f32 %v1057, %v1074
        %v1080 = vmul.f32 %v1058, %v1074
        %v1081 = vmul.f32 %v1059, %v1074
        %v1082 = vmul.f32 %v1060, %v1074
        %v1083 = vmul.f32 %v1061, %v1074
        %v1084 = vmul.f32 %v1062, %v1074
        %v1085 = vmul.f32 %v1063, %v1074
        %v1086 = vmul.f32 %v1064, %v1074
        %v1087 = vmul.f32 %v1065, %v1074
        %v1088 = vmul.f32 %v1066, %v1074
        %v1089 = vmul.f32 %v1067, %v1074
        %v1090 = vmul.f32 %v1068, %v1074
        %v1091 = vmul.f32 %v1069, %v1074
        %v1093 = vlaneseq
        %v1094 = vshrl.u32 %v1093, 7
        %v1095 = vsub.s32 0, %v1094
        %v1096 = vrot.slane %v859, %v1095
        %v1098 = vadd.f32 %v1076, %v1096
        %v1099 = vadd.f32 %v1077, %v1096
        %v1100 = vadd.f32 %v1078, %v1096
        %v1101 = vadd.f32 %v1079, %v1096
        %v1102 = vadd.f32 %v1080, %v1096
        %v1103 = vadd.f32 %v1081, %v1096
        %v1104 = vadd.f32 %v1082, %v1096
        %v1105 = vadd.f32 %v1083, %v1096
        %v1106 = vadd.f32 %v1084, %v1096
        %v1107 = vadd.f32 %v1085, %v1096
        %v1108 = vadd.f32 %v1086, %v1096
        %v1109 = vadd.f32 %v1087, %v1096
        %v1110 = vadd.f32 %v1088, %v1096
        %v1111 = vadd.f32 %v1089, %v1096
        %v1112 = vadd.f32 %v1090, %v1096
        %v1113 = vadd.f32 %v1091, %v1096
        %v1114 = vpack.c.bf16 %v1099, %v1098
        %v1115 = vpack.c.bf16 %v1101, %v1100
        %v1116 = vpack.c.bf16 %v1103, %v1102
        %v1117 = vpack.c.bf16 %v1105, %v1104
        %v1118 = vpack.c.bf16 %v1107, %v1106
        %v1119 = vpack.c.bf16 %v1109, %v1108
        %v1120 = vpack.c.bf16 %v1111, %v1110
        %v1121 = vpack.c.bf16 %v1113, %v1112
        %v1122 = vld [vmem:[%s6] sm:$0xf]
        %v1123 = vld [vmem:[%s6 + $0x4] sm:$0xf]
        %v1124 = vld [vmem:[%s6 + $0x8] sm:$0xf]
        %v1125 = vld [vmem:[%s6 + $0xc] sm:$0xf]
        %v1126 = vld [vmem:[%s7] sm:$0x1]
        %v1128 = vlaneseq
        %v1129 = vshrl.u32 %v1128, 7
        %v1130 = vsub.s32 0, %v1129
        %v1131 = vrot.slane %v1126, %v1130
        %v1137 = vunpack.c.l.b16 %v1122
        %v1138 = vunpack.c.l.b16 %v1123
        %v1139 = vunpack.c.l.b16 %v1124
        %v1140 = vunpack.c.l.b16 %v1125
        %v1141 = vpack.c.b16 %v1138, %v1137
        %v1142 = vpack.c.b16 %v1140, %v1139
        %v1146 = vsel %vm860, %v1114, 0
        %v1149 = vsel %vm860, %v1115, 0
        %v1152 = vsel %vm860, %v1116, 0
        %v1155 = vsel %vm860, %v1117, 0
        %v1158 = vsel %vm860, %v1118, 0
        %v1161 = vsel %vm860, %v1119, 0
        %v1164 = vsel %vm860, %v1120, 0
        %v1167 = vsel %vm860, %v1121, 0
        %1169 = vmatprep.subr.bf16.mxu0 0
        %1170 = vmatpush1.bf16.msra.mxu0 %v1141
        %1171 = vmatprep.subr.bf16.mxu0 0
        %1172 = vmatpush1.bf16.msra.mxu0 %v1142
        %1173 = vmatprep.subr.bf16.mxu0 0
        %1174 = vmatpush1.bf16.msra.mxu0 0
        %1175 = vmatprep.subr.bf16.mxu0 0
        %1176 = vmatpush1.bf16.msra.mxu0 0
        %1177 = vmatprep.subr.bf16.mxu0 0
        %1178 = vmatpush1.bf16.msra.mxu0 0
        %1179 = vmatprep.subr.bf16.mxu0 0
        %1180 = vmatpush1.bf16.msra.mxu0 0
        %1181 = vmatprep.subr.bf16.mxu0 0
        %1182 = vmatpush1.bf16.msra.mxu0 0
        %1183 = vmatprep.subr.bf16.mxu0 0
        %1184 = vmatpush1.bf16.msra.mxu0 0
        %1185 = vmatprep.subr.bf16.mxu0 0
        %1186 = vmatpush1.bf16.msra.mxu0 0
        %1187 = vmatprep.subr.bf16.mxu0 0
        %1188 = vmatpush1.bf16.msra.mxu0 0
        %1189 = vmatprep.subr.bf16.mxu0 0
        %1190 = vmatpush1.bf16.msra.mxu0 0
        %1191 = vmatprep.subr.bf16.mxu0 0
        %1192 = vmatpush1.bf16.msra.mxu0 0
        %1193 = vmatprep.subr.bf16.mxu0 0
        %1194 = vmatpush1.bf16.msra.mxu0 0
        %1195 = vmatprep.subr.bf16.mxu0 0
        %1196 = vmatpush1.bf16.msra.mxu0 0
        %1197 = vmatprep.subr.bf16.mxu0 0
        %1198 = vmatpush1.bf16.msra.mxu0 0
        %1199 = vmatprep.subr.bf16.mxu0 0
        %1200 = vmatpush1.bf16.msra.mxu0 0
        %1201 = vmatprep.mubr.bf16.mxu0 0
        %1202 = vmatmul.mubr.bf16.gmra.mrb[0].mxu0 %v1146
        %v1203 = vpop.f32.mrb[0].mxu0
        %v1204 = vadd.f32 %v1131, %v1203
        %v1205 = vpop.f32.mrb[0].mxu0
        %v1206 = vpop.f32.mrb[0].mxu0
        %v1207 = vadd.f32 %v1131, %v1206
        %v1208 = vpop.f32.mrb[0].mxu0
        %1209 = vmatprep.mubr.bf16.mxu0 0
        %1210 = vmatmul.mubr.bf16.gmra.mrb[0].mxu0 %v1149
        %v1211 = vpop.f32.mrb[0].mxu0
        %v1212 = vadd.f32 %v1131, %v1211
        %v1213 = vpop.f32.mrb[0].mxu0
        %v1214 = vpop.f32.mrb[0].mxu0
        %v1215 = vadd.f32 %v1131, %v1214
        %v1216 = vpop.f32.mrb[0].mxu0
        %1217 = vmatprep.mubr.bf16.mxu0 0
        %1218 = vmatmul.mubr.bf16.gmra.mrb[0].mxu0 %v1152
        %v1219 = vpop.f32.mrb[0].mxu0
        %v1220 = vadd.f32 %v1131, %v1219
        %v1221 = vpop.f32.mrb[0].mxu0
        %v1222 = vpop.f32.mrb[0].mxu0
        %v1223 = vadd.f32 %v1131, %v1222
        %v1224 = vpop.f32.mrb[0].mxu0
        %1225 = vmatprep.mubr.bf16.mxu0 0
        %1226 = vmatmul.mubr.bf16.gmra.mrb[0].mxu0 %v1155
        %v1227 = vpop.f32.mrb[0].mxu0
        %v1228 = vadd.f32 %v1131, %v1227
        %v1229 = vpop.f32.mrb[0].mxu0
        %v1230 = vpop.f32.mrb[0].mxu0
        %v1231 = vadd.f32 %v1131, %v1230
        %v1232 = vpop.f32.mrb[0].mxu0
        %1233 = vmatprep.mubr.bf16.mxu0 0
        %1234 = vmatmul.mubr.bf16.gmra.mrb[0].mxu0 %v1158
        %v1235 = vpop.f32.mrb[0].mxu0
        %v1236 = vadd.f32 %v1131, %v1235
        %v1237 = vpop.f32.mrb[0].mxu0
        %v1238 = vpop.f32.mrb[0].mxu0
        %v1239 = vadd.f32 %v1131, %v1238
        %v1240 = vpop.f32.mrb[0].mxu0
        %1241 = vmatprep.mubr.bf16.mxu0 0
        %1242 = vmatmul.mubr.bf16.gmra.mrb[0].mxu0 %v1161
        %v1243 = vpop.f32.mrb[0].mxu0
        %v1244 = vadd.f32 %v1131, %v1243
        %v1245 = vpop.f32.mrb[0].mxu0
        %v1246 = vpop.f32.mrb[0].mxu0
        %v1247 = vadd.f32 %v1131, %v1246
        %v1248 = vpop.f32.mrb[0].mxu0
        %1249 = vmatprep.mubr.bf16.mxu0 0
        %1250 = vmatmul.mubr.bf16.gmra.mrb[0].mxu0 %v1164
        %v1251 = vpop.f32.mrb[0].mxu0
        %v1252 = vadd.f32 %v1131, %v1251
        %v1253 = vpop.f32.mrb[0].mxu0
        %v1254 = vpop.f32.mrb[0].mxu0
        %v1255 = vadd.f32 %v1131, %v1254
        %v1256 = vpop.f32.mrb[0].mxu0
        %1257 = vmatprep.mubr.bf16.mxu0 0
        %1258 = vmatmul.mubr.bf16.gmra.mrb[0].mxu0 %v1167
        %v1259 = vpop.f32.mrb[0].mxu0
        %v1260 = vadd.f32 %v1131, %v1259
        %v1261 = vpop.f32.mrb[0].mxu0
        %v1262 = vpop.f32.mrb[0].mxu0
        %v1263 = vadd.f32 %v1131, %v1262
        %v1264 = vpop.f32.mrb[0].mxu0
        %1265 = vdwg.mxu0
        %v1266 = vpack.c.bf16 %v1207, %v1204
        %v1267 = vpack.c.bf16 %v1215, %v1212
        %v1268 = vpack.c.bf16 %v1223, %v1220
        %v1269 = vpack.c.bf16 %v1231, %v1228
        %v1270 = vpack.c.bf16 %v1239, %v1236
        %v1271 = vpack.c.bf16 %v1247, %v1244
        %v1272 = vpack.c.bf16 %v1255, %v1252
        %v1273 = vpack.c.bf16 %v1263, %v1260
        %1275 = vrot.lane.b32.xlu0 %v1266, 96
        %v1276 = vpop.permute.xlu0 %1275
        %vm1277 = vcmask 64512
        %v1279 = vsel %vm1277, %v1266, 0
        %v1282 = vsel %vm1277, %v1276, 0
        %1284 = vmatprep.subr.bf16.mxu0 0
        %1285 = vmatpush1.bf16.xpose.msra.mxu0 %v1282
        %1286 = vmatprep.subr.bf16.mxu0 0
        %1287 = vmatpush1.bf16.xpose.msra.mxu0 0
        %1288 = vmatprep.subr.bf16.mxu0 0
        %1289 = vmatpush1.bf16.xpose.msra.mxu0 0
        %1290 = vmatprep.subr.bf16.mxu0 0
        %1291 = vmatpush1.bf16.xpose.msra.mxu0 0
        %1292 = vmatprep.subr.bf16.mxu0 0
        %1293 = vmatpush1.bf16.xpose.msra.mxu0 0
        %1294 = vmatprep.subr.bf16.mxu0 0
        %1295 = vmatpush1.bf16.xpose.msra.mxu0 0
        %1296 = vmatprep.subr.bf16.mxu0 0
        %1297 = vmatpush1.bf16.xpose.msra.mxu0 0
        %1298 = vmatprep.subr.bf16.mxu0 0
        %1299 = vmatpush1.bf16.xpose.msra.mxu0 0
        %1300 = vmatprep.subr.bf16.mxu0 0
        %1301 = vmatpush1.bf16.xpose.msra.mxu0 0
        %1302 = vmatprep.subr.bf16.mxu0 0
        %1303 = vmatpush1.bf16.xpose.msra.mxu0 0
        %1304 = vmatprep.subr.bf16.mxu0 0
        %1305 = vmatpush1.bf16.xpose.msra.mxu0 0
        %1306 = vmatprep.subr.bf16.mxu0 0
        %1307 = vmatpush1.bf16.xpose.msra.mxu0 0
        %1308 = vmatprep.subr.bf16.mxu0 0
        %1309 = vmatpush1.bf16.xpose.msra.mxu0 0
        %1310 = vmatprep.subr.bf16.mxu0 0
        %1311 = vmatpush1.bf16.xpose.msra.mxu0 0
        %1312 = vmatprep.subr.bf16.mxu0 0
        %1313 = vmatpush1.bf16.xpose.msra.mxu0 0
        %1314 = vmatprep.subr.bf16.mxu0 0
        %1315 = vmatpush1.bf16.xpose.msra.mxu0 0
        %1316 = vmatprep.mubr.bf16.mxu0 0
        %1317 = vmatmul.mubr.bf16.gmra.mrb[0].mxu0 %v1279
        %v1318 = vpop.f32.mrb[0].mxu0
        %v1319 = vadd.f32 0.0, %v1318
        %v1320 = vpop.f32.mrb[0].mxu0
        %v1321 = vpop.f32.mrb[0].mxu0
        %v1322 = vadd.f32 0.0, %v1321
        %v1323 = vpop.f32.mrb[0].mxu0
        %1324 = vdwg.mxu0
        %1326 = vrot.lane.b32.xlu0 %v1267, 96
        %v1327 = vpop.permute.xlu0 %1326
        %v1329 = vsel %vm1277, %v1267, 0
        %v1332 = vsel %vm1277, %v1327, 0
        %1334 = vmatprep.subr.bf16.mxu0 0
        %1335 = vmatpush1.bf16.xpose.msra.mxu0 %v1332
        %1336 = vmatprep.subr.bf16.mxu0 0
        %1337 = vmatpush1.bf16.xpose.msra.mxu0 0
        %1338 = vmatprep.subr.bf16.mxu0 0
        %1339 = vmatpush1.bf16.xpose.msra.mxu0 0
        %1340 = vmatprep.subr.bf16.mxu0 0
        %1341 = vmatpush1.bf16.xpose.msra.mxu0 0
        %1342 = vmatprep.subr.bf16.mxu0 0
        %1343 = vmatpush1.bf16.xpose.msra.mxu0 0
        %1344 = vmatprep.subr.bf16.mxu0 0
        %1345 = vmatpush1.bf16.xpose.msra.mxu0 0
        %1346 = vmatprep.subr.bf16.mxu0 0
        %1347 = vmatpush1.bf16.xpose.msra.mxu0 0
        %1348 = vmatprep.subr.bf16.mxu0 0
        %1349 = vmatpush1.bf16.xpose.msra.mxu0 0
        %1350 = vmatprep.subr.bf16.mxu0 0
        %1351 = vmatpush1.bf16.xpose.msra.mxu0 0
        %1352 = vmatprep.subr.bf16.mxu0 0
        %1353 = vmatpush1.bf16.xpose.msra.mxu0 0
        %1354 = vmatprep.subr.bf16.mxu0 0
        %1355 = vmatpush1.bf16.xpose.msra.mxu0 0
        %1356 = vmatprep.subr.bf16.mxu0 0
        %1357 = vmatpush1.bf16.xpose.msra.mxu0 0
        %1358 = vmatprep.subr.bf16.mxu0 0
        %1359 = vmatpush1.bf16.xpose.msra.mxu0 0
        %1360 = vmatprep.subr.bf16.mxu0 0
        %1361 = vmatpush1.bf16.xpose.msra.mxu0 0
        %1362 = vmatprep.subr.bf16.mxu0 0
        %1363 = vmatpush1.bf16.xpose.msra.mxu0 0
        %1364 = vmatprep.subr.bf16.mxu0 0
        %1365 = vmatpush1.bf16.xpose.msra.mxu0 0
        %1366 = vmatprep.mubr.bf16.mxu0 0
        %1367 = vmatmul.mubr.bf16.gmra.mrb[0].mxu0 %v1329
        %v1368 = vpop.f32.mrb[0].mxu0
        %v1369 = vadd.f32 0.0, %v1368
        %v1370 = vpop.f32.mrb[0].mxu0
        %v1371 = vpop.f32.mrb[0].mxu0
        %v1372 = vadd.f32 0.0, %v1371
        %v1373 = vpop.f32.mrb[0].mxu0
        %1374 = vdwg.mxu0
        %1376 = vrot.lane.b32.xlu0 %v1268, 96
        %v1377 = vpop.permute.xlu0 %1376
        %v1379 = vsel %vm1277, %v1268, 0
        %v1382 = vsel %vm1277, %v1377, 0
        %1384 = vmatprep.subr.bf16.mxu0 0
        %1385 = vmatpush1.bf16.xpose.msra.mxu0 %v1382
        %1386 = vmatprep.subr.bf16.mxu0 0
        %1387 = vmatpush1.bf16.xpose.msra.mxu0 0
        %1388 = vmatprep.subr.bf16.mxu0 0
        %1389 = vmatpush1.bf16.xpose.msra.mxu0 0
        %1390 = vmatprep.subr.bf16.mxu0 0
        %1391 = vmatpush1.bf16.xpose.msra.mxu0 0
        %1392 = vmatprep.subr.bf16.mxu0 0
        %1393 = vmatpush1.bf16.xpose.msra.mxu0 0
        %1394 = vmatprep.subr.bf16.mxu0 0
        %1395 = vmatpush1.bf16.xpose.msra.mxu0 0
        %1396 = vmatprep.subr.bf16.mxu0 0
        %1397 = vmatpush1.bf16.xpose.msra.mxu0 0
        %1398 = vmatprep.subr.bf16.mxu0 0
        %1399 = vmatpush1.bf16.xpose.msra.mxu0 0
        %1400 = vmatprep.subr.bf16.mxu0 0
        %1401 = vmatpush1.bf16.xpose.msra.mxu0 0
        %1402 = vmatprep.subr.bf16.mxu0 0
        %1403 = vmatpush1.bf16.xpose.msra.mxu0 0
        %1404 = vmatprep.subr.bf16.mxu0 0
        %1405 = vmatpush1.bf16.xpose.msra.mxu0 0
        %1406 = vmatprep.subr.bf16.mxu0 0
        %1407 = vmatpush1.bf16.xpose.msra.mxu0 0
        %1408 = vmatprep.subr.bf16.mxu0 0
        %1409 = vmatpush1.bf16.xpose.msra.mxu0 0
        %1410 = vmatprep.subr.bf16.mxu0 0
        %1411 = vmatpush1.bf16.xpose.msra.mxu0 0
        %1412 = vmatprep.subr.bf16.mxu0 0
        %1413 = vmatpush1.bf16.xpose.msra.mxu0 0
        %1414 = vmatprep.subr.bf16.mxu0 0
        %1415 = vmatpush1.bf16.xpose.msra.mxu0 0
        %1416 = vmatprep.mubr.bf16.mxu0 0
        %1417 = vmatmul.mubr.bf16.gmra.mrb[0].mxu0 %v1379
        %v1418 = vpop.f32.mrb[0].mxu0
        %v1419 = vadd.f32 0.0, %v1418
        %v1420 = vpop.f32.mrb[0].mxu0
        %v1421 = vpop.f32.mrb[0].mxu0
        %v1422 = vadd.f32 0.0, %v1421
        %v1423 = vpop.f32.mrb[0].mxu0
        %1424 = vdwg.mxu0
        %1426 = vrot.lane.b32.xlu0 %v1269, 96
        %v1427 = vpop.permute.xlu0 %1426
        %v1429 = vsel %vm1277, %v1269, 0
        %v1432 = vsel %vm1277, %v1427, 0
        %1434 = vmatprep.subr.bf16.mxu0 0
        %1435 = vmatpush1.bf16.xpose.msra.mxu0 %v1432
        %1436 = vmatprep.subr.bf16.mxu0 0
        %1437 = vmatpush1.bf16.xpose.msra.mxu0 0
        %1438 = vmatprep.subr.bf16.mxu0 0
        %1439 = vmatpush1.bf16.xpose.msra.mxu0 0
        %1440 = vmatprep.subr.bf16.mxu0 0
        %1441 = vmatpush1.bf16.xpose.msra.mxu0 0
        %1442 = vmatprep.subr.bf16.mxu0 0
        %1443 = vmatpush1.bf16.xpose.msra.mxu0 0
        %1444 = vmatprep.subr.bf16.mxu0 0
        %1445 = vmatpush1.bf16.xpose.msra.mxu0 0
        %1446 = vmatprep.subr.bf16.mxu0 0
        %1447 = vmatpush1.bf16.xpose.msra.mxu0 0
        %1448 = vmatprep.subr.bf16.mxu0 0
        %1449 = vmatpush1.bf16.xpose.msra.mxu0 0
        %1450 = vmatprep.subr.bf16.mxu0 0
        %1451 = vmatpush1.bf16.xpose.msra.mxu0 0
        %1452 = vmatprep.subr.bf16.mxu0 0
        %1453 = vmatpush1.bf16.xpose.msra.mxu0 0
        %1454 = vmatprep.subr.bf16.mxu0 0
        %1455 = vmatpush1.bf16.xpose.msra.mxu0 0
        %1456 = vmatprep.subr.bf16.mxu0 0
        %1457 = vmatpush1.bf16.xpose.msra.mxu0 0
        %1458 = vmatprep.subr.bf16.mxu0 0
        %1459 = vmatpush1.bf16.xpose.msra.mxu0 0
        %1460 = vmatprep.subr.bf16.mxu0 0
        %1461 = vmatpush1.bf16.xpose.msra.mxu0 0
        %1462 = vmatprep.subr.bf16.mxu0 0
        %1463 = vmatpush1.bf16.xpose.msra.mxu0 0
        %1464 = vmatprep.subr.bf16.mxu0 0
        %1465 = vmatpush1.bf16.xpose.msra.mxu0 0
        %1466 = vmatprep.mubr.bf16.mxu0 0
        %1467 = vmatmul.mubr.bf16.gmra.mrb[0].mxu0 %v1429
        %v1468 = vpop.f32.mrb[0].mxu0
        %v1469 = vadd.f32 0.0, %v1468
        %v1470 = vpop.f32.mrb[0].mxu0
        %v1471 = vpop.f32.mrb[0].mxu0
        %v1472 = vadd.f32 0.0, %v1471
        %v1473 = vpop.f32.mrb[0].mxu0
        %1474 = vdwg.mxu0
        %1476 = vrot.lane.b32.xlu0 %v1270, 96
        %v1477 = vpop.permute.xlu0 %1476
        %v1479 = vsel %vm1277, %v1270, 0
        %v1482 = vsel %vm1277, %v1477, 0
        %1484 = vmatprep.subr.bf16.mxu0 0
        %1485 = vmatpush1.bf16.xpose.msra.mxu0 %v1482
        %1486 = vmatprep.subr.bf16.mxu0 0
        %1487 = vmatpush1.bf16.xpose.msra.mxu0 0
        %1488 = vmatprep.subr.bf16.mxu0 0
        %1489 = vmatpush1.bf16.xpose.msra.mxu0 0
        %1490 = vmatprep.subr.bf16.mxu0 0
        %1491 = vmatpush1.bf16.xpose.msra.mxu0 0
        %1492 = vmatprep.subr.bf16.mxu0 0
        %1493 = vmatpush1.bf16.xpose.msra.mxu0 0
        %1494 = vmatprep.subr.bf16.mxu0 0
        %1495 = vmatpush1.bf16.xpose.msra.mxu0 0
        %1496 = vmatprep.subr.bf16.mxu0 0
        %1497 = vmatpush1.bf16.xpose.msra.mxu0 0
        %1498 = vmatprep.subr.bf16.mxu0 0
        %1499 = vmatpush1.bf16.xpose.msra.mxu0 0
        %1500 = vmatprep.subr.bf16.mxu0 0
        %1501 = vmatpush1.bf16.xpose.msra.mxu0 0
        %1502 = vmatprep.subr.bf16.mxu0 0
        %1503 = vmatpush1.bf16.xpose.msra.mxu0 0
        %1504 = vmatprep.subr.bf16.mxu0 0
        %1505 = vmatpush1.bf16.xpose.msra.mxu0 0
        %1506 = vmatprep.subr.bf16.mxu0 0
        %1507 = vmatpush1.bf16.xpose.msra.mxu0 0
        %1508 = vmatprep.subr.bf16.mxu0 0
        %1509 = vmatpush1.bf16.xpose.msra.mxu0 0
        %1510 = vmatprep.subr.bf16.mxu0 0
        %1511 = vmatpush1.bf16.xpose.msra.mxu0 0
        %1512 = vmatprep.subr.bf16.mxu0 0
        %1513 = vmatpush1.bf16.xpose.msra.mxu0 0
        %1514 = vmatprep.subr.bf16.mxu0 0
        %1515 = vmatpush1.bf16.xpose.msra.mxu0 0
        %1516 = vmatprep.mubr.bf16.mxu0 0
        %1517 = vmatmul.mubr.bf16.gmra.mrb[0].mxu0 %v1479
        %v1518 = vpop.f32.mrb[0].mxu0
        %v1519 = vadd.f32 0.0, %v1518
        %v1520 = vpop.f32.mrb[0].mxu0
        %v1521 = vpop.f32.mrb[0].mxu0
        %v1522 = vadd.f32 0.0, %v1521
        %v1523 = vpop.f32.mrb[0].mxu0
        %1524 = vdwg.mxu0
        %1526 = vrot.lane.b32.xlu0 %v1271, 96
        %v1527 = vpop.permute.xlu0 %1526
        %v1529 = vsel %vm1277, %v1271, 0
        %v1532 = vsel %vm1277, %v1527, 0
        %1534 = vmatprep.subr.bf16.mxu0 0
        %1535 = vmatpush1.bf16.xpose.msra.mxu0 %v1532
        %1536 = vmatprep.subr.bf16.mxu0 0
        %1537 = vmatpush1.bf16.xpose.msra.mxu0 0
        %1538 = vmatprep.subr.bf16.mxu0 0
        %1539 = vmatpush1.bf16.xpose.msra.mxu0 0
        %1540 = vmatprep.subr.bf16.mxu0 0
        %1541 = vmatpush1.bf16.xpose.msra.mxu0 0
        %1542 = vmatprep.subr.bf16.mxu0 0
        %1543 = vmatpush1.bf16.xpose.msra.mxu0 0
        %1544 = vmatprep.subr.bf16.mxu0 0
        %1545 = vmatpush1.bf16.xpose.msra.mxu0 0
        %1546 = vmatprep.subr.bf16.mxu0 0
        %1547 = vmatpush1.bf16.xpose.msra.mxu0 0
        %1548 = vmatprep.subr.bf16.mxu0 0
        %1549 = vmatpush1.bf16.xpose.msra.mxu0 0
        %1550 = vmatprep.subr.bf16.mxu0 0
        %1551 = vmatpush1.bf16.xpose.msra.mxu0 0
        %1552 = vmatprep.subr.bf16.mxu0 0
        %1553 = vmatpush1.bf16.xpose.msra.mxu0 0
        %1554 = vmatprep.subr.bf16.mxu0 0
        %1555 = vmatpush1.bf16.xpose.msra.mxu0 0
        %1556 = vmatprep.subr.bf16.mxu0 0
        %1557 = vmatpush1.bf16.xpose.msra.mxu0 0
        %1558 = vmatprep.subr.bf16.mxu0 0
        %1559 = vmatpush1.bf16.xpose.msra.mxu0 0
        %1560 = vmatprep.subr.bf16.mxu0 0
        %1561 = vmatpush1.bf16.xpose.msra.mxu0 0
        %1562 = vmatprep.subr.bf16.mxu0 0
        %1563 = vmatpush1.bf16.xpose.msra.mxu0 0
        %1564 = vmatprep.subr.bf16.mxu0 0
        %1565 = vmatpush1.bf16.xpose.msra.mxu0 0
        %1566 = vmatprep.mubr.bf16.mxu0 0
        %1567 = vmatmul.mubr.bf16.gmra.mrb[0].mxu0 %v1529
        %v1568 = vpop.f32.mrb[0].mxu0
        %v1569 = vadd.f32 0.0, %v1568
        %v1570 = vpop.f32.mrb[0].mxu0
        %v1571 = vpop.f32.mrb[0].mxu0
        %v1572 = vadd.f32 0.0, %v1571
        %v1573 = vpop.f32.mrb[0].mxu0
        %1574 = vdwg.mxu0
        %1576 = vrot.lane.b32.xlu0 %v1272, 96
        %v1577 = vpop.permute.xlu0 %1576
        %v1579 = vsel %vm1277, %v1272, 0
        %v1582 = vsel %vm1277, %v1577, 0
        %1584 = vmatprep.subr.bf16.mxu0 0
        %1585 = vmatpush1.bf16.xpose.msra.mxu0 %v1582
        %1586 = vmatprep.subr.bf16.mxu0 0
        %1587 = vmatpush1.bf16.xpose.msra.mxu0 0
        %1588 = vmatprep.subr.bf16.mxu0 0
        %1589 = vmatpush1.bf16.xpose.msra.mxu0 0
        %1590 = vmatprep.subr.bf16.mxu0 0
        %1591 = vmatpush1.bf16.xpose.msra.mxu0 0
        %1592 = vmatprep.subr.bf16.mxu0 0
        %1593 = vmatpush1.bf16.xpose.msra.mxu0 0
        %1594 = vmatprep.subr.bf16.mxu0 0
        %1595 = vmatpush1.bf16.xpose.msra.mxu0 0
        %1596 = vmatprep.subr.bf16.mxu0 0
        %1597 = vmatpush1.bf16.xpose.msra.mxu0 0
        %1598 = vmatprep.subr.bf16.mxu0 0
        %1599 = vmatpush1.bf16.xpose.msra.mxu0 0
        %1600 = vmatprep.subr.bf16.mxu0 0
        %1601 = vmatpush1.bf16.xpose.msra.mxu0 0
        %1602 = vmatprep.subr.bf16.mxu0 0
        %1603 = vmatpush1.bf16.xpose.msra.mxu0 0
        %1604 = vmatprep.subr.bf16.mxu0 0
        %1605 = vmatpush1.bf16.xpose.msra.mxu0 0
        %1606 = vmatprep.subr.bf16.mxu0 0
        %1607 = vmatpush1.bf16.xpose.msra.mxu0 0
        %1608 = vmatprep.subr.bf16.mxu0 0
        %1609 = vmatpush1.bf16.xpose.msra.mxu0 0
        %1610 = vmatprep.subr.bf16.mxu0 0
        %1611 = vmatpush1.bf16.xpose.msra.mxu0 0
        %1612 = vmatprep.subr.bf16.mxu0 0
        %1613 = vmatpush1.bf16.xpose.msra.mxu0 0
        %1614 = vmatprep.subr.bf16.mxu0 0
        %1615 = vmatpush1.bf16.xpose.msra.mxu0 0
        %1616 = vmatprep.mubr.bf16.mxu0 0
        %1617 = vmatmul.mubr.bf16.gmra.mrb[0].mxu0 %v1579
        %v1618 = vpop.f32.mrb[0].mxu0
        %v1619 = vadd.f32 0.0, %v1618
        %v1620 = vpop.f32.mrb[0].mxu0
        %v1621 = vpop.f32.mrb[0].mxu0
        %v1622 = vadd.f32 0.0, %v1621
        %v1623 = vpop.f32.mrb[0].mxu0
        %1624 = vdwg.mxu0
        %1626 = vrot.lane.b32.xlu0 %v1273, 96
        %v1627 = vpop.permute.xlu0 %1626
        %v1629 = vsel %vm1277, %v1273, 0
        %v1632 = vsel %vm1277, %v1627, 0
        %1634 = vmatprep.subr.bf16.mxu0 0
        %1635 = vmatpush1.bf16.xpose.msra.mxu0 %v1632
        %1636 = vmatprep.subr.bf16.mxu0 0
        %1637 = vmatpush1.bf16.xpose.msra.mxu0 0
        %1638 = vmatprep.subr.bf16.mxu0 0
        %1639 = vmatpush1.bf16.xpose.msra.mxu0 0
        %1640 = vmatprep.subr.bf16.mxu0 0
        %1641 = vmatpush1.bf16.xpose.msra.mxu0 0
        %1642 = vmatprep.subr.bf16.mxu0 0
        %1643 = vmatpush1.bf16.xpose.msra.mxu0 0
        %1644 = vmatprep.subr.bf16.mxu0 0
        %1645 = vmatpush1.bf16.xpose.msra.mxu0 0
        %1646 = vmatprep.subr.bf16.mxu0 0
        %1647 = vmatpush1.bf16.xpose.msra.mxu0 0
        %1648 = vmatprep.subr.bf16.mxu0 0
        %1649 = vmatpush1.bf16.xpose.msra.mxu0 0
        %1650 = vmatprep.subr.bf16.mxu0 0
        %1651 = vmatpush1.bf16.xpose.msra.mxu0 0
        %1652 = vmatprep.subr.bf16.mxu0 0
        %1653 = vmatpush1.bf16.xpose.msra.mxu0 0
        %1654 = vmatprep.subr.bf16.mxu0 0
        %1655 = vmatpush1.bf16.xpose.msra.mxu0 0
        %1656 = vmatprep.subr.bf16.mxu0 0
        %1657 = vmatpush1.bf16.xpose.msra.mxu0 0
        %1658 = vmatprep.subr.bf16.mxu0 0
        %1659 = vmatpush1.bf16.xpose.msra.mxu0 0
        %1660 = vmatprep.subr.bf16.mxu0 0
        %1661 = vmatpush1.bf16.xpose.msra.mxu0 0
        %1662 = vmatprep.subr.bf16.mxu0 0
        %1663 = vmatpush1.bf16.xpose.msra.mxu0 0
        %1664 = vmatprep.subr.bf16.mxu0 0
        %1665 = vmatpush1.bf16.xpose.msra.mxu0 0
        %1666 = vmatprep.mubr.bf16.mxu0 0
        %1667 = vmatmul.mubr.bf16.gmra.mrb[0].mxu0 %v1629
        %v1668 = vpop.f32.mrb[0].mxu0
        %v1669 = vadd.f32 0.0, %v1668
        %v1670 = vpop.f32.mrb[0].mxu0
        %v1671 = vpop.f32.mrb[0].mxu0
        %v1672 = vadd.f32 0.0, %v1671
        %v1673 = vpop.f32.mrb[0].mxu0
        %1674 = vdwg.mxu0
        %vm1675 = vcmask 130048
        %v1676 = vsel %vm1675, %v1319, -inf
        %1677 = vmax.xlane.f32.xlu0 %v1676
        %v1678 = vpop.xlane.xlu0 %1677
        %v1679 = vsel %vm1675, %v1322, -inf
        %1680 = vmax.xlane.f32.xlu0 %v1679
        %v1681 = vpop.xlane.xlu0 %1680
        %v1682 = vsel %vm1675, %v1369, -inf
        %1683 = vmax.xlane.f32.xlu0 %v1682
        %v1684 = vpop.xlane.xlu0 %1683
        %v1685 = vsel %vm1675, %v1372, -inf
        %1686 = vmax.xlane.f32.xlu0 %v1685
        %v1687 = vpop.xlane.xlu0 %1686
        %v1688 = vsel %vm1675, %v1419, -inf
        %1689 = vmax.xlane.f32.xlu0 %v1688
        %v1690 = vpop.xlane.xlu0 %1689
        %v1691 = vsel %vm1675, %v1422, -inf
        %1692 = vmax.xlane.f32.xlu0 %v1691
        %v1693 = vpop.xlane.xlu0 %1692
        %v1694 = vsel %vm1675, %v1469, -inf
        %1695 = vmax.xlane.f32.xlu0 %v1694
        %v1696 = vpop.xlane.xlu0 %1695
        %v1697 = vsel %vm1675, %v1472, -inf
        %1698 = vmax.xlane.f32.xlu0 %v1697
        %v1699 = vpop.xlane.xlu0 %1698
        %v1700 = vsel %vm1675, %v1519, -inf
        %1701 = vmax.xlane.f32.xlu0 %v1700
        %v1702 = vpop.xlane.xlu0 %1701
        %v1703 = vsel %vm1675, %v1522, -inf
        %1704 = vmax.xlane.f32.xlu0 %v1703
        %v1705 = vpop.xlane.xlu0 %1704
        %v1706 = vsel %vm1675, %v1569, -inf
        %1707 = vmax.xlane.f32.xlu0 %v1706
        %v1708 = vpop.xlane.xlu0 %1707
        %v1709 = vsel %vm1675, %v1572, -inf
        %1710 = vmax.xlane.f32.xlu0 %v1709
        %v1711 = vpop.xlane.xlu0 %1710
        %v1712 = vsel %vm1675, %v1619, -inf
        %1713 = vmax.xlane.f32.xlu0 %v1712
        %v1714 = vpop.xlane.xlu0 %1713
        %v1715 = vsel %vm1675, %v1622, -inf
        %1716 = vmax.xlane.f32.xlu0 %v1715
        %v1717 = vpop.xlane.xlu0 %1716
        %v1718 = vsel %vm1675, %v1669, -inf
        %1719 = vmax.xlane.f32.xlu0 %v1718
        %v1720 = vpop.xlane.xlu0 %1719
        %v1721 = vsel %vm1675, %v1672, -inf
        %1722 = vmax.xlane.f32.xlu0 %v1721
        %v1723 = vpop.xlane.xlu0 %1722
        %v1724 = vsub.f32 %v1319, %v1678
        %v1725 = vsub.f32 %v1322, %v1681
        %v1726 = vsub.f32 %v1369, %v1684
        %v1727 = vsub.f32 %v1372, %v1687
        %v1728 = vsub.f32 %v1419, %v1690
        %v1729 = vsub.f32 %v1422, %v1693
        %v1730 = vsub.f32 %v1469, %v1696
        %v1731 = vsub.f32 %v1472, %v1699
        %v1732 = vsub.f32 %v1519, %v1702
        %v1733 = vsub.f32 %v1522, %v1705
        %v1734 = vsub.f32 %v1569, %v1708
        %v1735 = vsub.f32 %v1572, %v1711
        %v1736 = vsub.f32 %v1619, %v1714
        %v1737 = vsub.f32 %v1622, %v1717
        %v1738 = vsub.f32 %v1669, %v1720
        %v1739 = vsub.f32 %v1672, %v1723
        %v1740 = vmul.f32 %v1724, 1.442695
        %v1741 = vpow.pop %v1740
        %v1742 = vmul.f32 %v1725, 1.442695
        %v1743 = vpow.pop %v1742
        %v1744 = vmul.f32 %v1726, 1.442695
        %v1745 = vpow.pop %v1744
        %v1746 = vmul.f32 %v1727, 1.442695
        %v1747 = vpow.pop %v1746
        %v1748 = vmul.f32 %v1728, 1.442695
        %v1749 = vpow.pop %v1748
        %v1750 = vmul.f32 %v1729, 1.442695
        %v1751 = vpow.pop %v1750
        %v1752 = vmul.f32 %v1730, 1.442695
        %v1753 = vpow.pop %v1752
        %v1754 = vmul.f32 %v1731, 1.442695
        %v1755 = vpow.pop %v1754
        %v1756 = vmul.f32 %v1732, 1.442695
        %v1757 = vpow.pop %v1756
        %v1758 = vmul.f32 %v1733, 1.442695
        %v1759 = vpow.pop %v1758
        %v1760 = vmul.f32 %v1734, 1.442695
        %v1761 = vpow.pop %v1760
        %v1762 = vmul.f32 %v1735, 1.442695
        %v1763 = vpow.pop %v1762
        %v1764 = vmul.f32 %v1736, 1.442695
        %v1765 = vpow.pop %v1764
        %v1766 = vmul.f32 %v1737, 1.442695
        %v1767 = vpow.pop %v1766
        %v1768 = vmul.f32 %v1738, 1.442695
        %v1769 = vpow.pop %v1768
        %v1770 = vmul.f32 %v1739, 1.442695
        %v1771 = vpow.pop %v1770
        %v1772 = vsel %vm1675, %v1741, 0.0
        %1773 = vadd.xlane.f32.xlu0 %v1772
        %v1774 = vpop.xlane.xlu0 %1773
        %v1775 = vsel %vm1675, %v1743, 0.0
        %1776 = vadd.xlane.f32.xlu0 %v1775
        %v1777 = vpop.xlane.xlu0 %1776
        %v1778 = vsel %vm1675, %v1745, 0.0
        %1779 = vadd.xlane.f32.xlu0 %v1778
        %v1780 = vpop.xlane.xlu0 %1779
        %v1781 = vsel %vm1675, %v1747, 0.0
        %1782 = vadd.xlane.f32.xlu0 %v1781
        %v1783 = vpop.xlane.xlu0 %1782
        %v1784 = vsel %vm1675, %v1749, 0.0
        %1785 = vadd.xlane.f32.xlu0 %v1784
        %v1786 = vpop.xlane.xlu0 %1785
        %v1787 = vsel %vm1675, %v1751, 0.0
        %1788 = vadd.xlane.f32.xlu0 %v1787
        %v1789 = vpop.xlane.xlu0 %1788
        %v1790 = vsel %vm1675, %v1753, 0.0
        %1791 = vadd.xlane.f32.xlu0 %v1790
        %v1792 = vpop.xlane.xlu0 %1791
        %v1793 = vsel %vm1675, %v1755, 0.0
        %1794 = vadd.xlane.f32.xlu0 %v1793
        %v1795 = vpop.xlane.xlu0 %1794
        %v1796 = vsel %vm1675, %v1757, 0.0
        %1797 = vadd.xlane.f32.xlu0 %v1796
        %v1798 = vpop.xlane.xlu0 %1797
        %v1799 = vsel %vm1675, %v1759, 0.0
        %1800 = vadd.xlane.f32.xlu0 %v1799
        %v1801 = vpop.xlane.xlu0 %1800
        %v1802 = vsel %vm1675, %v1761, 0.0
        %1803 = vadd.xlane.f32.xlu0 %v1802
        %v1804 = vpop.xlane.xlu0 %1803
        %v1805 = vsel %vm1675, %v1763, 0.0
        %1806 = vadd.xlane.f32.xlu0 %v1805
        %v1807 = vpop.xlane.xlu0 %1806
        %v1808 = vsel %vm1675, %v1765, 0.0
        %1809 = vadd.xlane.f32.xlu0 %v1808
        %v1810 = vpop.xlane.xlu0 %1809
        %v1811 = vsel %vm1675, %v1767, 0.0
        %1812 = vadd.xlane.f32.xlu0 %v1811
        %v1813 = vpop.xlane.xlu0 %1812
        %v1814 = vsel %vm1675, %v1769, 0.0
        %1815 = vadd.xlane.f32.xlu0 %v1814
        %v1816 = vpop.xlane.xlu0 %1815
        %v1817 = vsel %vm1675, %v1771, 0.0
        %1818 = vadd.xlane.f32.xlu0 %v1817
        %v1819 = vpop.xlane.xlu0 %1818
        %v1820 = vrcp.pop %v1774
        %v1821 = vmul.f32 %v1741, %v1820
        %v1822 = vrcp.pop %v1777
        %v1823 = vmul.f32 %v1743, %v1822
        %v1824 = vrcp.pop %v1780
        %v1825 = vmul.f32 %v1745, %v1824
        %v1826 = vrcp.pop %v1783
        %v1827 = vmul.f32 %v1747, %v1826
        %v1828 = vrcp.pop %v1786
        %v1829 = vmul.f32 %v1749, %v1828
        %v1830 = vrcp.pop %v1789
        %v1831 = vmul.f32 %v1751, %v1830
        %v1832 = vrcp.pop %v1792
        %v1833 = vmul.f32 %v1753, %v1832
        %v1834 = vrcp.pop %v1795
        %v1835 = vmul.f32 %v1755, %v1834
        %v1836 = vrcp.pop %v1798
        %v1837 = vmul.f32 %v1757, %v1836
        %v1838 = vrcp.pop %v1801
        %v1839 = vmul.f32 %v1759, %v1838
        %v1840 = vrcp.pop %v1804
        %v1841 = vmul.f32 %v1761, %v1840
        %v1842 = vrcp.pop %v1807
        %v1843 = vmul.f32 %v1763, %v1842
        %v1844 = vrcp.pop %v1810
        %v1845 = vmul.f32 %v1765, %v1844
        %v1846 = vrcp.pop %v1813
        %v1847 = vmul.f32 %v1767, %v1846
        %v1848 = vrcp.pop %v1816
        %v1849 = vmul.f32 %v1769, %v1848
        %v1850 = vrcp.pop %v1819
        %v1851 = vmul.f32 %v1771, %v1850
        %v1852 = vpack.c.bf16 %v1823, %v1821
        %v1853 = vpack.c.bf16 %v1827, %v1825
        %v1854 = vpack.c.bf16 %v1831, %v1829
        %v1855 = vpack.c.bf16 %v1835, %v1833
        %v1856 = vpack.c.bf16 %v1839, %v1837
        %v1857 = vpack.c.bf16 %v1843, %v1841
        %v1858 = vpack.c.bf16 %v1847, %v1845
        %v1859 = vpack.c.bf16 %v1851, %v1849
        %1860 = vrot.lane.b32.xlu0 %v1266, 64
        %v1861 = vpop.permute.xlu0 %1860
        %v1864 = vsel %vm1675, %v1852, 0
        %1866 = vmatprep.subr.bf16.mxu0 0
        %1867 = vmatpush1.bf16.msra.mxu0 %v1861
        %1868 = vmatprep.subr.bf16.mxu0 0
        %1869 = vmatpush1.bf16.msra.mxu0 0
        %1870 = vmatprep.subr.bf16.mxu0 0
        %1871 = vmatpush1.bf16.msra.mxu0 0
        %1872 = vmatprep.subr.bf16.mxu0 0
        %1873 = vmatpush1.bf16.msra.mxu0 0
        %1874 = vmatprep.subr.bf16.mxu0 0
        %1875 = vmatpush1.bf16.msra.mxu0 0
        %1876 = vmatprep.subr.bf16.mxu0 0
        %1877 = vmatpush1.bf16.msra.mxu0 0
        %1878 = vmatprep.subr.bf16.mxu0 0
        %1879 = vmatpush1.bf16.msra.mxu0 0
        %1880 = vmatprep.subr.bf16.mxu0 0
        %1881 = vmatpush1.bf16.msra.mxu0 0
        %1882 = vmatprep.subr.bf16.mxu0 0
        %1883 = vmatpush1.bf16.msra.mxu0 0
        %1884 = vmatprep.subr.bf16.mxu0 0
        %1885 = vmatpush1.bf16.msra.mxu0 0
        %1886 = vmatprep.subr.bf16.mxu0 0
        %1887 = vmatpush1.bf16.msra.mxu0 0
        %1888 = vmatprep.subr.bf16.mxu0 0
        %1889 = vmatpush1.bf16.msra.mxu0 0
        %1890 = vmatprep.subr.bf16.mxu0 0
        %1891 = vmatpush1.bf16.msra.mxu0 0
        %1892 = vmatprep.subr.bf16.mxu0 0
        %1893 = vmatpush1.bf16.msra.mxu0 0
        %1894 = vmatprep.subr.bf16.mxu0 0
        %1895 = vmatpush1.bf16.msra.mxu0 0
        %1896 = vmatprep.subr.bf16.mxu0 0
        %1897 = vmatpush1.bf16.msra.mxu0 0
        %1898 = vmatprep.mubr.bf16.mxu0 0
        %1899 = vmatmul.mubr.bf16.gmra.mrb[0].mxu0 %v1864
        %v1900 = vpop.f32.mrb[0].mxu0
        %v1901 = vadd.f32 0.0, %v1900
        %v1902 = vpop.f32.mrb[0].mxu0
        %v1903 = vpop.f32.mrb[0].mxu0
        %v1904 = vadd.f32 0.0, %v1903
        %v1905 = vpop.f32.mrb[0].mxu0
        %1906 = vdwg.mxu0
        %1907 = vrot.lane.b32.xlu0 %v1267, 64
        %v1908 = vpop.permute.xlu0 %1907
        %v1911 = vsel %vm1675, %v1853, 0
        %1913 = vmatprep.subr.bf16.mxu0 0
        %1914 = vmatpush1.bf16.msra.mxu0 %v1908
        %1915 = vmatprep.subr.bf16.mxu0 0
        %1916 = vmatpush1.bf16.msra.mxu0 0
        %1917 = vmatprep.subr.bf16.mxu0 0
        %1918 = vmatpush1.bf16.msra.mxu0 0
        %1919 = vmatprep.subr.bf16.mxu0 0
        %1920 = vmatpush1.bf16.msra.mxu0 0
        %1921 = vmatprep.subr.bf16.mxu0 0
        %1922 = vmatpush1.bf16.msra.mxu0 0
        %1923 = vmatprep.subr.bf16.mxu0 0
        %1924 = vmatpush1.bf16.msra.mxu0 0
        %1925 = vmatprep.subr.bf16.mxu0 0
        %1926 = vmatpush1.bf16.msra.mxu0 0
        %1927 = vmatprep.subr.bf16.mxu0 0
        %1928 = vmatpush1.bf16.msra.mxu0 0
        %1929 = vmatprep.subr.bf16.mxu0 0
        %1930 = vmatpush1.bf16.msra.mxu0 0
        %1931 = vmatprep.subr.bf16.mxu0 0
        %1932 = vmatpush1.bf16.msra.mxu0 0
        %1933 = vmatprep.subr.bf16.mxu0 0
        %1934 = vmatpush1.bf16.msra.mxu0 0
        %1935 = vmatprep.subr.bf16.mxu0 0
        %1936 = vmatpush1.bf16.msra.mxu0 0
        %1937 = vmatprep.subr.bf16.mxu0 0
        %1938 = vmatpush1.bf16.msra.mxu0 0
        %1939 = vmatprep.subr.bf16.mxu0 0
        %1940 = vmatpush1.bf16.msra.mxu0 0
        %1941 = vmatprep.subr.bf16.mxu0 0
        %1942 = vmatpush1.bf16.msra.mxu0 0
        %1943 = vmatprep.subr.bf16.mxu0 0
        %1944 = vmatpush1.bf16.msra.mxu0 0
        %1945 = vmatprep.mubr.bf16.mxu0 0
        %1946 = vmatmul.mubr.bf16.gmra.mrb[0].mxu0 %v1911
        %v1947 = vpop.f32.mrb[0].mxu0
        %v1948 = vadd.f32 0.0, %v1947
        %v1949 = vpop.f32.mrb[0].mxu0
        %v1950 = vpop.f32.mrb[0].mxu0
        %v1951 = vadd.f32 0.0, %v1950
        %v1952 = vpop.f32.mrb[0].mxu0
        %1953 = vdwg.mxu0
        %1954 = vrot.lane.b32.xlu0 %v1268, 64
        %v1955 = vpop.permute.xlu0 %1954
        %v1958 = vsel %vm1675, %v1854, 0
        %1960 = vmatprep.subr.bf16.mxu0 0
        %1961 = vmatpush1.bf16.msra.mxu0 %v1955
        %1962 = vmatprep.subr.bf16.mxu0 0
        %1963 = vmatpush1.bf16.msra.mxu0 0
        %1964 = vmatprep.subr.bf16.mxu0 0
        %1965 = vmatpush1.bf16.msra.mxu0 0
        %1966 = vmatprep.subr.bf16.mxu0 0
        %1967 = vmatpush1.bf16.msra.mxu0 0
        %1968 = vmatprep.subr.bf16.mxu0 0
        %1969 = vmatpush1.bf16.msra.mxu0 0
        %1970 = vmatprep.subr.bf16.mxu0 0
        %1971 = vmatpush1.bf16.msra.mxu0 0
        %1972 = vmatprep.subr.bf16.mxu0 0
        %1973 = vmatpush1.bf16.msra.mxu0 0
        %1974 = vmatprep.subr.bf16.mxu0 0
        %1975 = vmatpush1.bf16.msra.mxu0 0
        %1976 = vmatprep.subr.bf16.mxu0 0
        %1977 = vmatpush1.bf16.msra.mxu0 0
        %1978 = vmatprep.subr.bf16.mxu0 0
        %1979 = vmatpush1.bf16.msra.mxu0 0
        %1980 = vmatprep.subr.bf16.mxu0 0
        %1981 = vmatpush1.bf16.msra.mxu0 0
        %1982 = vmatprep.subr.bf16.mxu0 0
        %1983 = vmatpush1.bf16.msra.mxu0 0
        %1984 = vmatprep.subr.bf16.mxu0 0
        %1985 = vmatpush1.bf16.msra.mxu0 0
        %1986 = vmatprep.subr.bf16.mxu0 0
        %1987 = vmatpush1.bf16.msra.mxu0 0
        %1988 = vmatprep.subr.bf16.mxu0 0
        %1989 = vmatpush1.bf16.msra.mxu0 0
        %1990 = vmatprep.subr.bf16.mxu0 0
        %1991 = vmatpush1.bf16.msra.mxu0 0
        %1992 = vmatprep.mubr.bf16.mxu0 0
        %1993 = vmatmul.mubr.bf16.gmra.mrb[0].mxu0 %v1958
        %v1994 = vpop.f32.mrb[0].mxu0
        %v1995 = vadd.f32 0.0, %v1994
        %v1996 = vpop.f32.mrb[0].mxu0
        %v1997 = vpop.f32.mrb[0].mxu0
        %v1998 = vadd.f32 0.0, %v1997
        %v1999 = vpop.f32.mrb[0].mxu0
        %2000 = vdwg.mxu0
        %2001 = vrot.lane.b32.xlu0 %v1269, 64
        %v2002 = vpop.permute.xlu0 %2001
        %v2005 = vsel %vm1675, %v1855, 0
        %2007 = vmatprep.subr.bf16.mxu0 0
        %2008 = vmatpush1.bf16.msra.mxu0 %v2002
        %2009 = vmatprep.subr.bf16.mxu0 0
        %2010 = vmatpush1.bf16.msra.mxu0 0
        %2011 = vmatprep.subr.bf16.mxu0 0
        %2012 = vmatpush1.bf16.msra.mxu0 0
        %2013 = vmatprep.subr.bf16.mxu0 0
        %2014 = vmatpush1.bf16.msra.mxu0 0
        %2015 = vmatprep.subr.bf16.mxu0 0
        %2016 = vmatpush1.bf16.msra.mxu0 0
        %2017 = vmatprep.subr.bf16.mxu0 0
        %2018 = vmatpush1.bf16.msra.mxu0 0
        %2019 = vmatprep.subr.bf16.mxu0 0
        %2020 = vmatpush1.bf16.msra.mxu0 0
        %2021 = vmatprep.subr.bf16.mxu0 0
        %2022 = vmatpush1.bf16.msra.mxu0 0
        %2023 = vmatprep.subr.bf16.mxu0 0
        %2024 = vmatpush1.bf16.msra.mxu0 0
        %2025 = vmatprep.subr.bf16.mxu0 0
        %2026 = vmatpush1.bf16.msra.mxu0 0
        %2027 = vmatprep.subr.bf16.mxu0 0
        %2028 = vmatpush1.bf16.msra.mxu0 0
        %2029 = vmatprep.subr.bf16.mxu0 0
        %2030 = vmatpush1.bf16.msra.mxu0 0
        %2031 = vmatprep.subr.bf16.mxu0 0
        %2032 = vmatpush1.bf16.msra.mxu0 0
        %2033 = vmatprep.subr.bf16.mxu0 0
        %2034 = vmatpush1.bf16.msra.mxu0 0
        %2035 = vmatprep.subr.bf16.mxu0 0
        %2036 = vmatpush1.bf16.msra.mxu0 0
        %2037 = vmatprep.subr.bf16.mxu0 0
        %2038 = vmatpush1.bf16.msra.mxu0 0
        %2039 = vmatprep.mubr.bf16.mxu0 0
        %2040 = vmatmul.mubr.bf16.gmra.mrb[0].mxu0 %v2005
        %v2041 = vpop.f32.mrb[0].mxu0
        %v2042 = vadd.f32 0.0, %v2041
        %v2043 = vpop.f32.mrb[0].mxu0
        %v2044 = vpop.f32.mrb[0].mxu0
        %v2045 = vadd.f32 0.0, %v2044
        %v2046 = vpop.f32.mrb[0].mxu0
        %2047 = vdwg.mxu0
        %2048 = vrot.lane.b32.xlu0 %v1270, 64
        %v2049 = vpop.permute.xlu0 %2048
        %v2052 = vsel %vm1675, %v1856, 0
        %2054 = vmatprep.subr.bf16.mxu0 0
        %2055 = vmatpush1.bf16.msra.mxu0 %v2049
        %2056 = vmatprep.subr.bf16.mxu0 0
        %2057 = vmatpush1.bf16.msra.mxu0 0
        %2058 = vmatprep.subr.bf16.mxu0 0
        %2059 = vmatpush1.bf16.msra.mxu0 0
        %2060 = vmatprep.subr.bf16.mxu0 0
        %2061 = vmatpush1.bf16.msra.mxu0 0
        %2062 = vmatprep.subr.bf16.mxu0 0
        %2063 = vmatpush1.bf16.msra.mxu0 0
        %2064 = vmatprep.subr.bf16.mxu0 0
        %2065 = vmatpush1.bf16.msra.mxu0 0
        %2066 = vmatprep.subr.bf16.mxu0 0
        %2067 = vmatpush1.bf16.msra.mxu0 0
        %2068 = vmatprep.subr.bf16.mxu0 0
        %2069 = vmatpush1.bf16.msra.mxu0 0
        %2070 = vmatprep.subr.bf16.mxu0 0
        %2071 = vmatpush1.bf16.msra.mxu0 0
        %2072 = vmatprep.subr.bf16.mxu0 0
        %2073 = vmatpush1.bf16.msra.mxu0 0
        %2074 = vmatprep.subr.bf16.mxu0 0
        %2075 = vmatpush1.bf16.msra.mxu0 0
        %2076 = vmatprep.subr.bf16.mxu0 0
        %2077 = vmatpush1.bf16.msra.mxu0 0
        %2078 = vmatprep.subr.bf16.mxu0 0
        %2079 = vmatpush1.bf16.msra.mxu0 0
        %2080 = vmatprep.subr.bf16.mxu0 0
        %2081 = vmatpush1.bf16.msra.mxu0 0
        %2082 = vmatprep.subr.bf16.mxu0 0
        %2083 = vmatpush1.bf16.msra.mxu0 0
        %2084 = vmatprep.subr.bf16.mxu0 0
        %2085 = vmatpush1.bf16.msra.mxu0 0
        %2086 = vmatprep.mubr.bf16.mxu0 0
        %2087 = vmatmul.mubr.bf16.gmra.mrb[0].mxu0 %v2052
        %v2088 = vpop.f32.mrb[0].mxu0
        %v2089 = vadd.f32 0.0, %v2088
        %v2090 = vpop.f32.mrb[0].mxu0
        %v2091 = vpop.f32.mrb[0].mxu0
        %v2092 = vadd.f32 0.0, %v2091
        %v2093 = vpop.f32.mrb[0].mxu0
        %2094 = vdwg.mxu0
        %2095 = vrot.lane.b32.xlu0 %v1271, 64
        %v2096 = vpop.permute.xlu0 %2095
        %v2099 = vsel %vm1675, %v1857, 0
        %2101 = vmatprep.subr.bf16.mxu0 0
        %2102 = vmatpush1.bf16.msra.mxu0 %v2096
        %2103 = vmatprep.subr.bf16.mxu0 0
        %2104 = vmatpush1.bf16.msra.mxu0 0
        %2105 = vmatprep.subr.bf16.mxu0 0
        %2106 = vmatpush1.bf16.msra.mxu0 0
        %2107 = vmatprep.subr.bf16.mxu0 0
        %2108 = vmatpush1.bf16.msra.mxu0 0
        %2109 = vmatprep.subr.bf16.mxu0 0
        %2110 = vmatpush1.bf16.msra.mxu0 0
        %2111 = vmatprep.subr.bf16.mxu0 0
        %2112 = vmatpush1.bf16.msra.mxu0 0
        %2113 = vmatprep.subr.bf16.mxu0 0
        %2114 = vmatpush1.bf16.msra.mxu0 0
        %2115 = vmatprep.subr.bf16.mxu0 0
        %2116 = vmatpush1.bf16.msra.mxu0 0
        %2117 = vmatprep.subr.bf16.mxu0 0
        %2118 = vmatpush1.bf16.msra.mxu0 0
        %2119 = vmatprep.subr.bf16.mxu0 0
        %2120 = vmatpush1.bf16.msra.mxu0 0
        %2121 = vmatprep.subr.bf16.mxu0 0
        %2122 = vmatpush1.bf16.msra.mxu0 0
        %2123 = vmatprep.subr.bf16.mxu0 0
        %2124 = vmatpush1.bf16.msra.mxu0 0
        %2125 = vmatprep.subr.bf16.mxu0 0
        %2126 = vmatpush1.bf16.msra.mxu0 0
        %2127 = vmatprep.subr.bf16.mxu0 0
        %2128 = vmatpush1.bf16.msra.mxu0 0
        %2129 = vmatprep.subr.bf16.mxu0 0
        %2130 = vmatpush1.bf16.msra.mxu0 0
        %2131 = vmatprep.subr.bf16.mxu0 0
        %2132 = vmatpush1.bf16.msra.mxu0 0
        %2133 = vmatprep.mubr.bf16.mxu0 0
        %2134 = vmatmul.mubr.bf16.gmra.mrb[0].mxu0 %v2099
        %v2135 = vpop.f32.mrb[0].mxu0
        %v2136 = vadd.f32 0.0, %v2135
        %v2137 = vpop.f32.mrb[0].mxu0
        %v2138 = vpop.f32.mrb[0].mxu0
        %v2139 = vadd.f32 0.0, %v2138
        %v2140 = vpop.f32.mrb[0].mxu0
        %2141 = vdwg.mxu0
        %2142 = vrot.lane.b32.xlu0 %v1272, 64
        %v2143 = vpop.permute.xlu0 %2142
        %v2146 = vsel %vm1675, %v1858, 0
        %2148 = vmatprep.subr.bf16.mxu0 0
        %2149 = vmatpush1.bf16.msra.mxu0 %v2143
        %2150 = vmatprep.subr.bf16.mxu0 0
        %2151 = vmatpush1.bf16.msra.mxu0 0
        %2152 = vmatprep.subr.bf16.mxu0 0
        %2153 = vmatpush1.bf16.msra.mxu0 0
        %2154 = vmatprep.subr.bf16.mxu0 0
        %2155 = vmatpush1.bf16.msra.mxu0 0
        %2156 = vmatprep.subr.bf16.mxu0 0
        %2157 = vmatpush1.bf16.msra.mxu0 0
        %2158 = vmatprep.subr.bf16.mxu0 0
        %2159 = vmatpush1.bf16.msra.mxu0 0
        %2160 = vmatprep.subr.bf16.mxu0 0
        %2161 = vmatpush1.bf16.msra.mxu0 0
        %2162 = vmatprep.subr.bf16.mxu0 0
        %2163 = vmatpush1.bf16.msra.mxu0 0
        %2164 = vmatprep.subr.bf16.mxu0 0
        %2165 = vmatpush1.bf16.msra.mxu0 0
        %2166 = vmatprep.subr.bf16.mxu0 0
        %2167 = vmatpush1.bf16.msra.mxu0 0
        %2168 = vmatprep.subr.bf16.mxu0 0
        %2169 = vmatpush1.bf16.msra.mxu0 0
        %2170 = vmatprep.subr.bf16.mxu0 0
        %2171 = vmatpush1.bf16.msra.mxu0 0
        %2172 = vmatprep.subr.bf16.mxu0 0
        %2173 = vmatpush1.bf16.msra.mxu0 0
        %2174 = vmatprep.subr.bf16.mxu0 0
        %2175 = vmatpush1.bf16.msra.mxu0 0
        %2176 = vmatprep.subr.bf16.mxu0 0
        %2177 = vmatpush1.bf16.msra.mxu0 0
        %2178 = vmatprep.subr.bf16.mxu0 0
        %2179 = vmatpush1.bf16.msra.mxu0 0
        %2180 = vmatprep.mubr.bf16.mxu0 0
        %2181 = vmatmul.mubr.bf16.gmra.mrb[0].mxu0 %v2146
        %v2182 = vpop.f32.mrb[0].mxu0
        %v2183 = vadd.f32 0.0, %v2182
        %v2184 = vpop.f32.mrb[0].mxu0
        %v2185 = vpop.f32.mrb[0].mxu0
        %v2186 = vadd.f32 0.0, %v2185
        %v2187 = vpop.f32.mrb[0].mxu0
        %2188 = vdwg.mxu0
        %2189 = vrot.lane.b32.xlu0 %v1273, 64
        %v2190 = vpop.permute.xlu0 %2189
        %v2193 = vsel %vm1675, %v1859, 0
        %2195 = vmatprep.subr.bf16.mxu0 0
        %2196 = vmatpush1.bf16.msra.mxu0 %v2190
        %2197 = vmatprep.subr.bf16.mxu0 0
        %2198 = vmatpush1.bf16.msra.mxu0 0
        %2199 = vmatprep.subr.bf16.mxu0 0
        %2200 = vmatpush1.bf16.msra.mxu0 0
        %2201 = vmatprep.subr.bf16.mxu0 0
        %2202 = vmatpush1.bf16.msra.mxu0 0
        %2203 = vmatprep.subr.bf16.mxu0 0
        %2204 = vmatpush1.bf16.msra.mxu0 0
        %2205 = vmatprep.subr.bf16.mxu0 0
        %2206 = vmatpush1.bf16.msra.mxu0 0
        %2207 = vmatprep.subr.bf16.mxu0 0
        %2208 = vmatpush1.bf16.msra.mxu0 0
        %2209 = vmatprep.subr.bf16.mxu0 0
        %2210 = vmatpush1.bf16.msra.mxu0 0
        %2211 = vmatprep.subr.bf16.mxu0 0
        %2212 = vmatpush1.bf16.msra.mxu0 0
        %2213 = vmatprep.subr.bf16.mxu0 0
        %2214 = vmatpush1.bf16.msra.mxu0 0
        %2215 = vmatprep.subr.bf16.mxu0 0
        %2216 = vmatpush1.bf16.msra.mxu0 0
        %2217 = vmatprep.subr.bf16.mxu0 0
        %2218 = vmatpush1.bf16.msra.mxu0 0
        %2219 = vmatprep.subr.bf16.mxu0 0
        %2220 = vmatpush1.bf16.msra.mxu0 0
        %2221 = vmatprep.subr.bf16.mxu0 0
        %2222 = vmatpush1.bf16.msra.mxu0 0
        %2223 = vmatprep.subr.bf16.mxu0 0
        %2224 = vmatpush1.bf16.msra.mxu0 0
        %2225 = vmatprep.subr.bf16.mxu0 0
        %2226 = vmatpush1.bf16.msra.mxu0 0
        %2227 = vmatprep.mubr.bf16.mxu0 0
        %2228 = vmatmul.mubr.bf16.gmra.mrb[0].mxu0 %v2193
        %v2229 = vpop.f32.mrb[0].mxu0
        %v2230 = vadd.f32 0.0, %v2229
        %v2231 = vpop.f32.mrb[0].mxu0
        %v2232 = vpop.f32.mrb[0].mxu0
        %v2233 = vadd.f32 0.0, %v2232
        %v2234 = vpop.f32.mrb[0].mxu0
        %2235 = vdwg.mxu0
        %2236 = vst.msk [vmem:[#allocation2] sm:$0xff] %vm1277, %v1901
        %2237 = vst.msk [vmem:[#allocation2 + $0x8] sm:$0xff] %vm1277, %v1904
        %2238 = vst.msk [vmem:[#allocation2 + $0x10] sm:$0xff] %vm1277, %v1948
        %2239 = vst.msk [vmem:[#allocation2 + $0x18] sm:$0xff] %vm1277, %v1951
        %2240 = vst.msk [vmem:[#allocation2 + $0x20] sm:$0xff] %vm1277, %v1995
        %2241 = vst.msk [vmem:[#allocation2 + $0x28] sm:$0xff] %vm1277, %v1998
        %2242 = vst.msk [vmem:[#allocation2 + $0x30] sm:$0xff] %vm1277, %v2042
        %2243 = vst.msk [vmem:[#allocation2 + $0x38] sm:$0xff] %vm1277, %v2045
        %2244 = vst.msk [vmem:[#allocation2 + $0x40] sm:$0xff] %vm1277, %v2089
        %2245 = vst.msk [vmem:[#allocation2 + $0x48] sm:$0xff] %vm1277, %v2092
        %2246 = vst.msk [vmem:[#allocation2 + $0x50] sm:$0xff] %vm1277, %v2136
        %2247 = vst.msk [vmem:[#allocation2 + $0x58] sm:$0xff] %vm1277, %v2139
        %2248 = vst.msk [vmem:[#allocation2 + $0x60] sm:$0xff] %vm1277, %v2183
        %2249 = vst.msk [vmem:[#allocation2 + $0x68] sm:$0xff] %vm1277, %v2186
        %2250 = vst.msk [vmem:[#allocation2 + $0x70] sm:$0xff] %vm1277, %v2230
        %2251 = vst.msk [vmem:[#allocation2 + $0x78] sm:$0xff] %vm1277, %v2233
        %2252 = vrot.lane.b32.xlu0 %v1266, 120
        %v2253 = vpop.permute.xlu0 %2252
        %2254 = vrot.lane.b32.xlu0 %v1266, 88
        %v2255 = vpop.permute.xlu0 %2254
        %v2257 = vsel %vm1277, %v2253, 0
        %v2260 = vsel %vm1277, %v2255, 0
        %2262 = vmatprep.subr.bf16.mxu0 0
        %2263 = vmatpush1.bf16.xpose.msra.mxu0 %v2260
        %2264 = vmatprep.subr.bf16.mxu0 0
        %2265 = vmatpush1.bf16.xpose.msra.mxu0 0
        %2266 = vmatprep.subr.bf16.mxu0 0
        %2267 = vmatpush1.bf16.xpose.msra.mxu0 0
        %2268 = vmatprep.subr.bf16.mxu0 0
        %2269 = vmatpush1.bf16.xpose.msra.mxu0 0
        %2270 = vmatprep.subr.bf16.mxu0 0
        %2271 = vmatpush1.bf16.xpose.msra.mxu0 0
        %2272 = vmatprep.subr.bf16.mxu0 0
        %2273 = vmatpush1.bf16.xpose.msra.mxu0 0
        %2274 = vmatprep.subr.bf16.mxu0 0
        %2275 = vmatpush1.bf16.xpose.msra.mxu0 0
        %2276 = vmatprep.subr.bf16.mxu0 0
        %2277 = vmatpush1.bf16.xpose.msra.mxu0 0
        %2278 = vmatprep.subr.bf16.mxu0 0
        %2279 = vmatpush1.bf16.xpose.msra.mxu0 0
        %2280 = vmatprep.subr.bf16.mxu0 0
        %2281 = vmatpush1.bf16.xpose.msra.mxu0 0
        %2282 = vmatprep.subr.bf16.mxu0 0
        %2283 = vmatpush1.bf16.xpose.msra.mxu0 0
        %2284 = vmatprep.subr.bf16.mxu0 0
        %2285 = vmatpush1.bf16.xpose.msra.mxu0 0
        %2286 = vmatprep.subr.bf16.mxu0 0
        %2287 = vmatpush1.bf16.xpose.msra.mxu0 0
        %2288 = vmatprep.subr.bf16.mxu0 0
        %2289 = vmatpush1.bf16.xpose.msra.mxu0 0
        %2290 = vmatprep.subr.bf16.mxu0 0
        %2291 = vmatpush1.bf16.xpose.msra.mxu0 0
        %2292 = vmatprep.subr.bf16.mxu0 0
        %2293 = vmatpush1.bf16.xpose.msra.mxu0 0
        %2294 = vmatprep.mubr.bf16.mxu0 0
        %2295 = vmatmul.mubr.bf16.gmra.mrb[0].mxu0 %v2257
        %v2296 = vpop.f32.mrb[0].mxu0
        %v2297 = vadd.f32 0.0, %v2296
        %v2298 = vpop.f32.mrb[0].mxu0
        %v2299 = vpop.f32.mrb[0].mxu0
        %v2300 = vadd.f32 0.0, %v2299
        %v2301 = vpop.f32.mrb[0].mxu0
        %2302 = vdwg.mxu0
        %2303 = vrot.lane.b32.xlu0 %v1267, 120
        %v2304 = vpop.permute.xlu0 %2303
        %2305 = vrot.lane.b32.xlu0 %v1267, 88
        %v2306 = vpop.permute.xlu0 %2305
        %v2308 = vsel %vm1277, %v2304, 0
        %v2311 = vsel %vm1277, %v2306, 0
        %2313 = vmatprep.subr.bf16.mxu0 0
        %2314 = vmatpush1.bf16.xpose.msra.mxu0 %v2311
        %2315 = vmatprep.subr.bf16.mxu0 0
        %2316 = vmatpush1.bf16.xpose.msra.mxu0 0
        %2317 = vmatprep.subr.bf16.mxu0 0
        %2318 = vmatpush1.bf16.xpose.msra.mxu0 0
        %2319 = vmatprep.subr.bf16.mxu0 0
        %2320 = vmatpush1.bf16.xpose.msra.mxu0 0
        %2321 = vmatprep.subr.bf16.mxu0 0
        %2322 = vmatpush1.bf16.xpose.msra.mxu0 0
        %2323 = vmatprep.subr.bf16.mxu0 0
        %2324 = vmatpush1.bf16.xpose.msra.mxu0 0
        %2325 = vmatprep.subr.bf16.mxu0 0
        %2326 = vmatpush1.bf16.xpose.msra.mxu0 0
        %2327 = vmatprep.subr.bf16.mxu0 0
        %2328 = vmatpush1.bf16.xpose.msra.mxu0 0
        %2329 = vmatprep.subr.bf16.mxu0 0
        %2330 = vmatpush1.bf16.xpose.msra.mxu0 0
        %2331 = vmatprep.subr.bf16.mxu0 0
        %2332 = vmatpush1.bf16.xpose.msra.mxu0 0
        %2333 = vmatprep.subr.bf16.mxu0 0
        %2334 = vmatpush1.bf16.xpose.msra.mxu0 0
        %2335 = vmatprep.subr.bf16.mxu0 0
        %2336 = vmatpush1.bf16.xpose.msra.mxu0 0
        %2337 = vmatprep.subr.bf16.mxu0 0
        %2338 = vmatpush1.bf16.xpose.msra.mxu0 0
        %2339 = vmatprep.subr.bf16.mxu0 0
        %2340 = vmatpush1.bf16.xpose.msra.mxu0 0
        %2341 = vmatprep.subr.bf16.mxu0 0
        %2342 = vmatpush1.bf16.xpose.msra.mxu0 0
        %2343 = vmatprep.subr.bf16.mxu0 0
        %2344 = vmatpush1.bf16.xpose.msra.mxu0 0
        %2345 = vmatprep.mubr.bf16.mxu0 0
        %2346 = vmatmul.mubr.bf16.gmra.mrb[0].mxu0 %v2308
        %v2347 = vpop.f32.mrb[0].mxu0
        %v2348 = vadd.f32 0.0, %v2347
        %v2349 = vpop.f32.mrb[0].mxu0
        %v2350 = vpop.f32.mrb[0].mxu0
        %v2351 = vadd.f32 0.0, %v2350
        %v2352 = vpop.f32.mrb[0].mxu0
        %2353 = vdwg.mxu0
        %2354 = vrot.lane.b32.xlu0 %v1268, 120
        %v2355 = vpop.permute.xlu0 %2354
        %2356 = vrot.lane.b32.xlu0 %v1268, 88
        %v2357 = vpop.permute.xlu0 %2356
        %v2359 = vsel %vm1277, %v2355, 0
        %v2362 = vsel %vm1277, %v2357, 0
        %2364 = vmatprep.subr.bf16.mxu0 0
        %2365 = vmatpush1.bf16.xpose.msra.mxu0 %v2362
        %2366 = vmatprep.subr.bf16.mxu0 0
        %2367 = vmatpush1.bf16.xpose.msra.mxu0 0
        %2368 = vmatprep.subr.bf16.mxu0 0
        %2369 = vmatpush1.bf16.xpose.msra.mxu0 0
        %2370 = vmatprep.subr.bf16.mxu0 0
        %2371 = vmatpush1.bf16.xpose.msra.mxu0 0
        %2372 = vmatprep.subr.bf16.mxu0 0
        %2373 = vmatpush1.bf16.xpose.msra.mxu0 0
        %2374 = vmatprep.subr.bf16.mxu0 0
        %2375 = vmatpush1.bf16.xpose.msra.mxu0 0
        %2376 = vmatprep.subr.bf16.mxu0 0
        %2377 = vmatpush1.bf16.xpose.msra.mxu0 0
        %2378 = vmatprep.subr.bf16.mxu0 0
        %2379 = vmatpush1.bf16.xpose.msra.mxu0 0
        %2380 = vmatprep.subr.bf16.mxu0 0
        %2381 = vmatpush1.bf16.xpose.msra.mxu0 0
        %2382 = vmatprep.subr.bf16.mxu0 0
        %2383 = vmatpush1.bf16.xpose.msra.mxu0 0
        %2384 = vmatprep.subr.bf16.mxu0 0
        %2385 = vmatpush1.bf16.xpose.msra.mxu0 0
        %2386 = vmatprep.subr.bf16.mxu0 0
        %2387 = vmatpush1.bf16.xpose.msra.mxu0 0
        %2388 = vmatprep.subr.bf16.mxu0 0
        %2389 = vmatpush1.bf16.xpose.msra.mxu0 0
        %2390 = vmatprep.subr.bf16.mxu0 0
        %2391 = vmatpush1.bf16.xpose.msra.mxu0 0
        %2392 = vmatprep.subr.bf16.mxu0 0
        %2393 = vmatpush1.bf16.xpose.msra.mxu0 0
        %2394 = vmatprep.subr.bf16.mxu0 0
        %2395 = vmatpush1.bf16.xpose.msra.mxu0 0
        %2396 = vmatprep.mubr.bf16.mxu0 0
        %2397 = vmatmul.mubr.bf16.gmra.mrb[0].mxu0 %v2359
        %v2398 = vpop.f32.mrb[0].mxu0
        %v2399 = vadd.f32 0.0, %v2398
        %v2400 = vpop.f32.mrb[0].mxu0
        %v2401 = vpop.f32.mrb[0].mxu0
        %v2402 = vadd.f32 0.0, %v2401
        %v2403 = vpop.f32.mrb[0].mxu0
        %2404 = vdwg.mxu0
        %2405 = vrot.lane.b32.xlu0 %v1269, 120
        %v2406 = vpop.permute.xlu0 %2405
        %2407 = vrot.lane.b32.xlu0 %v1269, 88
        %v2408 = vpop.permute.xlu0 %2407
        %v2410 = vsel %vm1277, %v2406, 0
        %v2413 = vsel %vm1277, %v2408, 0
        %2415 = vmatprep.subr.bf16.mxu0 0
        %2416 = vmatpush1.bf16.xpose.msra.mxu0 %v2413
        %2417 = vmatprep.subr.bf16.mxu0 0
        %2418 = vmatpush1.bf16.xpose.msra.mxu0 0
        %2419 = vmatprep.subr.bf16.mxu0 0
        %2420 = vmatpush1.bf16.xpose.msra.mxu0 0
        %2421 = vmatprep.subr.bf16.mxu0 0
        %2422 = vmatpush1.bf16.xpose.msra.mxu0 0
        %2423 = vmatprep.subr.bf16.mxu0 0
        %2424 = vmatpush1.bf16.xpose.msra.mxu0 0
        %2425 = vmatprep.subr.bf16.mxu0 0
        %2426 = vmatpush1.bf16.xpose.msra.mxu0 0
        %2427 = vmatprep.subr.bf16.mxu0 0
        %2428 = vmatpush1.bf16.xpose.msra.mxu0 0
        %2429 = vmatprep.subr.bf16.mxu0 0
        %2430 = vmatpush1.bf16.xpose.msra.mxu0 0
        %2431 = vmatprep.subr.bf16.mxu0 0
        %2432 = vmatpush1.bf16.xpose.msra.mxu0 0
        %2433 = vmatprep.subr.bf16.mxu0 0
        %2434 = vmatpush1.bf16.xpose.msra.mxu0 0
        %2435 = vmatprep.subr.bf16.mxu0 0
        %2436 = vmatpush1.bf16.xpose.msra.mxu0 0
        %2437 = vmatprep.subr.bf16.mxu0 0
        %2438 = vmatpush1.bf16.xpose.msra.mxu0 0
        %2439 = vmatprep.subr.bf16.mxu0 0
        %2440 = vmatpush1.bf16.xpose.msra.mxu0 0
        %2441 = vmatprep.subr.bf16.mxu0 0
        %2442 = vmatpush1.bf16.xpose.msra.mxu0 0
        %2443 = vmatprep.subr.bf16.mxu0 0
        %2444 = vmatpush1.bf16.xpose.msra.mxu0 0
        %2445 = vmatprep.subr.bf16.mxu0 0
        %2446 = vmatpush1.bf16.xpose.msra.mxu0 0
        %2447 = vmatprep.mubr.bf16.mxu0 0
        %2448 = vmatmul.mubr.bf16.gmra.mrb[0].mxu0 %v2410
        %v2449 = vpop.f32.mrb[0].mxu0
        %v2450 = vadd.f32 0.0, %v2449
        %v2451 = vpop.f32.mrb[0].mxu0
        %v2452 = vpop.f32.mrb[0].mxu0
        %v2453 = vadd.f32 0.0, %v2452
        %v2454 = vpop.f32.mrb[0].mxu0
        %2455 = vdwg.mxu0
        %2456 = vrot.lane.b32.xlu0 %v1270, 120
        %v2457 = vpop.permute.xlu0 %2456
        %2458 = vrot.lane.b32.xlu0 %v1270, 88
        %v2459 = vpop.permute.xlu0 %2458
        %v2461 = vsel %vm1277, %v2457, 0
        %v2464 = vsel %vm1277, %v2459, 0
        %2466 = vmatprep.subr.bf16.mxu0 0
        %2467 = vmatpush1.bf16.xpose.msra.mxu0 %v2464
        %2468 = vmatprep.subr.bf16.mxu0 0
        %2469 = vmatpush1.bf16.xpose.msra.mxu0 0
        %2470 = vmatprep.subr.bf16.mxu0 0
        %2471 = vmatpush1.bf16.xpose.msra.mxu0 0
        %2472 = vmatprep.subr.bf16.mxu0 0
        %2473 = vmatpush1.bf16.xpose.msra.mxu0 0
        %2474 = vmatprep.subr.bf16.mxu0 0
        %2475 = vmatpush1.bf16.xpose.msra.mxu0 0
        %2476 = vmatprep.subr.bf16.mxu0 0
        %2477 = vmatpush1.bf16.xpose.msra.mxu0 0
        %2478 = vmatprep.subr.bf16.mxu0 0
        %2479 = vmatpush1.bf16.xpose.msra.mxu0 0
        %2480 = vmatprep.subr.bf16.mxu0 0
        %2481 = vmatpush1.bf16.xpose.msra.mxu0 0
        %2482 = vmatprep.subr.bf16.mxu0 0
        %2483 = vmatpush1.bf16.xpose.msra.mxu0 0
        %2484 = vmatprep.subr.bf16.mxu0 0
        %2485 = vmatpush1.bf16.xpose.msra.mxu0 0
        %2486 = vmatprep.subr.bf16.mxu0 0
        %2487 = vmatpush1.bf16.xpose.msra.mxu0 0
        %2488 = vmatprep.subr.bf16.mxu0 0
        %2489 = vmatpush1.bf16.xpose.msra.mxu0 0
        %2490 = vmatprep.subr.bf16.mxu0 0
        %2491 = vmatpush1.bf16.xpose.msra.mxu0 0
        %2492 = vmatprep.subr.bf16.mxu0 0
        %2493 = vmatpush1.bf16.xpose.msra.mxu0 0
        %2494 = vmatprep.subr.bf16.mxu0 0
        %2495 = vmatpush1.bf16.xpose.msra.mxu0 0
        %2496 = vmatprep.subr.bf16.mxu0 0
        %2497 = vmatpush1.bf16.xpose.msra.mxu0 0
        %2498 = vmatprep.mubr.bf16.mxu0 0
        %2499 = vmatmul.mubr.bf16.gmra.mrb[0].mxu0 %v2461
        %v2500 = vpop.f32.mrb[0].mxu0
        %v2501 = vadd.f32 0.0, %v2500
        %v2502 = vpop.f32.mrb[0].mxu0
        %v2503 = vpop.f32.mrb[0].mxu0
        %v2504 = vadd.f32 0.0, %v2503
        %v2505 = vpop.f32.mrb[0].mxu0
        %2506 = vdwg.mxu0
        %2507 = vrot.lane.b32.xlu0 %v1271, 120
        %v2508 = vpop.permute.xlu0 %2507
        %2509 = vrot.lane.b32.xlu0 %v1271, 88
        %v2510 = vpop.permute.xlu0 %2509
        %v2512 = vsel %vm1277, %v2508, 0
        %v2515 = vsel %vm1277, %v2510, 0
        %2517 = vmatprep.subr.bf16.mxu0 0
        %2518 = vmatpush1.bf16.xpose.msra.mxu0 %v2515
        %2519 = vmatprep.subr.bf16.mxu0 0
        %2520 = vmatpush1.bf16.xpose.msra.mxu0 0
        %2521 = vmatprep.subr.bf16.mxu0 0
        %2522 = vmatpush1.bf16.xpose.msra.mxu0 0
        %2523 = vmatprep.subr.bf16.mxu0 0
        %2524 = vmatpush1.bf16.xpose.msra.mxu0 0
        %2525 = vmatprep.subr.bf16.mxu0 0
        %2526 = vmatpush1.bf16.xpose.msra.mxu0 0
        %2527 = vmatprep.subr.bf16.mxu0 0
        %2528 = vmatpush1.bf16.xpose.msra.mxu0 0
        %2529 = vmatprep.subr.bf16.mxu0 0
        %2530 = vmatpush1.bf16.xpose.msra.mxu0 0
        %2531 = vmatprep.subr.bf16.mxu0 0
        %2532 = vmatpush1.bf16.xpose.msra.mxu0 0
        %2533 = vmatprep.subr.bf16.mxu0 0
        %2534 = vmatpush1.bf16.xpose.msra.mxu0 0
        %2535 = vmatprep.subr.bf16.mxu0 0
        %2536 = vmatpush1.bf16.xpose.msra.mxu0 0
        %2537 = vmatprep.subr.bf16.mxu0 0
        %2538 = vmatpush1.bf16.xpose.msra.mxu0 0
        %2539 = vmatprep.subr.bf16.mxu0 0
        %2540 = vmatpush1.bf16.xpose.msra.mxu0 0
        %2541 = vmatprep.subr.bf16.mxu0 0
        %2542 = vmatpush1.bf16.xpose.msra.mxu0 0
        %2543 = vmatprep.subr.bf16.mxu0 0
        %2544 = vmatpush1.bf16.xpose.msra.mxu0 0
        %2545 = vmatprep.subr.bf16.mxu0 0
        %2546 = vmatpush1.bf16.xpose.msra.mxu0 0
        %2547 = vmatprep.subr.bf16.mxu0 0
        %2548 = vmatpush1.bf16.xpose.msra.mxu0 0
        %2549 = vmatprep.mubr.bf16.mxu0 0
        %2550 = vmatmul.mubr.bf16.gmra.mrb[0].mxu0 %v2512
        %v2551 = vpop.f32.mrb[0].mxu0
        %v2552 = vadd.f32 0.0, %v2551
        %v2553 = vpop.f32.mrb[0].mxu0
        %v2554 = vpop.f32.mrb[0].mxu0
        %v2555 = vadd.f32 0.0, %v2554
        %v2556 = vpop.f32.mrb[0].mxu0
        %2557 = vdwg.mxu0
        %2558 = vrot.lane.b32.xlu0 %v1272, 120
        %v2559 = vpop.permute.xlu0 %2558
        %2560 = vrot.lane.b32.xlu0 %v1272, 88
        %v2561 = vpop.permute.xlu0 %2560
        %v2563 = vsel %vm1277, %v2559, 0
        %v2566 = vsel %vm1277, %v2561, 0
        %2568 = vmatprep.subr.bf16.mxu0 0
        %2569 = vmatpush1.bf16.xpose.msra.mxu0 %v2566
        %2570 = vmatprep.subr.bf16.mxu0 0
        %2571 = vmatpush1.bf16.xpose.msra.mxu0 0
        %2572 = vmatprep.subr.bf16.mxu0 0
        %2573 = vmatpush1.bf16.xpose.msra.mxu0 0
        %2574 = vmatprep.subr.bf16.mxu0 0
        %2575 = vmatpush1.bf16.xpose.msra.mxu0 0
        %2576 = vmatprep.subr.bf16.mxu0 0
        %2577 = vmatpush1.bf16.xpose.msra.mxu0 0
        %2578 = vmatprep.subr.bf16.mxu0 0
        %2579 = vmatpush1.bf16.xpose.msra.mxu0 0
        %2580 = vmatprep.subr.bf16.mxu0 0
        %2581 = vmatpush1.bf16.xpose.msra.mxu0 0
        %2582 = vmatprep.subr.bf16.mxu0 0
        %2583 = vmatpush1.bf16.xpose.msra.mxu0 0
        %2584 = vmatprep.subr.bf16.mxu0 0
        %2585 = vmatpush1.bf16.xpose.msra.mxu0 0
        %2586 = vmatprep.subr.bf16.mxu0 0
        %2587 = vmatpush1.bf16.xpose.msra.mxu0 0
        %2588 = vmatprep.subr.bf16.mxu0 0
        %2589 = vmatpush1.bf16.xpose.msra.mxu0 0
        %2590 = vmatprep.subr.bf16.mxu0 0
        %2591 = vmatpush1.bf16.xpose.msra.mxu0 0
        %2592 = vmatprep.subr.bf16.mxu0 0
        %2593 = vmatpush1.bf16.xpose.msra.mxu0 0
        %2594 = vmatprep.subr.bf16.mxu0 0
        %2595 = vmatpush1.bf16.xpose.msra.mxu0 0
        %2596 = vmatprep.subr.bf16.mxu0 0
        %2597 = vmatpush1.bf16.xpose.msra.mxu0 0
        %2598 = vmatprep.subr.bf16.mxu0 0
        %2599 = vmatpush1.bf16.xpose.msra.mxu0 0
        %2600 = vmatprep.mubr.bf16.mxu0 0
        %2601 = vmatmul.mubr.bf16.gmra.mrb[0].mxu0 %v2563
        %v2602 = vpop.f32.mrb[0].mxu0
        %v2603 = vadd.f32 0.0, %v2602
        %v2604 = vpop.f32.mrb[0].mxu0
        %v2605 = vpop.f32.mrb[0].mxu0
        %v2606 = vadd.f32 0.0, %v2605
        %v2607 = vpop.f32.mrb[0].mxu0
        %2608 = vdwg.mxu0
        %2609 = vrot.lane.b32.xlu0 %v1273, 120
        %v2610 = vpop.permute.xlu0 %2609
        %2611 = vrot.lane.b32.xlu0 %v1273, 88
        %v2612 = vpop.permute.xlu0 %2611
        %v2614 = vsel %vm1277, %v2610, 0
        %v2617 = vsel %vm1277, %v2612, 0
        %2619 = vmatprep.subr.bf16.mxu0 0
        %2620 = vmatpush1.bf16.xpose.msra.mxu0 %v2617
        %2621 = vmatprep.subr.bf16.mxu0 0
        %2622 = vmatpush1.bf16.xpose.msra.mxu0 0
        %2623 = vmatprep.subr.bf16.mxu0 0
        %2624 = vmatpush1.bf16.xpose.msra.mxu0 0
        %2625 = vmatprep.subr.bf16.mxu0 0
        %2626 = vmatpush1.bf16.xpose.msra.mxu0 0
        %2627 = vmatprep.subr.bf16.mxu0 0
        %2628 = vmatpush1.bf16.xpose.msra.mxu0 0
        %2629 = vmatprep.subr.bf16.mxu0 0
        %2630 = vmatpush1.bf16.xpose.msra.mxu0 0
        %2631 = vmatprep.subr.bf16.mxu0 0
        %2632 = vmatpush1.bf16.xpose.msra.mxu0 0
        %2633 = vmatprep.subr.bf16.mxu0 0
        %2634 = vmatpush1.bf16.xpose.msra.mxu0 0
        %2635 = vmatprep.subr.bf16.mxu0 0
        %2636 = vmatpush1.bf16.xpose.msra.mxu0 0
        %2637 = vmatprep.subr.bf16.mxu0 0
        %2638 = vmatpush1.bf16.xpose.msra.mxu0 0
        %2639 = vmatprep.subr.bf16.mxu0 0
        %2640 = vmatpush1.bf16.xpose.msra.mxu0 0
        %2641 = vmatprep.subr.bf16.mxu0 0
        %2642 = vmatpush1.bf16.xpose.msra.mxu0 0
        %2643 = vmatprep.subr.bf16.mxu0 0
        %2644 = vmatpush1.bf16.xpose.msra.mxu0 0
        %2645 = vmatprep.subr.bf16.mxu0 0
        %2646 = vmatpush1.bf16.xpose.msra.mxu0 0
        %2647 = vmatprep.subr.bf16.mxu0 0
        %2648 = vmatpush1.bf16.xpose.msra.mxu0 0
        %2649 = vmatprep.subr.bf16.mxu0 0
        %2650 = vmatpush1.bf16.xpose.msra.mxu0 0
        %2651 = vmatprep.mubr.bf16.mxu0 0
        %2652 = vmatmul.mubr.bf16.gmra.mrb[0].mxu0 %v2614
        %v2653 = vpop.f32.mrb[0].mxu0
        %v2654 = vadd.f32 0.0, %v2653
        %v2655 = vpop.f32.mrb[0].mxu0
        %v2656 = vpop.f32.mrb[0].mxu0
        %v2657 = vadd.f32 0.0, %v2656
        %v2658 = vpop.f32.mrb[0].mxu0
        %2659 = vdwg.mxu0
        %v2660 = vsel %vm1675, %v2297, -inf
        %2661 = vmax.xlane.f32.xlu0 %v2660
        %v2662 = vpop.xlane.xlu0 %2661
        %v2663 = vsel %vm1675, %v2300, -inf
        %2664 = vmax.xlane.f32.xlu0 %v2663
        %v2665 = vpop.xlane.xlu0 %2664
        %v2666 = vsel %vm1675, %v2348, -inf
        %2667 = vmax.xlane.f32.xlu0 %v2666
        %v2668 = vpop.xlane.xlu0 %2667
        %v2669 = vsel %vm1675, %v2351, -inf
        %2670 = vmax.xlane.f32.xlu0 %v2669
        %v2671 = vpop.xlane.xlu0 %2670
        %v2672 = vsel %vm1675, %v2399, -inf
        %2673 = vmax.xlane.f32.xlu0 %v2672
        %v2674 = vpop.xlane.xlu0 %2673
        %v2675 = vsel %vm1675, %v2402, -inf
        %2676 = vmax.xlane.f32.xlu0 %v2675
        %v2677 = vpop.xlane.xlu0 %2676
        %v2678 = vsel %vm1675, %v2450, -inf
        %2679 = vmax.xlane.f32.xlu0 %v2678
        %v2680 = vpop.xlane.xlu0 %2679
        %v2681 = vsel %vm1675, %v2453, -inf
        %2682 = vmax.xlane.f32.xlu0 %v2681
        %v2683 = vpop.xlane.xlu0 %2682
        %v2684 = vsel %vm1675, %v2501, -inf
        %2685 = vmax.xlane.f32.xlu0 %v2684
        %v2686 = vpop.xlane.xlu0 %2685
        %v2687 = vsel %vm1675, %v2504, -inf
        %2688 = vmax.xlane.f32.xlu0 %v2687
        %v2689 = vpop.xlane.xlu0 %2688
        %v2690 = vsel %vm1675, %v2552, -inf
        %2691 = vmax.xlane.f32.xlu0 %v2690
        %v2692 = vpop.xlane.xlu0 %2691
        %v2693 = vsel %vm1675, %v2555, -inf
        %2694 = vmax.xlane.f32.xlu0 %v2693
        %v2695 = vpop.xlane.xlu0 %2694
        %v2696 = vsel %vm1675, %v2603, -inf
        %2697 = vmax.xlane.f32.xlu0 %v2696
        %v2698 = vpop.xlane.xlu0 %2697
        %v2699 = vsel %vm1675, %v2606, -inf
        %2700 = vmax.xlane.f32.xlu0 %v2699
        %v2701 = vpop.xlane.xlu0 %2700
        %v2702 = vsel %vm1675, %v2654, -inf
        %2703 = vmax.xlane.f32.xlu0 %v2702
        %v2704 = vpop.xlane.xlu0 %2703
        %v2705 = vsel %vm1675, %v2657, -inf
        %2706 = vmax.xlane.f32.xlu0 %v2705
        %v2707 = vpop.xlane.xlu0 %2706
        %v2708 = vsub.f32 %v2297, %v2662
        %v2709 = vsub.f32 %v2300, %v2665
        %v2710 = vsub.f32 %v2348, %v2668
        %v2711 = vsub.f32 %v2351, %v2671
        %v2712 = vsub.f32 %v2399, %v2674
        %v2713 = vsub.f32 %v2402, %v2677
        %v2714 = vsub.f32 %v2450, %v2680
        %v2715 = vsub.f32 %v2453, %v2683
        %v2716 = vsub.f32 %v2501, %v2686
        %v2717 = vsub.f32 %v2504, %v2689
        %v2718 = vsub.f32 %v2552, %v2692
        %v2719 = vsub.f32 %v2555, %v2695
        %v2720 = vsub.f32 %v2603, %v2698
        %v2721 = vsub.f32 %v2606, %v2701
        %v2722 = vsub.f32 %v2654, %v2704
        %v2723 = vsub.f32 %v2657, %v2707
        %v2724 = vmul.f32 %v2708, 1.442695
        %v2725 = vpow.pop %v2724
        %v2726 = vmul.f32 %v2709, 1.442695
        %v2727 = vpow.pop %v2726
        %v2728 = vmul.f32 %v2710, 1.442695
        %v2729 = vpow.pop %v2728
        %v2730 = vmul.f32 %v2711, 1.442695
        %v2731 = vpow.pop %v2730
        %v2732 = vmul.f32 %v2712, 1.442695
        %v2733 = vpow.pop %v2732
        %v2734 = vmul.f32 %v2713, 1.442695
        %v2735 = vpow.pop %v2734
        %v2736 = vmul.f32 %v2714, 1.442695
        %v2737 = vpow.pop %v2736
        %v2738 = vmul.f32 %v2715, 1.442695
        %v2739 = vpow.pop %v2738
        %v2740 = vmul.f32 %v2716, 1.442695
        %v2741 = vpow.pop %v2740
        %v2742 = vmul.f32 %v2717, 1.442695
        %v2743 = vpow.pop %v2742
        %v2744 = vmul.f32 %v2718, 1.442695
        %v2745 = vpow.pop %v2744
        %v2746 = vmul.f32 %v2719, 1.442695
        %v2747 = vpow.pop %v2746
        %v2748 = vmul.f32 %v2720, 1.442695
        %v2749 = vpow.pop %v2748
        %v2750 = vmul.f32 %v2721, 1.442695
        %v2751 = vpow.pop %v2750
        %v2752 = vmul.f32 %v2722, 1.442695
        %v2753 = vpow.pop %v2752
        %v2754 = vmul.f32 %v2723, 1.442695
        %v2755 = vpow.pop %v2754
        %v2756 = vsel %vm1675, %v2725, 0.0
        %2757 = vadd.xlane.f32.xlu0 %v2756
        %v2758 = vpop.xlane.xlu0 %2757
        %v2759 = vsel %vm1675, %v2727, 0.0
        %2760 = vadd.xlane.f32.xlu0 %v2759
        %v2761 = vpop.xlane.xlu0 %2760
        %v2762 = vsel %vm1675, %v2729, 0.0
        %2763 = vadd.xlane.f32.xlu0 %v2762
        %v2764 = vpop.xlane.xlu0 %2763
        %v2765 = vsel %vm1675, %v2731, 0.0
        %2766 = vadd.xlane.f32.xlu0 %v2765
        %v2767 = vpop.xlane.xlu0 %2766
        %v2768 = vsel %vm1675, %v2733, 0.0
        %2769 = vadd.xlane.f32.xlu0 %v2768
        %v2770 = vpop.xlane.xlu0 %2769
        %v2771 = vsel %vm1675, %v2735, 0.0
        %2772 = vadd.xlane.f32.xlu0 %v2771
        %v2773 = vpop.xlane.xlu0 %2772
        %v2774 = vsel %vm1675, %v2737, 0.0
        %2775 = vadd.xlane.f32.xlu0 %v2774
        %v2776 = vpop.xlane.xlu0 %2775
        %v2777 = vsel %vm1675, %v2739, 0.0
        %2778 = vadd.xlane.f32.xlu0 %v2777
        %v2779 = vpop.xlane.xlu0 %2778
        %v2780 = vsel %vm1675, %v2741, 0.0
        %2781 = vadd.xlane.f32.xlu0 %v2780
        %v2782 = vpop.xlane.xlu0 %2781
        %v2783 = vsel %vm1675, %v2743, 0.0
        %2784 = vadd.xlane.f32.xlu0 %v2783
        %v2785 = vpop.xlane.xlu0 %2784
        %v2786 = vsel %vm1675, %v2745, 0.0
        %2787 = vadd.xlane.f32.xlu0 %v2786
        %v2788 = vpop.xlane.xlu0 %2787
        %v2789 = vsel %vm1675, %v2747, 0.0
        %2790 = vadd.xlane.f32.xlu0 %v2789
        %v2791 = vpop.xlane.xlu0 %2790
        %v2792 = vsel %vm1675, %v2749, 0.0
        %2793 = vadd.xlane.f32.xlu0 %v2792
        %v2794 = vpop.xlane.xlu0 %2793
        %v2795 = vsel %vm1675, %v2751, 0.0
        %2796 = vadd.xlane.f32.xlu0 %v2795
        %v2797 = vpop.xlane.xlu0 %2796
        %v2798 = vsel %vm1675, %v2753, 0.0
        %2799 = vadd.xlane.f32.xlu0 %v2798
        %v2800 = vpop.xlane.xlu0 %2799
        %v2801 = vsel %vm1675, %v2755, 0.0
        %2802 = vadd.xlane.f32.xlu0 %v2801
        %v2803 = vpop.xlane.xlu0 %2802
        %v2804 = vrcp.pop %v2758
        %v2805 = vmul.f32 %v2725, %v2804
        %v2806 = vrcp.pop %v2761
        %v2807 = vmul.f32 %v2727, %v2806
        %v2808 = vrcp.pop %v2764
        %v2809 = vmul.f32 %v2729, %v2808
        %v2810 = vrcp.pop %v2767
        %v2811 = vmul.f32 %v2731, %v2810
        %v2812 = vrcp.pop %v2770
        %v2813 = vmul.f32 %v2733, %v2812
        %v2814 = vrcp.pop %v2773
        %v2815 = vmul.f32 %v2735, %v2814
        %v2816 = vrcp.pop %v2776
        %v2817 = vmul.f32 %v2737, %v2816
        %v2818 = vrcp.pop %v2779
        %v2819 = vmul.f32 %v2739, %v2818
        %v2820 = vrcp.pop %v2782
        %v2821 = vmul.f32 %v2741, %v2820
        %v2822 = vrcp.pop %v2785
        %v2823 = vmul.f32 %v2743, %v2822
        %v2824 = vrcp.pop %v2788
        %v2825 = vmul.f32 %v2745, %v2824
        %v2826 = vrcp.pop %v2791
        %v2827 = vmul.f32 %v2747, %v2826
        %v2828 = vrcp.pop %v2794
        %v2829 = vmul.f32 %v2749, %v2828
        %v2830 = vrcp.pop %v2797
        %v2831 = vmul.f32 %v2751, %v2830
        %v2832 = vrcp.pop %v2800
        %v2833 = vmul.f32 %v2753, %v2832
        %v2834 = vrcp.pop %v2803
        %v2835 = vmul.f32 %v2755, %v2834
        %v2836 = vpack.c.bf16 %v2807, %v2805
        %v2837 = vpack.c.bf16 %v2811, %v2809
        %v2838 = vpack.c.bf16 %v2815, %v2813
        %v2839 = vpack.c.bf16 %v2819, %v2817
        %v2840 = vpack.c.bf16 %v2823, %v2821
        %v2841 = vpack.c.bf16 %v2827, %v2825
        %v2842 = vpack.c.bf16 %v2831, %v2829
        %v2843 = vpack.c.bf16 %v2835, %v2833
        %2844 = vrot.lane.b32.xlu0 %v1266, 56
        %v2845 = vpop.permute.xlu0 %2844
        %v2848 = vsel %vm1675, %v2836, 0
        %2850 = vmatprep.subr.bf16.mxu0 0
        %2851 = vmatpush1.bf16.msra.mxu0 %v2845
        %2852 = vmatprep.subr.bf16.mxu0 0
        %2853 = vmatpush1.bf16.msra.mxu0 0
        %2854 = vmatprep.subr.bf16.mxu0 0
        %2855 = vmatpush1.bf16.msra.mxu0 0
        %2856 = vmatprep.subr.bf16.mxu0 0
        %2857 = vmatpush1.bf16.msra.mxu0 0
        %2858 = vmatprep.subr.bf16.mxu0 0
        %2859 = vmatpush1.bf16.msra.mxu0 0
        %2860 = vmatprep.subr.bf16.mxu0 0
        %2861 = vmatpush1.bf16.msra.mxu0 0
        %2862 = vmatprep.subr.bf16.mxu0 0
        %2863 = vmatpush1.bf16.msra.mxu0 0
        %2864 = vmatprep.subr.bf16.mxu0 0
        %2865 = vmatpush1.bf16.msra.mxu0 0
        %2866 = vmatprep.subr.bf16.mxu0 0
        %2867 = vmatpush1.bf16.msra.mxu0 0
        %2868 = vmatprep.subr.bf16.mxu0 0
        %2869 = vmatpush1.bf16.msra.mxu0 0
        %2870 = vmatprep.subr.bf16.mxu0 0
        %2871 = vmatpush1.bf16.msra.mxu0 0
        %2872 = vmatprep.subr.bf16.mxu0 0
        %2873 = vmatpush1.bf16.msra.mxu0 0
        %2874 = vmatprep.subr.bf16.mxu0 0
        %2875 = vmatpush1.bf16.msra.mxu0 0
        %2876 = vmatprep.subr.bf16.mxu0 0
        %2877 = vmatpush1.bf16.msra.mxu0 0
        %2878 = vmatprep.subr.bf16.mxu0 0
        %2879 = vmatpush1.bf16.msra.mxu0 0
        %2880 = vmatprep.subr.bf16.mxu0 0
        %2881 = vmatpush1.bf16.msra.mxu0 0
        %2882 = vmatprep.mubr.bf16.mxu0 0
        %2883 = vmatmul.mubr.bf16.gmra.mrb[0].mxu0 %v2848
        %v2884 = vpop.f32.mrb[0].mxu0
        %v2885 = vadd.f32 0.0, %v2884
        %v2886 = vpop.f32.mrb[0].mxu0
        %v2887 = vpop.f32.mrb[0].mxu0
        %v2888 = vadd.f32 0.0, %v2887
        %v2889 = vpop.f32.mrb[0].mxu0
        %2890 = vdwg.mxu0
        %2891 = vrot.lane.b32.xlu0 %v1267, 56
        %v2892 = vpop.permute.xlu0 %2891
        %v2895 = vsel %vm1675, %v2837, 0
        %2897 = vmatprep.subr.bf16.mxu0 0
        %2898 = vmatpush1.bf16.msra.mxu0 %v2892
        %2899 = vmatprep.subr.bf16.mxu0 0
        %2900 = vmatpush1.bf16.msra.mxu0 0
        %2901 = vmatprep.subr.bf16.mxu0 0
        %2902 = vmatpush1.bf16.msra.mxu0 0
        %2903 = vmatprep.subr.bf16.mxu0 0
        %2904 = vmatpush1.bf16.msra.mxu0 0
        %2905 = vmatprep.subr.bf16.mxu0 0
        %2906 = vmatpush1.bf16.msra.mxu0 0
        %2907 = vmatprep.subr.bf16.mxu0 0
        %2908 = vmatpush1.bf16.msra.mxu0 0
        %2909 = vmatprep.subr.bf16.mxu0 0
        %2910 = vmatpush1.bf16.msra.mxu0 0
        %2911 = vmatprep.subr.bf16.mxu0 0
        %2912 = vmatpush1.bf16.msra.mxu0 0
        %2913 = vmatprep.subr.bf16.mxu0 0
        %2914 = vmatpush1.bf16.msra.mxu0 0
        %2915 = vmatprep.subr.bf16.mxu0 0
        %2916 = vmatpush1.bf16.msra.mxu0 0
        %2917 = vmatprep.subr.bf16.mxu0 0
        %2918 = vmatpush1.bf16.msra.mxu0 0
        %2919 = vmatprep.subr.bf16.mxu0 0
        %2920 = vmatpush1.bf16.msra.mxu0 0
        %2921 = vmatprep.subr.bf16.mxu0 0
        %2922 = vmatpush1.bf16.msra.mxu0 0
        %2923 = vmatprep.subr.bf16.mxu0 0
        %2924 = vmatpush1.bf16.msra.mxu0 0
        %2925 = vmatprep.subr.bf16.mxu0 0
        %2926 = vmatpush1.bf16.msra.mxu0 0
        %2927 = vmatprep.subr.bf16.mxu0 0
        %2928 = vmatpush1.bf16.msra.mxu0 0
        %2929 = vmatprep.mubr.bf16.mxu0 0
        %2930 = vmatmul.mubr.bf16.gmra.mrb[0].mxu0 %v2895
        %v2931 = vpop.f32.mrb[0].mxu0
        %v2932 = vadd.f32 0.0, %v2931
        %v2933 = vpop.f32.mrb[0].mxu0
        %v2934 = vpop.f32.mrb[0].mxu0
        %v2935 = vadd.f32 0.0, %v2934
        %v2936 = vpop.f32.mrb[0].mxu0
        %2937 = vdwg.mxu0
        %2938 = vrot.lane.b32.xlu0 %v1268, 56
        %v2939 = vpop.permute.xlu0 %2938
        %v2942 = vsel %vm1675, %v2838, 0
        %2944 = vmatprep.subr.bf16.mxu0 0
        %2945 = vmatpush1.bf16.msra.mxu0 %v2939
        %2946 = vmatprep.subr.bf16.mxu0 0
        %2947 = vmatpush1.bf16.msra.mxu0 0
        %2948 = vmatprep.subr.bf16.mxu0 0
        %2949 = vmatpush1.bf16.msra.mxu0 0
        %2950 = vmatprep.subr.bf16.mxu0 0
        %2951 = vmatpush1.bf16.msra.mxu0 0
        %2952 = vmatprep.subr.bf16.mxu0 0
        %2953 = vmatpush1.bf16.msra.mxu0 0
        %2954 = vmatprep.subr.bf16.mxu0 0
        %2955 = vmatpush1.bf16.msra.mxu0 0
        %2956 = vmatprep.subr.bf16.mxu0 0
        %2957 = vmatpush1.bf16.msra.mxu0 0
        %2958 = vmatprep.subr.bf16.mxu0 0
        %2959 = vmatpush1.bf16.msra.mxu0 0
        %2960 = vmatprep.subr.bf16.mxu0 0
        %2961 = vmatpush1.bf16.msra.mxu0 0
        %2962 = vmatprep.subr.bf16.mxu0 0
        %2963 = vmatpush1.bf16.msra.mxu0 0
        %2964 = vmatprep.subr.bf16.mxu0 0
        %2965 = vmatpush1.bf16.msra.mxu0 0
        %2966 = vmatprep.subr.bf16.mxu0 0
        %2967 = vmatpush1.bf16.msra.mxu0 0
        %2968 = vmatprep.subr.bf16.mxu0 0
        %2969 = vmatpush1.bf16.msra.mxu0 0
        %2970 = vmatprep.subr.bf16.mxu0 0
        %2971 = vmatpush1.bf16.msra.mxu0 0
        %2972 = vmatprep.subr.bf16.mxu0 0
        %2973 = vmatpush1.bf16.msra.mxu0 0
        %2974 = vmatprep.subr.bf16.mxu0 0
        %2975 = vmatpush1.bf16.msra.mxu0 0
        %2976 = vmatprep.mubr.bf16.mxu0 0
        %2977 = vmatmul.mubr.bf16.gmra.mrb[0].mxu0 %v2942
        %v2978 = vpop.f32.mrb[0].mxu0
        %v2979 = vadd.f32 0.0, %v2978
        %v2980 = vpop.f32.mrb[0].mxu0
        %v2981 = vpop.f32.mrb[0].mxu0
        %v2982 = vadd.f32 0.0, %v2981
        %v2983 = vpop.f32.mrb[0].mxu0
        %2984 = vdwg.mxu0
        %2985 = vrot.lane.b32.xlu0 %v1269, 56
        %v2986 = vpop.permute.xlu0 %2985
        %v2989 = vsel %vm1675, %v2839, 0
        %2991 = vmatprep.subr.bf16.mxu0 0
        %2992 = vmatpush1.bf16.msra.mxu0 %v2986
        %2993 = vmatprep.subr.bf16.mxu0 0
        %2994 = vmatpush1.bf16.msra.mxu0 0
        %2995 = vmatprep.subr.bf16.mxu0 0
        %2996 = vmatpush1.bf16.msra.mxu0 0
        %2997 = vmatprep.subr.bf16.mxu0 0
        %2998 = vmatpush1.bf16.msra.mxu0 0
        %2999 = vmatprep.subr.bf16.mxu0 0
        %3000 = vmatpush1.bf16.msra.mxu0 0
        %3001 = vmatprep.subr.bf16.mxu0 0
        %3002 = vmatpush1.bf16.msra.mxu0 0
        %3003 = vmatprep.subr.bf16.mxu0 0
        %3004 = vmatpush1.bf16.msra.mxu0 0
        %3005 = vmatprep.subr.bf16.mxu0 0
        %3006 = vmatpush1.bf16.msra.mxu0 0
        %3007 = vmatprep.subr.bf16.mxu0 0
        %3008 = vmatpush1.bf16.msra.mxu0 0
        %3009 = vmatprep.subr.bf16.mxu0 0
        %3010 = vmatpush1.bf16.msra.mxu0 0
        %3011 = vmatprep.subr.bf16.mxu0 0
        %3012 = vmatpush1.bf16.msra.mxu0 0
        %3013 = vmatprep.subr.bf16.mxu0 0
        %3014 = vmatpush1.bf16.msra.mxu0 0
        %3015 = vmatprep.subr.bf16.mxu0 0
        %3016 = vmatpush1.bf16.msra.mxu0 0
        %3017 = vmatprep.subr.bf16.mxu0 0
        %3018 = vmatpush1.bf16.msra.mxu0 0
        %3019 = vmatprep.subr.bf16.mxu0 0
        %3020 = vmatpush1.bf16.msra.mxu0 0
        %3021 = vmatprep.subr.bf16.mxu0 0
        %3022 = vmatpush1.bf16.msra.mxu0 0
        %3023 = vmatprep.mubr.bf16.mxu0 0
        %3024 = vmatmul.mubr.bf16.gmra.mrb[0].mxu0 %v2989
        %v3025 = vpop.f32.mrb[0].mxu0
        %v3026 = vadd.f32 0.0, %v3025
        %v3027 = vpop.f32.mrb[0].mxu0
        %v3028 = vpop.f32.mrb[0].mxu0
        %v3029 = vadd.f32 0.0, %v3028
        %v3030 = vpop.f32.mrb[0].mxu0
        %3031 = vdwg.mxu0
        %3032 = vrot.lane.b32.xlu0 %v1270, 56
        %v3033 = vpop.permute.xlu0 %3032
        %v3036 = vsel %vm1675, %v2840, 0
        %3038 = vmatprep.subr.bf16.mxu0 0
        %3039 = vmatpush1.bf16.msra.mxu0 %v3033
        %3040 = vmatprep.subr.bf16.mxu0 0
        %3041 = vmatpush1.bf16.msra.mxu0 0
        %3042 = vmatprep.subr.bf16.mxu0 0
        %3043 = vmatpush1.bf16.msra.mxu0 0
        %3044 = vmatprep.subr.bf16.mxu0 0
        %3045 = vmatpush1.bf16.msra.mxu0 0
        %3046 = vmatprep.subr.bf16.mxu0 0
        %3047 = vmatpush1.bf16.msra.mxu0 0
        %3048 = vmatprep.subr.bf16.mxu0 0
        %3049 = vmatpush1.bf16.msra.mxu0 0
        %3050 = vmatprep.subr.bf16.mxu0 0
        %3051 = vmatpush1.bf16.msra.mxu0 0
        %3052 = vmatprep.subr.bf16.mxu0 0
        %3053 = vmatpush1.bf16.msra.mxu0 0
        %3054 = vmatprep.subr.bf16.mxu0 0
        %3055 = vmatpush1.bf16.msra.mxu0 0
        %3056 = vmatprep.subr.bf16.mxu0 0
        %3057 = vmatpush1.bf16.msra.mxu0 0
        %3058 = vmatprep.subr.bf16.mxu0 0
        %3059 = vmatpush1.bf16.msra.mxu0 0
        %3060 = vmatprep.subr.bf16.mxu0 0
        %3061 = vmatpush1.bf16.msra.mxu0 0
        %3062 = vmatprep.subr.bf16.mxu0 0
        %3063 = vmatpush1.bf16.msra.mxu0 0
        %3064 = vmatprep.subr.bf16.mxu0 0
        %3065 = vmatpush1.bf16.msra.mxu0 0
        %3066 = vmatprep.subr.bf16.mxu0 0
        %3067 = vmatpush1.bf16.msra.mxu0 0
        %3068 = vmatprep.subr.bf16.mxu0 0
        %3069 = vmatpush1.bf16.msra.mxu0 0
        %3070 = vmatprep.mubr.bf16.mxu0 0
        %3071 = vmatmul.mubr.bf16.gmra.mrb[0].mxu0 %v3036
        %v3072 = vpop.f32.mrb[0].mxu0
        %v3073 = vadd.f32 0.0, %v3072
        %v3074 = vpop.f32.mrb[0].mxu0
        %v3075 = vpop.f32.mrb[0].mxu0
        %v3076 = vadd.f32 0.0, %v3075
        %v3077 = vpop.f32.mrb[0].mxu0
        %3078 = vdwg.mxu0
        %3079 = vrot.lane.b32.xlu0 %v1271, 56
        %v3080 = vpop.permute.xlu0 %3079
        %v3083 = vsel %vm1675, %v2841, 0
        %3085 = vmatprep.subr.bf16.mxu0 0
        %3086 = vmatpush1.bf16.msra.mxu0 %v3080
        %3087 = vmatprep.subr.bf16.mxu0 0
        %3088 = vmatpush1.bf16.msra.mxu0 0
        %3089 = vmatprep.subr.bf16.mxu0 0
        %3090 = vmatpush1.bf16.msra.mxu0 0
        %3091 = vmatprep.subr.bf16.mxu0 0
        %3092 = vmatpush1.bf16.msra.mxu0 0
        %3093 = vmatprep.subr.bf16.mxu0 0
        %3094 = vmatpush1.bf16.msra.mxu0 0
        %3095 = vmatprep.subr.bf16.mxu0 0
        %3096 = vmatpush1.bf16.msra.mxu0 0
        %3097 = vmatprep.subr.bf16.mxu0 0
        %3098 = vmatpush1.bf16.msra.mxu0 0
        %3099 = vmatprep.subr.bf16.mxu0 0
        %3100 = vmatpush1.bf16.msra.mxu0 0
        %3101 = vmatprep.subr.bf16.mxu0 0
        %3102 = vmatpush1.bf16.msra.mxu0 0
        %3103 = vmatprep.subr.bf16.mxu0 0
        %3104 = vmatpush1.bf16.msra.mxu0 0
        %3105 = vmatprep.subr.bf16.mxu0 0
        %3106 = vmatpush1.bf16.msra.mxu0 0
        %3107 = vmatprep.subr.bf16.mxu0 0
        %3108 = vmatpush1.bf16.msra.mxu0 0
        %3109 = vmatprep.subr.bf16.mxu0 0
        %3110 = vmatpush1.bf16.msra.mxu0 0
        %3111 = vmatprep.subr.bf16.mxu0 0
        %3112 = vmatpush1.bf16.msra.mxu0 0
        %3113 = vmatprep.subr.bf16.mxu0 0
        %3114 = vmatpush1.bf16.msra.mxu0 0
        %3115 = vmatprep.subr.bf16.mxu0 0
        %3116 = vmatpush1.bf16.msra.mxu0 0
        %3117 = vmatprep.mubr.bf16.mxu0 0
        %3118 = vmatmul.mubr.bf16.gmra.mrb[0].mxu0 %v3083
        %v3119 = vpop.f32.mrb[0].mxu0
        %v3120 = vadd.f32 0.0, %v3119
        %v3121 = vpop.f32.mrb[0].mxu0
        %v3122 = vpop.f32.mrb[0].mxu0
        %v3123 = vadd.f32 0.0, %v3122
        %v3124 = vpop.f32.mrb[0].mxu0
        %3125 = vdwg.mxu0
        %3126 = vrot.lane.b32.xlu0 %v1272, 56
        %v3127 = vpop.permute.xlu0 %3126
        %v3130 = vsel %vm1675, %v2842, 0
        %3132 = vmatprep.subr.bf16.mxu0 0
        %3133 = vmatpush1.bf16.msra.mxu0 %v3127
        %3134 = vmatprep.subr.bf16.mxu0 0
        %3135 = vmatpush1.bf16.msra.mxu0 0
        %3136 = vmatprep.subr.bf16.mxu0 0
        %3137 = vmatpush1.bf16.msra.mxu0 0
        %3138 = vmatprep.subr.bf16.mxu0 0
        %3139 = vmatpush1.bf16.msra.mxu0 0
        %3140 = vmatprep.subr.bf16.mxu0 0
        %3141 = vmatpush1.bf16.msra.mxu0 0
        %3142 = vmatprep.subr.bf16.mxu0 0
        %3143 = vmatpush1.bf16.msra.mxu0 0
        %3144 = vmatprep.subr.bf16.mxu0 0
        %3145 = vmatpush1.bf16.msra.mxu0 0
        %3146 = vmatprep.subr.bf16.mxu0 0
        %3147 = vmatpush1.bf16.msra.mxu0 0
        %3148 = vmatprep.subr.bf16.mxu0 0
        %3149 = vmatpush1.bf16.msra.mxu0 0
        %3150 = vmatprep.subr.bf16.mxu0 0
        %3151 = vmatpush1.bf16.msra.mxu0 0
        %3152 = vmatprep.subr.bf16.mxu0 0
        %3153 = vmatpush1.bf16.msra.mxu0 0
        %3154 = vmatprep.subr.bf16.mxu0 0
        %3155 = vmatpush1.bf16.msra.mxu0 0
        %3156 = vmatprep.subr.bf16.mxu0 0
        %3157 = vmatpush1.bf16.msra.mxu0 0
        %3158 = vmatprep.subr.bf16.mxu0 0
        %3159 = vmatpush1.bf16.msra.mxu0 0
        %3160 = vmatprep.subr.bf16.mxu0 0
        %3161 = vmatpush1.bf16.msra.mxu0 0
        %3162 = vmatprep.subr.bf16.mxu0 0
        %3163 = vmatpush1.bf16.msra.mxu0 0
        %3164 = vmatprep.mubr.bf16.mxu0 0
        %3165 = vmatmul.mubr.bf16.gmra.mrb[0].mxu0 %v3130
        %v3166 = vpop.f32.mrb[0].mxu0
        %v3167 = vadd.f32 0.0, %v3166
        %v3168 = vpop.f32.mrb[0].mxu0
        %v3169 = vpop.f32.mrb[0].mxu0
        %v3170 = vadd.f32 0.0, %v3169
        %v3171 = vpop.f32.mrb[0].mxu0
        %3172 = vdwg.mxu0
        %3173 = vrot.lane.b32.xlu0 %v1273, 56
        %v3174 = vpop.permute.xlu0 %3173
        %v3177 = vsel %vm1675, %v2843, 0
        %3179 = vmatprep.subr.bf16.mxu0 0
        %3180 = vmatpush1.bf16.msra.mxu0 %v3174
        %3181 = vmatprep.subr.bf16.mxu0 0
        %3182 = vmatpush1.bf16.msra.mxu0 0
        %3183 = vmatprep.subr.bf16.mxu0 0
        %3184 = vmatpush1.bf16.msra.mxu0 0
        %3185 = vmatprep.subr.bf16.mxu0 0
        %3186 = vmatpush1.bf16.msra.mxu0 0
        %3187 = vmatprep.subr.bf16.mxu0 0
        %3188 = vmatpush1.bf16.msra.mxu0 0
        %3189 = vmatprep.subr.bf16.mxu0 0
        %3190 = vmatpush1.bf16.msra.mxu0 0
        %3191 = vmatprep.subr.bf16.mxu0 0
        %3192 = vmatpush1.bf16.msra.mxu0 0
        %3193 = vmatprep.subr.bf16.mxu0 0
        %3194 = vmatpush1.bf16.msra.mxu0 0
        %3195 = vmatprep.subr.bf16.mxu0 0
        %3196 = vmatpush1.bf16.msra.mxu0 0
        %3197 = vmatprep.subr.bf16.mxu0 0
        %3198 = vmatpush1.bf16.msra.mxu0 0
        %3199 = vmatprep.subr.bf16.mxu0 0
        %3200 = vmatpush1.bf16.msra.mxu0 0
        %3201 = vmatprep.subr.bf16.mxu0 0
        %3202 = vmatpush1.bf16.msra.mxu0 0
        %3203 = vmatprep.subr.bf16.mxu0 0
        %3204 = vmatpush1.bf16.msra.mxu0 0
        %3205 = vmatprep.subr.bf16.mxu0 0
        %3206 = vmatpush1.bf16.msra.mxu0 0
        %3207 = vmatprep.subr.bf16.mxu0 0
        %3208 = vmatpush1.bf16.msra.mxu0 0
        %3209 = vmatprep.subr.bf16.mxu0 0
        %3210 = vmatpush1.bf16.msra.mxu0 0
        %3211 = vmatprep.mubr.bf16.mxu0 0
        %3212 = vmatmul.mubr.bf16.gmra.mrb[0].mxu0 %v3177
        %v3213 = vpop.f32.mrb[0].mxu0
        %v3214 = vadd.f32 0.0, %v3213
        %v3215 = vpop.f32.mrb[0].mxu0
        %v3216 = vpop.f32.mrb[0].mxu0
        %v3217 = vadd.f32 0.0, %v3216
        %v3218 = vpop.f32.mrb[0].mxu0
        %3219 = vdwg.mxu0
        %3236 = vrot.lane.b32.xlu0 %v2885, 8
        %v3237 = vpop.permute.xlu0 %3236
        %3238 = vrot.lane.b32.xlu0 %v2888, 8
        %v3239 = vpop.permute.xlu0 %3238
        %3240 = vrot.lane.b32.xlu0 %v2932, 8
        %v3241 = vpop.permute.xlu0 %3240
        %3242 = vrot.lane.b32.xlu0 %v2935, 8
        %v3243 = vpop.permute.xlu0 %3242
        %3244 = vrot.lane.b32.xlu0 %v2979, 8
        %v3245 = vpop.permute.xlu0 %3244
        %3246 = vrot.lane.b32.xlu0 %v2982, 8
        %v3247 = vpop.permute.xlu0 %3246
        %3248 = vrot.lane.b32.xlu0 %v3026, 8
        %v3249 = vpop.permute.xlu0 %3248
        %3250 = vrot.lane.b32.xlu0 %v3029, 8
        %v3251 = vpop.permute.xlu0 %3250
        %3252 = vrot.lane.b32.xlu0 %v3073, 8
        %v3253 = vpop.permute.xlu0 %3252
        %3254 = vrot.lane.b32.xlu0 %v3076, 8
        %v3255 = vpop.permute.xlu0 %3254
        %3256 = vrot.lane.b32.xlu0 %v3120, 8
        %v3257 = vpop.permute.xlu0 %3256
        %3258 = vrot.lane.b32.xlu0 %v3123, 8
        %v3259 = vpop.permute.xlu0 %3258
        %3260 = vrot.lane.b32.xlu0 %v3167, 8
        %v3261 = vpop.permute.xlu0 %3260
        %3262 = vrot.lane.b32.xlu0 %v3170, 8
        %v3263 = vpop.permute.xlu0 %3262
        %3264 = vrot.lane.b32.xlu0 %v3214, 8
        %v3265 = vpop.permute.xlu0 %3264
        %3266 = vrot.lane.b32.xlu0 %v3217, 8
        %v3267 = vpop.permute.xlu0 %3266
        %vm3284 = vcmask 130112
        %3285 = vst.msk [vmem:[#allocation2] sm:$0xff] %vm3284, %v3237
        %3286 = vst.msk [vmem:[#allocation2 + $0x8] sm:$0xff] %vm3284, %v3239
        %3287 = vst.msk [vmem:[#allocation2 + $0x10] sm:$0xff] %vm3284, %v3241
        %3288 = vst.msk [vmem:[#allocation2 + $0x18] sm:$0xff] %vm3284, %v3243
        %3289 = vst.msk [vmem:[#allocation2 + $0x20] sm:$0xff] %vm3284, %v3245
        %3290 = vst.msk [vmem:[#allocation2 + $0x28] sm:$0xff] %vm3284, %v3247
        %3291 = vst.msk [vmem:[#allocation2 + $0x30] sm:$0xff] %vm3284, %v3249
        %3292 = vst.msk [vmem:[#allocation2 + $0x38] sm:$0xff] %vm3284, %v3251
        %3293 = vst.msk [vmem:[#allocation2 + $0x40] sm:$0xff] %vm3284, %v3253
        %3294 = vst.msk [vmem:[#allocation2 + $0x48] sm:$0xff] %vm3284, %v3255
        %3295 = vst.msk [vmem:[#allocation2 + $0x50] sm:$0xff] %vm3284, %v3257
        %3296 = vst.msk [vmem:[#allocation2 + $0x58] sm:$0xff] %vm3284, %v3259
        %3297 = vst.msk [vmem:[#allocation2 + $0x60] sm:$0xff] %vm3284, %v3261
        %3298 = vst.msk [vmem:[#allocation2 + $0x68] sm:$0xff] %vm3284, %v3263
        %3299 = vst.msk [vmem:[#allocation2 + $0x70] sm:$0xff] %vm3284, %v3265
        %3300 = vst.msk [vmem:[#allocation2 + $0x78] sm:$0xff] %vm3284, %v3267
        %3301 = vrot.lane.b32.xlu0 %v1266, 112
        %v3302 = vpop.permute.xlu0 %3301
        %3303 = vrot.lane.b32.xlu0 %v1266, 80
        %v3304 = vpop.permute.xlu0 %3303
        %v3306 = vsel %vm1277, %v3302, 0
        %v3309 = vsel %vm1277, %v3304, 0
        %3311 = vmatprep.subr.bf16.mxu0 0
        %3312 = vmatpush1.bf16.xpose.msra.mxu0 %v3309
        %3313 = vmatprep.subr.bf16.mxu0 0
        %3314 = vmatpush1.bf16.xpose.msra.mxu0 0
        %3315 = vmatprep.subr.bf16.mxu0 0
        %3316 = vmatpush1.bf16.xpose.msra.mxu0 0
        %3317 = vmatprep.subr.bf16.mxu0 0
        %3318 = vmatpush1.bf16.xpose.msra.mxu0 0
        %3319 = vmatprep.subr.bf16.mxu0 0
        %3320 = vmatpush1.bf16.xpose.msra.mxu0 0
        %3321 = vmatprep.subr.bf16.mxu0 0
        %3322 = vmatpush1.bf16.xpose.msra.mxu0 0
        %3323 = vmatprep.subr.bf16.mxu0 0
        %3324 = vmatpush1.bf16.xpose.msra.mxu0 0
        %3325 = vmatprep.subr.bf16.mxu0 0
        %3326 = vmatpush1.bf16.xpose.msra.mxu0 0
        %3327 = vmatprep.subr.bf16.mxu0 0
        %3328 = vmatpush1.bf16.xpose.msra.mxu0 0
        %3329 = vmatprep.subr.bf16.mxu0 0
        %3330 = vmatpush1.bf16.xpose.msra.mxu0 0
        %3331 = vmatprep.subr.bf16.mxu0 0
        %3332 = vmatpush1.bf16.xpose.msra.mxu0 0
        %3333 = vmatprep.subr.bf16.mxu0 0
        %3334 = vmatpush1.bf16.xpose.msra.mxu0 0
        %3335 = vmatprep.subr.bf16.mxu0 0
        %3336 = vmatpush1.bf16.xpose.msra.mxu0 0
        %3337 = vmatprep.subr.bf16.mxu0 0
        %3338 = vmatpush1.bf16.xpose.msra.mxu0 0
        %3339 = vmatprep.subr.bf16.mxu0 0
        %3340 = vmatpush1.bf16.xpose.msra.mxu0 0
        %3341 = vmatprep.subr.bf16.mxu0 0
        %3342 = vmatpush1.bf16.xpose.msra.mxu0 0
        %3343 = vmatprep.mubr.bf16.mxu0 0
        %3344 = vmatmul.mubr.bf16.gmra.mrb[0].mxu0 %v3306
        %v3345 = vpop.f32.mrb[0].mxu0
        %v3346 = vadd.f32 0.0, %v3345
        %v3347 = vpop.f32.mrb[0].mxu0
        %v3348 = vpop.f32.mrb[0].mxu0
        %v3349 = vadd.f32 0.0, %v3348
        %v3350 = vpop.f32.mrb[0].mxu0
        %3351 = vdwg.mxu0
        %3352 = vrot.lane.b32.xlu0 %v1267, 112
        %v3353 = vpop.permute.xlu0 %3352
        %3354 = vrot.lane.b32.xlu0 %v1267, 80
        %v3355 = vpop.permute.xlu0 %3354
        %v3357 = vsel %vm1277, %v3353, 0
        %v3360 = vsel %vm1277, %v3355, 0
        %3362 = vmatprep.subr.bf16.mxu0 0
        %3363 = vmatpush1.bf16.xpose.msra.mxu0 %v3360
        %3364 = vmatprep.subr.bf16.mxu0 0
        %3365 = vmatpush1.bf16.xpose.msra.mxu0 0
        %3366 = vmatprep.subr.bf16.mxu0 0
        %3367 = vmatpush1.bf16.xpose.msra.mxu0 0
        %3368 = vmatprep.subr.bf16.mxu0 0
        %3369 = vmatpush1.bf16.xpose.msra.mxu0 0
        %3370 = vmatprep.subr.bf16.mxu0 0
        %3371 = vmatpush1.bf16.xpose.msra.mxu0 0
        %3372 = vmatprep.subr.bf16.mxu0 0
        %3373 = vmatpush1.bf16.xpose.msra.mxu0 0
        %3374 = vmatprep.subr.bf16.mxu0 0
        %3375 = vmatpush1.bf16.xpose.msra.mxu0 0
        %3376 = vmatprep.subr.bf16.mxu0 0
        %3377 = vmatpush1.bf16.xpose.msra.mxu0 0
        %3378 = vmatprep.subr.bf16.mxu0 0
        %3379 = vmatpush1.bf16.xpose.msra.mxu0 0
        %3380 = vmatprep.subr.bf16.mxu0 0
        %3381 = vmatpush1.bf16.xpose.msra.mxu0 0
        %3382 = vmatprep.subr.bf16.mxu0 0
        %3383 = vmatpush1.bf16.xpose.msra.mxu0 0
        %3384 = vmatprep.subr.bf16.mxu0 0
        %3385 = vmatpush1.bf16.xpose.msra.mxu0 0
        %3386 = vmatprep.subr.bf16.mxu0 0
        %3387 = vmatpush1.bf16.xpose.msra.mxu0 0
        %3388 = vmatprep.subr.bf16.mxu0 0
        %3389 = vmatpush1.bf16.xpose.msra.mxu0 0
        %3390 = vmatprep.subr.bf16.mxu0 0
        %3391 = vmatpush1.bf16.xpose.msra.mxu0 0
        %3392 = vmatprep.subr.bf16.mxu0 0
        %3393 = vmatpush1.bf16.xpose.msra.mxu0 0
        %3394 = vmatprep.mubr.bf16.mxu0 0
        %3395 = vmatmul.mubr.bf16.gmra.mrb[0].mxu0 %v3357
        %v3396 = vpop.f32.mrb[0].mxu0
        %v3397 = vadd.f32 0.0, %v3396
        %v3398 = vpop.f32.mrb[0].mxu0
        %v3399 = vpop.f32.mrb[0].mxu0
        %v3400 = vadd.f32 0.0, %v3399
        %v3401 = vpop.f32.mrb[0].mxu0
        %3402 = vdwg.mxu0
        %3403 = vrot.lane.b32.xlu0 %v1268, 112
        %v3404 = vpop.permute.xlu0 %3403
        %3405 = vrot.lane.b32.xlu0 %v1268, 80
        %v3406 = vpop.permute.xlu0 %3405
        %v3408 = vsel %vm1277, %v3404, 0
        %v3411 = vsel %vm1277, %v3406, 0
        %3413 = vmatprep.subr.bf16.mxu0 0
        %3414 = vmatpush1.bf16.xpose.msra.mxu0 %v3411
        %3415 = vmatprep.subr.bf16.mxu0 0
        %3416 = vmatpush1.bf16.xpose.msra.mxu0 0
        %3417 = vmatprep.subr.bf16.mxu0 0
        %3418 = vmatpush1.bf16.xpose.msra.mxu0 0
        %3419 = vmatprep.subr.bf16.mxu0 0
        %3420 = vmatpush1.bf16.xpose.msra.mxu0 0
        %3421 = vmatprep.subr.bf16.mxu0 0
        %3422 = vmatpush1.bf16.xpose.msra.mxu0 0
        %3423 = vmatprep.subr.bf16.mxu0 0
        %3424 = vmatpush1.bf16.xpose.msra.mxu0 0
        %3425 = vmatprep.subr.bf16.mxu0 0
        %3426 = vmatpush1.bf16.xpose.msra.mxu0 0
        %3427 = vmatprep.subr.bf16.mxu0 0
        %3428 = vmatpush1.bf16.xpose.msra.mxu0 0
        %3429 = vmatprep.subr.bf16.mxu0 0
        %3430 = vmatpush1.bf16.xpose.msra.mxu0 0
        %3431 = vmatprep.subr.bf16.mxu0 0
        %3432 = vmatpush1.bf16.xpose.msra.mxu0 0
        %3433 = vmatprep.subr.bf16.mxu0 0
        %3434 = vmatpush1.bf16.xpose.msra.mxu0 0
        %3435 = vmatprep.subr.bf16.mxu0 0
        %3436 = vmatpush1.bf16.xpose.msra.mxu0 0
        %3437 = vmatprep.subr.bf16.mxu0 0
        %3438 = vmatpush1.bf16.xpose.msra.mxu0 0
        %3439 = vmatprep.subr.bf16.mxu0 0
        %3440 = vmatpush1.bf16.xpose.msra.mxu0 0
        %3441 = vmatprep.subr.bf16.mxu0 0
        %3442 = vmatpush1.bf16.xpose.msra.mxu0 0
        %3443 = vmatprep.subr.bf16.mxu0 0
        %3444 = vmatpush1.bf16.xpose.msra.mxu0 0
        %3445 = vmatprep.mubr.bf16.mxu0 0
        %3446 = vmatmul.mubr.bf16.gmra.mrb[0].mxu0 %v3408
        %v3447 = vpop.f32.mrb[0].mxu0
        %v3448 = vadd.f32 0.0, %v3447
        %v3449 = vpop.f32.mrb[0].mxu0
        %v3450 = vpop.f32.mrb[0].mxu0
        %v3451 = vadd.f32 0.0, %v3450
        %v3452 = vpop.f32.mrb[0].mxu0
        %3453 = vdwg.mxu0
        %3454 = vrot.lane.b32.xlu0 %v1269, 112
        %v3455 = vpop.permute.xlu0 %3454
        %3456 = vrot.lane.b32.xlu0 %v1269, 80
        %v3457 = vpop.permute.xlu0 %3456
        %v3459 = vsel %vm1277, %v3455, 0
        %v3462 = vsel %vm1277, %v3457, 0
        %3464 = vmatprep.subr.bf16.mxu0 0
        %3465 = vmatpush1.bf16.xpose.msra.mxu0 %v3462
        %3466 = vmatprep.subr.bf16.mxu0 0
        %3467 = vmatpush1.bf16.xpose.msra.mxu0 0
        %3468 = vmatprep.subr.bf16.mxu0 0
        %3469 = vmatpush1.bf16.xpose.msra.mxu0 0
        %3470 = vmatprep.subr.bf16.mxu0 0
        %3471 = vmatpush1.bf16.xpose.msra.mxu0 0
        %3472 = vmatprep.subr.bf16.mxu0 0
        %3473 = vmatpush1.bf16.xpose.msra.mxu0 0
        %3474 = vmatprep.subr.bf16.mxu0 0
        %3475 = vmatpush1.bf16.xpose.msra.mxu0 0
        %3476 = vmatprep.subr.bf16.mxu0 0
        %3477 = vmatpush1.bf16.xpose.msra.mxu0 0
        %3478 = vmatprep.subr.bf16.mxu0 0
        %3479 = vmatpush1.bf16.xpose.msra.mxu0 0
        %3480 = vmatprep.subr.bf16.mxu0 0
        %3481 = vmatpush1.bf16.xpose.msra.mxu0 0
        %3482 = vmatprep.subr.bf16.mxu0 0
        %3483 = vmatpush1.bf16.xpose.msra.mxu0 0
        %3484 = vmatprep.subr.bf16.mxu0 0
        %3485 = vmatpush1.bf16.xpose.msra.mxu0 0
        %3486 = vmatprep.subr.bf16.mxu0 0
        %3487 = vmatpush1.bf16.xpose.msra.mxu0 0
        %3488 = vmatprep.subr.bf16.mxu0 0
        %3489 = vmatpush1.bf16.xpose.msra.mxu0 0
        %3490 = vmatprep.subr.bf16.mxu0 0
        %3491 = vmatpush1.bf16.xpose.msra.mxu0 0
        %3492 = vmatprep.subr.bf16.mxu0 0
        %3493 = vmatpush1.bf16.xpose.msra.mxu0 0
        %3494 = vmatprep.subr.bf16.mxu0 0
        %3495 = vmatpush1.bf16.xpose.msra.mxu0 0
        %3496 = vmatprep.mubr.bf16.mxu0 0
        %3497 = vmatmul.mubr.bf16.gmra.mrb[0].mxu0 %v3459
        %v3498 = vpop.f32.mrb[0].mxu0
        %v3499 = vadd.f32 0.0, %v3498
        %v3500 = vpop.f32.mrb[0].mxu0
        %v3501 = vpop.f32.mrb[0].mxu0
        %v3502 = vadd.f32 0.0, %v3501
        %v3503 = vpop.f32.mrb[0].mxu0
        %3504 = vdwg.mxu0
        %3505 = vrot.lane.b32.xlu0 %v1270, 112
        %v3506 = vpop.permute.xlu0 %3505
        %3507 = vrot.lane.b32.xlu0 %v1270, 80
        %v3508 = vpop.permute.xlu0 %3507
        %v3510 = vsel %vm1277, %v3506, 0
        %v3513 = vsel %vm1277, %v3508, 0
        %3515 = vmatprep.subr.bf16.mxu0 0
        %3516 = vmatpush1.bf16.xpose.msra.mxu0 %v3513
        %3517 = vmatprep.subr.bf16.mxu0 0
        %3518 = vmatpush1.bf16.xpose.msra.mxu0 0
        %3519 = vmatprep.subr.bf16.mxu0 0
        %3520 = vmatpush1.bf16.xpose.msra.mxu0 0
        %3521 = vmatprep.subr.bf16.mxu0 0
        %3522 = vmatpush1.bf16.xpose.msra.mxu0 0
        %3523 = vmatprep.subr.bf16.mxu0 0
        %3524 = vmatpush1.bf16.xpose.msra.mxu0 0
        %3525 = vmatprep.subr.bf16.mxu0 0
        %3526 = vmatpush1.bf16.xpose.msra.mxu0 0
        %3527 = vmatprep.subr.bf16.mxu0 0
        %3528 = vmatpush1.bf16.xpose.msra.mxu0 0
        %3529 = vmatprep.subr.bf16.mxu0 0
        %3530 = vmatpush1.bf16.xpose.msra.mxu0 0
        %3531 = vmatprep.subr.bf16.mxu0 0
        %3532 = vmatpush1.bf16.xpose.msra.mxu0 0
        %3533 = vmatprep.subr.bf16.mxu0 0
        %3534 = vmatpush1.bf16.xpose.msra.mxu0 0
        %3535 = vmatprep.subr.bf16.mxu0 0
        %3536 = vmatpush1.bf16.xpose.msra.mxu0 0
        %3537 = vmatprep.subr.bf16.mxu0 0
        %3538 = vmatpush1.bf16.xpose.msra.mxu0 0
        %3539 = vmatprep.subr.bf16.mxu0 0
        %3540 = vmatpush1.bf16.xpose.msra.mxu0 0
        %3541 = vmatprep.subr.bf16.mxu0 0
        %3542 = vmatpush1.bf16.xpose.msra.mxu0 0
        %3543 = vmatprep.subr.bf16.mxu0 0
        %3544 = vmatpush1.bf16.xpose.msra.mxu0 0
        %3545 = vmatprep.subr.bf16.mxu0 0
        %3546 = vmatpush1.bf16.xpose.msra.mxu0 0
        %3547 = vmatprep.mubr.bf16.mxu0 0
        %3548 = vmatmul.mubr.bf16.gmra.mrb[0].mxu0 %v3510
        %v3549 = vpop.f32.mrb[0].mxu0
        %v3550 = vadd.f32 0.0, %v3549
        %v3551 = vpop.f32.mrb[0].mxu0
        %v3552 = vpop.f32.mrb[0].mxu0
        %v3553 = vadd.f32 0.0, %v3552
        %v3554 = vpop.f32.mrb[0].mxu0
        %3555 = vdwg.mxu0
        %3556 = vrot.lane.b32.xlu0 %v1271, 112
        %v3557 = vpop.permute.xlu0 %3556
        %3558 = vrot.lane.b32.xlu0 %v1271, 80
        %v3559 = vpop.permute.xlu0 %3558
        %v3561 = vsel %vm1277, %v3557, 0
        %v3564 = vsel %vm1277, %v3559, 0
        %3566 = vmatprep.subr.bf16.mxu0 0
        %3567 = vmatpush1.bf16.xpose.msra.mxu0 %v3564
        %3568 = vmatprep.subr.bf16.mxu0 0
        %3569 = vmatpush1.bf16.xpose.msra.mxu0 0
        %3570 = vmatprep.subr.bf16.mxu0 0
        %3571 = vmatpush1.bf16.xpose.msra.mxu0 0
        %3572 = vmatprep.subr.bf16.mxu0 0
        %3573 = vmatpush1.bf16.xpose.msra.mxu0 0
        %3574 = vmatprep.subr.bf16.mxu0 0
        %3575 = vmatpush1.bf16.xpose.msra.mxu0 0
        %3576 = vmatprep.subr.bf16.mxu0 0
        %3577 = vmatpush1.bf16.xpose.msra.mxu0 0
        %3578 = vmatprep.subr.bf16.mxu0 0
        %3579 = vmatpush1.bf16.xpose.msra.mxu0 0
        %3580 = vmatprep.subr.bf16.mxu0 0
        %3581 = vmatpush1.bf16.xpose.msra.mxu0 0
        %3582 = vmatprep.subr.bf16.mxu0 0
        %3583 = vmatpush1.bf16.xpose.msra.mxu0 0
        %3584 = vmatprep.subr.bf16.mxu0 0
        %3585 = vmatpush1.bf16.xpose.msra.mxu0 0
        %3586 = vmatprep.subr.bf16.mxu0 0
        %3587 = vmatpush1.bf16.xpose.msra.mxu0 0
        %3588 = vmatprep.subr.bf16.mxu0 0
        %3589 = vmatpush1.bf16.xpose.msra.mxu0 0
        %3590 = vmatprep.subr.bf16.mxu0 0
        %3591 = vmatpush1.bf16.xpose.msra.mxu0 0
        %3592 = vmatprep.subr.bf16.mxu0 0
        %3593 = vmatpush1.bf16.xpose.msra.mxu0 0
        %3594 = vmatprep.subr.bf16.mxu0 0
        %3595 = vmatpush1.bf16.xpose.msra.mxu0 0
        %3596 = vmatprep.subr.bf16.mxu0 0
        %3597 = vmatpush1.bf16.xpose.msra.mxu0 0
        %3598 = vmatprep.mubr.bf16.mxu0 0
        %3599 = vmatmul.mubr.bf16.gmra.mrb[0].mxu0 %v3561
        %v3600 = vpop.f32.mrb[0].mxu0
        %v3601 = vadd.f32 0.0, %v3600
        %v3602 = vpop.f32.mrb[0].mxu0
        %v3603 = vpop.f32.mrb[0].mxu0
        %v3604 = vadd.f32 0.0, %v3603
        %v3605 = vpop.f32.mrb[0].mxu0
        %3606 = vdwg.mxu0
        %3607 = vrot.lane.b32.xlu0 %v1272, 112
        %v3608 = vpop.permute.xlu0 %3607
        %3609 = vrot.lane.b32.xlu0 %v1272, 80
        %v3610 = vpop.permute.xlu0 %3609
        %v3612 = vsel %vm1277, %v3608, 0
        %v3615 = vsel %vm1277, %v3610, 0
        %3617 = vmatprep.subr.bf16.mxu0 0
        %3618 = vmatpush1.bf16.xpose.msra.mxu0 %v3615
        %3619 = vmatprep.subr.bf16.mxu0 0
        %3620 = vmatpush1.bf16.xpose.msra.mxu0 0
        %3621 = vmatprep.subr.bf16.mxu0 0
        %3622 = vmatpush1.bf16.xpose.msra.mxu0 0
        %3623 = vmatprep.subr.bf16.mxu0 0
        %3624 = vmatpush1.bf16.xpose.msra.mxu0 0
        %3625 = vmatprep.subr.bf16.mxu0 0
        %3626 = vmatpush1.bf16.xpose.msra.mxu0 0
        %3627 = vmatprep.subr.bf16.mxu0 0
        %3628 = vmatpush1.bf16.xpose.msra.mxu0 0
        %3629 = vmatprep.subr.bf16.mxu0 0
        %3630 = vmatpush1.bf16.xpose.msra.mxu0 0
        %3631 = vmatprep.subr.bf16.mxu0 0
        %3632 = vmatpush1.bf16.xpose.msra.mxu0 0
        %3633 = vmatprep.subr.bf16.mxu0 0
        %3634 = vmatpush1.bf16.xpose.msra.mxu0 0
        %3635 = vmatprep.subr.bf16.mxu0 0
        %3636 = vmatpush1.bf16.xpose.msra.mxu0 0
        %3637 = vmatprep.subr.bf16.mxu0 0
        %3638 = vmatpush1.bf16.xpose.msra.mxu0 0
        %3639 = vmatprep.subr.bf16.mxu0 0
        %3640 = vmatpush1.bf16.xpose.msra.mxu0 0
        %3641 = vmatprep.subr.bf16.mxu0 0
        %3642 = vmatpush1.bf16.xpose.msra.mxu0 0
        %3643 = vmatprep.subr.bf16.mxu0 0
        %3644 = vmatpush1.bf16.xpose.msra.mxu0 0
        %3645 = vmatprep.subr.bf16.mxu0 0
        %3646 = vmatpush1.bf16.xpose.msra.mxu0 0
        %3647 = vmatprep.subr.bf16.mxu0 0
        %3648 = vmatpush1.bf16.xpose.msra.mxu0 0
        %3649 = vmatprep.mubr.bf16.mxu0 0
        %3650 = vmatmul.mubr.bf16.gmra.mrb[0].mxu0 %v3612
        %v3651 = vpop.f32.mrb[0].mxu0
        %v3652 = vadd.f32 0.0, %v3651
        %v3653 = vpop.f32.mrb[0].mxu0
        %v3654 = vpop.f32.mrb[0].mxu0
        %v3655 = vadd.f32 0.0, %v3654
        %v3656 = vpop.f32.mrb[0].mxu0
        %3657 = vdwg.mxu0
        %3658 = vrot.lane.b32.xlu0 %v1273, 112
        %v3659 = vpop.permute.xlu0 %3658
        %3660 = vrot.lane.b32.xlu0 %v1273, 80
        %v3661 = vpop.permute.xlu0 %3660
        %v3663 = vsel %vm1277, %v3659, 0
        %v3666 = vsel %vm1277, %v3661, 0
        %3668 = vmatprep.subr.bf16.mxu0 0
        %3669 = vmatpush1.bf16.xpose.msra.mxu0 %v3666
        %3670 = vmatprep.subr.bf16.mxu0 0
        %3671 = vmatpush1.bf16.xpose.msra.mxu0 0
        %3672 = vmatprep.subr.bf16.mxu0 0
        %3673 = vmatpush1.bf16.xpose.msra.mxu0 0
        %3674 = vmatprep.subr.bf16.mxu0 0
        %3675 = vmatpush1.bf16.xpose.msra.mxu0 0
        %3676 = vmatprep.subr.bf16.mxu0 0
        %3677 = vmatpush1.bf16.xpose.msra.mxu0 0
        %3678 = vmatprep.subr.bf16.mxu0 0
        %3679 = vmatpush1.bf16.xpose.msra.mxu0 0
        %3680 = vmatprep.subr.bf16.mxu0 0
        %3681 = vmatpush1.bf16.xpose.msra.mxu0 0
        %3682 = vmatprep.subr.bf16.mxu0 0
        %3683 = vmatpush1.bf16.xpose.msra.mxu0 0
        %3684 = vmatprep.subr.bf16.mxu0 0
        %3685 = vmatpush1.bf16.xpose.msra.mxu0 0
        %3686 = vmatprep.subr.bf16.mxu0 0
        %3687 = vmatpush1.bf16.xpose.msra.mxu0 0
        %3688 = vmatprep.subr.bf16.mxu0 0
        %3689 = vmatpush1.bf16.xpose.msra.mxu0 0
        %3690 = vmatprep.subr.bf16.mxu0 0
        %3691 = vmatpush1.bf16.xpose.msra.mxu0 0
        %3692 = vmatprep.subr.bf16.mxu0 0
        %3693 = vmatpush1.bf16.xpose.msra.mxu0 0
        %3694 = vmatprep.subr.bf16.mxu0 0
        %3695 = vmatpush1.bf16.xpose.msra.mxu0 0
        %3696 = vmatprep.subr.bf16.mxu0 0
        %3697 = vmatpush1.bf16.xpose.msra.mxu0 0
        %3698 = vmatprep.subr.bf16.mxu0 0
        %3699 = vmatpush1.bf16.xpose.msra.mxu0 0
        %3700 = vmatprep.mubr.bf16.mxu0 0
        %3701 = vmatmul.mubr.bf16.gmra.mrb[0].mxu0 %v3663
        %v3702 = vpop.f32.mrb[0].mxu0
        %v3703 = vadd.f32 0.0, %v3702
        %v3704 = vpop.f32.mrb[0].mxu0
        %v3705 = vpop.f32.mrb[0].mxu0
        %v3706 = vadd.f32 0.0, %v3705
        %v3707 = vpop.f32.mrb[0].mxu0
        %3708 = vdwg.mxu0
        %v3709 = vsel %vm1675, %v3346, -inf
        %3710 = vmax.xlane.f32.xlu0 %v3709
        %v3711 = vpop.xlane.xlu0 %3710
        %v3712 = vsel %vm1675, %v3349, -inf
        %3713 = vmax.xlane.f32.xlu0 %v3712
        %v3714 = vpop.xlane.xlu0 %3713
        %v3715 = vsel %vm1675, %v3397, -inf
        %3716 = vmax.xlane.f32.xlu0 %v3715
        %v3717 = vpop.xlane.xlu0 %3716
        %v3718 = vsel %vm1675, %v3400, -inf
        %3719 = vmax.xlane.f32.xlu0 %v3718
        %v3720 = vpop.xlane.xlu0 %3719
        %v3721 = vsel %vm1675, %v3448, -inf
        %3722 = vmax.xlane.f32.xlu0 %v3721
        %v3723 = vpop.xlane.xlu0 %3722
        %v3724 = vsel %vm1675, %v3451, -inf
        %3725 = vmax.xlane.f32.xlu0 %v3724
        %v3726 = vpop.xlane.xlu0 %3725
        %v3727 = vsel %vm1675, %v3499, -inf
        %3728 = vmax.xlane.f32.xlu0 %v3727
        %v3729 = vpop.xlane.xlu0 %3728
        %v3730 = vsel %vm1675, %v3502, -inf
        %3731 = vmax.xlane.f32.xlu0 %v3730
        %v3732 = vpop.xlane.xlu0 %3731
        %v3733 = vsel %vm1675, %v3550, -inf
        %3734 = vmax.xlane.f32.xlu0 %v3733
        %v3735 = vpop.xlane.xlu0 %3734
        %v3736 = vsel %vm1675, %v3553, -inf
        %3737 = vmax.xlane.f32.xlu0 %v3736
        %v3738 = vpop.xlane.xlu0 %3737
        %v3739 = vsel %vm1675, %v3601, -inf
        %3740 = vmax.xlane.f32.xlu0 %v3739
        %v3741 = vpop.xlane.xlu0 %3740
        %v3742 = vsel %vm1675, %v3604, -inf
        %3743 = vmax.xlane.f32.xlu0 %v3742
        %v3744 = vpop.xlane.xlu0 %3743
        %v3745 = vsel %vm1675, %v3652, -inf
        %3746 = vmax.xlane.f32.xlu0 %v3745
        %v3747 = vpop.xlane.xlu0 %3746
        %v3748 = vsel %vm1675, %v3655, -inf
        %3749 = vmax.xlane.f32.xlu0 %v3748
        %v3750 = vpop.xlane.xlu0 %3749
        %v3751 = vsel %vm1675, %v3703, -inf
        %3752 = vmax.xlane.f32.xlu0 %v3751
        %v3753 = vpop.xlane.xlu0 %3752
        %v3754 = vsel %vm1675, %v3706, -inf
        %3755 = vmax.xlane.f32.xlu0 %v3754
        %v3756 = vpop.xlane.xlu0 %3755
        %v3757 = vsub.f32 %v3346, %v3711
        %v3758 = vsub.f32 %v3349, %v3714
        %v3759 = vsub.f32 %v3397, %v3717
        %v3760 = vsub.f32 %v3400, %v3720
        %v3761 = vsub.f32 %v3448, %v3723
        %v3762 = vsub.f32 %v3451, %v3726
        %v3763 = vsub.f32 %v3499, %v3729
        %v3764 = vsub.f32 %v3502, %v3732
        %v3765 = vsub.f32 %v3550, %v3735
        %v3766 = vsub.f32 %v3553, %v3738
        %v3767 = vsub.f32 %v3601, %v3741
        %v3768 = vsub.f32 %v3604, %v3744
        %v3769 = vsub.f32 %v3652, %v3747
        %v3770 = vsub.f32 %v3655, %v3750
        %v3771 = vsub.f32 %v3703, %v3753
        %v3772 = vsub.f32 %v3706, %v3756
        %v3773 = vmul.f32 %v3757, 1.442695
        %v3774 = vpow.pop %v3773
        %v3775 = vmul.f32 %v3758, 1.442695
        %v3776 = vpow.pop %v3775
        %v3777 = vmul.f32 %v3759, 1.442695
        %v3778 = vpow.pop %v3777
        %v3779 = vmul.f32 %v3760, 1.442695
        %v3780 = vpow.pop %v3779
        %v3781 = vmul.f32 %v3761, 1.442695
        %v3782 = vpow.pop %v3781
        %v3783 = vmul.f32 %v3762, 1.442695
        %v3784 = vpow.pop %v3783
        %v3785 = vmul.f32 %v3763, 1.442695
        %v3786 = vpow.pop %v3785
        %v3787 = vmul.f32 %v3764, 1.442695
        %v3788 = vpow.pop %v3787
        %v3789 = vmul.f32 %v3765, 1.442695
        %v3790 = vpow.pop %v3789
        %v3791 = vmul.f32 %v3766, 1.442695
        %v3792 = vpow.pop %v3791
        %v3793 = vmul.f32 %v3767, 1.442695
        %v3794 = vpow.pop %v3793
        %v3795 = vmul.f32 %v3768, 1.442695
        %v3796 = vpow.pop %v3795
        %v3797 = vmul.f32 %v3769, 1.442695
        %v3798 = vpow.pop %v3797
        %v3799 = vmul.f32 %v3770, 1.442695
        %v3800 = vpow.pop %v3799
        %v3801 = vmul.f32 %v3771, 1.442695
        %v3802 = vpow.pop %v3801
        %v3803 = vmul.f32 %v3772, 1.442695
        %v3804 = vpow.pop %v3803
        %v3805 = vsel %vm1675, %v3774, 0.0
        %3806 = vadd.xlane.f32.xlu0 %v3805
        %v3807 = vpop.xlane.xlu0 %3806
        %v3808 = vsel %vm1675, %v3776, 0.0
        %3809 = vadd.xlane.f32.xlu0 %v3808
        %v3810 = vpop.xlane.xlu0 %3809
        %v3811 = vsel %vm1675, %v3778, 0.0
        %3812 = vadd.xlane.f32.xlu0 %v3811
        %v3813 = vpop.xlane.xlu0 %3812
        %v3814 = vsel %vm1675, %v3780, 0.0
        %3815 = vadd.xlane.f32.xlu0 %v3814
        %v3816 = vpop.xlane.xlu0 %3815
        %v3817 = vsel %vm1675, %v3782, 0.0
        %3818 = vadd.xlane.f32.xlu0 %v3817
        %v3819 = vpop.xlane.xlu0 %3818
        %v3820 = vsel %vm1675, %v3784, 0.0
        %3821 = vadd.xlane.f32.xlu0 %v3820
        %v3822 = vpop.xlane.xlu0 %3821
        %v3823 = vsel %vm1675, %v3786, 0.0
        %3824 = vadd.xlane.f32.xlu0 %v3823
        %v3825 = vpop.xlane.xlu0 %3824
        %v3826 = vsel %vm1675, %v3788, 0.0
        %3827 = vadd.xlane.f32.xlu0 %v3826
        %v3828 = vpop.xlane.xlu0 %3827
        %v3829 = vsel %vm1675, %v3790, 0.0
        %3830 = vadd.xlane.f32.xlu0 %v3829
        %v3831 = vpop.xlane.xlu0 %3830
        %v3832 = vsel %vm1675, %v3792, 0.0
        %3833 = vadd.xlane.f32.xlu0 %v3832
        %v3834 = vpop.xlane.xlu0 %3833
        %v3835 = vsel %vm1675, %v3794, 0.0
        %3836 = vadd.xlane.f32.xlu0 %v3835
        %v3837 = vpop.xlane.xlu0 %3836
        %v3838 = vsel %vm1675, %v3796, 0.0
        %3839 = vadd.xlane.f32.xlu0 %v3838
        %v3840 = vpop.xlane.xlu0 %3839
        %v3841 = vsel %vm1675, %v3798, 0.0
        %3842 = vadd.xlane.f32.xlu0 %v3841
        %v3843 = vpop.xlane.xlu0 %3842
        %v3844 = vsel %vm1675, %v3800, 0.0
        %3845 = vadd.xlane.f32.xlu0 %v3844
        %v3846 = vpop.xlane.xlu0 %3845
        %v3847 = vsel %vm1675, %v3802, 0.0
        %3848 = vadd.xlane.f32.xlu0 %v3847
        %v3849 = vpop.xlane.xlu0 %3848
        %v3850 = vsel %vm1675, %v3804, 0.0
        %3851 = vadd.xlane.f32.xlu0 %v3850
        %v3852 = vpop.xlane.xlu0 %3851
        %v3853 = vrcp.pop %v3807
        %v3854 = vmul.f32 %v3774, %v3853
        %v3855 = vrcp.pop %v3810
        %v3856 = vmul.f32 %v3776, %v3855
        %v3857 = vrcp.pop %v3813
        %v3858 = vmul.f32 %v3778, %v3857
        %v3859 = vrcp.pop %v3816
        %v3860 = vmul.f32 %v3780, %v3859
        %v3861 = vrcp.pop %v3819
        %v3862 = vmul.f32 %v3782, %v3861
        %v3863 = vrcp.pop %v3822
        %v3864 = vmul.f32 %v3784, %v3863
        %v3865 = vrcp.pop %v3825
        %v3866 = vmul.f32 %v3786, %v3865
        %v3867 = vrcp.pop %v3828
        %v3868 = vmul.f32 %v3788, %v3867
        %v3869 = vrcp.pop %v3831
        %v3870 = vmul.f32 %v3790, %v3869
        %v3871 = vrcp.pop %v3834
        %v3872 = vmul.f32 %v3792, %v3871
        %v3873 = vrcp.pop %v3837
        %v3874 = vmul.f32 %v3794, %v3873
        %v3875 = vrcp.pop %v3840
        %v3876 = vmul.f32 %v3796, %v3875
        %v3877 = vrcp.pop %v3843
        %v3878 = vmul.f32 %v3798, %v3877
        %v3879 = vrcp.pop %v3846
        %v3880 = vmul.f32 %v3800, %v3879
        %v3881 = vrcp.pop %v3849
        %v3882 = vmul.f32 %v3802, %v3881
        %v3883 = vrcp.pop %v3852
        %v3884 = vmul.f32 %v3804, %v3883
        %v3885 = vpack.c.bf16 %v3856, %v3854
        %v3886 = vpack.c.bf16 %v3860, %v3858
        %v3887 = vpack.c.bf16 %v3864, %v3862
        %v3888 = vpack.c.bf16 %v3868, %v3866
        %v3889 = vpack.c.bf16 %v3872, %v3870
        %v3890 = vpack.c.bf16 %v3876, %v3874
        %v3891 = vpack.c.bf16 %v3880, %v3878
        %v3892 = vpack.c.bf16 %v3884, %v3882
        %3893 = vrot.lane.b32.xlu0 %v1266, 48
        %v3894 = vpop.permute.xlu0 %3893
        %v3897 = vsel %vm1675, %v3885, 0
        %3899 = vmatprep.subr.bf16.mxu0 0
        %3900 = vmatpush1.bf16.msra.mxu0 %v3894
        %3901 = vmatprep.subr.bf16.mxu0 0
        %3902 = vmatpush1.bf16.msra.mxu0 0
        %3903 = vmatprep.subr.bf16.mxu0 0
        %3904 = vmatpush1.bf16.msra.mxu0 0
        %3905 = vmatprep.subr.bf16.mxu0 0
        %3906 = vmatpush1.bf16.msra.mxu0 0
        %3907 = vmatprep.subr.bf16.mxu0 0
        %3908 = vmatpush1.bf16.msra.mxu0 0
        %3909 = vmatprep.subr.bf16.mxu0 0
        %3910 = vmatpush1.bf16.msra.mxu0 0
        %3911 = vmatprep.subr.bf16.mxu0 0
        %3912 = vmatpush1.bf16.msra.mxu0 0
        %3913 = vmatprep.subr.bf16.mxu0 0
        %3914 = vmatpush1.bf16.msra.mxu0 0
        %3915 = vmatprep.subr.bf16.mxu0 0
        %3916 = vmatpush1.bf16.msra.mxu0 0
        %3917 = vmatprep.subr.bf16.mxu0 0
        %3918 = vmatpush1.bf16.msra.mxu0 0
        %3919 = vmatprep.subr.bf16.mxu0 0
        %3920 = vmatpush1.bf16.msra.mxu0 0
        %3921 = vmatprep.subr.bf16.mxu0 0
        %3922 = vmatpush1.bf16.msra.mxu0 0
        %3923 = vmatprep.subr.bf16.mxu0 0
        %3924 = vmatpush1.bf16.msra.mxu0 0
        %3925 = vmatprep.subr.bf16.mxu0 0
        %3926 = vmatpush1.bf16.msra.mxu0 0
        %3927 = vmatprep.subr.bf16.mxu0 0
        %3928 = vmatpush1.bf16.msra.mxu0 0
        %3929 = vmatprep.subr.bf16.mxu0 0
        %3930 = vmatpush1.bf16.msra.mxu0 0
        %3931 = vmatprep.mubr.bf16.mxu0 0
        %3932 = vmatmul.mubr.bf16.gmra.mrb[0].mxu0 %v3897
        %v3933 = vpop.f32.mrb[0].mxu0
        %v3934 = vadd.f32 0.0, %v3933
        %v3935 = vpop.f32.mrb[0].mxu0
        %v3936 = vpop.f32.mrb[0].mxu0
        %v3937 = vadd.f32 0.0, %v3936
        %v3938 = vpop.f32.mrb[0].mxu0
        %3939 = vdwg.mxu0
        %3940 = vrot.lane.b32.xlu0 %v1267, 48
        %v3941 = vpop.permute.xlu0 %3940
        %v3944 = vsel %vm1675, %v3886, 0
        %3946 = vmatprep.subr.bf16.mxu0 0
        %3947 = vmatpush1.bf16.msra.mxu0 %v3941
        %3948 = vmatprep.subr.bf16.mxu0 0
        %3949 = vmatpush1.bf16.msra.mxu0 0
        %3950 = vmatprep.subr.bf16.mxu0 0
        %3951 = vmatpush1.bf16.msra.mxu0 0
        %3952 = vmatprep.subr.bf16.mxu0 0
        %3953 = vmatpush1.bf16.msra.mxu0 0
        %3954 = vmatprep.subr.bf16.mxu0 0
        %3955 = vmatpush1.bf16.msra.mxu0 0
        %3956 = vmatprep.subr.bf16.mxu0 0
        %3957 = vmatpush1.bf16.msra.mxu0 0
        %3958 = vmatprep.subr.bf16.mxu0 0
        %3959 = vmatpush1.bf16.msra.mxu0 0
        %3960 = vmatprep.subr.bf16.mxu0 0
        %3961 = vmatpush1.bf16.msra.mxu0 0
        %3962 = vmatprep.subr.bf16.mxu0 0
        %3963 = vmatpush1.bf16.msra.mxu0 0
        %3964 = vmatprep.subr.bf16.mxu0 0
        %3965 = vmatpush1.bf16.msra.mxu0 0
        %3966 = vmatprep.subr.bf16.mxu0 0
        %3967 = vmatpush1.bf16.msra.mxu0 0
        %3968 = vmatprep.subr.bf16.mxu0 0
        %3969 = vmatpush1.bf16.msra.mxu0 0
        %3970 = vmatprep.subr.bf16.mxu0 0
        %3971 = vmatpush1.bf16.msra.mxu0 0
        %3972 = vmatprep.subr.bf16.mxu0 0
        %3973 = vmatpush1.bf16.msra.mxu0 0
        %3974 = vmatprep.subr.bf16.mxu0 0
        %3975 = vmatpush1.bf16.msra.mxu0 0
        %3976 = vmatprep.subr.bf16.mxu0 0
        %3977 = vmatpush1.bf16.msra.mxu0 0
        %3978 = vmatprep.mubr.bf16.mxu0 0
        %3979 = vmatmul.mubr.bf16.gmra.mrb[0].mxu0 %v3944
        %v3980 = vpop.f32.mrb[0].mxu0
        %v3981 = vadd.f32 0.0, %v3980
        %v3982 = vpop.f32.mrb[0].mxu0
        %v3983 = vpop.f32.mrb[0].mxu0
        %v3984 = vadd.f32 0.0, %v3983
        %v3985 = vpop.f32.mrb[0].mxu0
        %3986 = vdwg.mxu0
        %3987 = vrot.lane.b32.xlu0 %v1268, 48
        %v3988 = vpop.permute.xlu0 %3987
        %v3991 = vsel %vm1675, %v3887, 0
        %3993 = vmatprep.subr.bf16.mxu0 0
        %3994 = vmatpush1.bf16.msra.mxu0 %v3988
        %3995 = vmatprep.subr.bf16.mxu0 0
        %3996 = vmatpush1.bf16.msra.mxu0 0
        %3997 = vmatprep.subr.bf16.mxu0 0
        %3998 = vmatpush1.bf16.msra.mxu0 0
        %3999 = vmatprep.subr.bf16.mxu0 0
        %4000 = vmatpush1.bf16.msra.mxu0 0
        %4001 = vmatprep.subr.bf16.mxu0 0
        %4002 = vmatpush1.bf16.msra.mxu0 0
        %4003 = vmatprep.subr.bf16.mxu0 0
        %4004 = vmatpush1.bf16.msra.mxu0 0
        %4005 = vmatprep.subr.bf16.mxu0 0
        %4006 = vmatpush1.bf16.msra.mxu0 0
        %4007 = vmatprep.subr.bf16.mxu0 0
        %4008 = vmatpush1.bf16.msra.mxu0 0
        %4009 = vmatprep.subr.bf16.mxu0 0
        %4010 = vmatpush1.bf16.msra.mxu0 0
        %4011 = vmatprep.subr.bf16.mxu0 0
        %4012 = vmatpush1.bf16.msra.mxu0 0
        %4013 = vmatprep.subr.bf16.mxu0 0
        %4014 = vmatpush1.bf16.msra.mxu0 0
        %4015 = vmatprep.subr.bf16.mxu0 0
        %4016 = vmatpush1.bf16.msra.mxu0 0
        %4017 = vmatprep.subr.bf16.mxu0 0
        %4018 = vmatpush1.bf16.msra.mxu0 0
        %4019 = vmatprep.subr.bf16.mxu0 0
        %4020 = vmatpush1.bf16.msra.mxu0 0
        %4021 = vmatprep.subr.bf16.mxu0 0
        %4022 = vmatpush1.bf16.msra.mxu0 0
        %4023 = vmatprep.subr.bf16.mxu0 0
        %4024 = vmatpush1.bf16.msra.mxu0 0
        %4025 = vmatprep.mubr.bf16.mxu0 0
        %4026 = vmatmul.mubr.bf16.gmra.mrb[0].mxu0 %v3991
        %v4027 = vpop.f32.mrb[0].mxu0
        %v4028 = vadd.f32 0.0, %v4027
        %v4029 = vpop.f32.mrb[0].mxu0
        %v4030 = vpop.f32.mrb[0].mxu0
        %v4031 = vadd.f32 0.0, %v4030
        %v4032 = vpop.f32.mrb[0].mxu0
        %4033 = vdwg.mxu0
        %4034 = vrot.lane.b32.xlu0 %v1269, 48
        %v4035 = vpop.permute.xlu0 %4034
        %v4038 = vsel %vm1675, %v3888, 0
        %4040 = vmatprep.subr.bf16.mxu0 0
        %4041 = vmatpush1.bf16.msra.mxu0 %v4035
        %4042 = vmatprep.subr.bf16.mxu0 0
        %4043 = vmatpush1.bf16.msra.mxu0 0
        %4044 = vmatprep.subr.bf16.mxu0 0
        %4045 = vmatpush1.bf16.msra.mxu0 0
        %4046 = vmatprep.subr.bf16.mxu0 0
        %4047 = vmatpush1.bf16.msra.mxu0 0
        %4048 = vmatprep.subr.bf16.mxu0 0
        %4049 = vmatpush1.bf16.msra.mxu0 0
        %4050 = vmatprep.subr.bf16.mxu0 0
        %4051 = vmatpush1.bf16.msra.mxu0 0
        %4052 = vmatprep.subr.bf16.mxu0 0
        %4053 = vmatpush1.bf16.msra.mxu0 0
        %4054 = vmatprep.subr.bf16.mxu0 0
        %4055 = vmatpush1.bf16.msra.mxu0 0
        %4056 = vmatprep.subr.bf16.mxu0 0
        %4057 = vmatpush1.bf16.msra.mxu0 0
        %4058 = vmatprep.subr.bf16.mxu0 0
        %4059 = vmatpush1.bf16.msra.mxu0 0
        %4060 = vmatprep.subr.bf16.mxu0 0
        %4061 = vmatpush1.bf16.msra.mxu0 0
        %4062 = vmatprep.subr.bf16.mxu0 0
        %4063 = vmatpush1.bf16.msra.mxu0 0
        %4064 = vmatprep.subr.bf16.mxu0 0
        %4065 = vmatpush1.bf16.msra.mxu0 0
        %4066 = vmatprep.subr.bf16.mxu0 0
        %4067 = vmatpush1.bf16.msra.mxu0 0
        %4068 = vmatprep.subr.bf16.mxu0 0
        %4069 = vmatpush1.bf16.msra.mxu0 0
        %4070 = vmatprep.subr.bf16.mxu0 0
        %4071 = vmatpush1.bf16.msra.mxu0 0
        %4072 = vmatprep.mubr.bf16.mxu0 0
        %4073 = vmatmul.mubr.bf16.gmra.mrb[0].mxu0 %v4038
        %v4074 = vpop.f32.mrb[0].mxu0
        %v4075 = vadd.f32 0.0, %v4074
        %v4076 = vpop.f32.mrb[0].mxu0
        %v4077 = vpop.f32.mrb[0].mxu0
        %v4078 = vadd.f32 0.0, %v4077
        %v4079 = vpop.f32.mrb[0].mxu0
        %4080 = vdwg.mxu0
        %4081 = vrot.lane.b32.xlu0 %v1270, 48
        %v4082 = vpop.permute.xlu0 %4081
        %v4085 = vsel %vm1675, %v3889, 0
        %4087 = vmatprep.subr.bf16.mxu0 0
        %4088 = vmatpush1.bf16.msra.mxu0 %v4082
        %4089 = vmatprep.subr.bf16.mxu0 0
        %4090 = vmatpush1.bf16.msra.mxu0 0
        %4091 = vmatprep.subr.bf16.mxu0 0
        %4092 = vmatpush1.bf16.msra.mxu0 0
        %4093 = vmatprep.subr.bf16.mxu0 0
        %4094 = vmatpush1.bf16.msra.mxu0 0
        %4095 = vmatprep.subr.bf16.mxu0 0
        %4096 = vmatpush1.bf16.msra.mxu0 0
        %4097 = vmatprep.subr.bf16.mxu0 0
        %4098 = vmatpush1.bf16.msra.mxu0 0
        %4099 = vmatprep.subr.bf16.mxu0 0
        %4100 = vmatpush1.bf16.msra.mxu0 0
        %4101 = vmatprep.subr.bf16.mxu0 0
        %4102 = vmatpush1.bf16.msra.mxu0 0
        %4103 = vmatprep.subr.bf16.mxu0 0
        %4104 = vmatpush1.bf16.msra.mxu0 0
        %4105 = vmatprep.subr.bf16.mxu0 0
        %4106 = vmatpush1.bf16.msra.mxu0 0
        %4107 = vmatprep.subr.bf16.mxu0 0
        %4108 = vmatpush1.bf16.msra.mxu0 0
        %4109 = vmatprep.subr.bf16.mxu0 0
        %4110 = vmatpush1.bf16.msra.mxu0 0
        %4111 = vmatprep.subr.bf16.mxu0 0
        %4112 = vmatpush1.bf16.msra.mxu0 0
        %4113 = vmatprep.subr.bf16.mxu0 0
        %4114 = vmatpush1.bf16.msra.mxu0 0
        %4115 = vmatprep.subr.bf16.mxu0 0
        %4116 = vmatpush1.bf16.msra.mxu0 0
        %4117 = vmatprep.subr.bf16.mxu0 0
        %4118 = vmatpush1.bf16.msra.mxu0 0
        %4119 = vmatprep.mubr.bf16.mxu0 0
        %4120 = vmatmul.mubr.bf16.gmra.mrb[0].mxu0 %v4085
        %v4121 = vpop.f32.mrb[0].mxu0
        %v4122 = vadd.f32 0.0, %v4121
        %v4123 = vpop.f32.mrb[0].mxu0
        %v4124 = vpop.f32.mrb[0].mxu0
        %v4125 = vadd.f32 0.0, %v4124
        %v4126 = vpop.f32.mrb[0].mxu0
        %4127 = vdwg.mxu0
        %4128 = vrot.lane.b32.xlu0 %v1271, 48
        %v4129 = vpop.permute.xlu0 %4128
        %v4132 = vsel %vm1675, %v3890, 0
        %4134 = vmatprep.subr.bf16.mxu0 0
        %4135 = vmatpush1.bf16.msra.mxu0 %v4129
        %4136 = vmatprep.subr.bf16.mxu0 0
        %4137 = vmatpush1.bf16.msra.mxu0 0
        %4138 = vmatprep.subr.bf16.mxu0 0
        %4139 = vmatpush1.bf16.msra.mxu0 0
        %4140 = vmatprep.subr.bf16.mxu0 0
        %4141 = vmatpush1.bf16.msra.mxu0 0
        %4142 = vmatprep.subr.bf16.mxu0 0
        %4143 = vmatpush1.bf16.msra.mxu0 0
        %4144 = vmatprep.subr.bf16.mxu0 0
        %4145 = vmatpush1.bf16.msra.mxu0 0
        %4146 = vmatprep.subr.bf16.mxu0 0
        %4147 = vmatpush1.bf16.msra.mxu0 0
        %4148 = vmatprep.subr.bf16.mxu0 0
        %4149 = vmatpush1.bf16.msra.mxu0 0
        %4150 = vmatprep.subr.bf16.mxu0 0
        %4151 = vmatpush1.bf16.msra.mxu0 0
        %4152 = vmatprep.subr.bf16.mxu0 0
        %4153 = vmatpush1.bf16.msra.mxu0 0
        %4154 = vmatprep.subr.bf16.mxu0 0
        %4155 = vmatpush1.bf16.msra.mxu0 0
        %4156 = vmatprep.subr.bf16.mxu0 0
        %4157 = vmatpush1.bf16.msra.mxu0 0
        %4158 = vmatprep.subr.bf16.mxu0 0
        %4159 = vmatpush1.bf16.msra.mxu0 0
        %4160 = vmatprep.subr.bf16.mxu0 0
        %4161 = vmatpush1.bf16.msra.mxu0 0
        %4162 = vmatprep.subr.bf16.mxu0 0
        %4163 = vmatpush1.bf16.msra.mxu0 0
        %4164 = vmatprep.subr.bf16.mxu0 0
        %4165 = vmatpush1.bf16.msra.mxu0 0
        %4166 = vmatprep.mubr.bf16.mxu0 0
        %4167 = vmatmul.mubr.bf16.gmra.mrb[0].mxu0 %v4132
        %v4168 = vpop.f32.mrb[0].mxu0
        %v4169 = vadd.f32 0.0, %v4168
        %v4170 = vpop.f32.mrb[0].mxu0
        %v4171 = vpop.f32.mrb[0].mxu0
        %v4172 = vadd.f32 0.0, %v4171
        %v4173 = vpop.f32.mrb[0].mxu0
        %4174 = vdwg.mxu0
        %4175 = vrot.lane.b32.xlu0 %v1272, 48
        %v4176 = vpop.permute.xlu0 %4175
        %v4179 = vsel %vm1675, %v3891, 0
        %4181 = vmatprep.subr.bf16.mxu0 0
        %4182 = vmatpush1.bf16.msra.mxu0 %v4176
        %4183 = vmatprep.subr.bf16.mxu0 0
        %4184 = vmatpush1.bf16.msra.mxu0 0
        %4185 = vmatprep.subr.bf16.mxu0 0
        %4186 = vmatpush1.bf16.msra.mxu0 0
        %4187 = vmatprep.subr.bf16.mxu0 0
        %4188 = vmatpush1.bf16.msra.mxu0 0
        %4189 = vmatprep.subr.bf16.mxu0 0
        %4190 = vmatpush1.bf16.msra.mxu0 0
        %4191 = vmatprep.subr.bf16.mxu0 0
        %4192 = vmatpush1.bf16.msra.mxu0 0
        %4193 = vmatprep.subr.bf16.mxu0 0
        %4194 = vmatpush1.bf16.msra.mxu0 0
        %4195 = vmatprep.subr.bf16.mxu0 0
        %4196 = vmatpush1.bf16.msra.mxu0 0
        %4197 = vmatprep.subr.bf16.mxu0 0
        %4198 = vmatpush1.bf16.msra.mxu0 0
        %4199 = vmatprep.subr.bf16.mxu0 0
        %4200 = vmatpush1.bf16.msra.mxu0 0
        %4201 = vmatprep.subr.bf16.mxu0 0
        %4202 = vmatpush1.bf16.msra.mxu0 0
        %4203 = vmatprep.subr.bf16.mxu0 0
        %4204 = vmatpush1.bf16.msra.mxu0 0
        %4205 = vmatprep.subr.bf16.mxu0 0
        %4206 = vmatpush1.bf16.msra.mxu0 0
        %4207 = vmatprep.subr.bf16.mxu0 0
        %4208 = vmatpush1.bf16.msra.mxu0 0
        %4209 = vmatprep.subr.bf16.mxu0 0
        %4210 = vmatpush1.bf16.msra.mxu0 0
        %4211 = vmatprep.subr.bf16.mxu0 0
        %4212 = vmatpush1.bf16.msra.mxu0 0
        %4213 = vmatprep.mubr.bf16.mxu0 0
        %4214 = vmatmul.mubr.bf16.gmra.mrb[0].mxu0 %v4179
        %v4215 = vpop.f32.mrb[0].mxu0
        %v4216 = vadd.f32 0.0, %v4215
        %v4217 = vpop.f32.mrb[0].mxu0
        %v4218 = vpop.f32.mrb[0].mxu0
        %v4219 = vadd.f32 0.0, %v4218
        %v4220 = vpop.f32.mrb[0].mxu0
        %4221 = vdwg.mxu0
        %4222 = vrot.lane.b32.xlu0 %v1273, 48
        %v4223 = vpop.permute.xlu0 %4222
        %v4226 = vsel %vm1675, %v3892, 0
        %4228 = vmatprep.subr.bf16.mxu0 0
        %4229 = vmatpush1.bf16.msra.mxu0 %v4223
        %4230 = vmatprep.subr.bf16.mxu0 0
        %4231 = vmatpush1.bf16.msra.mxu0 0
        %4232 = vmatprep.subr.bf16.mxu0 0
        %4233 = vmatpush1.bf16.msra.mxu0 0
        %4234 = vmatprep.subr.bf16.mxu0 0
        %4235 = vmatpush1.bf16.msra.mxu0 0
        %4236 = vmatprep.subr.bf16.mxu0 0
        %4237 = vmatpush1.bf16.msra.mxu0 0
        %4238 = vmatprep.subr.bf16.mxu0 0
        %4239 = vmatpush1.bf16.msra.mxu0 0
        %4240 = vmatprep.subr.bf16.mxu0 0
        %4241 = vmatpush1.bf16.msra.mxu0 0
        %4242 = vmatprep.subr.bf16.mxu0 0
        %4243 = vmatpush1.bf16.msra.mxu0 0
        %4244 = vmatprep.subr.bf16.mxu0 0
        %4245 = vmatpush1.bf16.msra.mxu0 0
        %4246 = vmatprep.subr.bf16.mxu0 0
        %4247 = vmatpush1.bf16.msra.mxu0 0
        %4248 = vmatprep.subr.bf16.mxu0 0
        %4249 = vmatpush1.bf16.msra.mxu0 0
        %4250 = vmatprep.subr.bf16.mxu0 0
        %4251 = vmatpush1.bf16.msra.mxu0 0
        %4252 = vmatprep.subr.bf16.mxu0 0
        %4253 = vmatpush1.bf16.msra.mxu0 0
        %4254 = vmatprep.subr.bf16.mxu0 0
        %4255 = vmatpush1.bf16.msra.mxu0 0
        %4256 = vmatprep.subr.bf16.mxu0 0
        %4257 = vmatpush1.bf16.msra.mxu0 0
        %4258 = vmatprep.subr.bf16.mxu0 0
        %4259 = vmatpush1.bf16.msra.mxu0 0
        %4260 = vmatprep.mubr.bf16.mxu0 0
        %4261 = vmatmul.mubr.bf16.gmra.mrb[0].mxu0 %v4226
        %v4262 = vpop.f32.mrb[0].mxu0
        %v4263 = vadd.f32 0.0, %v4262
        %v4264 = vpop.f32.mrb[0].mxu0
        %v4265 = vpop.f32.mrb[0].mxu0
        %v4266 = vadd.f32 0.0, %v4265
        %v4267 = vpop.f32.mrb[0].mxu0
        %4268 = vdwg.mxu0
        %4285 = vrot.lane.b32.xlu0 %v3934, 16
        %v4286 = vpop.permute.xlu0 %4285
        %4287 = vrot.lane.b32.xlu0 %v3937, 16
        %v4288 = vpop.permute.xlu0 %4287
        %4289 = vrot.lane.b32.xlu0 %v3981, 16
        %v4290 = vpop.permute.xlu0 %4289
        %4291 = vrot.lane.b32.xlu0 %v3984, 16
        %v4292 = vpop.permute.xlu0 %4291
        %4293 = vrot.lane.b32.xlu0 %v4028, 16
        %v4294 = vpop.permute.xlu0 %4293
        %4295 = vrot.lane.b32.xlu0 %v4031, 16
        %v4296 = vpop.permute.xlu0 %4295
        %4297 = vrot.lane.b32.xlu0 %v4075, 16
        %v4298 = vpop.permute.xlu0 %4297
        %4299 = vrot.lane.b32.xlu0 %v4078, 16
        %v4300 = vpop.permute.xlu0 %4299
        %4301 = vrot.lane.b32.xlu0 %v4122, 16
        %v4302 = vpop.permute.xlu0 %4301
        %4303 = vrot.lane.b32.xlu0 %v4125, 16
        %v4304 = vpop.permute.xlu0 %4303
        %4305 = vrot.lane.b32.xlu0 %v4169, 16
        %v4306 = vpop.permute.xlu0 %4305
        %4307 = vrot.lane.b32.xlu0 %v4172, 16
        %v4308 = vpop.permute.xlu0 %4307
        %4309 = vrot.lane.b32.xlu0 %v4216, 16
        %v4310 = vpop.permute.xlu0 %4309
        %4311 = vrot.lane.b32.xlu0 %v4219, 16
        %v4312 = vpop.permute.xlu0 %4311
        %4313 = vrot.lane.b32.xlu0 %v4263, 16
        %v4314 = vpop.permute.xlu0 %4313
        %4315 = vrot.lane.b32.xlu0 %v4266, 16
        %v4316 = vpop.permute.xlu0 %4315
        %vm4333 = vcmask 195712
        %4334 = vst.msk [vmem:[#allocation2] sm:$0xff] %vm4333, %v4286
        %4335 = vst.msk [vmem:[#allocation2 + $0x8] sm:$0xff] %vm4333, %v4288
        %4336 = vst.msk [vmem:[#allocation2 + $0x10] sm:$0xff] %vm4333, %v4290
        %4337 = vst.msk [vmem:[#allocation2 + $0x18] sm:$0xff] %vm4333, %v4292
        %4338 = vst.msk [vmem:[#allocation2 + $0x20] sm:$0xff] %vm4333, %v4294
        %4339 = vst.msk [vmem:[#allocation2 + $0x28] sm:$0xff] %vm4333, %v4296
        %4340 = vst.msk [vmem:[#allocation2 + $0x30] sm:$0xff] %vm4333, %v4298
        %4341 = vst.msk [vmem:[#allocation2 + $0x38] sm:$0xff] %vm4333, %v4300
        %4342 = vst.msk [vmem:[#allocation2 + $0x40] sm:$0xff] %vm4333, %v4302
        %4343 = vst.msk [vmem:[#allocation2 + $0x48] sm:$0xff] %vm4333, %v4304
        %4344 = vst.msk [vmem:[#allocation2 + $0x50] sm:$0xff] %vm4333, %v4306
        %4345 = vst.msk [vmem:[#allocation2 + $0x58] sm:$0xff] %vm4333, %v4308
        %4346 = vst.msk [vmem:[#allocation2 + $0x60] sm:$0xff] %vm4333, %v4310
        %4347 = vst.msk [vmem:[#allocation2 + $0x68] sm:$0xff] %vm4333, %v4312
        %4348 = vst.msk [vmem:[#allocation2 + $0x70] sm:$0xff] %vm4333, %v4314
        %4349 = vst.msk [vmem:[#allocation2 + $0x78] sm:$0xff] %vm4333, %v4316
        %4350 = vrot.lane.b32.xlu0 %v1266, 104
        %v4351 = vpop.permute.xlu0 %4350
        %4352 = vrot.lane.b32.xlu0 %v1266, 72
        %v4353 = vpop.permute.xlu0 %4352
        %v4355 = vsel %vm1277, %v4351, 0
        %v4358 = vsel %vm1277, %v4353, 0
        %4360 = vmatprep.subr.bf16.mxu0 0
        %4361 = vmatpush1.bf16.xpose.msra.mxu0 %v4358
        %4362 = vmatprep.subr.bf16.mxu0 0
        %4363 = vmatpush1.bf16.xpose.msra.mxu0 0
        %4364 = vmatprep.subr.bf16.mxu0 0
        %4365 = vmatpush1.bf16.xpose.msra.mxu0 0
        %4366 = vmatprep.subr.bf16.mxu0 0
        %4367 = vmatpush1.bf16.xpose.msra.mxu0 0
        %4368 = vmatprep.subr.bf16.mxu0 0
        %4369 = vmatpush1.bf16.xpose.msra.mxu0 0
        %4370 = vmatprep.subr.bf16.mxu0 0
        %4371 = vmatpush1.bf16.xpose.msra.mxu0 0
        %4372 = vmatprep.subr.bf16.mxu0 0
        %4373 = vmatpush1.bf16.xpose.msra.mxu0 0
        %4374 = vmatprep.subr.bf16.mxu0 0
        %4375 = vmatpush1.bf16.xpose.msra.mxu0 0
        %4376 = vmatprep.subr.bf16.mxu0 0
        %4377 = vmatpush1.bf16.xpose.msra.mxu0 0
        %4378 = vmatprep.subr.bf16.mxu0 0
        %4379 = vmatpush1.bf16.xpose.msra.mxu0 0
        %4380 = vmatprep.subr.bf16.mxu0 0
        %4381 = vmatpush1.bf16.xpose.msra.mxu0 0
        %4382 = vmatprep.subr.bf16.mxu0 0
        %4383 = vmatpush1.bf16.xpose.msra.mxu0 0
        %4384 = vmatprep.subr.bf16.mxu0 0
        %4385 = vmatpush1.bf16.xpose.msra.mxu0 0
        %4386 = vmatprep.subr.bf16.mxu0 0
        %4387 = vmatpush1.bf16.xpose.msra.mxu0 0
        %4388 = vmatprep.subr.bf16.mxu0 0
        %4389 = vmatpush1.bf16.xpose.msra.mxu0 0
        %4390 = vmatprep.subr.bf16.mxu0 0
        %4391 = vmatpush1.bf16.xpose.msra.mxu0 0
        %4392 = vmatprep.mubr.bf16.mxu0 0
        %4393 = vmatmul.mubr.bf16.gmra.mrb[0].mxu0 %v4355
        %v4394 = vpop.f32.mrb[0].mxu0
        %v4395 = vadd.f32 0.0, %v4394
        %v4396 = vpop.f32.mrb[0].mxu0
        %v4397 = vpop.f32.mrb[0].mxu0
        %v4398 = vadd.f32 0.0, %v4397
        %v4399 = vpop.f32.mrb[0].mxu0
        %4400 = vdwg.mxu0
        %4401 = vrot.lane.b32.xlu0 %v1267, 104
        %v4402 = vpop.permute.xlu0 %4401
        %4403 = vrot.lane.b32.xlu0 %v1267, 72
        %v4404 = vpop.permute.xlu0 %4403
        %v4406 = vsel %vm1277, %v4402, 0
        %v4409 = vsel %vm1277, %v4404, 0
        %4411 = vmatprep.subr.bf16.mxu0 0
        %4412 = vmatpush1.bf16.xpose.msra.mxu0 %v4409
        %4413 = vmatprep.subr.bf16.mxu0 0
        %4414 = vmatpush1.bf16.xpose.msra.mxu0 0
        %4415 = vmatprep.subr.bf16.mxu0 0
        %4416 = vmatpush1.bf16.xpose.msra.mxu0 0
        %4417 = vmatprep.subr.bf16.mxu0 0
        %4418 = vmatpush1.bf16.xpose.msra.mxu0 0
        %4419 = vmatprep.subr.bf16.mxu0 0
        %4420 = vmatpush1.bf16.xpose.msra.mxu0 0
        %4421 = vmatprep.subr.bf16.mxu0 0
        %4422 = vmatpush1.bf16.xpose.msra.mxu0 0
        %4423 = vmatprep.subr.bf16.mxu0 0
        %4424 = vmatpush1.bf16.xpose.msra.mxu0 0
        %4425 = vmatprep.subr.bf16.mxu0 0
        %4426 = vmatpush1.bf16.xpose.msra.mxu0 0
        %4427 = vmatprep.subr.bf16.mxu0 0
        %4428 = vmatpush1.bf16.xpose.msra.mxu0 0
        %4429 = vmatprep.subr.bf16.mxu0 0
        %4430 = vmatpush1.bf16.xpose.msra.mxu0 0
        %4431 = vmatprep.subr.bf16.mxu0 0
        %4432 = vmatpush1.bf16.xpose.msra.mxu0 0
        %4433 = vmatprep.subr.bf16.mxu0 0
        %4434 = vmatpush1.bf16.xpose.msra.mxu0 0
        %4435 = vmatprep.subr.bf16.mxu0 0
        %4436 = vmatpush1.bf16.xpose.msra.mxu0 0
        %4437 = vmatprep.subr.bf16.mxu0 0
        %4438 = vmatpush1.bf16.xpose.msra.mxu0 0
        %4439 = vmatprep.subr.bf16.mxu0 0
        %4440 = vmatpush1.bf16.xpose.msra.mxu0 0
        %4441 = vmatprep.subr.bf16.mxu0 0
        %4442 = vmatpush1.bf16.xpose.msra.mxu0 0
        %4443 = vmatprep.mubr.bf16.mxu0 0
        %4444 = vmatmul.mubr.bf16.gmra.mrb[0].mxu0 %v4406
        %v4445 = vpop.f32.mrb[0].mxu0
        %v4446 = vadd.f32 0.0, %v4445
        %v4447 = vpop.f32.mrb[0].mxu0
        %v4448 = vpop.f32.mrb[0].mxu0
        %v4449 = vadd.f32 0.0, %v4448
        %v4450 = vpop.f32.mrb[0].mxu0
        %4451 = vdwg.mxu0
        %4452 = vrot.lane.b32.xlu0 %v1268, 104
        %v4453 = vpop.permute.xlu0 %4452
        %4454 = vrot.lane.b32.xlu0 %v1268, 72
        %v4455 = vpop.permute.xlu0 %4454
        %v4457 = vsel %vm1277, %v4453, 0
        %v4460 = vsel %vm1277, %v4455, 0
        %4462 = vmatprep.subr.bf16.mxu0 0
        %4463 = vmatpush1.bf16.xpose.msra.mxu0 %v4460
        %4464 = vmatprep.subr.bf16.mxu0 0
        %4465 = vmatpush1.bf16.xpose.msra.mxu0 0
        %4466 = vmatprep.subr.bf16.mxu0 0
        %4467 = vmatpush1.bf16.xpose.msra.mxu0 0
        %4468 = vmatprep.subr.bf16.mxu0 0
        %4469 = vmatpush1.bf16.xpose.msra.mxu0 0
        %4470 = vmatprep.subr.bf16.mxu0 0
        %4471 = vmatpush1.bf16.xpose.msra.mxu0 0
        %4472 = vmatprep.subr.bf16.mxu0 0
        %4473 = vmatpush1.bf16.xpose.msra.mxu0 0
        %4474 = vmatprep.subr.bf16.mxu0 0
        %4475 = vmatpush1.bf16.xpose.msra.mxu0 0
        %4476 = vmatprep.subr.bf16.mxu0 0
        %4477 = vmatpush1.bf16.xpose.msra.mxu0 0
        %4478 = vmatprep.subr.bf16.mxu0 0
        %4479 = vmatpush1.bf16.xpose.msra.mxu0 0
        %4480 = vmatprep.subr.bf16.mxu0 0
        %4481 = vmatpush1.bf16.xpose.msra.mxu0 0
        %4482 = vmatprep.subr.bf16.mxu0 0
        %4483 = vmatpush1.bf16.xpose.msra.mxu0 0
        %4484 = vmatprep.subr.bf16.mxu0 0
        %4485 = vmatpush1.bf16.xpose.msra.mxu0 0
        %4486 = vmatprep.subr.bf16.mxu0 0
        %4487 = vmatpush1.bf16.xpose.msra.mxu0 0
        %4488 = vmatprep.subr.bf16.mxu0 0
        %4489 = vmatpush1.bf16.xpose.msra.mxu0 0
        %4490 = vmatprep.subr.bf16.mxu0 0
        %4491 = vmatpush1.bf16.xpose.msra.mxu0 0
        %4492 = vmatprep.subr.bf16.mxu0 0
        %4493 = vmatpush1.bf16.xpose.msra.mxu0 0
        %4494 = vmatprep.mubr.bf16.mxu0 0
        %4495 = vmatmul.mubr.bf16.gmra.mrb[0].mxu0 %v4457
        %v4496 = vpop.f32.mrb[0].mxu0
        %v4497 = vadd.f32 0.0, %v4496
        %v4498 = vpop.f32.mrb[0].mxu0
        %v4499 = vpop.f32.mrb[0].mxu0
        %v4500 = vadd.f32 0.0, %v4499
        %v4501 = vpop.f32.mrb[0].mxu0
        %4502 = vdwg.mxu0
        %4503 = vrot.lane.b32.xlu0 %v1269, 104
        %v4504 = vpop.permute.xlu0 %4503
        %4505 = vrot.lane.b32.xlu0 %v1269, 72
        %v4506 = vpop.permute.xlu0 %4505
        %v4508 = vsel %vm1277, %v4504, 0
        %v4511 = vsel %vm1277, %v4506, 0
        %4513 = vmatprep.subr.bf16.mxu0 0
        %4514 = vmatpush1.bf16.xpose.msra.mxu0 %v4511
        %4515 = vmatprep.subr.bf16.mxu0 0
        %4516 = vmatpush1.bf16.xpose.msra.mxu0 0
        %4517 = vmatprep.subr.bf16.mxu0 0
        %4518 = vmatpush1.bf16.xpose.msra.mxu0 0
        %4519 = vmatprep.subr.bf16.mxu0 0
        %4520 = vmatpush1.bf16.xpose.msra.mxu0 0
        %4521 = vmatprep.subr.bf16.mxu0 0
        %4522 = vmatpush1.bf16.xpose.msra.mxu0 0
        %4523 = vmatprep.subr.bf16.mxu0 0
        %4524 = vmatpush1.bf16.xpose.msra.mxu0 0
        %4525 = vmatprep.subr.bf16.mxu0 0
        %4526 = vmatpush1.bf16.xpose.msra.mxu0 0
        %4527 = vmatprep.subr.bf16.mxu0 0
        %4528 = vmatpush1.bf16.xpose.msra.mxu0 0
        %4529 = vmatprep.subr.bf16.mxu0 0
        %4530 = vmatpush1.bf16.xpose.msra.mxu0 0
        %4531 = vmatprep.subr.bf16.mxu0 0
        %4532 = vmatpush1.bf16.xpose.msra.mxu0 0
        %4533 = vmatprep.subr.bf16.mxu0 0
        %4534 = vmatpush1.bf16.xpose.msra.mxu0 0
        %4535 = vmatprep.subr.bf16.mxu0 0
        %4536 = vmatpush1.bf16.xpose.msra.mxu0 0
        %4537 = vmatprep.subr.bf16.mxu0 0
        %4538 = vmatpush1.bf16.xpose.msra.mxu0 0
        %4539 = vmatprep.subr.bf16.mxu0 0
        %4540 = vmatpush1.bf16.xpose.msra.mxu0 0
        %4541 = vmatprep.subr.bf16.mxu0 0
        %4542 = vmatpush1.bf16.xpose.msra.mxu0 0
        %4543 = vmatprep.subr.bf16.mxu0 0
        %4544 = vmatpush1.bf16.xpose.msra.mxu0 0
        %4545 = vmatprep.mubr.bf16.mxu0 0
        %4546 = vmatmul.mubr.bf16.gmra.mrb[0].mxu0 %v4508
        %v4547 = vpop.f32.mrb[0].mxu0
        %v4548 = vadd.f32 0.0, %v4547
        %v4549 = vpop.f32.mrb[0].mxu0
        %v4550 = vpop.f32.mrb[0].mxu0
        %v4551 = vadd.f32 0.0, %v4550
        %v4552 = vpop.f32.mrb[0].mxu0
        %4553 = vdwg.mxu0
        %4554 = vrot.lane.b32.xlu0 %v1270, 104
        %v4555 = vpop.permute.xlu0 %4554
        %4556 = vrot.lane.b32.xlu0 %v1270, 72
        %v4557 = vpop.permute.xlu0 %4556
        %v4559 = vsel %vm1277, %v4555, 0
        %v4562 = vsel %vm1277, %v4557, 0
        %4564 = vmatprep.subr.bf16.mxu0 0
        %4565 = vmatpush1.bf16.xpose.msra.mxu0 %v4562
        %4566 = vmatprep.subr.bf16.mxu0 0
        %4567 = vmatpush1.bf16.xpose.msra.mxu0 0
        %4568 = vmatprep.subr.bf16.mxu0 0
        %4569 = vmatpush1.bf16.xpose.msra.mxu0 0
        %4570 = vmatprep.subr.bf16.mxu0 0
        %4571 = vmatpush1.bf16.xpose.msra.mxu0 0
        %4572 = vmatprep.subr.bf16.mxu0 0
        %4573 = vmatpush1.bf16.xpose.msra.mxu0 0
        %4574 = vmatprep.subr.bf16.mxu0 0
        %4575 = vmatpush1.bf16.xpose.msra.mxu0 0
        %4576 = vmatprep.subr.bf16.mxu0 0
        %4577 = vmatpush1.bf16.xpose.msra.mxu0 0
        %4578 = vmatprep.subr.bf16.mxu0 0
        %4579 = vmatpush1.bf16.xpose.msra.mxu0 0
        %4580 = vmatprep.subr.bf16.mxu0 0
        %4581 = vmatpush1.bf16.xpose.msra.mxu0 0
        %4582 = vmatprep.subr.bf16.mxu0 0
        %4583 = vmatpush1.bf16.xpose.msra.mxu0 0
        %4584 = vmatprep.subr.bf16.mxu0 0
        %4585 = vmatpush1.bf16.xpose.msra.mxu0 0
        %4586 = vmatprep.subr.bf16.mxu0 0
        %4587 = vmatpush1.bf16.xpose.msra.mxu0 0
        %4588 = vmatprep.subr.bf16.mxu0 0
        %4589 = vmatpush1.bf16.xpose.msra.mxu0 0
        %4590 = vmatprep.subr.bf16.mxu0 0
        %4591 = vmatpush1.bf16.xpose.msra.mxu0 0
        %4592 = vmatprep.subr.bf16.mxu0 0
        %4593 = vmatpush1.bf16.xpose.msra.mxu0 0
        %4594 = vmatprep.subr.bf16.mxu0 0
        %4595 = vmatpush1.bf16.xpose.msra.mxu0 0
        %4596 = vmatprep.mubr.bf16.mxu0 0
        %4597 = vmatmul.mubr.bf16.gmra.mrb[0].mxu0 %v4559
        %v4598 = vpop.f32.mrb[0].mxu0
        %v4599 = vadd.f32 0.0, %v4598
        %v4600 = vpop.f32.mrb[0].mxu0
        %v4601 = vpop.f32.mrb[0].mxu0
        %v4602 = vadd.f32 0.0, %v4601
        %v4603 = vpop.f32.mrb[0].mxu0
        %4604 = vdwg.mxu0
        %4605 = vrot.lane.b32.xlu0 %v1271, 104
        %v4606 = vpop.permute.xlu0 %4605
        %4607 = vrot.lane.b32.xlu0 %v1271, 72
        %v4608 = vpop.permute.xlu0 %4607
        %v4610 = vsel %vm1277, %v4606, 0
        %v4613 = vsel %vm1277, %v4608, 0
        %4615 = vmatprep.subr.bf16.mxu0 0
        %4616 = vmatpush1.bf16.xpose.msra.mxu0 %v4613
        %4617 = vmatprep.subr.bf16.mxu0 0
        %4618 = vmatpush1.bf16.xpose.msra.mxu0 0
        %4619 = vmatprep.subr.bf16.mxu0 0
        %4620 = vmatpush1.bf16.xpose.msra.mxu0 0
        %4621 = vmatprep.subr.bf16.mxu0 0
        %4622 = vmatpush1.bf16.xpose.msra.mxu0 0
        %4623 = vmatprep.subr.bf16.mxu0 0
        %4624 = vmatpush1.bf16.xpose.msra.mxu0 0
        %4625 = vmatprep.subr.bf16.mxu0 0
        %4626 = vmatpush1.bf16.xpose.msra.mxu0 0
        %4627 = vmatprep.subr.bf16.mxu0 0
        %4628 = vmatpush1.bf16.xpose.msra.mxu0 0
        %4629 = vmatprep.subr.bf16.mxu0 0
        %4630 = vmatpush1.bf16.xpose.msra.mxu0 0
        %4631 = vmatprep.subr.bf16.mxu0 0
        %4632 = vmatpush1.bf16.xpose.msra.mxu0 0
        %4633 = vmatprep.subr.bf16.mxu0 0
        %4634 = vmatpush1.bf16.xpose.msra.mxu0 0
        %4635 = vmatprep.subr.bf16.mxu0 0
        %4636 = vmatpush1.bf16.xpose.msra.mxu0 0
        %4637 = vmatprep.subr.bf16.mxu0 0
        %4638 = vmatpush1.bf16.xpose.msra.mxu0 0
        %4639 = vmatprep.subr.bf16.mxu0 0
        %4640 = vmatpush1.bf16.xpose.msra.mxu0 0
        %4641 = vmatprep.subr.bf16.mxu0 0
        %4642 = vmatpush1.bf16.xpose.msra.mxu0 0
        %4643 = vmatprep.subr.bf16.mxu0 0
        %4644 = vmatpush1.bf16.xpose.msra.mxu0 0
        %4645 = vmatprep.subr.bf16.mxu0 0
        %4646 = vmatpush1.bf16.xpose.msra.mxu0 0
        %4647 = vmatprep.mubr.bf16.mxu0 0
        %4648 = vmatmul.mubr.bf16.gmra.mrb[0].mxu0 %v4610
        %v4649 = vpop.f32.mrb[0].mxu0
        %v4650 = vadd.f32 0.0, %v4649
        %v4651 = vpop.f32.mrb[0].mxu0
        %v4652 = vpop.f32.mrb[0].mxu0
        %v4653 = vadd.f32 0.0, %v4652
        %v4654 = vpop.f32.mrb[0].mxu0
        %4655 = vdwg.mxu0
        %4656 = vrot.lane.b32.xlu0 %v1272, 104
        %v4657 = vpop.permute.xlu0 %4656
        %4658 = vrot.lane.b32.xlu0 %v1272, 72
        %v4659 = vpop.permute.xlu0 %4658
        %v4661 = vsel %vm1277, %v4657, 0
        %v4664 = vsel %vm1277, %v4659, 0
        %4666 = vmatprep.subr.bf16.mxu0 0
        %4667 = vmatpush1.bf16.xpose.msra.mxu0 %v4664
        %4668 = vmatprep.subr.bf16.mxu0 0
        %4669 = vmatpush1.bf16.xpose.msra.mxu0 0
        %4670 = vmatprep.subr.bf16.mxu0 0
        %4671 = vmatpush1.bf16.xpose.msra.mxu0 0
        %4672 = vmatprep.subr.bf16.mxu0 0
        %4673 = vmatpush1.bf16.xpose.msra.mxu0 0
        %4674 = vmatprep.subr.bf16.mxu0 0
        %4675 = vmatpush1.bf16.xpose.msra.mxu0 0
        %4676 = vmatprep.subr.bf16.mxu0 0
        %4677 = vmatpush1.bf16.xpose.msra.mxu0 0
        %4678 = vmatprep.subr.bf16.mxu0 0
        %4679 = vmatpush1.bf16.xpose.msra.mxu0 0
        %4680 = vmatprep.subr.bf16.mxu0 0
        %4681 = vmatpush1.bf16.xpose.msra.mxu0 0
        %4682 = vmatprep.subr.bf16.mxu0 0
        %4683 = vmatpush1.bf16.xpose.msra.mxu0 0
        %4684 = vmatprep.subr.bf16.mxu0 0
        %4685 = vmatpush1.bf16.xpose.msra.mxu0 0
        %4686 = vmatprep.subr.bf16.mxu0 0
        %4687 = vmatpush1.bf16.xpose.msra.mxu0 0
        %4688 = vmatprep.subr.bf16.mxu0 0
        %4689 = vmatpush1.bf16.xpose.msra.mxu0 0
        %4690 = vmatprep.subr.bf16.mxu0 0
        %4691 = vmatpush1.bf16.xpose.msra.mxu0 0
        %4692 = vmatprep.subr.bf16.mxu0 0
        %4693 = vmatpush1.bf16.xpose.msra.mxu0 0
        %4694 = vmatprep.subr.bf16.mxu0 0
        %4695 = vmatpush1.bf16.xpose.msra.mxu0 0
        %4696 = vmatprep.subr.bf16.mxu0 0
        %4697 = vmatpush1.bf16.xpose.msra.mxu0 0
        %4698 = vmatprep.mubr.bf16.mxu0 0
        %4699 = vmatmul.mubr.bf16.gmra.mrb[0].mxu0 %v4661
        %v4700 = vpop.f32.mrb[0].mxu0
        %v4701 = vadd.f32 0.0, %v4700
        %v4702 = vpop.f32.mrb[0].mxu0
        %v4703 = vpop.f32.mrb[0].mxu0
        %v4704 = vadd.f32 0.0, %v4703
        %v4705 = vpop.f32.mrb[0].mxu0
        %4706 = vdwg.mxu0
        %4707 = vrot.lane.b32.xlu0 %v1273, 104
        %v4708 = vpop.permute.xlu0 %4707
        %4709 = vrot.lane.b32.xlu0 %v1273, 72
        %v4710 = vpop.permute.xlu0 %4709
        %v4712 = vsel %vm1277, %v4708, 0
        %v4715 = vsel %vm1277, %v4710, 0
        %4717 = vmatprep.subr.bf16.mxu0 0
        %4718 = vmatpush1.bf16.xpose.msra.mxu0 %v4715
        %4719 = vmatprep.subr.bf16.mxu0 0
        %4720 = vmatpush1.bf16.xpose.msra.mxu0 0
        %4721 = vmatprep.subr.bf16.mxu0 0
        %4722 = vmatpush1.bf16.xpose.msra.mxu0 0
        %4723 = vmatprep.subr.bf16.mxu0 0
        %4724 = vmatpush1.bf16.xpose.msra.mxu0 0
        %4725 = vmatprep.subr.bf16.mxu0 0
        %4726 = vmatpush1.bf16.xpose.msra.mxu0 0
        %4727 = vmatprep.subr.bf16.mxu0 0
        %4728 = vmatpush1.bf16.xpose.msra.mxu0 0
        %4729 = vmatprep.subr.bf16.mxu0 0
        %4730 = vmatpush1.bf16.xpose.msra.mxu0 0
        %4731 = vmatprep.subr.bf16.mxu0 0
        %4732 = vmatpush1.bf16.xpose.msra.mxu0 0
        %4733 = vmatprep.subr.bf16.mxu0 0
        %4734 = vmatpush1.bf16.xpose.msra.mxu0 0
        %4735 = vmatprep.subr.bf16.mxu0 0
        %4736 = vmatpush1.bf16.xpose.msra.mxu0 0
        %4737 = vmatprep.subr.bf16.mxu0 0
        %4738 = vmatpush1.bf16.xpose.msra.mxu0 0
        %4739 = vmatprep.subr.bf16.mxu0 0
        %4740 = vmatpush1.bf16.xpose.msra.mxu0 0
        %4741 = vmatprep.subr.bf16.mxu0 0
        %4742 = vmatpush1.bf16.xpose.msra.mxu0 0
        %4743 = vmatprep.subr.bf16.mxu0 0
        %4744 = vmatpush1.bf16.xpose.msra.mxu0 0
        %4745 = vmatprep.subr.bf16.mxu0 0
        %4746 = vmatpush1.bf16.xpose.msra.mxu0 0
        %4747 = vmatprep.subr.bf16.mxu0 0
        %4748 = vmatpush1.bf16.xpose.msra.mxu0 0
        %4749 = vmatprep.mubr.bf16.mxu0 0
        %4750 = vmatmul.mubr.bf16.gmra.mrb[0].mxu0 %v4712
        %v4751 = vpop.f32.mrb[0].mxu0
        %v4752 = vadd.f32 0.0, %v4751
        %v4753 = vpop.f32.mrb[0].mxu0
        %v4754 = vpop.f32.mrb[0].mxu0
        %v4755 = vadd.f32 0.0, %v4754
        %v4756 = vpop.f32.mrb[0].mxu0
        %4757 = vdwg.mxu0
        %v4758 = vsel %vm1675, %v4395, -inf
        %4759 = vmax.xlane.f32.xlu0 %v4758
        %v4760 = vpop.xlane.xlu0 %4759
        %v4761 = vsel %vm1675, %v4398, -inf
        %4762 = vmax.xlane.f32.xlu0 %v4761
        %v4763 = vpop.xlane.xlu0 %4762
        %v4764 = vsel %vm1675, %v4446, -inf
        %4765 = vmax.xlane.f32.xlu0 %v4764
        %v4766 = vpop.xlane.xlu0 %4765
        %v4767 = vsel %vm1675, %v4449, -inf
        %4768 = vmax.xlane.f32.xlu0 %v4767
        %v4769 = vpop.xlane.xlu0 %4768
        %v4770 = vsel %vm1675, %v4497, -inf
        %4771 = vmax.xlane.f32.xlu0 %v4770
        %v4772 = vpop.xlane.xlu0 %4771
        %v4773 = vsel %vm1675, %v4500, -inf
        %4774 = vmax.xlane.f32.xlu0 %v4773
        %v4775 = vpop.xlane.xlu0 %4774
        %v4776 = vsel %vm1675, %v4548, -inf
        %4777 = vmax.xlane.f32.xlu0 %v4776
        %v4778 = vpop.xlane.xlu0 %4777
        %v4779 = vsel %vm1675, %v4551, -inf
        %4780 = vmax.xlane.f32.xlu0 %v4779
        %v4781 = vpop.xlane.xlu0 %4780
        %v4782 = vsel %vm1675, %v4599, -inf
        %4783 = vmax.xlane.f32.xlu0 %v4782
        %v4784 = vpop.xlane.xlu0 %4783
        %v4785 = vsel %vm1675, %v4602, -inf
        %4786 = vmax.xlane.f32.xlu0 %v4785
        %v4787 = vpop.xlane.xlu0 %4786
        %v4788 = vsel %vm1675, %v4650, -inf
        %4789 = vmax.xlane.f32.xlu0 %v4788
        %v4790 = vpop.xlane.xlu0 %4789
        %v4791 = vsel %vm1675, %v4653, -inf
        %4792 = vmax.xlane.f32.xlu0 %v4791
        %v4793 = vpop.xlane.xlu0 %4792
        %v4794 = vsel %vm1675, %v4701, -inf
        %4795 = vmax.xlane.f32.xlu0 %v4794
        %v4796 = vpop.xlane.xlu0 %4795
        %v4797 = vsel %vm1675, %v4704, -inf
        %4798 = vmax.xlane.f32.xlu0 %v4797
        %v4799 = vpop.xlane.xlu0 %4798
        %v4800 = vsel %vm1675, %v4752, -inf
        %4801 = vmax.xlane.f32.xlu0 %v4800
        %v4802 = vpop.xlane.xlu0 %4801
        %v4803 = vsel %vm1675, %v4755, -inf
        %4804 = vmax.xlane.f32.xlu0 %v4803
        %v4805 = vpop.xlane.xlu0 %4804
        %v4806 = vsub.f32 %v4395, %v4760
        %v4807 = vsub.f32 %v4398, %v4763
        %v4808 = vsub.f32 %v4446, %v4766
        %v4809 = vsub.f32 %v4449, %v4769
        %v4810 = vsub.f32 %v4497, %v4772
        %v4811 = vsub.f32 %v4500, %v4775
        %v4812 = vsub.f32 %v4548, %v4778
        %v4813 = vsub.f32 %v4551, %v4781
        %v4814 = vsub.f32 %v4599, %v4784
        %v4815 = vsub.f32 %v4602, %v4787
        %v4816 = vsub.f32 %v4650, %v4790
        %v4817 = vsub.f32 %v4653, %v4793
        %v4818 = vsub.f32 %v4701, %v4796
        %v4819 = vsub.f32 %v4704, %v4799
        %v4820 = vsub.f32 %v4752, %v4802
        %v4821 = vsub.f32 %v4755, %v4805
        %v4822 = vmul.f32 %v4806, 1.442695
        %v4823 = vpow.pop %v4822
        %v4824 = vmul.f32 %v4807, 1.442695
        %v4825 = vpow.pop %v4824
        %v4826 = vmul.f32 %v4808, 1.442695
        %v4827 = vpow.pop %v4826
        %v4828 = vmul.f32 %v4809, 1.442695
        %v4829 = vpow.pop %v4828
        %v4830 = vmul.f32 %v4810, 1.442695
        %v4831 = vpow.pop %v4830
        %v4832 = vmul.f32 %v4811, 1.442695
        %v4833 = vpow.pop %v4832
        %v4834 = vmul.f32 %v4812, 1.442695
        %v4835 = vpow.pop %v4834
        %v4836 = vmul.f32 %v4813, 1.442695
        %v4837 = vpow.pop %v4836
        %v4838 = vmul.f32 %v4814, 1.442695
        %v4839 = vpow.pop %v4838
        %v4840 = vmul.f32 %v4815, 1.442695
        %v4841 = vpow.pop %v4840
        %v4842 = vmul.f32 %v4816, 1.442695
        %v4843 = vpow.pop %v4842
        %v4844 = vmul.f32 %v4817, 1.442695
        %v4845 = vpow.pop %v4844
        %v4846 = vmul.f32 %v4818, 1.442695
        %v4847 = vpow.pop %v4846
        %v4848 = vmul.f32 %v4819, 1.442695
        %v4849 = vpow.pop %v4848
        %v4850 = vmul.f32 %v4820, 1.442695
        %v4851 = vpow.pop %v4850
        %v4852 = vmul.f32 %v4821, 1.442695
        %v4853 = vpow.pop %v4852
        %v4854 = vsel %vm1675, %v4823, 0.0
        %4855 = vadd.xlane.f32.xlu0 %v4854
        %v4856 = vpop.xlane.xlu0 %4855
        %v4857 = vsel %vm1675, %v4825, 0.0
        %4858 = vadd.xlane.f32.xlu0 %v4857
        %v4859 = vpop.xlane.xlu0 %4858
        %v4860 = vsel %vm1675, %v4827, 0.0
        %4861 = vadd.xlane.f32.xlu0 %v4860
        %v4862 = vpop.xlane.xlu0 %4861
        %v4863 = vsel %vm1675, %v4829, 0.0
        %4864 = vadd.xlane.f32.xlu0 %v4863
        %v4865 = vpop.xlane.xlu0 %4864
        %v4866 = vsel %vm1675, %v4831, 0.0
        %4867 = vadd.xlane.f32.xlu0 %v4866
        %v4868 = vpop.xlane.xlu0 %4867
        %v4869 = vsel %vm1675, %v4833, 0.0
        %4870 = vadd.xlane.f32.xlu0 %v4869
        %v4871 = vpop.xlane.xlu0 %4870
        %v4872 = vsel %vm1675, %v4835, 0.0
        %4873 = vadd.xlane.f32.xlu0 %v4872
        %v4874 = vpop.xlane.xlu0 %4873
        %v4875 = vsel %vm1675, %v4837, 0.0
        %4876 = vadd.xlane.f32.xlu0 %v4875
        %v4877 = vpop.xlane.xlu0 %4876
        %v4878 = vsel %vm1675, %v4839, 0.0
        %4879 = vadd.xlane.f32.xlu0 %v4878
        %v4880 = vpop.xlane.xlu0 %4879
        %v4881 = vsel %vm1675, %v4841, 0.0
        %4882 = vadd.xlane.f32.xlu0 %v4881
        %v4883 = vpop.xlane.xlu0 %4882
        %v4884 = vsel %vm1675, %v4843, 0.0
        %4885 = vadd.xlane.f32.xlu0 %v4884
        %v4886 = vpop.xlane.xlu0 %4885
        %v4887 = vsel %vm1675, %v4845, 0.0
        %4888 = vadd.xlane.f32.xlu0 %v4887
        %v4889 = vpop.xlane.xlu0 %4888
        %v4890 = vsel %vm1675, %v4847, 0.0
        %4891 = vadd.xlane.f32.xlu0 %v4890
        %v4892 = vpop.xlane.xlu0 %4891
        %v4893 = vsel %vm1675, %v4849, 0.0
        %4894 = vadd.xlane.f32.xlu0 %v4893
        %v4895 = vpop.xlane.xlu0 %4894
        %v4896 = vsel %vm1675, %v4851, 0.0
        %4897 = vadd.xlane.f32.xlu0 %v4896
        %v4898 = vpop.xlane.xlu0 %4897
        %v4899 = vsel %vm1675, %v4853, 0.0
        %4900 = vadd.xlane.f32.xlu0 %v4899
        %v4901 = vpop.xlane.xlu0 %4900
        %v4902 = vrcp.pop %v4856
        %v4903 = vmul.f32 %v4823, %v4902
        %v4904 = vrcp.pop %v4859
        %v4905 = vmul.f32 %v4825, %v4904
        %v4906 = vrcp.pop %v4862
        %v4907 = vmul.f32 %v4827, %v4906
        %v4908 = vrcp.pop %v4865
        %v4909 = vmul.f32 %v4829, %v4908
        %v4910 = vrcp.pop %v4868
        %v4911 = vmul.f32 %v4831, %v4910
        %v4912 = vrcp.pop %v4871
        %v4913 = vmul.f32 %v4833, %v4912
        %v4914 = vrcp.pop %v4874
        %v4915 = vmul.f32 %v4835, %v4914
        %v4916 = vrcp.pop %v4877
        %v4917 = vmul.f32 %v4837, %v4916
        %v4918 = vrcp.pop %v4880
        %v4919 = vmul.f32 %v4839, %v4918
        %v4920 = vrcp.pop %v4883
        %v4921 = vmul.f32 %v4841, %v4920
        %v4922 = vrcp.pop %v4886
        %v4923 = vmul.f32 %v4843, %v4922
        %v4924 = vrcp.pop %v4889
        %v4925 = vmul.f32 %v4845, %v4924
        %v4926 = vrcp.pop %v4892
        %v4927 = vmul.f32 %v4847, %v4926
        %v4928 = vrcp.pop %v4895
        %v4929 = vmul.f32 %v4849, %v4928
        %v4930 = vrcp.pop %v4898
        %v4931 = vmul.f32 %v4851, %v4930
        %v4932 = vrcp.pop %v4901
        %v4933 = vmul.f32 %v4853, %v4932
        %v4934 = vpack.c.bf16 %v4905, %v4903
        %v4935 = vpack.c.bf16 %v4909, %v4907
        %v4936 = vpack.c.bf16 %v4913, %v4911
        %v4937 = vpack.c.bf16 %v4917, %v4915
        %v4938 = vpack.c.bf16 %v4921, %v4919
        %v4939 = vpack.c.bf16 %v4925, %v4923
        %v4940 = vpack.c.bf16 %v4929, %v4927
        %v4941 = vpack.c.bf16 %v4933, %v4931
        %4942 = vrot.lane.b32.xlu0 %v1266, 40
        %v4943 = vpop.permute.xlu0 %4942
        %v4946 = vsel %vm1675, %v4934, 0
        %4948 = vmatprep.subr.bf16.mxu0 0
        %4949 = vmatpush1.bf16.msra.mxu0 %v4943
        %4950 = vmatprep.subr.bf16.mxu0 0
        %4951 = vmatpush1.bf16.msra.mxu0 0
        %4952 = vmatprep.subr.bf16.mxu0 0
        %4953 = vmatpush1.bf16.msra.mxu0 0
        %4954 = vmatprep.subr.bf16.mxu0 0
        %4955 = vmatpush1.bf16.msra.mxu0 0
        %4956 = vmatprep.subr.bf16.mxu0 0
        %4957 = vmatpush1.bf16.msra.mxu0 0
        %4958 = vmatprep.subr.bf16.mxu0 0
        %4959 = vmatpush1.bf16.msra.mxu0 0
        %4960 = vmatprep.subr.bf16.mxu0 0
        %4961 = vmatpush1.bf16.msra.mxu0 0
        %4962 = vmatprep.subr.bf16.mxu0 0
        %4963 = vmatpush1.bf16.msra.mxu0 0
        %4964 = vmatprep.subr.bf16.mxu0 0
        %4965 = vmatpush1.bf16.msra.mxu0 0
        %4966 = vmatprep.subr.bf16.mxu0 0
        %4967 = vmatpush1.bf16.msra.mxu0 0
        %4968 = vmatprep.subr.bf16.mxu0 0
        %4969 = vmatpush1.bf16.msra.mxu0 0
        %4970 = vmatprep.subr.bf16.mxu0 0
        %4971 = vmatpush1.bf16.msra.mxu0 0
        %4972 = vmatprep.subr.bf16.mxu0 0
        %4973 = vmatpush1.bf16.msra.mxu0 0
        %4974 = vmatprep.subr.bf16.mxu0 0
        %4975 = vmatpush1.bf16.msra.mxu0 0
        %4976 = vmatprep.subr.bf16.mxu0 0
        %4977 = vmatpush1.bf16.msra.mxu0 0
        %4978 = vmatprep.subr.bf16.mxu0 0
        %4979 = vmatpush1.bf16.msra.mxu0 0
        %4980 = vmatprep.mubr.bf16.mxu0 0
        %4981 = vmatmul.mubr.bf16.gmra.mrb[0].mxu0 %v4946
        %v4982 = vpop.f32.mrb[0].mxu0
        %v4983 = vadd.f32 0.0, %v4982
        %v4984 = vpop.f32.mrb[0].mxu0
        %v4985 = vpop.f32.mrb[0].mxu0
        %v4986 = vadd.f32 0.0, %v4985
        %v4987 = vpop.f32.mrb[0].mxu0
        %4988 = vdwg.mxu0
        %4989 = vrot.lane.b32.xlu0 %v1267, 40
        %v4990 = vpop.permute.xlu0 %4989
        %v4993 = vsel %vm1675, %v4935, 0
        %4995 = vmatprep.subr.bf16.mxu0 0
        %4996 = vmatpush1.bf16.msra.mxu0 %v4990
        %4997 = vmatprep.subr.bf16.mxu0 0
        %4998 = vmatpush1.bf16.msra.mxu0 0
        %4999 = vmatprep.subr.bf16.mxu0 0
        %5000 = vmatpush1.bf16.msra.mxu0 0
        %5001 = vmatprep.subr.bf16.mxu0 0
        %5002 = vmatpush1.bf16.msra.mxu0 0
        %5003 = vmatprep.subr.bf16.mxu0 0
        %5004 = vmatpush1.bf16.msra.mxu0 0
        %5005 = vmatprep.subr.bf16.mxu0 0
        %5006 = vmatpush1.bf16.msra.mxu0 0
        %5007 = vmatprep.subr.bf16.mxu0 0
        %5008 = vmatpush1.bf16.msra.mxu0 0
        %5009 = vmatprep.subr.bf16.mxu0 0
        %5010 = vmatpush1.bf16.msra.mxu0 0
        %5011 = vmatprep.subr.bf16.mxu0 0
        %5012 = vmatpush1.bf16.msra.mxu0 0
        %5013 = vmatprep.subr.bf16.mxu0 0
        %5014 = vmatpush1.bf16.msra.mxu0 0
        %5015 = vmatprep.subr.bf16.mxu0 0
        %5016 = vmatpush1.bf16.msra.mxu0 0
        %5017 = vmatprep.subr.bf16.mxu0 0
        %5018 = vmatpush1.bf16.msra.mxu0 0
        %5019 = vmatprep.subr.bf16.mxu0 0
        %5020 = vmatpush1.bf16.msra.mxu0 0
        %5021 = vmatprep.subr.bf16.mxu0 0
        %5022 = vmatpush1.bf16.msra.mxu0 0
        %5023 = vmatprep.subr.bf16.mxu0 0
        %5024 = vmatpush1.bf16.msra.mxu0 0
        %5025 = vmatprep.subr.bf16.mxu0 0
        %5026 = vmatpush1.bf16.msra.mxu0 0
        %5027 = vmatprep.mubr.bf16.mxu0 0
        %5028 = vmatmul.mubr.bf16.gmra.mrb[0].mxu0 %v4993
        %v5029 = vpop.f32.mrb[0].mxu0
        %v5030 = vadd.f32 0.0, %v5029
        %v5031 = vpop.f32.mrb[0].mxu0
        %v5032 = vpop.f32.mrb[0].mxu0
        %v5033 = vadd.f32 0.0, %v5032
        %v5034 = vpop.f32.mrb[0].mxu0
        %5035 = vdwg.mxu0
        %5036 = vrot.lane.b32.xlu0 %v1268, 40
        %v5037 = vpop.permute.xlu0 %5036
        %v5040 = vsel %vm1675, %v4936, 0
        %5042 = vmatprep.subr.bf16.mxu0 0
        %5043 = vmatpush1.bf16.msra.mxu0 %v5037
        %5044 = vmatprep.subr.bf16.mxu0 0
        %5045 = vmatpush1.bf16.msra.mxu0 0
        %5046 = vmatprep.subr.bf16.mxu0 0
        %5047 = vmatpush1.bf16.msra.mxu0 0
        %5048 = vmatprep.subr.bf16.mxu0 0
        %5049 = vmatpush1.bf16.msra.mxu0 0
        %5050 = vmatprep.subr.bf16.mxu0 0
        %5051 = vmatpush1.bf16.msra.mxu0 0
        %5052 = vmatprep.subr.bf16.mxu0 0
        %5053 = vmatpush1.bf16.msra.mxu0 0
        %5054 = vmatprep.subr.bf16.mxu0 0
        %5055 = vmatpush1.bf16.msra.mxu0 0
        %5056 = vmatprep.subr.bf16.mxu0 0
        %5057 = vmatpush1.bf16.msra.mxu0 0
        %5058 = vmatprep.subr.bf16.mxu0 0
        %5059 = vmatpush1.bf16.msra.mxu0 0
        %5060 = vmatprep.subr.bf16.mxu0 0
        %5061 = vmatpush1.bf16.msra.mxu0 0
        %5062 = vmatprep.subr.bf16.mxu0 0
        %5063 = vmatpush1.bf16.msra.mxu0 0
        %5064 = vmatprep.subr.bf16.mxu0 0
        %5065 = vmatpush1.bf16.msra.mxu0 0
        %5066 = vmatprep.subr.bf16.mxu0 0
        %5067 = vmatpush1.bf16.msra.mxu0 0
        %5068 = vmatprep.subr.bf16.mxu0 0
        %5069 = vmatpush1.bf16.msra.mxu0 0
        %5070 = vmatprep.subr.bf16.mxu0 0
        %5071 = vmatpush1.bf16.msra.mxu0 0
        %5072 = vmatprep.subr.bf16.mxu0 0
        %5073 = vmatpush1.bf16.msra.mxu0 0
        %5074 = vmatprep.mubr.bf16.mxu0 0
        %5075 = vmatmul.mubr.bf16.gmra.mrb[0].mxu0 %v5040
        %v5076 = vpop.f32.mrb[0].mxu0
        %v5077 = vadd.f32 0.0, %v5076
        %v5078 = vpop.f32.mrb[0].mxu0
        %v5079 = vpop.f32.mrb[0].mxu0
        %v5080 = vadd.f32 0.0, %v5079
        %v5081 = vpop.f32.mrb[0].mxu0
        %5082 = vdwg.mxu0
        %5083 = vrot.lane.b32.xlu0 %v1269, 40
        %v5084 = vpop.permute.xlu0 %5083
        %v5087 = vsel %vm1675, %v4937, 0
        %5089 = vmatprep.subr.bf16.mxu0 0
        %5090 = vmatpush1.bf16.msra.mxu0 %v5084
        %5091 = vmatprep.subr.bf16.mxu0 0
        %5092 = vmatpush1.bf16.msra.mxu0 0
        %5093 = vmatprep.subr.bf16.mxu0 0
        %5094 = vmatpush1.bf16.msra.mxu0 0
        %5095 = vmatprep.subr.bf16.mxu0 0
        %5096 = vmatpush1.bf16.msra.mxu0 0
        %5097 = vmatprep.subr.bf16.mxu0 0
        %5098 = vmatpush1.bf16.msra.mxu0 0
        %5099 = vmatprep.subr.bf16.mxu0 0
        %5100 = vmatpush1.bf16.msra.mxu0 0
        %5101 = vmatprep.subr.bf16.mxu0 0
        %5102 = vmatpush1.bf16.msra.mxu0 0
        %5103 = vmatprep.subr.bf16.mxu0 0
        %5104 = vmatpush1.bf16.msra.mxu0 0
        %5105 = vmatprep.subr.bf16.mxu0 0
        %5106 = vmatpush1.bf16.msra.mxu0 0
        %5107 = vmatprep.subr.bf16.mxu0 0
        %5108 = vmatpush1.bf16.msra.mxu0 0
        %5109 = vmatprep.subr.bf16.mxu0 0
        %5110 = vmatpush1.bf16.msra.mxu0 0
        %5111 = vmatprep.subr.bf16.mxu0 0
        %5112 = vmatpush1.bf16.msra.mxu0 0
        %5113 = vmatprep.subr.bf16.mxu0 0
        %5114 = vmatpush1.bf16.msra.mxu0 0
        %5115 = vmatprep.subr.bf16.mxu0 0
        %5116 = vmatpush1.bf16.msra.mxu0 0
        %5117 = vmatprep.subr.bf16.mxu0 0
        %5118 = vmatpush1.bf16.msra.mxu0 0
        %5119 = vmatprep.subr.bf16.mxu0 0
        %5120 = vmatpush1.bf16.msra.mxu0 0
        %5121 = vmatprep.mubr.bf16.mxu0 0
        %5122 = vmatmul.mubr.bf16.gmra.mrb[0].mxu0 %v5087
        %v5123 = vpop.f32.mrb[0].mxu0
        %v5124 = vadd.f32 0.0, %v5123
        %v5125 = vpop.f32.mrb[0].mxu0
        %v5126 = vpop.f32.mrb[0].mxu0
        %v5127 = vadd.f32 0.0, %v5126
        %v5128 = vpop.f32.mrb[0].mxu0
        %5129 = vdwg.mxu0
        %5130 = vrot.lane.b32.xlu0 %v1270, 40
        %v5131 = vpop.permute.xlu0 %5130
        %v5134 = vsel %vm1675, %v4938, 0
        %5136 = vmatprep.subr.bf16.mxu0 0
        %5137 = vmatpush1.bf16.msra.mxu0 %v5131
        %5138 = vmatprep.subr.bf16.mxu0 0
        %5139 = vmatpush1.bf16.msra.mxu0 0
        %5140 = vmatprep.subr.bf16.mxu0 0
        %5141 = vmatpush1.bf16.msra.mxu0 0
        %5142 = vmatprep.subr.bf16.mxu0 0
        %5143 = vmatpush1.bf16.msra.mxu0 0
        %5144 = vmatprep.subr.bf16.mxu0 0
        %5145 = vmatpush1.bf16.msra.mxu0 0
        %5146 = vmatprep.subr.bf16.mxu0 0
        %5147 = vmatpush1.bf16.msra.mxu0 0
        %5148 = vmatprep.subr.bf16.mxu0 0
        %5149 = vmatpush1.bf16.msra.mxu0 0
        %5150 = vmatprep.subr.bf16.mxu0 0
        %5151 = vmatpush1.bf16.msra.mxu0 0
        %5152 = vmatprep.subr.bf16.mxu0 0
        %5153 = vmatpush1.bf16.msra.mxu0 0
        %5154 = vmatprep.subr.bf16.mxu0 0
        %5155 = vmatpush1.bf16.msra.mxu0 0
        %5156 = vmatprep.subr.bf16.mxu0 0
        %5157 = vmatpush1.bf16.msra.mxu0 0
        %5158 = vmatprep.subr.bf16.mxu0 0
        %5159 = vmatpush1.bf16.msra.mxu0 0
        %5160 = vmatprep.subr.bf16.mxu0 0
        %5161 = vmatpush1.bf16.msra.mxu0 0
        %5162 = vmatprep.subr.bf16.mxu0 0
        %5163 = vmatpush1.bf16.msra.mxu0 0
        %5164 = vmatprep.subr.bf16.mxu0 0
        %5165 = vmatpush1.bf16.msra.mxu0 0
        %5166 = vmatprep.subr.bf16.mxu0 0
        %5167 = vmatpush1.bf16.msra.mxu0 0
        %5168 = vmatprep.mubr.bf16.mxu0 0
        %5169 = vmatmul.mubr.bf16.gmra.mrb[0].mxu0 %v5134
        %v5170 = vpop.f32.mrb[0].mxu0
        %v5171 = vadd.f32 0.0, %v5170
        %v5172 = vpop.f32.mrb[0].mxu0
        %v5173 = vpop.f32.mrb[0].mxu0
        %v5174 = vadd.f32 0.0, %v5173
        %v5175 = vpop.f32.mrb[0].mxu0
        %5176 = vdwg.mxu0
        %5177 = vrot.lane.b32.xlu0 %v1271, 40
        %v5178 = vpop.permute.xlu0 %5177
        %v5181 = vsel %vm1675, %v4939, 0
        %5183 = vmatprep.subr.bf16.mxu0 0
        %5184 = vmatpush1.bf16.msra.mxu0 %v5178
        %5185 = vmatprep.subr.bf16.mxu0 0
        %5186 = vmatpush1.bf16.msra.mxu0 0
        %5187 = vmatprep.subr.bf16.mxu0 0
        %5188 = vmatpush1.bf16.msra.mxu0 0
        %5189 = vmatprep.subr.bf16.mxu0 0
        %5190 = vmatpush1.bf16.msra.mxu0 0
        %5191 = vmatprep.subr.bf16.mxu0 0
        %5192 = vmatpush1.bf16.msra.mxu0 0
        %5193 = vmatprep.subr.bf16.mxu0 0
        %5194 = vmatpush1.bf16.msra.mxu0 0
        %5195 = vmatprep.subr.bf16.mxu0 0
        %5196 = vmatpush1.bf16.msra.mxu0 0
        %5197 = vmatprep.subr.bf16.mxu0 0
        %5198 = vmatpush1.bf16.msra.mxu0 0
        %5199 = vmatprep.subr.bf16.mxu0 0
        %5200 = vmatpush1.bf16.msra.mxu0 0
        %5201 = vmatprep.subr.bf16.mxu0 0
        %5202 = vmatpush1.bf16.msra.mxu0 0
        %5203 = vmatprep.subr.bf16.mxu0 0
        %5204 = vmatpush1.bf16.msra.mxu0 0
        %5205 = vmatprep.subr.bf16.mxu0 0
        %5206 = vmatpush1.bf16.msra.mxu0 0
        %5207 = vmatprep.subr.bf16.mxu0 0
        %5208 = vmatpush1.bf16.msra.mxu0 0
        %5209 = vmatprep.subr.bf16.mxu0 0
        %5210 = vmatpush1.bf16.msra.mxu0 0
        %5211 = vmatprep.subr.bf16.mxu0 0
        %5212 = vmatpush1.bf16.msra.mxu0 0
        %5213 = vmatprep.subr.bf16.mxu0 0
        %5214 = vmatpush1.bf16.msra.mxu0 0
        %5215 = vmatprep.mubr.bf16.mxu0 0
        %5216 = vmatmul.mubr.bf16.gmra.mrb[0].mxu0 %v5181
        %v5217 = vpop.f32.mrb[0].mxu0
        %v5218 = vadd.f32 0.0, %v5217
        %v5219 = vpop.f32.mrb[0].mxu0
        %v5220 = vpop.f32.mrb[0].mxu0
        %v5221 = vadd.f32 0.0, %v5220
        %v5222 = vpop.f32.mrb[0].mxu0
        %5223 = vdwg.mxu0
        %5224 = vrot.lane.b32.xlu0 %v1272, 40
        %v5225 = vpop.permute.xlu0 %5224
        %v5228 = vsel %vm1675, %v4940, 0
        %5230 = vmatprep.subr.bf16.mxu0 0
        %5231 = vmatpush1.bf16.msra.mxu0 %v5225
        %5232 = vmatprep.subr.bf16.mxu0 0
        %5233 = vmatpush1.bf16.msra.mxu0 0
        %5234 = vmatprep.subr.bf16.mxu0 0
        %5235 = vmatpush1.bf16.msra.mxu0 0
        %5236 = vmatprep.subr.bf16.mxu0 0
        %5237 = vmatpush1.bf16.msra.mxu0 0
        %5238 = vmatprep.subr.bf16.mxu0 0
        %5239 = vmatpush1.bf16.msra.mxu0 0
        %5240 = vmatprep.subr.bf16.mxu0 0
        %5241 = vmatpush1.bf16.msra.mxu0 0
        %5242 = vmatprep.subr.bf16.mxu0 0
        %5243 = vmatpush1.bf16.msra.mxu0 0
        %5244 = vmatprep.subr.bf16.mxu0 0
        %5245 = vmatpush1.bf16.msra.mxu0 0
        %5246 = vmatprep.subr.bf16.mxu0 0
        %5247 = vmatpush1.bf16.msra.mxu0 0
        %5248 = vmatprep.subr.bf16.mxu0 0
        %5249 = vmatpush1.bf16.msra.mxu0 0
        %5250 = vmatprep.subr.bf16.mxu0 0
        %5251 = vmatpush1.bf16.msra.mxu0 0
        %5252 = vmatprep.subr.bf16.mxu0 0
        %5253 = vmatpush1.bf16.msra.mxu0 0
        %5254 = vmatprep.subr.bf16.mxu0 0
        %5255 = vmatpush1.bf16.msra.mxu0 0
        %5256 = vmatprep.subr.bf16.mxu0 0
        %5257 = vmatpush1.bf16.msra.mxu0 0
        %5258 = vmatprep.subr.bf16.mxu0 0
        %5259 = vmatpush1.bf16.msra.mxu0 0
        %5260 = vmatprep.subr.bf16.mxu0 0
        %5261 = vmatpush1.bf16.msra.mxu0 0
        %5262 = vmatprep.mubr.bf16.mxu0 0
        %5263 = vmatmul.mubr.bf16.gmra.mrb[0].mxu0 %v5228
        %v5264 = vpop.f32.mrb[0].mxu0
        %v5265 = vadd.f32 0.0, %v5264
        %v5266 = vpop.f32.mrb[0].mxu0
        %v5267 = vpop.f32.mrb[0].mxu0
        %v5268 = vadd.f32 0.0, %v5267
        %v5269 = vpop.f32.mrb[0].mxu0
        %5270 = vdwg.mxu0
        %5271 = vrot.lane.b32.xlu0 %v1273, 40
        %v5272 = vpop.permute.xlu0 %5271
        %v5275 = vsel %vm1675, %v4941, 0
        %5277 = vmatprep.subr.bf16.mxu0 0
        %5278 = vmatpush1.bf16.msra.mxu0 %v5272
        %5279 = vmatprep.subr.bf16.mxu0 0
        %5280 = vmatpush1.bf16.msra.mxu0 0
        %5281 = vmatprep.subr.bf16.mxu0 0
        %5282 = vmatpush1.bf16.msra.mxu0 0
        %5283 = vmatprep.subr.bf16.mxu0 0
        %5284 = vmatpush1.bf16.msra.mxu0 0
        %5285 = vmatprep.subr.bf16.mxu0 0
        %5286 = vmatpush1.bf16.msra.mxu0 0
        %5287 = vmatprep.subr.bf16.mxu0 0
        %5288 = vmatpush1.bf16.msra.mxu0 0
        %5289 = vmatprep.subr.bf16.mxu0 0
        %5290 = vmatpush1.bf16.msra.mxu0 0
        %5291 = vmatprep.subr.bf16.mxu0 0
        %5292 = vmatpush1.bf16.msra.mxu0 0
        %5293 = vmatprep.subr.bf16.mxu0 0
        %5294 = vmatpush1.bf16.msra.mxu0 0
        %5295 = vmatprep.subr.bf16.mxu0 0
        %5296 = vmatpush1.bf16.msra.mxu0 0
        %5297 = vmatprep.subr.bf16.mxu0 0
        %5298 = vmatpush1.bf16.msra.mxu0 0
        %5299 = vmatprep.subr.bf16.mxu0 0
        %5300 = vmatpush1.bf16.msra.mxu0 0
        %5301 = vmatprep.subr.bf16.mxu0 0
        %5302 = vmatpush1.bf16.msra.mxu0 0
        %5303 = vmatprep.subr.bf16.mxu0 0
        %5304 = vmatpush1.bf16.msra.mxu0 0
        %5305 = vmatprep.subr.bf16.mxu0 0
        %5306 = vmatpush1.bf16.msra.mxu0 0
        %5307 = vmatprep.subr.bf16.mxu0 0
        %5308 = vmatpush1.bf16.msra.mxu0 0
        %5309 = vmatprep.mubr.bf16.mxu0 0
        %5310 = vmatmul.mubr.bf16.gmra.mrb[0].mxu0 %v5275
        %v5311 = vpop.f32.mrb[0].mxu0
        %v5312 = vadd.f32 0.0, %v5311
        %v5313 = vpop.f32.mrb[0].mxu0
        %v5314 = vpop.f32.mrb[0].mxu0
        %v5315 = vadd.f32 0.0, %v5314
        %v5316 = vpop.f32.mrb[0].mxu0
        %5317 = vdwg.mxu0
        %5334 = vrot.lane.b32.xlu0 %v4983, 24
        %v5335 = vpop.permute.xlu0 %5334
        %5336 = vrot.lane.b32.xlu0 %v4986, 24
        %v5337 = vpop.permute.xlu0 %5336
        %5338 = vrot.lane.b32.xlu0 %v5030, 24
        %v5339 = vpop.permute.xlu0 %5338
        %5340 = vrot.lane.b32.xlu0 %v5033, 24
        %v5341 = vpop.permute.xlu0 %5340
        %5342 = vrot.lane.b32.xlu0 %v5077, 24
        %v5343 = vpop.permute.xlu0 %5342
        %5344 = vrot.lane.b32.xlu0 %v5080, 24
        %v5345 = vpop.permute.xlu0 %5344
        %5346 = vrot.lane.b32.xlu0 %v5124, 24
        %v5347 = vpop.permute.xlu0 %5346
        %5348 = vrot.lane.b32.xlu0 %v5127, 24
        %v5349 = vpop.permute.xlu0 %5348
        %5350 = vrot.lane.b32.xlu0 %v5171, 24
        %v5351 = vpop.permute.xlu0 %5350
        %5352 = vrot.lane.b32.xlu0 %v5174, 24
        %v5353 = vpop.permute.xlu0 %5352
        %5354 = vrot.lane.b32.xlu0 %v5218, 24
        %v5355 = vpop.permute.xlu0 %5354
        %5356 = vrot.lane.b32.xlu0 %v5221, 24
        %v5357 = vpop.permute.xlu0 %5356
        %5358 = vrot.lane.b32.xlu0 %v5265, 24
        %v5359 = vpop.permute.xlu0 %5358
        %5360 = vrot.lane.b32.xlu0 %v5268, 24
        %v5361 = vpop.permute.xlu0 %5360
        %5362 = vrot.lane.b32.xlu0 %v5312, 24
        %v5363 = vpop.permute.xlu0 %5362
        %5364 = vrot.lane.b32.xlu0 %v5315, 24
        %v5365 = vpop.permute.xlu0 %5364
        %vm5382 = vcmask 261312
        %5383 = vst.msk [vmem:[#allocation2] sm:$0xff] %vm5382, %v5335
        %5384 = vst.msk [vmem:[#allocation2 + $0x8] sm:$0xff] %vm5382, %v5337
        %5385 = vst.msk [vmem:[#allocation2 + $0x10] sm:$0xff] %vm5382, %v5339
        %5386 = vst.msk [vmem:[#allocation2 + $0x18] sm:$0xff] %vm5382, %v5341
        %5387 = vst.msk [vmem:[#allocation2 + $0x20] sm:$0xff] %vm5382, %v5343
        %5388 = vst.msk [vmem:[#allocation2 + $0x28] sm:$0xff] %vm5382, %v5345
        %5389 = vst.msk [vmem:[#allocation2 + $0x30] sm:$0xff] %vm5382, %v5347
        %5390 = vst.msk [vmem:[#allocation2 + $0x38] sm:$0xff] %vm5382, %v5349
        %5391 = vst.msk [vmem:[#allocation2 + $0x40] sm:$0xff] %vm5382, %v5351
        %5392 = vst.msk [vmem:[#allocation2 + $0x48] sm:$0xff] %vm5382, %v5353
        %5393 = vst.msk [vmem:[#allocation2 + $0x50] sm:$0xff] %vm5382, %v5355
        %5394 = vst.msk [vmem:[#allocation2 + $0x58] sm:$0xff] %vm5382, %v5357
        %5395 = vst.msk [vmem:[#allocation2 + $0x60] sm:$0xff] %vm5382, %v5359
        %5396 = vst.msk [vmem:[#allocation2 + $0x68] sm:$0xff] %vm5382, %v5361
        %5397 = vst.msk [vmem:[#allocation2 + $0x70] sm:$0xff] %vm5382, %v5363
        %5398 = vst.msk [vmem:[#allocation2 + $0x78] sm:$0xff] %vm5382, %v5365
        %v5399 = vld [vmem:[#allocation2] sm:$0xff]
        %v5400 = vld [vmem:[#allocation2 + $0x8] sm:$0xff]
        %v5401 = vld [vmem:[#allocation2 + $0x10] sm:$0xff]
        %v5402 = vld [vmem:[#allocation2 + $0x18] sm:$0xff]
        %v5403 = vld [vmem:[#allocation2 + $0x20] sm:$0xff]
        %v5404 = vld [vmem:[#allocation2 + $0x28] sm:$0xff]
        %v5405 = vld [vmem:[#allocation2 + $0x30] sm:$0xff]
        %v5406 = vld [vmem:[#allocation2 + $0x38] sm:$0xff]
        %v5407 = vld [vmem:[#allocation2 + $0x40] sm:$0xff]
        %v5408 = vld [vmem:[#allocation2 + $0x48] sm:$0xff]
        %v5409 = vld [vmem:[#allocation2 + $0x50] sm:$0xff]
        %v5410 = vld [vmem:[#allocation2 + $0x58] sm:$0xff]
        %v5411 = vld [vmem:[#allocation2 + $0x60] sm:$0xff]
        %v5412 = vld [vmem:[#allocation2 + $0x68] sm:$0xff]
        %v5413 = vld [vmem:[#allocation2 + $0x70] sm:$0xff]
        %v5414 = vld [vmem:[#allocation2 + $0x78] sm:$0xff]
        %v5415 = vpack.c.bf16 %v5400, %v5399
        %v5416 = vpack.c.bf16 %v5402, %v5401
        %v5417 = vpack.c.bf16 %v5404, %v5403
        %v5418 = vpack.c.bf16 %v5406, %v5405
        %v5419 = vpack.c.bf16 %v5408, %v5407
        %v5420 = vpack.c.bf16 %v5410, %v5409
        %v5421 = vpack.c.bf16 %v5412, %v5411
        %v5422 = vpack.c.bf16 %v5414, %v5413
        %v5423 = vld [vmem:[%s8] sm:$0xf]
        %v5424 = vld [vmem:[%s8 + $0x4] sm:$0xf]
        %v5425 = vld [vmem:[%s8 + $0x8] sm:$0xf]
        %v5426 = vld [vmem:[%s8 + $0xc] sm:$0xf]
        %v5427 = vld [vmem:[%s9] sm:$0x1]
        %v5429 = vlaneseq
        %v5430 = vshrl.u32 %v5429, 7
        %v5431 = vsub.s32 0, %v5430
        %v5432 = vrot.slane %v5427, %v5431
        %v5438 = vunpack.c.l.b16 %v5423
        %v5439 = vunpack.c.l.b16 %v5424
        %v5440 = vunpack.c.l.b16 %v5425
        %v5441 = vunpack.c.l.b16 %v5426
        %v5442 = vpack.c.b16 %v5439, %v5438
        %v5443 = vpack.c.b16 %v5441, %v5440
        %v5447 = vsel %vm860, %v5415, 0
        %v5450 = vsel %vm860, %v5416, 0
        %v5453 = vsel %vm860, %v5417, 0
        %v5456 = vsel %vm860, %v5418, 0
        %v5459 = vsel %vm860, %v5419, 0
        %v5462 = vsel %vm860, %v5420, 0
        %v5465 = vsel %vm860, %v5421, 0
        %v5468 = vsel %vm860, %v5422, 0
        %5470 = vmatprep.subr.bf16.mxu0 0
        %5471 = vmatpush1.bf16.msra.mxu0 %v5442
        %5472 = vmatprep.subr.bf16.mxu0 0
        %5473 = vmatpush1.bf16.msra.mxu0 %v5443
        %5474 = vmatprep.subr.bf16.mxu0 0
        %5475 = vmatpush1.bf16.msra.mxu0 0
        %5476 = vmatprep.subr.bf16.mxu0 0
        %5477 = vmatpush1.bf16.msra.mxu0 0
        %5478 = vmatprep.subr.bf16.mxu0 0
        %5479 = vmatpush1.bf16.msra.mxu0 0
        %5480 = vmatprep.subr.bf16.mxu0 0
        %5481 = vmatpush1.bf16.msra.mxu0 0
        %5482 = vmatprep.subr.bf16.mxu0 0
        %5483 = vmatpush1.bf16.msra.mxu0 0
        %5484 = vmatprep.subr.bf16.mxu0 0
        %5485 = vmatpush1.bf16.msra.mxu0 0
        %5486 = vmatprep.subr.bf16.mxu0 0
        %5487 = vmatpush1.bf16.msra.mxu0 0
        %5488 = vmatprep.subr.bf16.mxu0 0
        %5489 = vmatpush1.bf16.msra.mxu0 0
        %5490 = vmatprep.subr.bf16.mxu0 0
        %5491 = vmatpush1.bf16.msra.mxu0 0
        %5492 = vmatprep.subr.bf16.mxu0 0
        %5493 = vmatpush1.bf16.msra.mxu0 0
        %5494 = vmatprep.subr.bf16.mxu0 0
        %5495 = vmatpush1.bf16.msra.mxu0 0
        %5496 = vmatprep.subr.bf16.mxu0 0
        %5497 = vmatpush1.bf16.msra.mxu0 0
        %5498 = vmatprep.subr.bf16.mxu0 0
        %5499 = vmatpush1.bf16.msra.mxu0 0
        %5500 = vmatprep.subr.bf16.mxu0 0
        %5501 = vmatpush1.bf16.msra.mxu0 0
        %5502 = vmatprep.mubr.bf16.mxu0 0
        %5503 = vmatmul.mubr.bf16.gmra.mrb[0].mxu0 %v5447
        %v5504 = vpop.f32.mrb[0].mxu0
        %v5505 = vadd.f32 %v5432, %v5504
        %v5506 = vpop.f32.mrb[0].mxu0
        %v5507 = vpop.f32.mrb[0].mxu0
        %v5508 = vadd.f32 %v5432, %v5507
        %v5509 = vpop.f32.mrb[0].mxu0
        %5510 = vmatprep.mubr.bf16.mxu0 0
        %5511 = vmatmul.mubr.bf16.gmra.mrb[0].mxu0 %v5450
        %v5512 = vpop.f32.mrb[0].mxu0
        %v5513 = vadd.f32 %v5432, %v5512
        %v5514 = vpop.f32.mrb[0].mxu0
        %v5515 = vpop.f32.mrb[0].mxu0
        %v5516 = vadd.f32 %v5432, %v5515
        %v5517 = vpop.f32.mrb[0].mxu0
        %5518 = vmatprep.mubr.bf16.mxu0 0
        %5519 = vmatmul.mubr.bf16.gmra.mrb[0].mxu0 %v5453
        %v5520 = vpop.f32.mrb[0].mxu0
        %v5521 = vadd.f32 %v5432, %v5520
        %v5522 = vpop.f32.mrb[0].mxu0
        %v5523 = vpop.f32.mrb[0].mxu0
        %v5524 = vadd.f32 %v5432, %v5523
        %v5525 = vpop.f32.mrb[0].mxu0
        %5526 = vmatprep.mubr.bf16.mxu0 0
        %5527 = vmatmul.mubr.bf16.gmra.mrb[0].mxu0 %v5456
        %v5528 = vpop.f32.mrb[0].mxu0
        %v5529 = vadd.f32 %v5432, %v5528
        %v5530 = vpop.f32.mrb[0].mxu0
        %v5531 = vpop.f32.mrb[0].mxu0
        %v5532 = vadd.f32 %v5432, %v5531
        %v5533 = vpop.f32.mrb[0].mxu0
        %5534 = vmatprep.mubr.bf16.mxu0 0
        %5535 = vmatmul.mubr.bf16.gmra.mrb[0].mxu0 %v5459
        %v5536 = vpop.f32.mrb[0].mxu0
        %v5537 = vadd.f32 %v5432, %v5536
        %v5538 = vpop.f32.mrb[0].mxu0
        %v5539 = vpop.f32.mrb[0].mxu0
        %v5540 = vadd.f32 %v5432, %v5539
        %v5541 = vpop.f32.mrb[0].mxu0
        %5542 = vmatprep.mubr.bf16.mxu0 0
        %5543 = vmatmul.mubr.bf16.gmra.mrb[0].mxu0 %v5462
        %v5544 = vpop.f32.mrb[0].mxu0
        %v5545 = vadd.f32 %v5432, %v5544
        %v5546 = vpop.f32.mrb[0].mxu0
        %v5547 = vpop.f32.mrb[0].mxu0
        %v5548 = vadd.f32 %v5432, %v5547
        %v5549 = vpop.f32.mrb[0].mxu0
        %5550 = vmatprep.mubr.bf16.mxu0 0
        %5551 = vmatmul.mubr.bf16.gmra.mrb[0].mxu0 %v5465
        %v5552 = vpop.f32.mrb[0].mxu0
        %v5553 = vadd.f32 %v5432, %v5552
        %v5554 = vpop.f32.mrb[0].mxu0
        %v5555 = vpop.f32.mrb[0].mxu0
        %v5556 = vadd.f32 %v5432, %v5555
        %v5557 = vpop.f32.mrb[0].mxu0
        %5558 = vmatprep.mubr.bf16.mxu0 0
        %5559 = vmatmul.mubr.bf16.gmra.mrb[0].mxu0 %v5468
        %v5560 = vpop.f32.mrb[0].mxu0
        %v5561 = vadd.f32 %v5432, %v5560
        %v5562 = vpop.f32.mrb[0].mxu0
        %v5563 = vpop.f32.mrb[0].mxu0
        %v5564 = vadd.f32 %v5432, %v5563
        %v5565 = vpop.f32.mrb[0].mxu0
        %5566 = vdwg.mxu0
        %v5567 = vadd.f32 %v842, %v5505
        %v5568 = vadd.f32 %v843, %v5508
        %v5569 = vadd.f32 %v844, %v5513
        %v5570 = vadd.f32 %v845, %v5516
        %v5571 = vadd.f32 %v846, %v5521
        %v5572 = vadd.f32 %v847, %v5524
        %v5573 = vadd.f32 %v848, %v5529
        %v5574 = vadd.f32 %v849, %v5532
        %v5575 = vadd.f32 %v850, %v5537
        %v5576 = vadd.f32 %v851, %v5540
        %v5577 = vadd.f32 %v852, %v5545
        %v5578 = vadd.f32 %v853, %v5548
        %v5579 = vadd.f32 %v854, %v5553
        %v5580 = vadd.f32 %v855, %v5556
        %v5581 = vadd.f32 %v856, %v5561
        %v5582 = vadd.f32 %v857, %v5564
        %v5583 = vld [vmem:[%s10] sm:$0x1]
        %v5584 = vld [vmem:[%s11] sm:$0x1]
        %v5585 = vsel %vm860, %v5567, 0.0
        %5586 = vadd.xlane.f32.xlu0 %v5585
        %v5587 = vpop.xlane.xlu0 %5586
        %v5588 = vsel %vm860, %v5568, 0.0
        %5589 = vadd.xlane.f32.xlu0 %v5588
        %v5590 = vpop.xlane.xlu0 %5589
        %v5591 = vsel %vm860, %v5569, 0.0
        %5592 = vadd.xlane.f32.xlu0 %v5591
        %v5593 = vpop.xlane.xlu0 %5592
        %v5594 = vsel %vm860, %v5570, 0.0
        %5595 = vadd.xlane.f32.xlu0 %v5594
        %v5596 = vpop.xlane.xlu0 %5595
        %v5597 = vsel %vm860, %v5571, 0.0
        %5598 = vadd.xlane.f32.xlu0 %v5597
        %v5599 = vpop.xlane.xlu0 %5598
        %v5600 = vsel %vm860, %v5572, 0.0
        %5601 = vadd.xlane.f32.xlu0 %v5600
        %v5602 = vpop.xlane.xlu0 %5601
        %v5603 = vsel %vm860, %v5573, 0.0
        %5604 = vadd.xlane.f32.xlu0 %v5603
        %v5605 = vpop.xlane.xlu0 %5604
        %v5606 = vsel %vm860, %v5574, 0.0
        %5607 = vadd.xlane.f32.xlu0 %v5606
        %v5608 = vpop.xlane.xlu0 %5607
        %v5609 = vsel %vm860, %v5575, 0.0
        %5610 = vadd.xlane.f32.xlu0 %v5609
        %v5611 = vpop.xlane.xlu0 %5610
        %v5612 = vsel %vm860, %v5576, 0.0
        %5613 = vadd.xlane.f32.xlu0 %v5612
        %v5614 = vpop.xlane.xlu0 %5613
        %v5615 = vsel %vm860, %v5577, 0.0
        %5616 = vadd.xlane.f32.xlu0 %v5615
        %v5617 = vpop.xlane.xlu0 %5616
        %v5618 = vsel %vm860, %v5578, 0.0
        %5619 = vadd.xlane.f32.xlu0 %v5618
        %v5620 = vpop.xlane.xlu0 %5619
        %v5621 = vsel %vm860, %v5579, 0.0
        %5622 = vadd.xlane.f32.xlu0 %v5621
        %v5623 = vpop.xlane.xlu0 %5622
        %v5624 = vsel %vm860, %v5580, 0.0
        %5625 = vadd.xlane.f32.xlu0 %v5624
        %v5626 = vpop.xlane.xlu0 %5625
        %v5627 = vsel %vm860, %v5581, 0.0
        %5628 = vadd.xlane.f32.xlu0 %v5627
        %v5629 = vpop.xlane.xlu0 %5628
        %v5630 = vsel %vm860, %v5582, 0.0
        %5631 = vadd.xlane.f32.xlu0 %v5630
        %v5632 = vpop.xlane.xlu0 %5631
        %v5633 = vmul.f32 %v5587, %v909
        %v5634 = vmul.f32 %v5590, %v909
        %v5635 = vmul.f32 %v5593, %v909
        %v5636 = vmul.f32 %v5596, %v909
        %v5637 = vmul.f32 %v5599, %v909
        %v5638 = vmul.f32 %v5602, %v909
        %v5639 = vmul.f32 %v5605, %v909
        %v5640 = vmul.f32 %v5608, %v909
        %v5641 = vmul.f32 %v5611, %v909
        %v5642 = vmul.f32 %v5614, %v909
        %v5643 = vmul.f32 %v5617, %v909
        %v5644 = vmul.f32 %v5620, %v909
        %v5645 = vmul.f32 %v5623, %v909
        %v5646 = vmul.f32 %v5626, %v909
        %v5647 = vmul.f32 %v5629, %v909
        %v5648 = vmul.f32 %v5632, %v909
        %v5649 = vsub.f32 %v5567, %v5633
        %v5650 = vsub.f32 %v5568, %v5634
        %v5651 = vsub.f32 %v5569, %v5635
        %v5652 = vsub.f32 %v5570, %v5636
        %v5653 = vsub.f32 %v5571, %v5637
        %v5654 = vsub.f32 %v5572, %v5638
        %v5655 = vsub.f32 %v5573, %v5639
        %v5656 = vsub.f32 %v5574, %v5640
        %v5657 = vsub.f32 %v5575, %v5641
        %v5658 = vsub.f32 %v5576, %v5642
        %v5659 = vsub.f32 %v5577, %v5643
        %v5660 = vsub.f32 %v5578, %v5644
        %v5661 = vsub.f32 %v5579, %v5645
        %v5662 = vsub.f32 %v5580, %v5646
        %v5663 = vsub.f32 %v5581, %v5647
        %v5664 = vsub.f32 %v5582, %v5648
        %v5665 = vmul.f32 %v5649, %v5649
        %v5666 = vmul.f32 %v5650, %v5650
        %v5667 = vmul.f32 %v5651, %v5651
        %v5668 = vmul.f32 %v5652, %v5652
        %v5669 = vmul.f32 %v5653, %v5653
        %v5670 = vmul.f32 %v5654, %v5654
        %v5671 = vmul.f32 %v5655, %v5655
        %v5672 = vmul.f32 %v5656, %v5656
        %v5673 = vmul.f32 %v5657, %v5657
        %v5674 = vmul.f32 %v5658, %v5658
        %v5675 = vmul.f32 %v5659, %v5659
        %v5676 = vmul.f32 %v5660, %v5660
        %v5677 = vmul.f32 %v5661, %v5661
        %v5678 = vmul.f32 %v5662, %v5662
        %v5679 = vmul.f32 %v5663, %v5663
        %v5680 = vmul.f32 %v5664, %v5664
        %v5681 = vsel %vm860, %v5665, 0.0
        %5682 = vadd.xlane.f32.xlu0 %v5681
        %v5683 = vpop.xlane.xlu0 %5682
        %v5684 = vsel %vm860, %v5666, 0.0
        %5685 = vadd.xlane.f32.xlu0 %v5684
        %v5686 = vpop.xlane.xlu0 %5685
        %v5687 = vsel %vm860, %v5667, 0.0
        %5688 = vadd.xlane.f32.xlu0 %v5687
        %v5689 = vpop.xlane.xlu0 %5688
        %v5690 = vsel %vm860, %v5668, 0.0
        %5691 = vadd.xlane.f32.xlu0 %v5690
        %v5692 = vpop.xlane.xlu0 %5691
        %v5693 = vsel %vm860, %v5669, 0.0
        %5694 = vadd.xlane.f32.xlu0 %v5693
        %v5695 = vpop.xlane.xlu0 %5694
        %v5696 = vsel %vm860, %v5670, 0.0
        %5697 = vadd.xlane.f32.xlu0 %v5696
        %v5698 = vpop.xlane.xlu0 %5697
        %v5699 = vsel %vm860, %v5671, 0.0
        %5700 = vadd.xlane.f32.xlu0 %v5699
        %v5701 = vpop.xlane.xlu0 %5700
        %v5702 = vsel %vm860, %v5672, 0.0
        %5703 = vadd.xlane.f32.xlu0 %v5702
        %v5704 = vpop.xlane.xlu0 %5703
        %v5705 = vsel %vm860, %v5673, 0.0
        %5706 = vadd.xlane.f32.xlu0 %v5705
        %v5707 = vpop.xlane.xlu0 %5706
        %v5708 = vsel %vm860, %v5674, 0.0
        %5709 = vadd.xlane.f32.xlu0 %v5708
        %v5710 = vpop.xlane.xlu0 %5709
        %v5711 = vsel %vm860, %v5675, 0.0
        %5712 = vadd.xlane.f32.xlu0 %v5711
        %v5713 = vpop.xlane.xlu0 %5712
        %v5714 = vsel %vm860, %v5676, 0.0
        %5715 = vadd.xlane.f32.xlu0 %v5714
        %v5716 = vpop.xlane.xlu0 %5715
        %v5717 = vsel %vm860, %v5677, 0.0
        %5718 = vadd.xlane.f32.xlu0 %v5717
        %v5719 = vpop.xlane.xlu0 %5718
        %v5720 = vsel %vm860, %v5678, 0.0
        %5721 = vadd.xlane.f32.xlu0 %v5720
        %v5722 = vpop.xlane.xlu0 %5721
        %v5723 = vsel %vm860, %v5679, 0.0
        %5724 = vadd.xlane.f32.xlu0 %v5723
        %v5725 = vpop.xlane.xlu0 %5724
        %v5726 = vsel %vm860, %v5680, 0.0
        %5727 = vadd.xlane.f32.xlu0 %v5726
        %v5728 = vpop.xlane.xlu0 %5727
        %v5729 = vmul.f32 %v5683, %v909
        %v5730 = vmul.f32 %v5686, %v909
        %v5731 = vmul.f32 %v5689, %v909
        %v5732 = vmul.f32 %v5692, %v909
        %v5733 = vmul.f32 %v5695, %v909
        %v5734 = vmul.f32 %v5698, %v909
        %v5735 = vmul.f32 %v5701, %v909
        %v5736 = vmul.f32 %v5704, %v909
        %v5737 = vmul.f32 %v5707, %v909
        %v5738 = vmul.f32 %v5710, %v909
        %v5739 = vmul.f32 %v5713, %v909
        %v5740 = vmul.f32 %v5716, %v909
        %v5741 = vmul.f32 %v5719, %v909
        %v5742 = vmul.f32 %v5722, %v909
        %v5743 = vmul.f32 %v5725, %v909
        %v5744 = vmul.f32 %v5728, %v909
        %v5745 = vadd.f32 %v5729, 1e-05
        %v5746 = vadd.f32 %v5730, 1e-05
        %v5747 = vadd.f32 %v5731, 1e-05
        %v5748 = vadd.f32 %v5732, 1e-05
        %v5749 = vadd.f32 %v5733, 1e-05
        %v5750 = vadd.f32 %v5734, 1e-05
        %v5751 = vadd.f32 %v5735, 1e-05
        %v5752 = vadd.f32 %v5736, 1e-05
        %v5753 = vadd.f32 %v5737, 1e-05
        %v5754 = vadd.f32 %v5738, 1e-05
        %v5755 = vadd.f32 %v5739, 1e-05
        %v5756 = vadd.f32 %v5740, 1e-05
        %v5757 = vadd.f32 %v5741, 1e-05
        %v5758 = vadd.f32 %v5742, 1e-05
        %v5759 = vadd.f32 %v5743, 1e-05
        %v5760 = vadd.f32 %v5744, 1e-05
        %v5761 = vrsqrt.pop %v5745
        %v5762 = vrsqrt.pop %v5746
        %v5763 = vrsqrt.pop %v5747
        %v5764 = vrsqrt.pop %v5748
        %v5765 = vrsqrt.pop %v5749
        %v5766 = vrsqrt.pop %v5750
        %v5767 = vrsqrt.pop %v5751
        %v5768 = vrsqrt.pop %v5752
        %v5769 = vrsqrt.pop %v5753
        %v5770 = vrsqrt.pop %v5754
        %v5771 = vrsqrt.pop %v5755
        %v5772 = vrsqrt.pop %v5756
        %v5773 = vrsqrt.pop %v5757
        %v5774 = vrsqrt.pop %v5758
        %v5775 = vrsqrt.pop %v5759
        %v5776 = vrsqrt.pop %v5760
        %v5777 = vmul.f32 %v5649, %v5761
        %v5778 = vmul.f32 %v5650, %v5762
        %v5779 = vmul.f32 %v5651, %v5763
        %v5780 = vmul.f32 %v5652, %v5764
        %v5781 = vmul.f32 %v5653, %v5765
        %v5782 = vmul.f32 %v5654, %v5766
        %v5783 = vmul.f32 %v5655, %v5767
        %v5784 = vmul.f32 %v5656, %v5768
        %v5785 = vmul.f32 %v5657, %v5769
        %v5786 = vmul.f32 %v5658, %v5770
        %v5787 = vmul.f32 %v5659, %v5771
        %v5788 = vmul.f32 %v5660, %v5772
        %v5789 = vmul.f32 %v5661, %v5773
        %v5790 = vmul.f32 %v5662, %v5774
        %v5791 = vmul.f32 %v5663, %v5775
        %v5792 = vmul.f32 %v5664, %v5776
        %v5794 = vlaneseq
        %v5795 = vshrl.u32 %v5794, 7
        %v5796 = vsub.s32 0, %v5795
        %v5797 = vrot.slane %v5583, %v5796
        %v5799 = vmul.f32 %v5777, %v5797
        %v5800 = vmul.f32 %v5778, %v5797
        %v5801 = vmul.f32 %v5779, %v5797
        %v5802 = vmul.f32 %v5780, %v5797
        %v5803 = vmul.f32 %v5781, %v5797
        %v5804 = vmul.f32 %v5782, %v5797
        %v5805 = vmul.f32 %v5783, %v5797
        %v5806 = vmul.f32 %v5784, %v5797
        %v5807 = vmul.f32 %v5785, %v5797
        %v5808 = vmul.f32 %v5786, %v5797
        %v5809 = vmul.f32 %v5787, %v5797
        %v5810 = vmul.f32 %v5788, %v5797
        %v5811 = vmul.f32 %v5789, %v5797
        %v5812 = vmul.f32 %v5790, %v5797
        %v5813 = vmul.f32 %v5791, %v5797
        %v5814 = vmul.f32 %v5792, %v5797
        %v5816 = vlaneseq
        %v5817 = vshrl.u32 %v5816, 7
        %v5818 = vsub.s32 0, %v5817
        %v5819 = vrot.slane %v5584, %v5818
        %v5821 = vadd.f32 %v5799, %v5819
        %v5822 = vadd.f32 %v5800, %v5819
        %v5823 = vadd.f32 %v5801, %v5819
        %v5824 = vadd.f32 %v5802, %v5819
        %v5825 = vadd.f32 %v5803, %v5819
        %v5826 = vadd.f32 %v5804, %v5819
        %v5827 = vadd.f32 %v5805, %v5819
        %v5828 = vadd.f32 %v5806, %v5819
        %v5829 = vadd.f32 %v5807, %v5819
        %v5830 = vadd.f32 %v5808, %v5819
        %v5831 = vadd.f32 %v5809, %v5819
        %v5832 = vadd.f32 %v5810, %v5819
        %v5833 = vadd.f32 %v5811, %v5819
        %v5834 = vadd.f32 %v5812, %v5819
        %v5835 = vadd.f32 %v5813, %v5819
        %v5836 = vadd.f32 %v5814, %v5819
        %v5837 = vpack.c.bf16 %v5822, %v5821
        %v5838 = vpack.c.bf16 %v5824, %v5823
        %v5839 = vpack.c.bf16 %v5826, %v5825
        %v5840 = vpack.c.bf16 %v5828, %v5827
        %v5841 = vpack.c.bf16 %v5830, %v5829
        %v5842 = vpack.c.bf16 %v5832, %v5831
        %v5843 = vpack.c.bf16 %v5834, %v5833
        %v5844 = vpack.c.bf16 %v5836, %v5835
        %v5845 = vld [vmem:[%s12] sm:$0xf]
        %v5846 = vld [vmem:[%s12 + $0x4] sm:$0xf]
        %v5847 = vld [vmem:[%s12 + $0x8] sm:$0xf]
        %v5848 = vld [vmem:[%s12 + $0xc] sm:$0xf]
        %v5849 = vld [vmem:[%s13] sm:$0x1]
        %v5851 = vlaneseq
        %v5852 = vshrl.u32 %v5851, 7
        %v5853 = vsub.s32 0, %v5852
        %v5854 = vrot.slane %v5849, %v5853
        %v5860 = vunpack.c.l.b16 %v5845
        %v5861 = vunpack.c.l.b16 %v5846
        %v5862 = vunpack.c.l.b16 %v5847
        %v5863 = vunpack.c.l.b16 %v5848
        %v5864 = vpack.c.b16 %v5861, %v5860
        %v5865 = vpack.c.b16 %v5863, %v5862
        %v5869 = vsel %vm860, %v5837, 0
        %v5872 = vsel %vm860, %v5838, 0
        %v5875 = vsel %vm860, %v5839, 0
        %v5878 = vsel %vm860, %v5840, 0
        %v5881 = vsel %vm860, %v5841, 0
        %v5884 = vsel %vm860, %v5842, 0
        %v5887 = vsel %vm860, %v5843, 0
        %v5890 = vsel %vm860, %v5844, 0
        %5892 = vmatprep.subr.bf16.mxu0 0
        %5893 = vmatpush1.bf16.msra.mxu0 %v5864
        %5894 = vmatprep.subr.bf16.mxu0 0
        %5895 = vmatpush1.bf16.msra.mxu0 %v5865
        %5896 = vmatprep.subr.bf16.mxu0 0
        %5897 = vmatpush1.bf16.msra.mxu0 0
        %5898 = vmatprep.subr.bf16.mxu0 0
        %5899 = vmatpush1.bf16.msra.mxu0 0
        %5900 = vmatprep.subr.bf16.mxu0 0
        %5901 = vmatpush1.bf16.msra.mxu0 0
        %5902 = vmatprep.subr.bf16.mxu0 0
        %5903 = vmatpush1.bf16.msra.mxu0 0
        %5904 = vmatprep.subr.bf16.mxu0 0
        %5905 = vmatpush1.bf16.msra.mxu0 0
        %5906 = vmatprep.subr.bf16.mxu0 0
        %5907 = vmatpush1.bf16.msra.mxu0 0
        %5908 = vmatprep.subr.bf16.mxu0 0
        %5909 = vmatpush1.bf16.msra.mxu0 0
        %5910 = vmatprep.subr.bf16.mxu0 0
        %5911 = vmatpush1.bf16.msra.mxu0 0
        %5912 = vmatprep.subr.bf16.mxu0 0
        %5913 = vmatpush1.bf16.msra.mxu0 0
        %5914 = vmatprep.subr.bf16.mxu0 0
        %5915 = vmatpush1.bf16.msra.mxu0 0
        %5916 = vmatprep.subr.bf16.mxu0 0
        %5917 = vmatpush1.bf16.msra.mxu0 0
        %5918 = vmatprep.subr.bf16.mxu0 0
        %5919 = vmatpush1.bf16.msra.mxu0 0
        %5920 = vmatprep.subr.bf16.mxu0 0
        %5921 = vmatpush1.bf16.msra.mxu0 0
        %5922 = vmatprep.subr.bf16.mxu0 0
        %5923 = vmatpush1.bf16.msra.mxu0 0
        %5924 = vmatprep.mubr.bf16.mxu0 0
        %5925 = vmatmul.mubr.bf16.gmra.mrb[0].mxu0 %v5869
        %v5926 = vpop.f32.mrb[0].mxu0
        %v5927 = vadd.f32 %v5854, %v5926
        %v5928 = vpop.f32.mrb[0].mxu0
        %v5929 = vpop.f32.mrb[0].mxu0
        %v5930 = vadd.f32 %v5854, %v5929
        %v5931 = vpop.f32.mrb[0].mxu0
        %5932 = vmatprep.mubr.bf16.mxu0 0
        %5933 = vmatmul.mubr.bf16.gmra.mrb[0].mxu0 %v5872
        %v5934 = vpop.f32.mrb[0].mxu0
        %v5935 = vadd.f32 %v5854, %v5934
        %v5936 = vpop.f32.mrb[0].mxu0
        %v5937 = vpop.f32.mrb[0].mxu0
        %v5938 = vadd.f32 %v5854, %v5937
        %v5939 = vpop.f32.mrb[0].mxu0
        %5940 = vmatprep.mubr.bf16.mxu0 0
        %5941 = vmatmul.mubr.bf16.gmra.mrb[0].mxu0 %v5875
        %v5942 = vpop.f32.mrb[0].mxu0
        %v5943 = vadd.f32 %v5854, %v5942
        %v5944 = vpop.f32.mrb[0].mxu0
        %v5945 = vpop.f32.mrb[0].mxu0
        %v5946 = vadd.f32 %v5854, %v5945
        %v5947 = vpop.f32.mrb[0].mxu0
        %5948 = vmatprep.mubr.bf16.mxu0 0
        %5949 = vmatmul.mubr.bf16.gmra.mrb[0].mxu0 %v5878
        %v5950 = vpop.f32.mrb[0].mxu0
        %v5951 = vadd.f32 %v5854, %v5950
        %v5952 = vpop.f32.mrb[0].mxu0
        %v5953 = vpop.f32.mrb[0].mxu0
        %v5954 = vadd.f32 %v5854, %v5953
        %v5955 = vpop.f32.mrb[0].mxu0
        %5956 = vmatprep.mubr.bf16.mxu0 0
        %5957 = vmatmul.mubr.bf16.gmra.mrb[0].mxu0 %v5881
        %v5958 = vpop.f32.mrb[0].mxu0
        %v5959 = vadd.f32 %v5854, %v5958
        %v5960 = vpop.f32.mrb[0].mxu0
        %v5961 = vpop.f32.mrb[0].mxu0
        %v5962 = vadd.f32 %v5854, %v5961
        %v5963 = vpop.f32.mrb[0].mxu0
        %5964 = vmatprep.mubr.bf16.mxu0 0
        %5965 = vmatmul.mubr.bf16.gmra.mrb[0].mxu0 %v5884
        %v5966 = vpop.f32.mrb[0].mxu0
        %v5967 = vadd.f32 %v5854, %v5966
        %v5968 = vpop.f32.mrb[0].mxu0
        %v5969 = vpop.f32.mrb[0].mxu0
        %v5970 = vadd.f32 %v5854, %v5969
        %v5971 = vpop.f32.mrb[0].mxu0
        %5972 = vmatprep.mubr.bf16.mxu0 0
        %5973 = vmatmul.mubr.bf16.gmra.mrb[0].mxu0 %v5887
        %v5974 = vpop.f32.mrb[0].mxu0
        %v5975 = vadd.f32 %v5854, %v5974
        %v5976 = vpop.f32.mrb[0].mxu0
        %v5977 = vpop.f32.mrb[0].mxu0
        %v5978 = vadd.f32 %v5854, %v5977
        %v5979 = vpop.f32.mrb[0].mxu0
        %5980 = vmatprep.mubr.bf16.mxu0 0
        %5981 = vmatmul.mubr.bf16.gmra.mrb[0].mxu0 %v5890
        %v5982 = vpop.f32.mrb[0].mxu0
        %v5983 = vadd.f32 %v5854, %v5982
        %v5984 = vpop.f32.mrb[0].mxu0
        %v5985 = vpop.f32.mrb[0].mxu0
        %v5986 = vadd.f32 %v5854, %v5985
        %v5987 = vpop.f32.mrb[0].mxu0
        %5988 = vdwg.mxu0
        %v5989 = vmul.f32 %v5927, 1.702
        %v5990 = vmul.f32 %v5930, 1.702
        %v5991 = vmul.f32 %v5935, 1.702
        %v5992 = vmul.f32 %v5938, 1.702
        %v5993 = vmul.f32 %v5943, 1.702
        %v5994 = vmul.f32 %v5946, 1.702
        %v5995 = vmul.f32 %v5951, 1.702
        %v5996 = vmul.f32 %v5954, 1.702
        %v5997 = vmul.f32 %v5959, 1.702
        %v5998 = vmul.f32 %v5962, 1.702
        %v5999 = vmul.f32 %v5967, 1.702
        %v6000 = vmul.f32 %v5970, 1.702
        %v6001 = vmul.f32 %v5975, 1.702
        %v6002 = vmul.f32 %v5978, 1.702
        %v6003 = vmul.f32 %v5983, 1.702
        %v6004 = vmul.f32 %v5986, 1.702
        %v6005 = vxor.u32 %v5989, 2147483648
        %v6006 = vxor.u32 %v5990, 2147483648
        %v6007 = vxor.u32 %v5991, 2147483648
        %v6008 = vxor.u32 %v5992, 2147483648
        %v6009 = vxor.u32 %v5993, 2147483648
        %v6010 = vxor.u32 %v5994, 2147483648
        %v6011 = vxor.u32 %v5995, 2147483648
        %v6012 = vxor.u32 %v5996, 2147483648
        %v6013 = vxor.u32 %v5997, 2147483648
        %v6014 = vxor.u32 %v5998, 2147483648
        %v6015 = vxor.u32 %v5999, 2147483648
        %v6016 = vxor.u32 %v6000, 2147483648
        %v6017 = vxor.u32 %v6001, 2147483648
        %v6018 = vxor.u32 %v6002, 2147483648
        %v6019 = vxor.u32 %v6003, 2147483648
        %v6020 = vxor.u32 %v6004, 2147483648
        %v6021 = vmul.f32 %v6005, 1.442695
        %v6022 = vpow.pop %v6021
        %v6023 = vmul.f32 %v6006, 1.442695
        %v6024 = vpow.pop %v6023
        %v6025 = vmul.f32 %v6007, 1.442695
        %v6026 = vpow.pop %v6025
        %v6027 = vmul.f32 %v6008, 1.442695
        %v6028 = vpow.pop %v6027
        %v6029 = vmul.f32 %v6009, 1.442695
        %v6030 = vpow.pop %v6029
        %v6031 = vmul.f32 %v6010, 1.442695
        %v6032 = vpow.pop %v6031
        %v6033 = vmul.f32 %v6011, 1.442695
        %v6034 = vpow.pop %v6033
        %v6035 = vmul.f32 %v6012, 1.442695
        %v6036 = vpow.pop %v6035
        %v6037 = vmul.f32 %v6013, 1.442695
        %v6038 = vpow.pop %v6037
        %v6039 = vmul.f32 %v6014, 1.442695
        %v6040 = vpow.pop %v6039
        %v6041 = vmul.f32 %v6015, 1.442695
        %v6042 = vpow.pop %v6041
        %v6043 = vmul.f32 %v6016, 1.442695
        %v6044 = vpow.pop %v6043
        %v6045 = vmul.f32 %v6017, 1.442695
        %v6046 = vpow.pop %v6045
        %v6047 = vmul.f32 %v6018, 1.442695
        %v6048 = vpow.pop %v6047
        %v6049 = vmul.f32 %v6019, 1.442695
        %v6050 = vpow.pop %v6049
        %v6051 = vmul.f32 %v6020, 1.442695
        %v6052 = vpow.pop %v6051
        %v6053 = vadd.f32 %v6022, 1.0
        %v6054 = vadd.f32 %v6024, 1.0
        %v6055 = vadd.f32 %v6026, 1.0
        %v6056 = vadd.f32 %v6028, 1.0
        %v6057 = vadd.f32 %v6030, 1.0
        %v6058 = vadd.f32 %v6032, 1.0
        %v6059 = vadd.f32 %v6034, 1.0
        %v6060 = vadd.f32 %v6036, 1.0
        %v6061 = vadd.f32 %v6038, 1.0
        %v6062 = vadd.f32 %v6040, 1.0
        %v6063 = vadd.f32 %v6042, 1.0
        %v6064 = vadd.f32 %v6044, 1.0
        %v6065 = vadd.f32 %v6046, 1.0
        %v6066 = vadd.f32 %v6048, 1.0
        %v6067 = vadd.f32 %v6050, 1.0
        %v6068 = vadd.f32 %v6052, 1.0
        %v6069 = vrcp.pop %v6053
        %v6070 = vmul.f32 1.0, %v6069
        %v6071 = vrcp.pop %v6054
        %v6072 = vmul.f32 1.0, %v6071
        %v6073 = vrcp.pop %v6055
        %v6074 = vmul.f32 1.0, %v6073
        %v6075 = vrcp.pop %v6056
        %v6076 = vmul.f32 1.0, %v6075
        %v6077 = vrcp.pop %v6057
        %v6078 = vmul.f32 1.0, %v6077
        %v6079 = vrcp.pop %v6058
        %v6080 = vmul.f32 1.0, %v6079
        %v6081 = vrcp.pop %v6059
        %v6082 = vmul.f32 1.0, %v6081
        %v6083 = vrcp.pop %v6060
        %v6084 = vmul.f32 1.0, %v6083
        %v6085 = vrcp.pop %v6061
        %v6086 = vmul.f32 1.0, %v6085
        %v6087 = vrcp.pop %v6062
        %v6088 = vmul.f32 1.0, %v6087
        %v6089 = vrcp.pop %v6063
        %v6090 = vmul.f32 1.0, %v6089
        %v6091 = vrcp.pop %v6064
        %v6092 = vmul.f32 1.0, %v6091
        %v6093 = vrcp.pop %v6065
        %v6094 = vmul.f32 1.0, %v6093
        %v6095 = vrcp.pop %v6066
        %v6096 = vmul.f32 1.0, %v6095
        %v6097 = vrcp.pop %v6067
        %v6098 = vmul.f32 1.0, %v6097
        %v6099 = vrcp.pop %v6068
        %v6100 = vmul.f32 1.0, %v6099
        %v6101 = vmul.f32 %v5927, %v6070
        %v6102 = vmul.f32 %v5930, %v6072
        %v6103 = vmul.f32 %v5935, %v6074
        %v6104 = vmul.f32 %v5938, %v6076
        %v6105 = vmul.f32 %v5943, %v6078
        %v6106 = vmul.f32 %v5946, %v6080
        %v6107 = vmul.f32 %v5951, %v6082
        %v6108 = vmul.f32 %v5954, %v6084
        %v6109 = vmul.f32 %v5959, %v6086
        %v6110 = vmul.f32 %v5962, %v6088
        %v6111 = vmul.f32 %v5967, %v6090
        %v6112 = vmul.f32 %v5970, %v6092
        %v6113 = vmul.f32 %v5975, %v6094
        %v6114 = vmul.f32 %v5978, %v6096
        %v6115 = vmul.f32 %v5983, %v6098
        %v6116 = vmul.f32 %v5986, %v6100
        %v6117 = vpack.c.bf16 %v6102, %v6101
        %v6118 = vpack.c.bf16 %v6104, %v6103
        %v6119 = vpack.c.bf16 %v6106, %v6105
        %v6120 = vpack.c.bf16 %v6108, %v6107
        %v6121 = vpack.c.bf16 %v6110, %v6109
        %v6122 = vpack.c.bf16 %v6112, %v6111
        %v6123 = vpack.c.bf16 %v6114, %v6113
        %v6124 = vpack.c.bf16 %v6116, %v6115
        %v6125 = vld [vmem:[%s14] sm:$0xf]
        %v6126 = vld [vmem:[%s14 + $0x4] sm:$0xf]
        %v6127 = vld [vmem:[%s14 + $0x8] sm:$0xf]
        %v6128 = vld [vmem:[%s14 + $0xc] sm:$0xf]
        %v6129 = vld [vmem:[%s14 + $0x10] sm:$0xf]
        %v6130 = vld [vmem:[%s14 + $0x14] sm:$0xf]
        %v6131 = vld [vmem:[%s14 + $0x18] sm:$0xf]
        %v6132 = vld [vmem:[%s14 + $0x1c] sm:$0xf]
        %v6133 = vld [vmem:[%s15] sm:$0x1]
        %v6135 = vlaneseq
        %v6136 = vshrl.u32 %v6135, 7
        %v6137 = vsub.s32 0, %v6136
        %v6138 = vrot.slane %v6133, %v6137
        %v6148 = vunpack.c.l.b16 %v6125
        %v6149 = vunpack.c.l.b16 %v6126
        %v6150 = vunpack.c.l.b16 %v6127
        %v6151 = vunpack.c.l.b16 %v6128
        %v6152 = vunpack.c.l.b16 %v6129
        %v6153 = vunpack.c.l.b16 %v6130
        %v6154 = vunpack.c.l.b16 %v6131
        %v6155 = vunpack.c.l.b16 %v6132
        %v6156 = vpack.c.b16 %v6149, %v6148
        %v6157 = vpack.c.b16 %v6151, %v6150
        %v6158 = vpack.c.b16 %v6153, %v6152
        %v6159 = vpack.c.b16 %v6155, %v6154
        %vm6164 = vcmask 523264
        %v6166 = vsel %vm6164, %v6117, 0
        %v6169 = vsel %vm6164, %v6118, 0
        %v6172 = vsel %vm6164, %v6119, 0
        %v6175 = vsel %vm6164, %v6120, 0
        %v6178 = vsel %vm6164, %v6121, 0
        %v6181 = vsel %vm6164, %v6122, 0
        %v6184 = vsel %vm6164, %v6123, 0
        %v6187 = vsel %vm6164, %v6124, 0
        %6189 = vmatprep.subr.bf16.mxu0 0
        %6190 = vmatpush1.bf16.msra.mxu0 %v6156
        %6191 = vmatprep.subr.bf16.mxu0 0
        %6192 = vmatpush1.bf16.msra.mxu0 %v6157
        %6193 = vmatprep.subr.bf16.mxu0 0
        %6194 = vmatpush1.bf16.msra.mxu0 %v6158
        %6195 = vmatprep.subr.bf16.mxu0 0
        %6196 = vmatpush1.bf16.msra.mxu0 %v6159
        %6197 = vmatprep.subr.bf16.mxu0 0
        %6198 = vmatpush1.bf16.msra.mxu0 0
        %6199 = vmatprep.subr.bf16.mxu0 0
        %6200 = vmatpush1.bf16.msra.mxu0 0
        %6201 = vmatprep.subr.bf16.mxu0 0
        %6202 = vmatpush1.bf16.msra.mxu0 0
        %6203 = vmatprep.subr.bf16.mxu0 0
        %6204 = vmatpush1.bf16.msra.mxu0 0
        %6205 = vmatprep.subr.bf16.mxu0 0
        %6206 = vmatpush1.bf16.msra.mxu0 0
        %6207 = vmatprep.subr.bf16.mxu0 0
        %6208 = vmatpush1.bf16.msra.mxu0 0
        %6209 = vmatprep.subr.bf16.mxu0 0
        %6210 = vmatpush1.bf16.msra.mxu0 0
        %6211 = vmatprep.subr.bf16.mxu0 0
        %6212 = vmatpush1.bf16.msra.mxu0 0
        %6213 = vmatprep.subr.bf16.mxu0 0
        %6214 = vmatpush1.bf16.msra.mxu0 0
        %6215 = vmatprep.subr.bf16.mxu0 0
        %6216 = vmatpush1.bf16.msra.mxu0 0
        %6217 = vmatprep.subr.bf16.mxu0 0
        %6218 = vmatpush1.bf16.msra.mxu0 0
        %6219 = vmatprep.subr.bf16.mxu0 0
        %6220 = vmatpush1.bf16.msra.mxu0 0
        %6221 = vmatprep.mubr.bf16.mxu0 0
        %6222 = vmatmul.mubr.bf16.gmra.mrb[0].mxu0 %v6166
        %v6223 = vpop.f32.mrb[0].mxu0
        %v6224 = vadd.f32 %v6138, %v6223
        %v6225 = vpop.f32.mrb[0].mxu0
        %v6226 = vpop.f32.mrb[0].mxu0
        %v6227 = vadd.f32 %v6138, %v6226
        %v6228 = vpop.f32.mrb[0].mxu0
        %6229 = vmatprep.mubr.bf16.mxu0 0
        %6230 = vmatmul.mubr.bf16.gmra.mrb[0].mxu0 %v6169
        %v6231 = vpop.f32.mrb[0].mxu0
        %v6232 = vadd.f32 %v6138, %v6231
        %v6233 = vpop.f32.mrb[0].mxu0
        %v6234 = vpop.f32.mrb[0].mxu0
        %v6235 = vadd.f32 %v6138, %v6234
        %v6236 = vpop.f32.mrb[0].mxu0
        %6237 = vmatprep.mubr.bf16.mxu0 0
        %6238 = vmatmul.mubr.bf16.gmra.mrb[0].mxu0 %v6172
        %v6239 = vpop.f32.mrb[0].mxu0
        %v6240 = vadd.f32 %v6138, %v6239
        %v6241 = vpop.f32.mrb[0].mxu0
        %v6242 = vpop.f32.mrb[0].mxu0
        %v6243 = vadd.f32 %v6138, %v6242
        %v6244 = vpop.f32.mrb[0].mxu0
        %6245 = vmatprep.mubr.bf16.mxu0 0
        %6246 = vmatmul.mubr.bf16.gmra.mrb[0].mxu0 %v6175
        %v6247 = vpop.f32.mrb[0].mxu0
        %v6248 = vadd.f32 %v6138, %v6247
        %v6249 = vpop.f32.mrb[0].mxu0
        %v6250 = vpop.f32.mrb[0].mxu0
        %v6251 = vadd.f32 %v6138, %v6250
        %v6252 = vpop.f32.mrb[0].mxu0
        %6253 = vmatprep.mubr.bf16.mxu0 0
        %6254 = vmatmul.mubr.bf16.gmra.mrb[0].mxu0 %v6178
        %v6255 = vpop.f32.mrb[0].mxu0
        %v6256 = vadd.f32 %v6138, %v6255
        %v6257 = vpop.f32.mrb[0].mxu0
        %v6258 = vpop.f32.mrb[0].mxu0
        %v6259 = vadd.f32 %v6138, %v6258
        %v6260 = vpop.f32.mrb[0].mxu0
        %6261 = vmatprep.mubr.bf16.mxu0 0
        %6262 = vmatmul.mubr.bf16.gmra.mrb[0].mxu0 %v6181
        %v6263 = vpop.f32.mrb[0].mxu0
        %v6264 = vadd.f32 %v6138, %v6263
        %v6265 = vpop.f32.mrb[0].mxu0
        %v6266 = vpop.f32.mrb[0].mxu0
        %v6267 = vadd.f32 %v6138, %v6266
        %v6268 = vpop.f32.mrb[0].mxu0
        %6269 = vmatprep.mubr.bf16.mxu0 0
        %6270 = vmatmul.mubr.bf16.gmra.mrb[0].mxu0 %v6184
        %v6271 = vpop.f32.mrb[0].mxu0
        %v6272 = vadd.f32 %v6138, %v6271
        %v6273 = vpop.f32.mrb[0].mxu0
        %v6274 = vpop.f32.mrb[0].mxu0
        %v6275 = vadd.f32 %v6138, %v6274
        %v6276 = vpop.f32.mrb[0].mxu0
        %6277 = vmatprep.mubr.bf16.mxu0 0
        %6278 = vmatmul.mubr.bf16.gmra.mrb[0].mxu0 %v6187
        %v6279 = vpop.f32.mrb[0].mxu0
        %v6280 = vadd.f32 %v6138, %v6279
        %v6281 = vpop.f32.mrb[0].mxu0
        %v6282 = vpop.f32.mrb[0].mxu0
        %v6283 = vadd.f32 %v6138, %v6282
        %v6284 = vpop.f32.mrb[0].mxu0
        %6285 = vdwg.mxu0
        %v6286 = vadd.f32 %v5567, %v6224
        %v6287 = vadd.f32 %v5568, %v6227
        %v6288 = vadd.f32 %v5569, %v6232
        %v6289 = vadd.f32 %v5570, %v6235
        %v6290 = vadd.f32 %v5571, %v6240
        %v6291 = vadd.f32 %v5572, %v6243
        %v6292 = vadd.f32 %v5573, %v6248
        %v6293 = vadd.f32 %v5574, %v6251
        %v6294 = vadd.f32 %v5575, %v6256
        %v6295 = vadd.f32 %v5576, %v6259
        %v6296 = vadd.f32 %v5577, %v6264
        %v6297 = vadd.f32 %v5578, %v6267
        %v6298 = vadd.f32 %v5579, %v6272
        %v6299 = vadd.f32 %v5580, %v6275
        %v6300 = vadd.f32 %v5581, %v6280
        %v6301 = vadd.f32 %v5582, %v6283
        %v6302 = vld [vmem:[%s16] sm:$0x1]
        %v6303 = vld [vmem:[%s17] sm:$0x1]
        %v6304 = vsel %vm860, %v6286, 0.0
        %6305 = vadd.xlane.f32.xlu0 %v6304
        %v6306 = vpop.xlane.xlu0 %6305
        %v6307 = vsel %vm860, %v6287, 0.0
        %6308 = vadd.xlane.f32.xlu0 %v6307
        %v6309 = vpop.xlane.xlu0 %6308
        %v6310 = vsel %vm860, %v6288, 0.0
        %6311 = vadd.xlane.f32.xlu0 %v6310
        %v6312 = vpop.xlane.xlu0 %6311
        %v6313 = vsel %vm860, %v6289, 0.0
        %6314 = vadd.xlane.f32.xlu0 %v6313
        %v6315 = vpop.xlane.xlu0 %6314
        %v6316 = vsel %vm860, %v6290, 0.0
        %6317 = vadd.xlane.f32.xlu0 %v6316
        %v6318 = vpop.xlane.xlu0 %6317
        %v6319 = vsel %vm860, %v6291, 0.0
        %6320 = vadd.xlane.f32.xlu0 %v6319
        %v6321 = vpop.xlane.xlu0 %6320
        %v6322 = vsel %vm860, %v6292, 0.0
        %6323 = vadd.xlane.f32.xlu0 %v6322
        %v6324 = vpop.xlane.xlu0 %6323
        %v6325 = vsel %vm860, %v6293, 0.0
        %6326 = vadd.xlane.f32.xlu0 %v6325
        %v6327 = vpop.xlane.xlu0 %6326
        %v6328 = vsel %vm860, %v6294, 0.0
        %6329 = vadd.xlane.f32.xlu0 %v6328
        %v6330 = vpop.xlane.xlu0 %6329
        %v6331 = vsel %vm860, %v6295, 0.0
        %6332 = vadd.xlane.f32.xlu0 %v6331
        %v6333 = vpop.xlane.xlu0 %6332
        %v6334 = vsel %vm860, %v6296, 0.0
        %6335 = vadd.xlane.f32.xlu0 %v6334
        %v6336 = vpop.xlane.xlu0 %6335
        %v6337 = vsel %vm860, %v6297, 0.0
        %6338 = vadd.xlane.f32.xlu0 %v6337
        %v6339 = vpop.xlane.xlu0 %6338
        %v6340 = vsel %vm860, %v6298, 0.0
        %6341 = vadd.xlane.f32.xlu0 %v6340
        %v6342 = vpop.xlane.xlu0 %6341
        %v6343 = vsel %vm860, %v6299, 0.0
        %6344 = vadd.xlane.f32.xlu0 %v6343
        %v6345 = vpop.xlane.xlu0 %6344
        %v6346 = vsel %vm860, %v6300, 0.0
        %6347 = vadd.xlane.f32.xlu0 %v6346
        %v6348 = vpop.xlane.xlu0 %6347
        %v6349 = vsel %vm860, %v6301, 0.0
        %6350 = vadd.xlane.f32.xlu0 %v6349
        %v6351 = vpop.xlane.xlu0 %6350
        %v6352 = vmul.f32 %v6306, %v909
        %v6353 = vmul.f32 %v6309, %v909
        %v6354 = vmul.f32 %v6312, %v909
        %v6355 = vmul.f32 %v6315, %v909
        %v6356 = vmul.f32 %v6318, %v909
        %v6357 = vmul.f32 %v6321, %v909
        %v6358 = vmul.f32 %v6324, %v909
        %v6359 = vmul.f32 %v6327, %v909
        %v6360 = vmul.f32 %v6330, %v909
        %v6361 = vmul.f32 %v6333, %v909
        %v6362 = vmul.f32 %v6336, %v909
        %v6363 = vmul.f32 %v6339, %v909
        %v6364 = vmul.f32 %v6342, %v909
        %v6365 = vmul.f32 %v6345, %v909
        %v6366 = vmul.f32 %v6348, %v909
        %v6367 = vmul.f32 %v6351, %v909
        %v6368 = vsub.f32 %v6286, %v6352
        %v6369 = vsub.f32 %v6287, %v6353
        %v6370 = vsub.f32 %v6288, %v6354
        %v6371 = vsub.f32 %v6289, %v6355
        %v6372 = vsub.f32 %v6290, %v6356
        %v6373 = vsub.f32 %v6291, %v6357
        %v6374 = vsub.f32 %v6292, %v6358
        %v6375 = vsub.f32 %v6293, %v6359
        %v6376 = vsub.f32 %v6294, %v6360
        %v6377 = vsub.f32 %v6295, %v6361
        %v6378 = vsub.f32 %v6296, %v6362
        %v6379 = vsub.f32 %v6297, %v6363
        %v6380 = vsub.f32 %v6298, %v6364
        %v6381 = vsub.f32 %v6299, %v6365
        %v6382 = vsub.f32 %v6300, %v6366
        %v6383 = vsub.f32 %v6301, %v6367
        %v6384 = vmul.f32 %v6368, %v6368
        %v6385 = vmul.f32 %v6369, %v6369
        %v6386 = vmul.f32 %v6370, %v6370
        %v6387 = vmul.f32 %v6371, %v6371
        %v6388 = vmul.f32 %v6372, %v6372
        %v6389 = vmul.f32 %v6373, %v6373
        %v6390 = vmul.f32 %v6374, %v6374
        %v6391 = vmul.f32 %v6375, %v6375
        %v6392 = vmul.f32 %v6376, %v6376
        %v6393 = vmul.f32 %v6377, %v6377
        %v6394 = vmul.f32 %v6378, %v6378
        %v6395 = vmul.f32 %v6379, %v6379
        %v6396 = vmul.f32 %v6380, %v6380
        %v6397 = vmul.f32 %v6381, %v6381
        %v6398 = vmul.f32 %v6382, %v6382
        %v6399 = vmul.f32 %v6383, %v6383
        %v6400 = vsel %vm860, %v6384, 0.0
        %6401 = vadd.xlane.f32.xlu0 %v6400
        %v6402 = vpop.xlane.xlu0 %6401
        %v6403 = vsel %vm860, %v6385, 0.0
        %6404 = vadd.xlane.f32.xlu0 %v6403
        %v6405 = vpop.xlane.xlu0 %6404
        %v6406 = vsel %vm860, %v6386, 0.0
        %6407 = vadd.xlane.f32.xlu0 %v6406
        %v6408 = vpop.xlane.xlu0 %6407
        %v6409 = vsel %vm860, %v6387, 0.0
        %6410 = vadd.xlane.f32.xlu0 %v6409
        %v6411 = vpop.xlane.xlu0 %6410
        %v6412 = vsel %vm860, %v6388, 0.0
        %6413 = vadd.xlane.f32.xlu0 %v6412
        %v6414 = vpop.xlane.xlu0 %6413
        %v6415 = vsel %vm860, %v6389, 0.0
        %6416 = vadd.xlane.f32.xlu0 %v6415
        %v6417 = vpop.xlane.xlu0 %6416
        %v6418 = vsel %vm860, %v6390, 0.0
        %6419 = vadd.xlane.f32.xlu0 %v6418
        %v6420 = vpop.xlane.xlu0 %6419
        %v6421 = vsel %vm860, %v6391, 0.0
        %6422 = vadd.xlane.f32.xlu0 %v6421
        %v6423 = vpop.xlane.xlu0 %6422
        %v6424 = vsel %vm860, %v6392, 0.0
        %6425 = vadd.xlane.f32.xlu0 %v6424
        %v6426 = vpop.xlane.xlu0 %6425
        %v6427 = vsel %vm860, %v6393, 0.0
        %6428 = vadd.xlane.f32.xlu0 %v6427
        %v6429 = vpop.xlane.xlu0 %6428
        %v6430 = vsel %vm860, %v6394, 0.0
        %6431 = vadd.xlane.f32.xlu0 %v6430
        %v6432 = vpop.xlane.xlu0 %6431
        %v6433 = vsel %vm860, %v6395, 0.0
        %6434 = vadd.xlane.f32.xlu0 %v6433
        %v6435 = vpop.xlane.xlu0 %6434
        %v6436 = vsel %vm860, %v6396, 0.0
        %6437 = vadd.xlane.f32.xlu0 %v6436
        %v6438 = vpop.xlane.xlu0 %6437
        %v6439 = vsel %vm860, %v6397, 0.0
        %6440 = vadd.xlane.f32.xlu0 %v6439
        %v6441 = vpop.xlane.xlu0 %6440
        %v6442 = vsel %vm860, %v6398, 0.0
        %6443 = vadd.xlane.f32.xlu0 %v6442
        %v6444 = vpop.xlane.xlu0 %6443
        %v6445 = vsel %vm860, %v6399, 0.0
        %6446 = vadd.xlane.f32.xlu0 %v6445
        %v6447 = vpop.xlane.xlu0 %6446
        %v6448 = vmul.f32 %v6402, %v909
        %v6449 = vmul.f32 %v6405, %v909
        %v6450 = vmul.f32 %v6408, %v909
        %v6451 = vmul.f32 %v6411, %v909
        %v6452 = vmul.f32 %v6414, %v909
        %v6453 = vmul.f32 %v6417, %v909
        %v6454 = vmul.f32 %v6420, %v909
        %v6455 = vmul.f32 %v6423, %v909
        %v6456 = vmul.f32 %v6426, %v909
        %v6457 = vmul.f32 %v6429, %v909
        %v6458 = vmul.f32 %v6432, %v909
        %v6459 = vmul.f32 %v6435, %v909
        %v6460 = vmul.f32 %v6438, %v909
        %v6461 = vmul.f32 %v6441, %v909
        %v6462 = vmul.f32 %v6444, %v909
        %v6463 = vmul.f32 %v6447, %v909
        %v6464 = vadd.f32 %v6448, 1e-05
        %v6465 = vadd.f32 %v6449, 1e-05
        %v6466 = vadd.f32 %v6450, 1e-05
        %v6467 = vadd.f32 %v6451, 1e-05
        %v6468 = vadd.f32 %v6452, 1e-05
        %v6469 = vadd.f32 %v6453, 1e-05
        %v6470 = vadd.f32 %v6454, 1e-05
        %v6471 = vadd.f32 %v6455, 1e-05
        %v6472 = vadd.f32 %v6456, 1e-05
        %v6473 = vadd.f32 %v6457, 1e-05
        %v6474 = vadd.f32 %v6458, 1e-05
        %v6475 = vadd.f32 %v6459, 1e-05
        %v6476 = vadd.f32 %v6460, 1e-05
        %v6477 = vadd.f32 %v6461, 1e-05
        %v6478 = vadd.f32 %v6462, 1e-05
        %v6479 = vadd.f32 %v6463, 1e-05
        %v6480 = vrsqrt.pop %v6464
        %v6481 = vrsqrt.pop %v6465
        %v6482 = vrsqrt.pop %v6466
        %v6483 = vrsqrt.pop %v6467
        %v6484 = vrsqrt.pop %v6468
        %v6485 = vrsqrt.pop %v6469
        %v6486 = vrsqrt.pop %v6470
        %v6487 = vrsqrt.pop %v6471
        %v6488 = vrsqrt.pop %v6472
        %v6489 = vrsqrt.pop %v6473
        %v6490 = vrsqrt.pop %v6474
        %v6491 = vrsqrt.pop %v6475
        %v6492 = vrsqrt.pop %v6476
        %v6493 = vrsqrt.pop %v6477
        %v6494 = vrsqrt.pop %v6478
        %v6495 = vrsqrt.pop %v6479
        %v6496 = vmul.f32 %v6368, %v6480
        %v6497 = vmul.f32 %v6369, %v6481
        %v6498 = vmul.f32 %v6370, %v6482
        %v6499 = vmul.f32 %v6371, %v6483
        %v6500 = vmul.f32 %v6372, %v6484
        %v6501 = vmul.f32 %v6373, %v6485
        %v6502 = vmul.f32 %v6374, %v6486
        %v6503 = vmul.f32 %v6375, %v6487
        %v6504 = vmul.f32 %v6376, %v6488
        %v6505 = vmul.f32 %v6377, %v6489
        %v6506 = vmul.f32 %v6378, %v6490
        %v6507 = vmul.f32 %v6379, %v6491
        %v6508 = vmul.f32 %v6380, %v6492
        %v6509 = vmul.f32 %v6381, %v6493
        %v6510 = vmul.f32 %v6382, %v6494
        %v6511 = vmul.f32 %v6383, %v6495
        %v6513 = vlaneseq
        %v6514 = vshrl.u32 %v6513, 7
        %v6515 = vsub.s32 0, %v6514
        %v6516 = vrot.slane %v6302, %v6515
        %v6518 = vmul.f32 %v6496, %v6516
        %v6519 = vmul.f32 %v6497, %v6516
        %v6520 = vmul.f32 %v6498, %v6516
        %v6521 = vmul.f32 %v6499, %v6516
        %v6522 = vmul.f32 %v6500, %v6516
        %v6523 = vmul.f32 %v6501, %v6516
        %v6524 = vmul.f32 %v6502, %v6516
        %v6525 = vmul.f32 %v6503, %v6516
        %v6526 = vmul.f32 %v6504, %v6516
        %v6527 = vmul.f32 %v6505, %v6516
        %v6528 = vmul.f32 %v6506, %v6516
        %v6529 = vmul.f32 %v6507, %v6516
        %v6530 = vmul.f32 %v6508, %v6516
        %v6531 = vmul.f32 %v6509, %v6516
        %v6532 = vmul.f32 %v6510, %v6516
        %v6533 = vmul.f32 %v6511, %v6516
        %v6535 = vlaneseq
        %v6536 = vshrl.u32 %v6535, 7
        %v6537 = vsub.s32 0, %v6536
        %v6538 = vrot.slane %v6303, %v6537
        %v6540 = vadd.f32 %v6518, %v6538
        %v6541 = vadd.f32 %v6519, %v6538
        %v6542 = vadd.f32 %v6520, %v6538
        %v6543 = vadd.f32 %v6521, %v6538
        %v6544 = vadd.f32 %v6522, %v6538
        %v6545 = vadd.f32 %v6523, %v6538
        %v6546 = vadd.f32 %v6524, %v6538
        %v6547 = vadd.f32 %v6525, %v6538
        %v6548 = vadd.f32 %v6526, %v6538
        %v6549 = vadd.f32 %v6527, %v6538
        %v6550 = vadd.f32 %v6528, %v6538
        %v6551 = vadd.f32 %v6529, %v6538
        %v6552 = vadd.f32 %v6530, %v6538
        %v6553 = vadd.f32 %v6531, %v6538
        %v6554 = vadd.f32 %v6532, %v6538
        %v6555 = vadd.f32 %v6533, %v6538
        %v6556 = vsel %vm860, %v6540, 0.0
        %v6557 = vsel %vm860, %v6541, 0.0
        %v6558 = vadd.f32 %v6556, %v6557
        %v6559 = vrot.slane %v6558, 4
        %v6560 = vadd.f32 %v6558, %v6559
        %v6561 = vrot.slane %v6560, 2
        %v6562 = vadd.f32 %v6560, %v6561
        %v6563 = vrot.slane %v6562, 1
        %v6564 = vadd.f32 %v6562, %v6563
        %v6565 = vsel %vm860, %v6542, 0.0
        %v6566 = vsel %vm860, %v6543, 0.0
        %v6567 = vadd.f32 %v6565, %v6566
        %v6568 = vrot.slane %v6567, 4
        %v6569 = vadd.f32 %v6567, %v6568
        %v6570 = vrot.slane %v6569, 2
        %v6571 = vadd.f32 %v6569, %v6570
        %v6572 = vrot.slane %v6571, 1
        %v6573 = vadd.f32 %v6571, %v6572
        %v6574 = vsel %vm860, %v6544, 0.0
        %v6575 = vsel %vm860, %v6545, 0.0
        %v6576 = vadd.f32 %v6574, %v6575
        %v6577 = vrot.slane %v6576, 4
        %v6578 = vadd.f32 %v6576, %v6577
        %v6579 = vrot.slane %v6578, 2
        %v6580 = vadd.f32 %v6578, %v6579
        %v6581 = vrot.slane %v6580, 1
        %v6582 = vadd.f32 %v6580, %v6581
        %v6583 = vsel %vm860, %v6546, 0.0
        %v6584 = vsel %vm860, %v6547, 0.0
        %v6585 = vadd.f32 %v6583, %v6584
        %v6586 = vrot.slane %v6585, 4
        %v6587 = vadd.f32 %v6585, %v6586
        %v6588 = vrot.slane %v6587, 2
        %v6589 = vadd.f32 %v6587, %v6588
        %v6590 = vrot.slane %v6589, 1
        %v6591 = vadd.f32 %v6589, %v6590
        %v6592 = vsel %vm860, %v6548, 0.0
        %v6593 = vsel %vm860, %v6549, 0.0
        %v6594 = vadd.f32 %v6592, %v6593
        %v6595 = vrot.slane %v6594, 4
        %v6596 = vadd.f32 %v6594, %v6595
        %v6597 = vrot.slane %v6596, 2
        %v6598 = vadd.f32 %v6596, %v6597
        %v6599 = vrot.slane %v6598, 1
        %v6600 = vadd.f32 %v6598, %v6599
        %v6601 = vsel %vm860, %v6550, 0.0
        %v6602 = vsel %vm860, %v6551, 0.0
        %v6603 = vadd.f32 %v6601, %v6602
        %v6604 = vrot.slane %v6603, 4
        %v6605 = vadd.f32 %v6603, %v6604
        %v6606 = vrot.slane %v6605, 2
        %v6607 = vadd.f32 %v6605, %v6606
        %v6608 = vrot.slane %v6607, 1
        %v6609 = vadd.f32 %v6607, %v6608
        %v6610 = vsel %vm860, %v6552, 0.0
        %v6611 = vsel %vm860, %v6553, 0.0
        %v6612 = vadd.f32 %v6610, %v6611
        %v6613 = vrot.slane %v6612, 4
        %v6614 = vadd.f32 %v6612, %v6613
        %v6615 = vrot.slane %v6614, 2
        %v6616 = vadd.f32 %v6614, %v6615
        %v6617 = vrot.slane %v6616, 1
        %v6618 = vadd.f32 %v6616, %v6617
        %v6619 = vsel %vm860, %v6554, 0.0
        %v6620 = vsel %vm860, %v6555, 0.0
        %v6621 = vadd.f32 %v6619, %v6620
        %v6622 = vrot.slane %v6621, 4
        %v6623 = vadd.f32 %v6621, %v6622
        %v6624 = vrot.slane %v6623, 2
        %v6625 = vadd.f32 %v6623, %v6624
        %v6626 = vrot.slane %v6625, 1
        %v6627 = vadd.f32 %v6625, %v6626
        %v6628 = vrcp.pop 16.0
        %v6629 = vmul.f32 %v6564, %v6628
        %v6630 = vmul.f32 %v6573, %v6628
        %v6631 = vmul.f32 %v6582, %v6628
        %v6632 = vmul.f32 %v6591, %v6628
        %v6633 = vmul.f32 %v6600, %v6628
        %v6634 = vmul.f32 %v6609, %v6628
        %v6635 = vmul.f32 %v6618, %v6628
        %v6636 = vmul.f32 %v6627, %v6628
        %v6637 = vpack.c.bf16 %v6629, %v6629
        %v6638 = vpack.c.bf16 %v6630, %v6630
        %v6639 = vpack.c.bf16 %v6631, %v6631
        %v6640 = vpack.c.bf16 %v6632, %v6632
        %v6641 = vpack.c.bf16 %v6633, %v6633
        %v6642 = vpack.c.bf16 %v6634, %v6634
        %v6643 = vpack.c.bf16 %v6635, %v6635
        %v6644 = vpack.c.bf16 %v6636, %v6636
        %v6645 = vld [vmem:[%s18] sm:$0xf]
        %v6646 = vld [vmem:[%s18 + $0x4] sm:$0xf]
        %v6647 = vld [vmem:[%s18 + $0x8] sm:$0xf]
        %v6648 = vld [vmem:[%s18 + $0xc] sm:$0xf]
        %v6649 = vld [vmem:[%s19] sm:$0x1]
        %v6651 = vlaneseq
        %v6652 = vshrl.u32 %v6651, 7
        %v6653 = vsub.s32 0, %v6652
        %v6654 = vrot.slane %v6649, %v6653
        %v6664 = vunpack.c.l.b16 %v6637
        %v6665 = vunpack.c.l.b16 %v6638
        %v6666 = vunpack.c.l.b16 %v6639
        %v6667 = vunpack.c.l.b16 %v6640
        %v6668 = vunpack.c.l.b16 %v6641
        %v6669 = vunpack.c.l.b16 %v6642
        %v6670 = vunpack.c.l.b16 %v6643
        %v6671 = vunpack.c.l.b16 %v6644
        %vm6672 = vcmask 1041409
        %v6673 = vsel %vm6672, %v6665, %v6664
        %vm6674 = vcmask 1042434
        %v6675 = vsel %vm6674, %v6666, %v6673
        %vm6676 = vcmask 1043459
        %v6677 = vsel %vm6676, %v6667, %v6675
        %vm6678 = vcmask 1044484
        %v6679 = vsel %vm6678, %v6668, %v6677
        %vm6680 = vcmask 1045509
        %v6681 = vsel %vm6680, %v6669, %v6679
        %vm6682 = vcmask 1046534
        %v6683 = vsel %vm6682, %v6670, %v6681
        %vm6684 = vcmask 1047559
        %v6685 = vsel %vm6684, %v6671, %v6683
        %v6686 = vpack.c.b16 %v6685, %v6685
        %v6691 = vunpack.c.l.b16 %v6645
        %v6692 = vunpack.c.l.b16 %v6646
        %v6693 = vunpack.c.l.b16 %v6647
        %v6694 = vunpack.c.l.b16 %v6648
        %v6695 = vpack.c.b16 %v6692, %v6691
        %v6696 = vpack.c.b16 %v6694, %v6693
        %v6700 = vsel %vm860, %v6686, 0
        %6702 = vmatprep.subr.bf16.mxu0 0
        %6703 = vmatpush1.bf16.msra.mxu0 %v6695
        %6704 = vmatprep.subr.bf16.mxu0 0
        %6705 = vmatpush1.bf16.msra.mxu0 %v6696
        %6706 = vmatprep.subr.bf16.mxu0 0
        %6707 = vmatpush1.bf16.msra.mxu0 0
        %6708 = vmatprep.subr.bf16.mxu0 0
        %6709 = vmatpush1.bf16.msra.mxu0 0
        %6710 = vmatprep.subr.bf16.mxu0 0
        %6711 = vmatpush1.bf16.msra.mxu0 0
        %6712 = vmatprep.subr.bf16.mxu0 0
        %6713 = vmatpush1.bf16.msra.mxu0 0
        %6714 = vmatprep.subr.bf16.mxu0 0
        %6715 = vmatpush1.bf16.msra.mxu0 0
        %6716 = vmatprep.subr.bf16.mxu0 0
        %6717 = vmatpush1.bf16.msra.mxu0 0
        %6718 = vmatprep.subr.bf16.mxu0 0
        %6719 = vmatpush1.bf16.msra.mxu0 0
        %6720 = vmatprep.subr.bf16.mxu0 0
        %6721 = vmatpush1.bf16.msra.mxu0 0
        %6722 = vmatprep.subr.bf16.mxu0 0
        %6723 = vmatpush1.bf16.msra.mxu0 0
        %6724 = vmatprep.subr.bf16.mxu0 0
        %6725 = vmatpush1.bf16.msra.mxu0 0
        %6726 = vmatprep.subr.bf16.mxu0 0
        %6727 = vmatpush1.bf16.msra.mxu0 0
        %6728 = vmatprep.subr.bf16.mxu0 0
        %6729 = vmatpush1.bf16.msra.mxu0 0
        %6730 = vmatprep.subr.bf16.mxu0 0
        %6731 = vmatpush1.bf16.msra.mxu0 0
        %6732 = vmatprep.subr.bf16.mxu0 0
        %6733 = vmatpush1.bf16.msra.mxu0 0
        %6734 = vmatprep.mubr.bf16.mxu0 0
        %6735 = vmatmul.mubr.bf16.gmra.mrb[0].mxu0 %v6700
        %v6736 = vpop.f32.mrb[0].mxu0
        %v6737 = vadd.f32 %v6654, %v6736
        %v6738 = vpop.f32.mrb[0].mxu0
        %v6739 = vpop.f32.mrb[0].mxu0
        %v6740 = vpop.f32.mrb[0].mxu0
        %6741 = vdwg.mxu0
        %6742 = vst.msk [vmem:[%s623] sm:$0xff] %vm860, %v6737
        %s6743 = sand.u32 %s467, 1
        %s6744 = scalar_lea.sflag [#allocation4], %s6743
        %s6745 = sand.u32 %s467, 1
        %s6746 = smul.addr %s6745, 8
        %s6747 = scalar_lea.vmem [#allocation3], %s6746
        // Predicated region
        $region101: #{model_wrapper_forward.1} parent=99 // pred_check
          %p6748 = pneg %p477
        $region102: #{model_wrapper_forward.1} parent=99 // pred_check_branch
          %6750 = sbr.rel (%p6748) target = $region104
        $region103: #{model_wrapper_forward.1} parent=99 // pred_region
          %s6752 = ssub.s32 128, 128
          %6753 = vsyncadd %s6744, %s6752
          %s6754 = smul.addr %s34, 128
          %s6755 = scalar_lea.hbm %s20, %s6754
          %s6757 = sshll.u32 %s6747, 4
          %s6758 = int_to_ptr.vmem [resolvable:$true] %s6757
          %6760 = dma.vmem_to_hbm [thread:$0]  %s6758, 128, %s6755, %s6744
        $region104: #{model_wrapper_forward.1} parent=99 // pred_fallthru
          _
      $region100: #{model_wrapper_forward.1} parent=5 // pred_fallthru
        _
      %p6761 = scmp.le.s32.totalorder 2, %s29
      // Predicated region
      $region105: #{model_wrapper_forward.1} parent=5 // pred_check
        %p6762 = pneg %p6761
      $region106: #{model_wrapper_forward.1} parent=5 // pred_check_branch
        %6764 = sbr.rel (%p6762) target = $region108
      $region107: #{model_wrapper_forward.1} parent=5 // pred_region
        %s6765 = ssub.s32 %s29, 2
        // Predicated region
        $region109: #{model_wrapper_forward.1} parent=107 // pred_check
          %p6766 = pneg %p483
        $region110: #{model_wrapper_forward.1} parent=107 // pred_check_branch
          %6768 = sbr.rel (%p6766) target = $region112
        $region111: #{model_wrapper_forward.1} parent=107 // pred_region
          %s6769 = sand.u32 %s468, 1
          %s6770 = scalar_lea.sflag [#allocation4], %s6769
          %s6771 = sand.u32 %s468, 1
          %s6772 = smul.addr %s6771, 8
          %s6773 = scalar_lea.vmem [#allocation3], %s6772
          %6774 = dma.done %s6770, 128
        $region112: #{model_wrapper_forward.1} parent=107 // pred_fallthru
          _
      $region108: #{model_wrapper_forward.1} parent=5 // pred_fallthru
        _
    $region6: #{model_wrapper_forward.1} parent=1 // loop_footer
      %s33 = sadd.s32 1, %s29
    $region7: #{model_wrapper_forward.1} parent=1 // loop_footer_branch
      %28 = sbr.rel target = $region3
    $region8: #{model_wrapper_forward.1} parent=1 // loop_exit
      _
    %6775 = vsyncpa [#allocation4], 1
    %s6776 = scalar_lea.sflag [#allocation4], 1
    %6777 = vsyncpa %s6776, 1

</llo_original>
